<compile_context>
chip_gen: v6e
topology: v6e:2x2x1
jax: 0.10.0
libtpu: 0.0.40
codegen_flags: <defaults>
</compile_context>

<pallas_src>
import functools

import jax
import jax.numpy as jnp
from jax.experimental import pallas as pl
from jax.experimental.pallas import tpu as pltpu


def _leaky_relu(x, negative_slope=0.2):
    return jnp.where(x >= 0, x, negative_slope * x)


def _round_up(x, m):
    return ((x + m - 1) // m) * m


def _choose_batch_tile(B):
    """Right-size the batch tile.

    * B <= 256: tile = B rounded up to 16 (bf16 sublane packing) -> no padded
      MXU work, single grid step.
    * 256 < B < 2048: tile = 128 -> >= 2 grid steps so the "parallel" batch
      axis can be sharded across both v7x TensorCores.
    * B >= 2048: tile = 256 to amortize the ~0.35us per-grid-step overhead
      while staying inside even v5e's 16 MiB default scoped-VMEM limit.
    """
    if B <= 256:
        return _round_up(max(B, 1), 16)
    if B < 2048:
        return 128
    return 256


def _make_generator_kernel(manual_w34):
    """Build the fused MLP kernel.

    manual_w34=True (grid == 1): w3/w4 arrive as raw HBM refs and are DMA'd
    into VMEM scratch at kernel entry; the waits sit right before the dots
    that consume them so the fetch overlaps fc1/fc2 compute.
    """

    def kernel(x_ref,
               w1_ref, b1_ref,
               w2_ref, b2_ref,
               w3_ref, b3_ref,
               w4_ref, b4_ref,
               out_ref, *scratch):
        if manual_w34:
            w3_vmem, w4_vmem, dma_sem = scratch
            cp3 = pltpu.make_async_copy(w3_ref, w3_vmem, dma_sem.at[0])
            cp4 = pltpu.make_async_copy(w4_ref, w4_vmem, dma_sem.at[1])
            cp3.start()
            cp4.start()

        x = x_ref[...]

        # fc1: Linear(n_features, 256) + LeakyReLU(0.2)
        h = jnp.dot(x, w1_ref[...], preferred_element_type=jnp.float32)
        h = _leaky_relu(h + b1_ref[...]).astype(jnp.bfloat16)

        # fc2: Linear(256, 512) + LeakyReLU(0.2)
        h = jnp.dot(h, w2_ref[...], preferred_element_type=jnp.float32)
        h = _leaky_relu(h + b2_ref[...]).astype(jnp.bfloat16)

        # fc3: Linear(512, 1024) + LeakyReLU(0.2)
        if manual_w34:
            cp3.wait()
            w3 = w3_vmem[...]
        else:
            w3 = w3_ref[...]
        h = jnp.dot(h, w3, preferred_element_type=jnp.float32)
        h = _leaky_relu(h + b3_ref[...]).astype(jnp.bfloat16)

        # output: Linear(1024, n_output_padded) + Tanh (epilogue in f32)
        if manual_w34:
            cp4.wait()
            w4 = w4_vmem[...]
        else:
            w4 = w4_ref[...]
        o = jnp.dot(h, w4, preferred_element_type=jnp.float32) + b4_ref[...]
        out_ref[...] = jnp.tanh(o).astype(out_ref.dtype)

    return kernel


@functools.partial(jax.jit, static_argnames=("out_dtype",))
def generator_forward(x, params, out_dtype=jnp.float32):
    """Run the Generator MLP with a fused Pallas kernel.

    x: (B, n_features) float32
    params: dict with w1..w4 of shape (in, out) and b1..b4 of shape (1, out)
            stored in float32 (cast to bf16 for the MXU here).
    out_dtype: jnp.float32 (matches PyTorch) or jnp.bfloat16 if the consumer
               tolerates it (halves the output HBM stream).
    """
    B, F = x.shape
    O = params["w4"].shape[1]

    batch_tile = _choose_batch_tile(B)
    Bp = _round_up(B, batch_tile)
    Fp = _round_up(F, 128)   # lane-align K of fc1
    Op = _round_up(O, 128)   # lane-align output (784 -> 896): dense stores

    xb = x.astype(jnp.bfloat16)
    if (Bp != B) or (Fp != F):
        xb = jnp.pad(xb, ((0, Bp - B), (0, Fp - F)))

    w1 = params["w1"].astype(jnp.bfloat16)
    if Fp != F:
        w1 = jnp.pad(w1, ((0, Fp - F), (0, 0)))
    w2 = params["w2"].astype(jnp.bfloat16)
    w3 = params["w3"].astype(jnp.bfloat16)
    w4 = params["w4"].astype(jnp.bfloat16)
    b1 = params["b1"].astype(jnp.float32)
    b2 = params["b2"].astype(jnp.float32)
    b3 = params["b3"].astype(jnp.float32)
    b4 = params["b4"].astype(jnp.float32)
    if Op != O:
        w4 = jnp.pad(w4, ((0, 0), (0, Op - O)))
        b4 = jnp.pad(b4, ((0, 0), (0, Op - O)))

    grid_len = Bp // batch_tile
    manual_w34 = grid_len == 1   # overlap the big-weight DMA only in the
                                 # single-step (small-batch) case; see header.

    def fixed(shape):
        # Whole array as one block; constant index_map -> Pallas does not
        # re-DMA the block across grid steps.
        return pl.BlockSpec(shape, lambda i: (0, 0))

    if manual_w34:
        w3_spec = pl.BlockSpec(memory_space=pl.ANY)
        w4_spec = pl.BlockSpec(memory_space=pl.ANY)
        scratch_shapes = [
            pltpu.VMEM(w3.shape, jnp.bfloat16),
            pltpu.VMEM(w4.shape, jnp.bfloat16),
            pltpu.SemaphoreType.DMA((2,)),
        ]
    else:
        w3_spec = fixed(w3.shape)
        w4_spec = fixed(w4.shape)
        scratch_shapes = []

    out = pl.pallas_call(
        _make_generator_kernel(manual_w34),
        out_shape=jax.ShapeDtypeStruct((Bp, Op), out_dtype),
        grid_spec=pltpu.PrefetchScalarGridSpec(
            num_scalar_prefetch=0,
            grid=(grid_len,),
            in_specs=[
                pl.BlockSpec((batch_tile, Fp), lambda i: (i, 0)),
                fixed(w1.shape), fixed(b1.shape),
                fixed(w2.shape), fixed(b2.shape),
                w3_spec, fixed(b3.shape),
                w4_spec, fixed(b4.shape),
            ],
            out_specs=pl.BlockSpec((batch_tile, Op), lambda i: (i, 0)),
            scratch_shapes=scratch_shapes,
        ),
        compiler_params=pltpu.CompilerParams(
            dimension_semantics=("parallel",),
        ),
    )(xb, w1, b1, w2, b2, w3, b3, w4, b4)

    if (Bp != B) or (Op != O):
        out = out[:B, :O]
    return out


def init_generator_params(key, n_features, n_output):
    """Deterministic init matching nn.Linear's default:
    U(-1/sqrt(fan_in), 1/sqrt(fan_in)) for both weight and bias."""
    dims = [(n_features, 256), (256, 512), (512, 1024), (1024, n_output)]
    params = {}
    for idx, (fan_in, fan_out) in enumerate(dims, start=1):
        key, kw, kb = jax.random.split(key, 3)
        bound = 1.0 / (fan_in ** 0.5)
        params[f"w{idx}"] = jax.random.uniform(
            kw, (fan_in, fan_out), jnp.float32, minval=-bound, maxval=bound)
        params[f"b{idx}"] = jax.random.uniform(
            kb, (1, fan_out), jnp.float32, minval=-bound, maxval=bound)
    return params


def generator_reference(x, params):
    """Pure-JAX reference mimicking the kernel's numerics:
    bf16 matmul inputs, f32 accumulation, f32 epilogues."""
    def dot_bf16(a, w):
        return jnp.dot(a.astype(jnp.bfloat16), w.astype(jnp.bfloat16),
                       preferred_element_type=jnp.float32)

    h = _leaky_relu(dot_bf16(x, params["w1"]) + params["b1"])
    h = _leaky_relu(dot_bf16(h, params["w2"]) + params["b2"])
    h = _leaky_relu(dot_bf16(h, params["w3"]) + params["b3"])
    return jnp.tanh(dot_bf16(h, params["w4"]) + params["b4"])


if __name__ == "__main__":
    key = jax.random.PRNGKey(0)
    k_param, k_x = jax.random.split(key)

    # MNIST-style generator: latent noise (100) -> flattened 28x28 image.
    batch = 64
    n_features = 100
    n_output = 784

    params = init_generator_params(k_param, n_features, n_output)
    x = jax.random.normal(k_x, (batch, n_features), jnp.float32)

    # Small batch: single grid step, manual w3/w4 DMA-overlap path.
    out = jax.block_until_ready(generator_forward(x, params))
    ref = generator_reference(x, params)
    assert out.shape == (batch, n_output)
    assert out.dtype == jnp.float32
    max_err = float(jnp.max(jnp.abs(out - ref)))
    assert jnp.allclose(out, ref, atol=1e-2, rtol=1e-2), (
        f"mismatch vs JAX reference (small batch), max abs err = {max_err}")

    # Larger batch: multi-step grid path (>= 2 steps -> both v7x TCs busy).
    x2 = jax.random.normal(jax.random.PRNGKey(1), (320, n_features), jnp.float32)
    out2 = jax.block_until_ready(generator_forward(x2, params))
    ref2 = generator_reference(x2, params)
    assert out2.shape == (320, n_output)
    max_err2 = float(jnp.max(jnp.abs(out2 - ref2)))
    assert jnp.allclose(out2, ref2, atol=1e-2, rtol=1e-2), (
        f"mismatch vs JAX reference (large batch), max abs err = {max_err2}")

    print("KERNEL_OK")
</pallas_src>

<mosaic_0001>
module attributes {stable_mosaic.version = 11 : i64} {
  func.func @kernel(%arg0: i32, %arg1: memref<64x128xbf16, #tpu.memory_space<vmem>>, %arg2: memref<128x256xbf16, #tpu.memory_space<vmem>>, %arg3: memref<1x256xf32, #tpu.memory_space<vmem>>, %arg4: memref<256x512xbf16, #tpu.memory_space<vmem>>, %arg5: memref<1x512xf32, #tpu.memory_space<vmem>>, %arg6: memref<512x1024xbf16, #tpu.memory_space<any>>, %arg7: memref<1x1024xf32, #tpu.memory_space<vmem>>, %arg8: memref<1024x896xbf16, #tpu.memory_space<any>>, %arg9: memref<1x896xf32, #tpu.memory_space<vmem>>, %arg10: memref<64x896xf32, #tpu.memory_space<vmem>>, %arg11: memref<512x1024xbf16, #tpu.memory_space<vmem>>, %arg12: memref<1024x896xbf16, #tpu.memory_space<vmem>>, %arg13: memref<2x!tpu.dma_semaphore, #tpu.memory_space<semaphore_mem>>) attributes {dimension_semantics = [#tpu.dimension_semantics<parallel>], iteration_bounds = array<i64: 1>, scalar_prefetch = 0 : i64, scratch_operands = 3 : i64, tpu.core_type = #tpu.core_type<tc>, window_params = [{transform_indices = @transform_0, window_bounds = array<i64: 64, 128>}, {pipeline_mode = #tpu.pipeline_mode<synchronous>, transform_indices = @transform_1, window_bounds = array<i64: 128, 256>}, {pipeline_mode = #tpu.pipeline_mode<synchronous>, transform_indices = @transform_2, window_bounds = array<i64: 1, 256>}, {pipeline_mode = #tpu.pipeline_mode<synchronous>, transform_indices = @transform_3, window_bounds = array<i64: 256, 512>}, {pipeline_mode = #tpu.pipeline_mode<synchronous>, transform_indices = @transform_4, window_bounds = array<i64: 1, 512>}, {}, {pipeline_mode = #tpu.pipeline_mode<synchronous>, transform_indices = @transform_6, window_bounds = array<i64: 1, 1024>}, {}, {pipeline_mode = #tpu.pipeline_mode<synchronous>, transform_indices = @transform_8, window_bounds = array<i64: 1, 896>}, {transform_indices = @transform_9, window_bounds = array<i64: 64, 896>}]} {
    %c0_i32 = arith.constant 0 : i32
    %0 = tpu.memref_slice %arg13[%c0_i32] : memref<2x!tpu.dma_semaphore, #tpu.memory_space<semaphore_mem>> -> memref<1x!tpu.dma_semaphore, #tpu.memory_space<semaphore_mem>>
    %1 = tpu.memref_squeeze %0 : memref<1x!tpu.dma_semaphore, #tpu.memory_space<semaphore_mem>> -> memref<!tpu.dma_semaphore, #tpu.memory_space<semaphore_mem>>
    tpu.enqueue_dma source(%arg6 : memref<512x1024xbf16, #tpu.memory_space<any>>) target(%arg11 : memref<512x1024xbf16, #tpu.memory_space<vmem>>) target_semaphore(%1 : memref<!tpu.dma_semaphore, #tpu.memory_space<semaphore_mem>>)
    %c1_i32 = arith.constant 1 : i32
    %2 = tpu.memref_slice %arg13[%c1_i32] : memref<2x!tpu.dma_semaphore, #tpu.memory_space<semaphore_mem>> -> memref<1x!tpu.dma_semaphore, #tpu.memory_space<semaphore_mem>>
    %3 = tpu.memref_squeeze %2 : memref<1x!tpu.dma_semaphore, #tpu.memory_space<semaphore_mem>> -> memref<!tpu.dma_semaphore, #tpu.memory_space<semaphore_mem>>
    tpu.enqueue_dma source(%arg8 : memref<1024x896xbf16, #tpu.memory_space<any>>) target(%arg12 : memref<1024x896xbf16, #tpu.memory_space<vmem>>) target_semaphore(%3 : memref<!tpu.dma_semaphore, #tpu.memory_space<semaphore_mem>>)
    %c0 = arith.constant 0 : index
    %c0_0 = arith.constant 0 : index
    %4 = vector.load %arg1[%c0, %c0_0] : memref<64x128xbf16, #tpu.memory_space<vmem>>, vector<64x128xbf16>
    %c0_1 = arith.constant 0 : index
    %c0_2 = arith.constant 0 : index
    %5 = vector.load %arg2[%c0_1, %c0_2] : memref<128x256xbf16, #tpu.memory_space<vmem>>, vector<128x256xbf16>
    %cst = arith.constant dense<0.000000e+00> : vector<64x256xf32>
    %6 = tpu.matmul %4, %5, %cst {dimension_numbers = #tpu.dot_dimension_numbers<[1], [0], [0], [1], [0, 0, 1, 1], [], []>} : vector<64x128xbf16>, vector<128x256xbf16>, vector<64x256xf32> -> vector<64x256xf32>
    %c0_3 = arith.constant 0 : index
    %c0_4 = arith.constant 0 : index
    %7 = vector.load %arg3[%c0_3, %c0_4] : memref<1x256xf32, #tpu.memory_space<vmem>>, vector<1x256xf32>
    %8 = vector.broadcast %7 : vector<1x256xf32> to vector<64x256xf32>
    %9 = arith.addf %6, %8 : vector<64x256xf32>
    %cst_5 = arith.constant 0.000000e+00 : f32
    %10 = vector.broadcast %cst_5 : f32 to vector<64x256xf32>
    %11 = arith.cmpf oge, %9, %10 : vector<64x256xf32>
    %cst_6 = arith.constant 2.000000e-01 : f32
    %12 = vector.broadcast %cst_6 : f32 to vector<64x256xf32>
    %13 = arith.mulf %12, %9 : vector<64x256xf32>
    %14 = arith.select %11, %9, %13 : vector<64x256xi1>, vector<64x256xf32>
    %15 = arith.truncf %14 : vector<64x256xf32> to vector<64x256xbf16>
    %c0_7 = arith.constant 0 : index
    %c0_8 = arith.constant 0 : index
    %16 = vector.load %arg4[%c0_7, %c0_8] : memref<256x512xbf16, #tpu.memory_space<vmem>>, vector<256x512xbf16>
    %cst_9 = arith.constant dense<0.000000e+00> : vector<64x512xf32>
    %17 = tpu.matmul %15, %16, %cst_9 {dimension_numbers = #tpu.dot_dimension_numbers<[1], [0], [0], [1], [0, 0, 1, 1], [], []>} : vector<64x256xbf16>, vector<256x512xbf16>, vector<64x512xf32> -> vector<64x512xf32>
    %c0_10 = arith.constant 0 : index
    %c0_11 = arith.constant 0 : index
    %18 = vector.load %arg5[%c0_10, %c0_11] : memref<1x512xf32, #tpu.memory_space<vmem>>, vector<1x512xf32>
    %19 = vector.broadcast %18 : vector<1x512xf32> to vector<64x512xf32>
    %20 = arith.addf %17, %19 : vector<64x512xf32>
    %cst_12 = arith.constant 0.000000e+00 : f32
    %21 = vector.broadcast %cst_12 : f32 to vector<64x512xf32>
    %22 = arith.cmpf oge, %20, %21 : vector<64x512xf32>
    %cst_13 = arith.constant 2.000000e-01 : f32
    %23 = vector.broadcast %cst_13 : f32 to vector<64x512xf32>
    %24 = arith.mulf %23, %20 : vector<64x512xf32>
    %25 = arith.select %22, %20, %24 : vector<64x512xi1>, vector<64x512xf32>
    %26 = arith.truncf %25 : vector<64x512xf32> to vector<64x512xbf16>
    %c0_i32_14 = arith.constant 0 : i32
    %27 = tpu.memref_slice %arg13[%c0_i32_14] : memref<2x!tpu.dma_semaphore, #tpu.memory_space<semaphore_mem>> -> memref<1x!tpu.dma_semaphore, #tpu.memory_space<semaphore_mem>>
    %28 = tpu.memref_squeeze %27 : memref<1x!tpu.dma_semaphore, #tpu.memory_space<semaphore_mem>> -> memref<!tpu.dma_semaphore, #tpu.memory_space<semaphore_mem>>
    tpu.wait_dma2 semaphore(%28 : memref<!tpu.dma_semaphore, #tpu.memory_space<semaphore_mem>>) src(%arg6 : memref<512x1024xbf16, #tpu.memory_space<any>>) dst(%arg11 : memref<512x1024xbf16, #tpu.memory_space<vmem>>)
    %c0_15 = arith.constant 0 : index
    %c0_16 = arith.constant 0 : index
    %29 = vector.load %arg11[%c0_15, %c0_16] : memref<512x1024xbf16, #tpu.memory_space<vmem>>, vector<512x1024xbf16>
    %cst_17 = arith.constant dense<0.000000e+00> : vector<64x1024xf32>
    %30 = tpu.matmul %26, %29, %cst_17 {dimension_numbers = #tpu.dot_dimension_numbers<[1], [0], [0], [1], [0, 0, 1, 1], [], []>} : vector<64x512xbf16>, vector<512x1024xbf16>, vector<64x1024xf32> -> vector<64x1024xf32>
    %c0_18 = arith.constant 0 : index
    %c0_19 = arith.constant 0 : index
    %31 = vector.load %arg7[%c0_18, %c0_19] : memref<1x1024xf32, #tpu.memory_space<vmem>>, vector<1x1024xf32>
    %32 = vector.broadcast %31 : vector<1x1024xf32> to vector<64x1024xf32>
    %33 = arith.addf %30, %32 : vector<64x1024xf32>
    %cst_20 = arith.constant 0.000000e+00 : f32
    %34 = vector.broadcast %cst_20 : f32 to vector<64x1024xf32>
    %35 = arith.cmpf oge, %33, %34 : vector<64x1024xf32>
    %cst_21 = arith.constant 2.000000e-01 : f32
    %36 = vector.broadcast %cst_21 : f32 to vector<64x1024xf32>
    %37 = arith.mulf %36, %33 : vector<64x1024xf32>
    %38 = arith.select %35, %33, %37 : vector<64x1024xi1>, vector<64x1024xf32>
    %39 = arith.truncf %38 : vector<64x1024xf32> to vector<64x1024xbf16>
    %c1_i32_22 = arith.constant 1 : i32
    %40 = tpu.memref_slice %arg13[%c1_i32_22] : memref<2x!tpu.dma_semaphore, #tpu.memory_space<semaphore_mem>> -> memref<1x!tpu.dma_semaphore, #tpu.memory_space<semaphore_mem>>
    %41 = tpu.memref_squeeze %40 : memref<1x!tpu.dma_semaphore, #tpu.memory_space<semaphore_mem>> -> memref<!tpu.dma_semaphore, #tpu.memory_space<semaphore_mem>>
    tpu.wait_dma2 semaphore(%41 : memref<!tpu.dma_semaphore, #tpu.memory_space<semaphore_mem>>) src(%arg8 : memref<1024x896xbf16, #tpu.memory_space<any>>) dst(%arg12 : memref<1024x896xbf16, #tpu.memory_space<vmem>>)
    %c0_23 = arith.constant 0 : index
    %c0_24 = arith.constant 0 : index
    %42 = vector.load %arg12[%c0_23, %c0_24] : memref<1024x896xbf16, #tpu.memory_space<vmem>>, vector<1024x896xbf16>
    %cst_25 = arith.constant dense<0.000000e+00> : vector<64x896xf32>
    %43 = tpu.matmul %39, %42, %cst_25 {dimension_numbers = #tpu.dot_dimension_numbers<[1], [0], [0], [1], [0, 0, 1, 1], [], []>} : vector<64x1024xbf16>, vector<1024x896xbf16>, vector<64x896xf32> -> vector<64x896xf32>
    %c0_26 = arith.constant 0 : index
    %c0_27 = arith.constant 0 : index
    %44 = vector.load %arg9[%c0_26, %c0_27] : memref<1x896xf32, #tpu.memory_space<vmem>>, vector<1x896xf32>
    %45 = vector.broadcast %44 : vector<1x896xf32> to vector<64x896xf32>
    %46 = arith.addf %43, %45 : vector<64x896xf32>
    %47 = math.tanh %46 : vector<64x896xf32>
    %c0_28 = arith.constant 0 : index
    %c0_29 = arith.constant 0 : index
    %48 = vector.load %arg10[%c0_28, %c0_29] : memref<64x896xf32, #tpu.memory_space<vmem>>, vector<64x896xf32>
    tpu.vector_store %arg10[%c0_28, %c0_29], %47 {strides = array<i32>} : memref<64x896xf32, #tpu.memory_space<vmem>>, vector<64x896xf32>,
    return
  }
  func.func @transform_0(%arg0: i32) -> (i32, i32) {
    %c0_i32 = arith.constant 0 : i32
    %c0_i32_0 = arith.constant 0 : i32
    return %arg0, %c0_i32 : i32, i32
  }
  func.func @transform_1(%arg0: i32) -> (i32, i32) {
    %c0_i32 = arith.constant 0 : i32
    %c0_i32_0 = arith.constant 0 : i32
    %c0_i32_1 = arith.constant 0 : i32
    return %c0_i32, %c0_i32_0 : i32, i32
  }
  func.func @transform_2(%arg0: i32) -> (i32, i32) {
    %c0_i32 = arith.constant 0 : i32
    %c0_i32_0 = arith.constant 0 : i32
    %c0_i32_1 = arith.constant 0 : i32
    return %c0_i32, %c0_i32_0 : i32, i32
  }
  func.func @transform_3(%arg0: i32) -> (i32, i32) {
    %c0_i32 = arith.constant 0 : i32
    %c0_i32_0 = arith.constant 0 : i32
    %c0_i32_1 = arith.constant 0 : i32
    return %c0_i32, %c0_i32_0 : i32, i32
  }
  func.func @transform_4(%arg0: i32) -> (i32, i32) {
    %c0_i32 = arith.constant 0 : i32
    %c0_i32_0 = arith.constant 0 : i32
    %c0_i32_1 = arith.constant 0 : i32
    return %c0_i32, %c0_i32_0 : i32, i32
  }
  func.func @transform_6(%arg0: i32) -> (i32, i32) {
    %c0_i32 = arith.constant 0 : i32
    %c0_i32_0 = arith.constant 0 : i32
    %c0_i32_1 = arith.constant 0 : i32
    return %c0_i32, %c0_i32_0 : i32, i32
  }
  func.func @transform_8(%arg0: i32) -> (i32, i32) {
    %c0_i32 = arith.constant 0 : i32
    %c0_i32_0 = arith.constant 0 : i32
    %c0_i32_1 = arith.constant 0 : i32
    return %c0_i32, %c0_i32_0 : i32, i32
  }
  func.func @transform_9(%arg0: i32) -> (i32, i32) {
    %c0_i32 = arith.constant 0 : i32
    %c0_i32_0 = arith.constant 0 : i32
    return %arg0, %c0_i32 : i32, i32
  }
}

</mosaic_0001>

<llo_original>
// kernel: generator_forward.1
$region0: #{generator_forward.1}
  #allocation0 [shape = 'u32[]', space=smem, size = 0x4, offset = 0x4, fixed_abs, tag = 'smem constant byte address 0x4 - core index']
  #allocation1 [shape = 'u32[144,128]{1,0:T(1,128)}', space=vmem, size = 0x12000, scoped, tag = 'internal scratch']
  #allocation2 [shape = 'bf16[512,1024]{1,0:T(8,128)(2,1)}', space=vmem, size = 0x100000, scoped, tag = 'scratch operand']
  #allocation3 [shape = 'bf16[1024,896]{1,0:T(8,128)(2,1)}', space=vmem, size = 0x1c0000, scoped, tag = 'scratch operand']
  #allocation4 [shape = 's32[2]{0}', space=sflag, size = 0x8, scoped, tag = 'scratch operand']
  #allocation7 [shape = 's32[]', space=sflag, size = 0x4, offset = 0, fixed_abs, tag = 'sflag constant byte address 0x0 - dummy sync flag']
  #allocation8 [shape = 's32[]', space=sflag, size = 0x4, offset = 0, fixed_abs, tag = 'sflag constant byte address 0x0 - dummy sync flag']
  %s0 = inlined_call_operand.vmem [shape: bf16[64,128], index: 0, kind: input, shape index: {}]
  %s1 = inlined_call_operand.vmem [shape: bf16[128,256], index: 1, kind: input, shape index: {}]
  %s2 = inlined_call_operand.vmem [shape: f32[1,256], index: 2, kind: input, shape index: {}]
  %s3 = inlined_call_operand.vmem [shape: bf16[256,512], index: 3, kind: input, shape index: {}]
  %s4 = inlined_call_operand.vmem [shape: f32[1,512], index: 4, kind: input, shape index: {}]
  %s5 = inlined_call_operand.vmem [shape: bf16[512,1024], index: 5, kind: input, shape index: {}]
  %s6 = inlined_call_operand.vmem [shape: f32[1,1024], index: 6, kind: input, shape index: {}]
  %s7 = inlined_call_operand.vmem [shape: bf16[1024,896], index: 7, kind: input, shape index: {}]
  %s8 = inlined_call_operand.vmem [shape: f32[1,896], index: 8, kind: input, shape index: {}]
  %s9 = inlined_call_operand.hbm [shape: f32[64,896], index: 9, kind: output, shape index: {}]
  %s10 = sld [smem:[#allocation0]]
  $region106: #{generator_forward.1} parent=0
    _
  %s12 = ssub.s32 1, %s10
  %s13 = scalar_select 0, %s12, %s10
  $region1: #{generator_forward.1} parent=0
    #allocation5 [shape = 'u8[229376]{0}', space=vmem, size = 0x38000, scoped, tag = 'output window, operand 0, single buffered']
    #allocation6 [shape = 's32[1]{0}', space=sflag, size = 0x4, scoped, tag = 'scoped memory for generator_forward.1']
    %14 = vsyncpa [#allocation6], 0
    // Predicated region
    $region2: #{generator_forward.1} parent=1 // pred_check
      _
    $region3: #{generator_forward.1} parent=1 // pred_check_branch
      %16 = sbr.rel (0) target = $region5
    $region4: #{generator_forward.1} parent=1 // pred_region
      _
    $region5: #{generator_forward.1} parent=1 // pred_fallthru
      _
    // Predicated region
    $region6: #{generator_forward.1} parent=1 // pred_check
      _
    $region7: #{generator_forward.1} parent=1 // pred_check_branch
      %18 = sbr.rel (0) target = $region9
    $region8: #{generator_forward.1} parent=1 // pred_region
      _
    $region9: #{generator_forward.1} parent=1 // pred_fallthru
      _
    // Predicated region
    $region10: #{generator_forward.1} parent=1 // pred_check
      _
    $region11: #{generator_forward.1} parent=1 // pred_check_branch
      %20 = sbr.rel (0) target = $region13
    $region12: #{generator_forward.1} parent=1 // pred_region
      _
    $region13: #{generator_forward.1} parent=1 // pred_fallthru
      _
    // Predicated region
    $region14: #{generator_forward.1} parent=1 // pred_check
      _
    $region15: #{generator_forward.1} parent=1 // pred_check_branch
      %22 = sbr.rel (0) target = $region17
    $region16: #{generator_forward.1} parent=1 // pred_region
      _
    $region17: #{generator_forward.1} parent=1 // pred_fallthru
      _
    // Predicated region
    $region18: #{generator_forward.1} parent=1 // pred_check
      _
    $region19: #{generator_forward.1} parent=1 // pred_check_branch
      %24 = sbr.rel (0) target = $region21
    $region20: #{generator_forward.1} parent=1 // pred_region
      _
    $region21: #{generator_forward.1} parent=1 // pred_fallthru
      _
    // Predicated region
    $region22: #{generator_forward.1} parent=1 // pred_check
      _
    $region23: #{generator_forward.1} parent=1 // pred_check_branch
      %26 = sbr.rel (0) target = $region25
    $region24: #{generator_forward.1} parent=1 // pred_region
      _
    $region25: #{generator_forward.1} parent=1 // pred_fallthru
      _
    // Predicated region
    $region26: #{generator_forward.1} parent=1 // pred_check
      _
    $region27: #{generator_forward.1} parent=1 // pred_check_branch
      %28 = sbr.rel (0) target = $region29
    $region28: #{generator_forward.1} parent=1 // pred_region
      _
    $region29: #{generator_forward.1} parent=1 // pred_fallthru
      _
    %p31 = scmp.lt.u32.totalorder 2048, 8
    %p32 = pneg %p31
    // Predicated region
    $region30: #{generator_forward.1} parent=1 // pred_check
      _
    $region31: #{generator_forward.1} parent=1 // pred_check_branch
      %34 = sbr.rel (%p31) target = $region33
    $region32: #{generator_forward.1} parent=1 // pred_region
      %s50 = sand.u32 2048, 7
      %p51 = scmp.eq.s32.totalorder %s50, 0
      // Predicated region
      $region45: #{generator_forward.1} parent=32 // pred_check
        %p52 = pneg %p51
      $region46: #{generator_forward.1} parent=32 // pred_check_branch
        %54 = sbr.rel (%p52) target = $region48
      $region47: #{generator_forward.1} parent=32 // pred_region
        loop: start=0, step=1, limit=1
        $region49: #{generator_forward.1} parent=47 // loop_pre_header
          _
        $region50: #{generator_forward.1} parent=47 // loop_header
          %s56 = sphi 0, %s60
          %p57 = scmp.ge.s32.totalorder %s56, 1
          %s61 = sphi %s5, %s5
          %s62 = sphi [#allocation2], [#allocation2]
        $region51: #{generator_forward.1} parent=47 // loop_header_branch
          %59 = sbr.rel (%p57) target = $region55
        $region52: #{generator_forward.1} parent=47 // loop_body
          %v63 = vld [vmem:[%s61] sm:$0xff]
          %64 = vst [vmem:[%s62] sm:$0xff] %v63
          %v65 = vld [vmem:[%s61 + $0x8] sm:$0xff]
          %66 = vst [vmem:[%s62 + $0x8] sm:$0xff] %v65
          %v67 = vld [vmem:[%s61 + $0x10] sm:$0xff]
          %68 = vst [vmem:[%s62 + $0x10] sm:$0xff] %v67
          %v69 = vld [vmem:[%s61 + $0x18] sm:$0xff]
          %70 = vst [vmem:[%s62 + $0x18] sm:$0xff] %v69
          %v71 = vld [vmem:[%s61 + $0x20] sm:$0xff]
          %72 = vst [vmem:[%s62 + $0x20] sm:$0xff] %v71
          %v73 = vld [vmem:[%s61 + $0x28] sm:$0xff]
          %74 = vst [vmem:[%s62 + $0x28] sm:$0xff] %v73
          %v75 = vld [vmem:[%s61 + $0x30] sm:$0xff]
          %76 = vst [vmem:[%s62 + $0x30] sm:$0xff] %v75
          %v77 = vld [vmem:[%s61 + $0x38] sm:$0xff]
          %78 = vst [vmem:[%s62 + $0x38] sm:$0xff] %v77
          %v79 = vld [vmem:[%s61 + $0x40] sm:$0xff]
          %80 = vst [vmem:[%s62 + $0x40] sm:$0xff] %v79
          %v81 = vld [vmem:[%s61 + $0x48] sm:$0xff]
          %82 = vst [vmem:[%s62 + $0x48] sm:$0xff] %v81
          %v83 = vld [vmem:[%s61 + $0x50] sm:$0xff]
          %84 = vst [vmem:[%s62 + $0x50] sm:$0xff] %v83
          %v85 = vld [vmem:[%s61 + $0x58] sm:$0xff]
          %86 = vst [vmem:[%s62 + $0x58] sm:$0xff] %v85
          %v87 = vld [vmem:[%s61 + $0x60] sm:$0xff]
          %88 = vst [vmem:[%s62 + $0x60] sm:$0xff] %v87
          %v89 = vld [vmem:[%s61 + $0x68] sm:$0xff]
          %90 = vst [vmem:[%s62 + $0x68] sm:$0xff] %v89
          %v91 = vld [vmem:[%s61 + $0x70] sm:$0xff]
          %92 = vst [vmem:[%s62 + $0x70] sm:$0xff] %v91
          %v93 = vld [vmem:[%s61 + $0x78] sm:$0xff]
          %94 = vst [vmem:[%s62 + $0x78] sm:$0xff] %v93
          %v95 = vld [vmem:[%s61 + $0x80] sm:$0xff]
          %96 = vst [vmem:[%s62 + $0x80] sm:$0xff] %v95
          %v97 = vld [vmem:[%s61 + $0x88] sm:$0xff]
          %98 = vst [vmem:[%s62 + $0x88] sm:$0xff] %v97
          %v99 = vld [vmem:[%s61 + $0x90] sm:$0xff]
          %100 = vst [vmem:[%s62 + $0x90] sm:$0xff] %v99
          %v101 = vld [vmem:[%s61 + $0x98] sm:$0xff]
          %102 = vst [vmem:[%s62 + $0x98] sm:$0xff] %v101
          %v103 = vld [vmem:[%s61 + $0xa0] sm:$0xff]
          %104 = vst [vmem:[%s62 + $0xa0] sm:$0xff] %v103
          %v105 = vld [vmem:[%s61 + $0xa8] sm:$0xff]
          %106 = vst [vmem:[%s62 + $0xa8] sm:$0xff] %v105
          %v107 = vld [vmem:[%s61 + $0xb0] sm:$0xff]
          %108 = vst [vmem:[%s62 + $0xb0] sm:$0xff] %v107
          %v109 = vld [vmem:[%s61 + $0xb8] sm:$0xff]
          %110 = vst [vmem:[%s62 + $0xb8] sm:$0xff] %v109
          %v111 = vld [vmem:[%s61 + $0xc0] sm:$0xff]
          %112 = vst [vmem:[%s62 + $0xc0] sm:$0xff] %v111
          %v113 = vld [vmem:[%s61 + $0xc8] sm:$0xff]
          %114 = vst [vmem:[%s62 + $0xc8] sm:$0xff] %v113
          %v115 = vld [vmem:[%s61 + $0xd0] sm:$0xff]
          %116 = vst [vmem:[%s62 + $0xd0] sm:$0xff] %v115
          %v117 = vld [vmem:[%s61 + $0xd8] sm:$0xff]
          %118 = vst [vmem:[%s62 + $0xd8] sm:$0xff] %v117
          %v119 = vld [vmem:[%s61 + $0xe0] sm:$0xff]
          %120 = vst [vmem:[%s62 + $0xe0] sm:$0xff] %v119
          %v121 = vld [vmem:[%s61 + $0xe8] sm:$0xff]
          %122 = vst [vmem:[%s62 + $0xe8] sm:$0xff] %v121
          %v123 = vld [vmem:[%s61 + $0xf0] sm:$0xff]
          %124 = vst [vmem:[%s62 + $0xf0] sm:$0xff] %v123
          %v125 = vld [vmem:[%s61 + $0xf8] sm:$0xff]
          %126 = vst [vmem:[%s62 + $0xf8] sm:$0xff] %v125
          %v127 = vld [vmem:[%s61 + $0x100] sm:$0xff]
          %128 = vst [vmem:[%s62 + $0x100] sm:$0xff] %v127
          %v129 = vld [vmem:[%s61 + $0x108] sm:$0xff]
          %130 = vst [vmem:[%s62 + $0x108] sm:$0xff] %v129
          %v131 = vld [vmem:[%s61 + $0x110] sm:$0xff]
          %132 = vst [vmem:[%s62 + $0x110] sm:$0xff] %v131
          %v133 = vld [vmem:[%s61 + $0x118] sm:$0xff]
          %134 = vst [vmem:[%s62 + $0x118] sm:$0xff] %v133
          %v135 = vld [vmem:[%s61 + $0x120] sm:$0xff]
          %136 = vst [vmem:[%s62 + $0x120] sm:$0xff] %v135
          %v137 = vld [vmem:[%s61 + $0x128] sm:$0xff]
          %138 = vst [vmem:[%s62 + $0x128] sm:$0xff] %v137
          %v139 = vld [vmem:[%s61 + $0x130] sm:$0xff]
          %140 = vst [vmem:[%s62 + $0x130] sm:$0xff] %v139
          %v141 = vld [vmem:[%s61 + $0x138] sm:$0xff]
          %142 = vst [vmem:[%s62 + $0x138] sm:$0xff] %v141
          %v143 = vld [vmem:[%s61 + $0x140] sm:$0xff]
          %144 = vst [vmem:[%s62 + $0x140] sm:$0xff] %v143
          %v145 = vld [vmem:[%s61 + $0x148] sm:$0xff]
          %146 = vst [vmem:[%s62 + $0x148] sm:$0xff] %v145
          %v147 = vld [vmem:[%s61 + $0x150] sm:$0xff]
          %148 = vst [vmem:[%s62 + $0x150] sm:$0xff] %v147
          %v149 = vld [vmem:[%s61 + $0x158] sm:$0xff]
          %150 = vst [vmem:[%s62 + $0x158] sm:$0xff] %v149
          %v151 = vld [vmem:[%s61 + $0x160] sm:$0xff]
          %152 = vst [vmem:[%s62 + $0x160] sm:$0xff] %v151
          %v153 = vld [vmem:[%s61 + $0x168] sm:$0xff]
          %154 = vst [vmem:[%s62 + $0x168] sm:$0xff] %v153
          %v155 = vld [vmem:[%s61 + $0x170] sm:$0xff]
          %156 = vst [vmem:[%s62 + $0x170] sm:$0xff] %v155
          %v157 = vld [vmem:[%s61 + $0x178] sm:$0xff]
          %158 = vst [vmem:[%s62 + $0x178] sm:$0xff] %v157
          %v159 = vld [vmem:[%s61 + $0x180] sm:$0xff]
          %160 = vst [vmem:[%s62 + $0x180] sm:$0xff] %v159
          %v161 = vld [vmem:[%s61 + $0x188] sm:$0xff]
          %162 = vst [vmem:[%s62 + $0x188] sm:$0xff] %v161
          %v163 = vld [vmem:[%s61 + $0x190] sm:$0xff]
          %164 = vst [vmem:[%s62 + $0x190] sm:$0xff] %v163
          %v165 = vld [vmem:[%s61 + $0x198] sm:$0xff]
          %166 = vst [vmem:[%s62 + $0x198] sm:$0xff] %v165
          %v167 = vld [vmem:[%s61 + $0x1a0] sm:$0xff]
          %168 = vst [vmem:[%s62 + $0x1a0] sm:$0xff] %v167
          %v169 = vld [vmem:[%s61 + $0x1a8] sm:$0xff]
          %170 = vst [vmem:[%s62 + $0x1a8] sm:$0xff] %v169
          %v171 = vld [vmem:[%s61 + $0x1b0] sm:$0xff]
          %172 = vst [vmem:[%s62 + $0x1b0] sm:$0xff] %v171
          %v173 = vld [vmem:[%s61 + $0x1b8] sm:$0xff]
          %174 = vst [vmem:[%s62 + $0x1b8] sm:$0xff] %v173
          %v175 = vld [vmem:[%s61 + $0x1c0] sm:$0xff]
          %176 = vst [vmem:[%s62 + $0x1c0] sm:$0xff] %v175
          %v177 = vld [vmem:[%s61 + $0x1c8] sm:$0xff]
          %178 = vst [vmem:[%s62 + $0x1c8] sm:$0xff] %v177
          %v179 = vld [vmem:[%s61 + $0x1d0] sm:$0xff]
          %180 = vst [vmem:[%s62 + $0x1d0] sm:$0xff] %v179
          %v181 = vld [vmem:[%s61 + $0x1d8] sm:$0xff]
          %182 = vst [vmem:[%s62 + $0x1d8] sm:$0xff] %v181
          %v183 = vld [vmem:[%s61 + $0x1e0] sm:$0xff]
          %184 = vst [vmem:[%s62 + $0x1e0] sm:$0xff] %v183
          %v185 = vld [vmem:[%s61 + $0x1e8] sm:$0xff]
          %186 = vst [vmem:[%s62 + $0x1e8] sm:$0xff] %v185
          %v187 = vld [vmem:[%s61 + $0x1f0] sm:$0xff]
          %188 = vst [vmem:[%s62 + $0x1f0] sm:$0xff] %v187
          %v189 = vld [vmem:[%s61 + $0x1f8] sm:$0xff]
          %190 = vst [vmem:[%s62 + $0x1f8] sm:$0xff] %v189
          %v191 = vld [vmem:[%s61 + $0x200] sm:$0xff]
          %192 = vst [vmem:[%s62 + $0x200] sm:$0xff] %v191
          %v193 = vld [vmem:[%s61 + $0x208] sm:$0xff]
          %194 = vst [vmem:[%s62 + $0x208] sm:$0xff] %v193
          %v195 = vld [vmem:[%s61 + $0x210] sm:$0xff]
          %196 = vst [vmem:[%s62 + $0x210] sm:$0xff] %v195
          %v197 = vld [vmem:[%s61 + $0x218] sm:$0xff]
          %198 = vst [vmem:[%s62 + $0x218] sm:$0xff] %v197
          %v199 = vld [vmem:[%s61 + $0x220] sm:$0xff]
          %200 = vst [vmem:[%s62 + $0x220] sm:$0xff] %v199
          %v201 = vld [vmem:[%s61 + $0x228] sm:$0xff]
          %202 = vst [vmem:[%s62 + $0x228] sm:$0xff] %v201
          %v203 = vld [vmem:[%s61 + $0x230] sm:$0xff]
          %204 = vst [vmem:[%s62 + $0x230] sm:$0xff] %v203
          %v205 = vld [vmem:[%s61 + $0x238] sm:$0xff]
          %206 = vst [vmem:[%s62 + $0x238] sm:$0xff] %v205
          %v207 = vld [vmem:[%s61 + $0x240] sm:$0xff]
          %208 = vst [vmem:[%s62 + $0x240] sm:$0xff] %v207
          %v209 = vld [vmem:[%s61 + $0x248] sm:$0xff]
          %210 = vst [vmem:[%s62 + $0x248] sm:$0xff] %v209
          %v211 = vld [vmem:[%s61 + $0x250] sm:$0xff]
          %212 = vst [vmem:[%s62 + $0x250] sm:$0xff] %v211
          %v213 = vld [vmem:[%s61 + $0x258] sm:$0xff]
          %214 = vst [vmem:[%s62 + $0x258] sm:$0xff] %v213
          %v215 = vld [vmem:[%s61 + $0x260] sm:$0xff]
          %216 = vst [vmem:[%s62 + $0x260] sm:$0xff] %v215
          %v217 = vld [vmem:[%s61 + $0x268] sm:$0xff]
          %218 = vst [vmem:[%s62 + $0x268] sm:$0xff] %v217
          %v219 = vld [vmem:[%s61 + $0x270] sm:$0xff]
          %220 = vst [vmem:[%s62 + $0x270] sm:$0xff] %v219
          %v221 = vld [vmem:[%s61 + $0x278] sm:$0xff]
          %222 = vst [vmem:[%s62 + $0x278] sm:$0xff] %v221
          %v223 = vld [vmem:[%s61 + $0x280] sm:$0xff]
          %224 = vst [vmem:[%s62 + $0x280] sm:$0xff] %v223
          %v225 = vld [vmem:[%s61 + $0x288] sm:$0xff]
          %226 = vst [vmem:[%s62 + $0x288] sm:$0xff] %v225
          %v227 = vld [vmem:[%s61 + $0x290] sm:$0xff]
          %228 = vst [vmem:[%s62 + $0x290] sm:$0xff] %v227
          %v229 = vld [vmem:[%s61 + $0x298] sm:$0xff]
          %230 = vst [vmem:[%s62 + $0x298] sm:$0xff] %v229
          %v231 = vld [vmem:[%s61 + $0x2a0] sm:$0xff]
          %232 = vst [vmem:[%s62 + $0x2a0] sm:$0xff] %v231
          %v233 = vld [vmem:[%s61 + $0x2a8] sm:$0xff]
          %234 = vst [vmem:[%s62 + $0x2a8] sm:$0xff] %v233
          %v235 = vld [vmem:[%s61 + $0x2b0] sm:$0xff]
          %236 = vst [vmem:[%s62 + $0x2b0] sm:$0xff] %v235
          %v237 = vld [vmem:[%s61 + $0x2b8] sm:$0xff]
          %238 = vst [vmem:[%s62 + $0x2b8] sm:$0xff] %v237
          %v239 = vld [vmem:[%s61 + $0x2c0] sm:$0xff]
          %240 = vst [vmem:[%s62 + $0x2c0] sm:$0xff] %v239
          %v241 = vld [vmem:[%s61 + $0x2c8] sm:$0xff]
          %242 = vst [vmem:[%s62 + $0x2c8] sm:$0xff] %v241
          %v243 = vld [vmem:[%s61 + $0x2d0] sm:$0xff]
          %244 = vst [vmem:[%s62 + $0x2d0] sm:$0xff] %v243
          %v245 = vld [vmem:[%s61 + $0x2d8] sm:$0xff]
          %246 = vst [vmem:[%s62 + $0x2d8] sm:$0xff] %v245
          %v247 = vld [vmem:[%s61 + $0x2e0] sm:$0xff]
          %248 = vst [vmem:[%s62 + $0x2e0] sm:$0xff] %v247
          %v249 = vld [vmem:[%s61 + $0x2e8] sm:$0xff]
          %250 = vst [vmem:[%s62 + $0x2e8] sm:$0xff] %v249
          %v251 = vld [vmem:[%s61 + $0x2f0] sm:$0xff]
          %252 = vst [vmem:[%s62 + $0x2f0] sm:$0xff] %v251
          %v253 = vld [vmem:[%s61 + $0x2f8] sm:$0xff]
          %254 = vst [vmem:[%s62 + $0x2f8] sm:$0xff] %v253
          %v255 = vld [vmem:[%s61 + $0x300] sm:$0xff]
          %256 = vst [vmem:[%s62 + $0x300] sm:$0xff] %v255
          %v257 = vld [vmem:[%s61 + $0x308] sm:$0xff]
          %258 = vst [vmem:[%s62 + $0x308] sm:$0xff] %v257
          %v259 = vld [vmem:[%s61 + $0x310] sm:$0xff]
          %260 = vst [vmem:[%s62 + $0x310] sm:$0xff] %v259
          %v261 = vld [vmem:[%s61 + $0x318] sm:$0xff]
          %262 = vst [vmem:[%s62 + $0x318] sm:$0xff] %v261
          %v263 = vld [vmem:[%s61 + $0x320] sm:$0xff]
          %264 = vst [vmem:[%s62 + $0x320] sm:$0xff] %v263
          %v265 = vld [vmem:[%s61 + $0x328] sm:$0xff]
          %266 = vst [vmem:[%s62 + $0x328] sm:$0xff] %v265
          %v267 = vld [vmem:[%s61 + $0x330] sm:$0xff]
          %268 = vst [vmem:[%s62 + $0x330] sm:$0xff] %v267
          %v269 = vld [vmem:[%s61 + $0x338] sm:$0xff]
          %270 = vst [vmem:[%s62 + $0x338] sm:$0xff] %v269
          %v271 = vld [vmem:[%s61 + $0x340] sm:$0xff]
          %272 = vst [vmem:[%s62 + $0x340] sm:$0xff] %v271
          %v273 = vld [vmem:[%s61 + $0x348] sm:$0xff]
          %274 = vst [vmem:[%s62 + $0x348] sm:$0xff] %v273
          %v275 = vld [vmem:[%s61 + $0x350] sm:$0xff]
          %276 = vst [vmem:[%s62 + $0x350] sm:$0xff] %v275
          %v277 = vld [vmem:[%s61 + $0x358] sm:$0xff]
          %278 = vst [vmem:[%s62 + $0x358] sm:$0xff] %v277
          %v279 = vld [vmem:[%s61 + $0x360] sm:$0xff]
          %280 = vst [vmem:[%s62 + $0x360] sm:$0xff] %v279
          %v281 = vld [vmem:[%s61 + $0x368] sm:$0xff]
          %282 = vst [vmem:[%s62 + $0x368] sm:$0xff] %v281
          %v283 = vld [vmem:[%s61 + $0x370] sm:$0xff]
          %284 = vst [vmem:[%s62 + $0x370] sm:$0xff] %v283
          %v285 = vld [vmem:[%s61 + $0x378] sm:$0xff]
          %286 = vst [vmem:[%s62 + $0x378] sm:$0xff] %v285
          %v287 = vld [vmem:[%s61 + $0x380] sm:$0xff]
          %288 = vst [vmem:[%s62 + $0x380] sm:$0xff] %v287
          %v289 = vld [vmem:[%s61 + $0x388] sm:$0xff]
          %290 = vst [vmem:[%s62 + $0x388] sm:$0xff] %v289
          %v291 = vld [vmem:[%s61 + $0x390] sm:$0xff]
          %292 = vst [vmem:[%s62 + $0x390] sm:$0xff] %v291
          %v293 = vld [vmem:[%s61 + $0x398] sm:$0xff]
          %294 = vst [vmem:[%s62 + $0x398] sm:$0xff] %v293
          %v295 = vld [vmem:[%s61 + $0x3a0] sm:$0xff]
          %296 = vst [vmem:[%s62 + $0x3a0] sm:$0xff] %v295
          %v297 = vld [vmem:[%s61 + $0x3a8] sm:$0xff]
          %298 = vst [vmem:[%s62 + $0x3a8] sm:$0xff] %v297
          %v299 = vld [vmem:[%s61 + $0x3b0] sm:$0xff]
          %300 = vst [vmem:[%s62 + $0x3b0] sm:$0xff] %v299
          %v301 = vld [vmem:[%s61 + $0x3b8] sm:$0xff]
          %302 = vst [vmem:[%s62 + $0x3b8] sm:$0xff] %v301
          %v303 = vld [vmem:[%s61 + $0x3c0] sm:$0xff]
          %304 = vst [vmem:[%s62 + $0x3c0] sm:$0xff] %v303
          %v305 = vld [vmem:[%s61 + $0x3c8] sm:$0xff]
          %306 = vst [vmem:[%s62 + $0x3c8] sm:$0xff] %v305
          %v307 = vld [vmem:[%s61 + $0x3d0] sm:$0xff]
          %308 = vst [vmem:[%s62 + $0x3d0] sm:$0xff] %v307
          %v309 = vld [vmem:[%s61 + $0x3d8] sm:$0xff]
          %310 = vst [vmem:[%s62 + $0x3d8] sm:$0xff] %v309
          %v311 = vld [vmem:[%s61 + $0x3e0] sm:$0xff]
          %312 = vst [vmem:[%s62 + $0x3e0] sm:$0xff] %v311
          %v313 = vld [vmem:[%s61 + $0x3e8] sm:$0xff]
          %314 = vst [vmem:[%s62 + $0x3e8] sm:$0xff] %v313
          %v315 = vld [vmem:[%s61 + $0x3f0] sm:$0xff]
          %316 = vst [vmem:[%s62 + $0x3f0] sm:$0xff] %v315
          %v317 = vld [vmem:[%s61 + $0x3f8] sm:$0xff]
          %318 = vst [vmem:[%s62 + $0x3f8] sm:$0xff] %v317
          %v319 = vld [vmem:[%s61 + $0x400] sm:$0xff]
          %320 = vst [vmem:[%s62 + $0x400] sm:$0xff] %v319
          %v321 = vld [vmem:[%s61 + $0x408] sm:$0xff]
          %322 = vst [vmem:[%s62 + $0x408] sm:$0xff] %v321
          %v323 = vld [vmem:[%s61 + $0x410] sm:$0xff]
          %324 = vst [vmem:[%s62 + $0x410] sm:$0xff] %v323
          %v325 = vld [vmem:[%s61 + $0x418] sm:$0xff]
          %326 = vst [vmem:[%s62 + $0x418] sm:$0xff] %v325
          %v327 = vld [vmem:[%s61 + $0x420] sm:$0xff]
          %328 = vst [vmem:[%s62 + $0x420] sm:$0xff] %v327
          %v329 = vld [vmem:[%s61 + $0x428] sm:$0xff]
          %330 = vst [vmem:[%s62 + $0x428] sm:$0xff] %v329
          %v331 = vld [vmem:[%s61 + $0x430] sm:$0xff]
          %332 = vst [vmem:[%s62 + $0x430] sm:$0xff] %v331
          %v333 = vld [vmem:[%s61 + $0x438] sm:$0xff]
          %334 = vst [vmem:[%s62 + $0x438] sm:$0xff] %v333
          %v335 = vld [vmem:[%s61 + $0x440] sm:$0xff]
          %336 = vst [vmem:[%s62 + $0x440] sm:$0xff] %v335
          %v337 = vld [vmem:[%s61 + $0x448] sm:$0xff]
          %338 = vst [vmem:[%s62 + $0x448] sm:$0xff] %v337
          %v339 = vld [vmem:[%s61 + $0x450] sm:$0xff]
          %340 = vst [vmem:[%s62 + $0x450] sm:$0xff] %v339
          %v341 = vld [vmem:[%s61 + $0x458] sm:$0xff]
          %342 = vst [vmem:[%s62 + $0x458] sm:$0xff] %v341
          %v343 = vld [vmem:[%s61 + $0x460] sm:$0xff]
          %344 = vst [vmem:[%s62 + $0x460] sm:$0xff] %v343
          %v345 = vld [vmem:[%s61 + $0x468] sm:$0xff]
          %346 = vst [vmem:[%s62 + $0x468] sm:$0xff] %v345
          %v347 = vld [vmem:[%s61 + $0x470] sm:$0xff]
          %348 = vst [vmem:[%s62 + $0x470] sm:$0xff] %v347
          %v349 = vld [vmem:[%s61 + $0x478] sm:$0xff]
          %350 = vst [vmem:[%s62 + $0x478] sm:$0xff] %v349
          %v351 = vld [vmem:[%s61 + $0x480] sm:$0xff]
          %352 = vst [vmem:[%s62 + $0x480] sm:$0xff] %v351
          %v353 = vld [vmem:[%s61 + $0x488] sm:$0xff]
          %354 = vst [vmem:[%s62 + $0x488] sm:$0xff] %v353
          %v355 = vld [vmem:[%s61 + $0x490] sm:$0xff]
          %356 = vst [vmem:[%s62 + $0x490] sm:$0xff] %v355
          %v357 = vld [vmem:[%s61 + $0x498] sm:$0xff]
          %358 = vst [vmem:[%s62 + $0x498] sm:$0xff] %v357
          %v359 = vld [vmem:[%s61 + $0x4a0] sm:$0xff]
          %360 = vst [vmem:[%s62 + $0x4a0] sm:$0xff] %v359
          %v361 = vld [vmem:[%s61 + $0x4a8] sm:$0xff]
          %362 = vst [vmem:[%s62 + $0x4a8] sm:$0xff] %v361
          %v363 = vld [vmem:[%s61 + $0x4b0] sm:$0xff]
          %364 = vst [vmem:[%s62 + $0x4b0] sm:$0xff] %v363
          %v365 = vld [vmem:[%s61 + $0x4b8] sm:$0xff]
          %366 = vst [vmem:[%s62 + $0x4b8] sm:$0xff] %v365
          %v367 = vld [vmem:[%s61 + $0x4c0] sm:$0xff]
          %368 = vst [vmem:[%s62 + $0x4c0] sm:$0xff] %v367
          %v369 = vld [vmem:[%s61 + $0x4c8] sm:$0xff]
          %370 = vst [vmem:[%s62 + $0x4c8] sm:$0xff] %v369
          %v371 = vld [vmem:[%s61 + $0x4d0] sm:$0xff]
          %372 = vst [vmem:[%s62 + $0x4d0] sm:$0xff] %v371
          %v373 = vld [vmem:[%s61 + $0x4d8] sm:$0xff]
          %374 = vst [vmem:[%s62 + $0x4d8] sm:$0xff] %v373
          %v375 = vld [vmem:[%s61 + $0x4e0] sm:$0xff]
          %376 = vst [vmem:[%s62 + $0x4e0] sm:$0xff] %v375
          %v377 = vld [vmem:[%s61 + $0x4e8] sm:$0xff]
          %378 = vst [vmem:[%s62 + $0x4e8] sm:$0xff] %v377
          %v379 = vld [vmem:[%s61 + $0x4f0] sm:$0xff]
          %380 = vst [vmem:[%s62 + $0x4f0] sm:$0xff] %v379
          %v381 = vld [vmem:[%s61 + $0x4f8] sm:$0xff]
          %382 = vst [vmem:[%s62 + $0x4f8] sm:$0xff] %v381
          %v383 = vld [vmem:[%s61 + $0x500] sm:$0xff]
          %384 = vst [vmem:[%s62 + $0x500] sm:$0xff] %v383
          %v385 = vld [vmem:[%s61 + $0x508] sm:$0xff]
          %386 = vst [vmem:[%s62 + $0x508] sm:$0xff] %v385
          %v387 = vld [vmem:[%s61 + $0x510] sm:$0xff]
          %388 = vst [vmem:[%s62 + $0x510] sm:$0xff] %v387
          %v389 = vld [vmem:[%s61 + $0x518] sm:$0xff]
          %390 = vst [vmem:[%s62 + $0x518] sm:$0xff] %v389
          %v391 = vld [vmem:[%s61 + $0x520] sm:$0xff]
          %392 = vst [vmem:[%s62 + $0x520] sm:$0xff] %v391
          %v393 = vld [vmem:[%s61 + $0x528] sm:$0xff]
          %394 = vst [vmem:[%s62 + $0x528] sm:$0xff] %v393
          %v395 = vld [vmem:[%s61 + $0x530] sm:$0xff]
          %396 = vst [vmem:[%s62 + $0x530] sm:$0xff] %v395
          %v397 = vld [vmem:[%s61 + $0x538] sm:$0xff]
          %398 = vst [vmem:[%s62 + $0x538] sm:$0xff] %v397
          %v399 = vld [vmem:[%s61 + $0x540] sm:$0xff]
          %400 = vst [vmem:[%s62 + $0x540] sm:$0xff] %v399
          %v401 = vld [vmem:[%s61 + $0x548] sm:$0xff]
          %402 = vst [vmem:[%s62 + $0x548] sm:$0xff] %v401
          %v403 = vld [vmem:[%s61 + $0x550] sm:$0xff]
          %404 = vst [vmem:[%s62 + $0x550] sm:$0xff] %v403
          %v405 = vld [vmem:[%s61 + $0x558] sm:$0xff]
          %406 = vst [vmem:[%s62 + $0x558] sm:$0xff] %v405
          %v407 = vld [vmem:[%s61 + $0x560] sm:$0xff]
          %408 = vst [vmem:[%s62 + $0x560] sm:$0xff] %v407
          %v409 = vld [vmem:[%s61 + $0x568] sm:$0xff]
          %410 = vst [vmem:[%s62 + $0x568] sm:$0xff] %v409
          %v411 = vld [vmem:[%s61 + $0x570] sm:$0xff]
          %412 = vst [vmem:[%s62 + $0x570] sm:$0xff] %v411
          %v413 = vld [vmem:[%s61 + $0x578] sm:$0xff]
          %414 = vst [vmem:[%s62 + $0x578] sm:$0xff] %v413
          %v415 = vld [vmem:[%s61 + $0x580] sm:$0xff]
          %416 = vst [vmem:[%s62 + $0x580] sm:$0xff] %v415
          %v417 = vld [vmem:[%s61 + $0x588] sm:$0xff]
          %418 = vst [vmem:[%s62 + $0x588] sm:$0xff] %v417
          %v419 = vld [vmem:[%s61 + $0x590] sm:$0xff]
          %420 = vst [vmem:[%s62 + $0x590] sm:$0xff] %v419
          %v421 = vld [vmem:[%s61 + $0x598] sm:$0xff]
          %422 = vst [vmem:[%s62 + $0x598] sm:$0xff] %v421
          %v423 = vld [vmem:[%s61 + $0x5a0] sm:$0xff]
          %424 = vst [vmem:[%s62 + $0x5a0] sm:$0xff] %v423
          %v425 = vld [vmem:[%s61 + $0x5a8] sm:$0xff]
          %426 = vst [vmem:[%s62 + $0x5a8] sm:$0xff] %v425
          %v427 = vld [vmem:[%s61 + $0x5b0] sm:$0xff]
          %428 = vst [vmem:[%s62 + $0x5b0] sm:$0xff] %v427
          %v429 = vld [vmem:[%s61 + $0x5b8] sm:$0xff]
          %430 = vst [vmem:[%s62 + $0x5b8] sm:$0xff] %v429
          %v431 = vld [vmem:[%s61 + $0x5c0] sm:$0xff]
          %432 = vst [vmem:[%s62 + $0x5c0] sm:$0xff] %v431
          %v433 = vld [vmem:[%s61 + $0x5c8] sm:$0xff]
          %434 = vst [vmem:[%s62 + $0x5c8] sm:$0xff] %v433
          %v435 = vld [vmem:[%s61 + $0x5d0] sm:$0xff]
          %436 = vst [vmem:[%s62 + $0x5d0] sm:$0xff] %v435
          %v437 = vld [vmem:[%s61 + $0x5d8] sm:$0xff]
          %438 = vst [vmem:[%s62 + $0x5d8] sm:$0xff] %v437
          %v439 = vld [vmem:[%s61 + $0x5e0] sm:$0xff]
          %440 = vst [vmem:[%s62 + $0x5e0] sm:$0xff] %v439
          %v441 = vld [vmem:[%s61 + $0x5e8] sm:$0xff]
          %442 = vst [vmem:[%s62 + $0x5e8] sm:$0xff] %v441
          %v443 = vld [vmem:[%s61 + $0x5f0] sm:$0xff]
          %444 = vst [vmem:[%s62 + $0x5f0] sm:$0xff] %v443
          %v445 = vld [vmem:[%s61 + $0x5f8] sm:$0xff]
          %446 = vst [vmem:[%s62 + $0x5f8] sm:$0xff] %v445
          %v447 = vld [vmem:[%s61 + $0x600] sm:$0xff]
          %448 = vst [vmem:[%s62 + $0x600] sm:$0xff] %v447
          %v449 = vld [vmem:[%s61 + $0x608] sm:$0xff]
          %450 = vst [vmem:[%s62 + $0x608] sm:$0xff] %v449
          %v451 = vld [vmem:[%s61 + $0x610] sm:$0xff]
          %452 = vst [vmem:[%s62 + $0x610] sm:$0xff] %v451
          %v453 = vld [vmem:[%s61 + $0x618] sm:$0xff]
          %454 = vst [vmem:[%s62 + $0x618] sm:$0xff] %v453
          %v455 = vld [vmem:[%s61 + $0x620] sm:$0xff]
          %456 = vst [vmem:[%s62 + $0x620] sm:$0xff] %v455
          %v457 = vld [vmem:[%s61 + $0x628] sm:$0xff]
          %458 = vst [vmem:[%s62 + $0x628] sm:$0xff] %v457
          %v459 = vld [vmem:[%s61 + $0x630] sm:$0xff]
          %460 = vst [vmem:[%s62 + $0x630] sm:$0xff] %v459
          %v461 = vld [vmem:[%s61 + $0x638] sm:$0xff]
          %462 = vst [vmem:[%s62 + $0x638] sm:$0xff] %v461
          %v463 = vld [vmem:[%s61 + $0x640] sm:$0xff]
          %464 = vst [vmem:[%s62 + $0x640] sm:$0xff] %v463
          %v465 = vld [vmem:[%s61 + $0x648] sm:$0xff]
          %466 = vst [vmem:[%s62 + $0x648] sm:$0xff] %v465
          %v467 = vld [vmem:[%s61 + $0x650] sm:$0xff]
          %468 = vst [vmem:[%s62 + $0x650] sm:$0xff] %v467
          %v469 = vld [vmem:[%s61 + $0x658] sm:$0xff]
          %470 = vst [vmem:[%s62 + $0x658] sm:$0xff] %v469
          %v471 = vld [vmem:[%s61 + $0x660] sm:$0xff]
          %472 = vst [vmem:[%s62 + $0x660] sm:$0xff] %v471
          %v473 = vld [vmem:[%s61 + $0x668] sm:$0xff]
          %474 = vst [vmem:[%s62 + $0x668] sm:$0xff] %v473
          %v475 = vld [vmem:[%s61 + $0x670] sm:$0xff]
          %476 = vst [vmem:[%s62 + $0x670] sm:$0xff] %v475
          %v477 = vld [vmem:[%s61 + $0x678] sm:$0xff]
          %478 = vst [vmem:[%s62 + $0x678] sm:$0xff] %v477
          %v479 = vld [vmem:[%s61 + $0x680] sm:$0xff]
          %480 = vst [vmem:[%s62 + $0x680] sm:$0xff] %v479
          %v481 = vld [vmem:[%s61 + $0x688] sm:$0xff]
          %482 = vst [vmem:[%s62 + $0x688] sm:$0xff] %v481
          %v483 = vld [vmem:[%s61 + $0x690] sm:$0xff]
          %484 = vst [vmem:[%s62 + $0x690] sm:$0xff] %v483
          %v485 = vld [vmem:[%s61 + $0x698] sm:$0xff]
          %486 = vst [vmem:[%s62 + $0x698] sm:$0xff] %v485
          %v487 = vld [vmem:[%s61 + $0x6a0] sm:$0xff]
          %488 = vst [vmem:[%s62 + $0x6a0] sm:$0xff] %v487
          %v489 = vld [vmem:[%s61 + $0x6a8] sm:$0xff]
          %490 = vst [vmem:[%s62 + $0x6a8] sm:$0xff] %v489
          %v491 = vld [vmem:[%s61 + $0x6b0] sm:$0xff]
          %492 = vst [vmem:[%s62 + $0x6b0] sm:$0xff] %v491
          %v493 = vld [vmem:[%s61 + $0x6b8] sm:$0xff]
          %494 = vst [vmem:[%s62 + $0x6b8] sm:$0xff] %v493
          %v495 = vld [vmem:[%s61 + $0x6c0] sm:$0xff]
          %496 = vst [vmem:[%s62 + $0x6c0] sm:$0xff] %v495
          %v497 = vld [vmem:[%s61 + $0x6c8] sm:$0xff]
          %498 = vst [vmem:[%s62 + $0x6c8] sm:$0xff] %v497
          %v499 = vld [vmem:[%s61 + $0x6d0] sm:$0xff]
          %500 = vst [vmem:[%s62 + $0x6d0] sm:$0xff] %v499
          %v501 = vld [vmem:[%s61 + $0x6d8] sm:$0xff]
          %502 = vst [vmem:[%s62 + $0x6d8] sm:$0xff] %v501
          %v503 = vld [vmem:[%s61 + $0x6e0] sm:$0xff]
          %504 = vst [vmem:[%s62 + $0x6e0] sm:$0xff] %v503
          %v505 = vld [vmem:[%s61 + $0x6e8] sm:$0xff]
          %506 = vst [vmem:[%s62 + $0x6e8] sm:$0xff] %v505
          %v507 = vld [vmem:[%s61 + $0x6f0] sm:$0xff]
          %508 = vst [vmem:[%s62 + $0x6f0] sm:$0xff] %v507
          %v509 = vld [vmem:[%s61 + $0x6f8] sm:$0xff]
          %510 = vst [vmem:[%s62 + $0x6f8] sm:$0xff] %v509
          %v511 = vld [vmem:[%s61 + $0x700] sm:$0xff]
          %512 = vst [vmem:[%s62 + $0x700] sm:$0xff] %v511
          %v513 = vld [vmem:[%s61 + $0x708] sm:$0xff]
          %514 = vst [vmem:[%s62 + $0x708] sm:$0xff] %v513
          %v515 = vld [vmem:[%s61 + $0x710] sm:$0xff]
          %516 = vst [vmem:[%s62 + $0x710] sm:$0xff] %v515
          %v517 = vld [vmem:[%s61 + $0x718] sm:$0xff]
          %518 = vst [vmem:[%s62 + $0x718] sm:$0xff] %v517
          %v519 = vld [vmem:[%s61 + $0x720] sm:$0xff]
          %520 = vst [vmem:[%s62 + $0x720] sm:$0xff] %v519
          %v521 = vld [vmem:[%s61 + $0x728] sm:$0xff]
          %522 = vst [vmem:[%s62 + $0x728] sm:$0xff] %v521
          %v523 = vld [vmem:[%s61 + $0x730] sm:$0xff]
          %524 = vst [vmem:[%s62 + $0x730] sm:$0xff] %v523
          %v525 = vld [vmem:[%s61 + $0x738] sm:$0xff]
          %526 = vst [vmem:[%s62 + $0x738] sm:$0xff] %v525
          %v527 = vld [vmem:[%s61 + $0x740] sm:$0xff]
          %528 = vst [vmem:[%s62 + $0x740] sm:$0xff] %v527
          %v529 = vld [vmem:[%s61 + $0x748] sm:$0xff]
          %530 = vst [vmem:[%s62 + $0x748] sm:$0xff] %v529
          %v531 = vld [vmem:[%s61 + $0x750] sm:$0xff]
          %532 = vst [vmem:[%s62 + $0x750] sm:$0xff] %v531
          %v533 = vld [vmem:[%s61 + $0x758] sm:$0xff]
          %534 = vst [vmem:[%s62 + $0x758] sm:$0xff] %v533
          %v535 = vld [vmem:[%s61 + $0x760] sm:$0xff]
          %536 = vst [vmem:[%s62 + $0x760] sm:$0xff] %v535
          %v537 = vld [vmem:[%s61 + $0x768] sm:$0xff]
          %538 = vst [vmem:[%s62 + $0x768] sm:$0xff] %v537
          %v539 = vld [vmem:[%s61 + $0x770] sm:$0xff]
          %540 = vst [vmem:[%s62 + $0x770] sm:$0xff] %v539
          %v541 = vld [vmem:[%s61 + $0x778] sm:$0xff]
          %542 = vst [vmem:[%s62 + $0x778] sm:$0xff] %v541
          %v543 = vld [vmem:[%s61 + $0x780] sm:$0xff]
          %544 = vst [vmem:[%s62 + $0x780] sm:$0xff] %v543
          %v545 = vld [vmem:[%s61 + $0x788] sm:$0xff]
          %546 = vst [vmem:[%s62 + $0x788] sm:$0xff] %v545
          %v547 = vld [vmem:[%s61 + $0x790] sm:$0xff]
          %548 = vst [vmem:[%s62 + $0x790] sm:$0xff] %v547
          %v549 = vld [vmem:[%s61 + $0x798] sm:$0xff]
          %550 = vst [vmem:[%s62 + $0x798] sm:$0xff] %v549
          %v551 = vld [vmem:[%s61 + $0x7a0] sm:$0xff]
          %552 = vst [vmem:[%s62 + $0x7a0] sm:$0xff] %v551
          %v553 = vld [vmem:[%s61 + $0x7a8] sm:$0xff]
          %554 = vst [vmem:[%s62 + $0x7a8] sm:$0xff] %v553
          %v555 = vld [vmem:[%s61 + $0x7b0] sm:$0xff]
          %556 = vst [vmem:[%s62 + $0x7b0] sm:$0xff] %v555
          %v557 = vld [vmem:[%s61 + $0x7b8] sm:$0xff]
          %558 = vst [vmem:[%s62 + $0x7b8] sm:$0xff] %v557
          %v559 = vld [vmem:[%s61 + $0x7c0] sm:$0xff]
          %560 = vst [vmem:[%s62 + $0x7c0] sm:$0xff] %v559
          %v561 = vld [vmem:[%s61 + $0x7c8] sm:$0xff]
          %562 = vst [vmem:[%s62 + $0x7c8] sm:$0xff] %v561
          %v563 = vld [vmem:[%s61 + $0x7d0] sm:$0xff]
          %564 = vst [vmem:[%s62 + $0x7d0] sm:$0xff] %v563
          %v565 = vld [vmem:[%s61 + $0x7d8] sm:$0xff]
          %566 = vst [vmem:[%s62 + $0x7d8] sm:$0xff] %v565
          %v567 = vld [vmem:[%s61 + $0x7e0] sm:$0xff]
          %568 = vst [vmem:[%s62 + $0x7e0] sm:$0xff] %v567
          %v569 = vld [vmem:[%s61 + $0x7e8] sm:$0xff]
          %570 = vst [vmem:[%s62 + $0x7e8] sm:$0xff] %v569
          %v571 = vld [vmem:[%s61 + $0x7f0] sm:$0xff]
          %572 = vst [vmem:[%s62 + $0x7f0] sm:$0xff] %v571
          %v573 = vld [vmem:[%s61 + $0x7f8] sm:$0xff]
          %574 = vst [vmem:[%s62 + $0x7f8] sm:$0xff] %v573
        $region53: #{generator_forward.1} parent=47 // loop_footer
          %s60 = sadd.s32 1, %s56
        $region54: #{generator_forward.1} parent=47 // loop_footer_branch
          %55 = sbr.rel target = $region50
        $region55: #{generator_forward.1} parent=47 // loop_exit
          _
      $region48: #{generator_forward.1} parent=32 // pred_fallthru
        _
      %p575 = pneg %p51
      // Predicated region
      $region56: #{generator_forward.1} parent=32 // pred_check
        _
      $region57: #{generator_forward.1} parent=32 // pred_check_branch
        %577 = sbr.rel (%p51) target = $region59
      $region58: #{generator_forward.1} parent=32 // pred_region
        %s578 = sand.u32 2048, 7
      $region59: #{generator_forward.1} parent=32 // pred_fallthru
        _
    $region33: #{generator_forward.1} parent=1 // pred_fallthru
      _
    // Predicated region
    $region34: #{generator_forward.1} parent=1 // pred_check
      %p35 = pneg %p31
    $region35: #{generator_forward.1} parent=1 // pred_check_branch
      %37 = sbr.rel (%p35) target = $region37
    $region36: #{generator_forward.1} parent=1 // pred_region
      %s38 = sshll.u32 1, 2048
      %s39 = ssub.s32 %s38, 1
      loop: start=0, step=1, limit=1
      $region38: #{generator_forward.1} parent=36 // loop_pre_header
        _
      $region39: #{generator_forward.1} parent=36 // loop_header
        %s41 = sphi 0, %s45
        %p42 = scmp.ge.s32.totalorder %s41, 1
        %s46 = sphi %s5, %s5
        %s47 = sphi [#allocation2], [#allocation2]
      $region40: #{generator_forward.1} parent=36 // loop_header_branch
        %44 = sbr.rel (%p42) target = $region44
      $region41: #{generator_forward.1} parent=36 // loop_body
        %v48 = vld [vmem:[%s46] sm:%s39]
        %49 = vst [vmem:[%s47] sm:%s39] %v48
      $region42: #{generator_forward.1} parent=36 // loop_footer
        %s45 = sadd.s32 1, %s41
      $region43: #{generator_forward.1} parent=36 // loop_footer_branch
        %40 = sbr.rel target = $region39
      $region44: #{generator_forward.1} parent=36 // loop_exit
        _
    $region37: #{generator_forward.1} parent=1 // pred_fallthru
      _
    // Predicated region
    $region60: #{generator_forward.1} parent=1 // pred_check
      _
    $region61: #{generator_forward.1} parent=1 // pred_check_branch
      %581 = sbr.rel (0) target = $region63
    $region62: #{generator_forward.1} parent=1 // pred_region
      %582 = vsyncadd [#allocation4], 32768
    $region63: #{generator_forward.1} parent=1 // pred_fallthru
      _
    %s583 = scalar_lea.sflag [#allocation4], 1
    %p585 = scmp.lt.u32.totalorder 3584, 8
    %p586 = pneg %p585
    // Predicated region
    $region64: #{generator_forward.1} parent=1 // pred_check
      _
    $region65: #{generator_forward.1} parent=1 // pred_check_branch
      %588 = sbr.rel (%p585) target = $region67
    $region66: #{generator_forward.1} parent=1 // pred_region
      %s604 = sand.u32 3584, 7
      %p605 = scmp.eq.s32.totalorder %s604, 0
      // Predicated region
      $region79: #{generator_forward.1} parent=66 // pred_check
        %p606 = pneg %p605
      $region80: #{generator_forward.1} parent=66 // pred_check_branch
        %608 = sbr.rel (%p606) target = $region82
      $region81: #{generator_forward.1} parent=66 // pred_region
        loop: start=0, step=1, limit=1
        $region83: #{generator_forward.1} parent=81 // loop_pre_header
          _
        $region84: #{generator_forward.1} parent=81 // loop_header
          %s610 = sphi 0, %s614
          %p611 = scmp.ge.s32.totalorder %s610, 1
          %s615 = sphi %s7, %s7
          %s616 = sphi [#allocation3], [#allocation3]
        $region85: #{generator_forward.1} parent=81 // loop_header_branch
          %613 = sbr.rel (%p611) target = $region89
        $region86: #{generator_forward.1} parent=81 // loop_body
          %v617 = vld [vmem:[%s615] sm:$0xff]
          %618 = vst [vmem:[%s616] sm:$0xff] %v617
          %v619 = vld [vmem:[%s615 + $0x8] sm:$0xff]
          %620 = vst [vmem:[%s616 + $0x8] sm:$0xff] %v619
          %v621 = vld [vmem:[%s615 + $0x10] sm:$0xff]
          %622 = vst [vmem:[%s616 + $0x10] sm:$0xff] %v621
          %v623 = vld [vmem:[%s615 + $0x18] sm:$0xff]
          %624 = vst [vmem:[%s616 + $0x18] sm:$0xff] %v623
          %v625 = vld [vmem:[%s615 + $0x20] sm:$0xff]
          %626 = vst [vmem:[%s616 + $0x20] sm:$0xff] %v625
          %v627 = vld [vmem:[%s615 + $0x28] sm:$0xff]
          %628 = vst [vmem:[%s616 + $0x28] sm:$0xff] %v627
          %v629 = vld [vmem:[%s615 + $0x30] sm:$0xff]
          %630 = vst [vmem:[%s616 + $0x30] sm:$0xff] %v629
          %v631 = vld [vmem:[%s615 + $0x38] sm:$0xff]
          %632 = vst [vmem:[%s616 + $0x38] sm:$0xff] %v631
          %v633 = vld [vmem:[%s615 + $0x40] sm:$0xff]
          %634 = vst [vmem:[%s616 + $0x40] sm:$0xff] %v633
          %v635 = vld [vmem:[%s615 + $0x48] sm:$0xff]
          %636 = vst [vmem:[%s616 + $0x48] sm:$0xff] %v635
          %v637 = vld [vmem:[%s615 + $0x50] sm:$0xff]
          %638 = vst [vmem:[%s616 + $0x50] sm:$0xff] %v637
          %v639 = vld [vmem:[%s615 + $0x58] sm:$0xff]
          %640 = vst [vmem:[%s616 + $0x58] sm:$0xff] %v639
          %v641 = vld [vmem:[%s615 + $0x60] sm:$0xff]
          %642 = vst [vmem:[%s616 + $0x60] sm:$0xff] %v641
          %v643 = vld [vmem:[%s615 + $0x68] sm:$0xff]
          %644 = vst [vmem:[%s616 + $0x68] sm:$0xff] %v643
          %v645 = vld [vmem:[%s615 + $0x70] sm:$0xff]
          %646 = vst [vmem:[%s616 + $0x70] sm:$0xff] %v645
          %v647 = vld [vmem:[%s615 + $0x78] sm:$0xff]
          %648 = vst [vmem:[%s616 + $0x78] sm:$0xff] %v647
          %v649 = vld [vmem:[%s615 + $0x80] sm:$0xff]
          %650 = vst [vmem:[%s616 + $0x80] sm:$0xff] %v649
          %v651 = vld [vmem:[%s615 + $0x88] sm:$0xff]
          %652 = vst [vmem:[%s616 + $0x88] sm:$0xff] %v651
          %v653 = vld [vmem:[%s615 + $0x90] sm:$0xff]
          %654 = vst [vmem:[%s616 + $0x90] sm:$0xff] %v653
          %v655 = vld [vmem:[%s615 + $0x98] sm:$0xff]
          %656 = vst [vmem:[%s616 + $0x98] sm:$0xff] %v655
          %v657 = vld [vmem:[%s615 + $0xa0] sm:$0xff]
          %658 = vst [vmem:[%s616 + $0xa0] sm:$0xff] %v657
          %v659 = vld [vmem:[%s615 + $0xa8] sm:$0xff]
          %660 = vst [vmem:[%s616 + $0xa8] sm:$0xff] %v659
          %v661 = vld [vmem:[%s615 + $0xb0] sm:$0xff]
          %662 = vst [vmem:[%s616 + $0xb0] sm:$0xff] %v661
          %v663 = vld [vmem:[%s615 + $0xb8] sm:$0xff]
          %664 = vst [vmem:[%s616 + $0xb8] sm:$0xff] %v663
          %v665 = vld [vmem:[%s615 + $0xc0] sm:$0xff]
          %666 = vst [vmem:[%s616 + $0xc0] sm:$0xff] %v665
          %v667 = vld [vmem:[%s615 + $0xc8] sm:$0xff]
          %668 = vst [vmem:[%s616 + $0xc8] sm:$0xff] %v667
          %v669 = vld [vmem:[%s615 + $0xd0] sm:$0xff]
          %670 = vst [vmem:[%s616 + $0xd0] sm:$0xff] %v669
          %v671 = vld [vmem:[%s615 + $0xd8] sm:$0xff]
          %672 = vst [vmem:[%s616 + $0xd8] sm:$0xff] %v671
          %v673 = vld [vmem:[%s615 + $0xe0] sm:$0xff]
          %674 = vst [vmem:[%s616 + $0xe0] sm:$0xff] %v673
          %v675 = vld [vmem:[%s615 + $0xe8] sm:$0xff]
          %676 = vst [vmem:[%s616 + $0xe8] sm:$0xff] %v675
          %v677 = vld [vmem:[%s615 + $0xf0] sm:$0xff]
          %678 = vst [vmem:[%s616 + $0xf0] sm:$0xff] %v677
          %v679 = vld [vmem:[%s615 + $0xf8] sm:$0xff]
          %680 = vst [vmem:[%s616 + $0xf8] sm:$0xff] %v679
          %v681 = vld [vmem:[%s615 + $0x100] sm:$0xff]
          %682 = vst [vmem:[%s616 + $0x100] sm:$0xff] %v681
          %v683 = vld [vmem:[%s615 + $0x108] sm:$0xff]
          %684 = vst [vmem:[%s616 + $0x108] sm:$0xff] %v683
          %v685 = vld [vmem:[%s615 + $0x110] sm:$0xff]
          %686 = vst [vmem:[%s616 + $0x110] sm:$0xff] %v685
          %v687 = vld [vmem:[%s615 + $0x118] sm:$0xff]
          %688 = vst [vmem:[%s616 + $0x118] sm:$0xff] %v687
          %v689 = vld [vmem:[%s615 + $0x120] sm:$0xff]
          %690 = vst [vmem:[%s616 + $0x120] sm:$0xff] %v689
          %v691 = vld [vmem:[%s615 + $0x128] sm:$0xff]
          %692 = vst [vmem:[%s616 + $0x128] sm:$0xff] %v691
          %v693 = vld [vmem:[%s615 + $0x130] sm:$0xff]
          %694 = vst [vmem:[%s616 + $0x130] sm:$0xff] %v693
          %v695 = vld [vmem:[%s615 + $0x138] sm:$0xff]
          %696 = vst [vmem:[%s616 + $0x138] sm:$0xff] %v695
          %v697 = vld [vmem:[%s615 + $0x140] sm:$0xff]
          %698 = vst [vmem:[%s616 + $0x140] sm:$0xff] %v697
          %v699 = vld [vmem:[%s615 + $0x148] sm:$0xff]
          %700 = vst [vmem:[%s616 + $0x148] sm:$0xff] %v699
          %v701 = vld [vmem:[%s615 + $0x150] sm:$0xff]
          %702 = vst [vmem:[%s616 + $0x150] sm:$0xff] %v701
          %v703 = vld [vmem:[%s615 + $0x158] sm:$0xff]
          %704 = vst [vmem:[%s616 + $0x158] sm:$0xff] %v703
          %v705 = vld [vmem:[%s615 + $0x160] sm:$0xff]
          %706 = vst [vmem:[%s616 + $0x160] sm:$0xff] %v705
          %v707 = vld [vmem:[%s615 + $0x168] sm:$0xff]
          %708 = vst [vmem:[%s616 + $0x168] sm:$0xff] %v707
          %v709 = vld [vmem:[%s615 + $0x170] sm:$0xff]
          %710 = vst [vmem:[%s616 + $0x170] sm:$0xff] %v709
          %v711 = vld [vmem:[%s615 + $0x178] sm:$0xff]
          %712 = vst [vmem:[%s616 + $0x178] sm:$0xff] %v711
          %v713 = vld [vmem:[%s615 + $0x180] sm:$0xff]
          %714 = vst [vmem:[%s616 + $0x180] sm:$0xff] %v713
          %v715 = vld [vmem:[%s615 + $0x188] sm:$0xff]
          %716 = vst [vmem:[%s616 + $0x188] sm:$0xff] %v715
          %v717 = vld [vmem:[%s615 + $0x190] sm:$0xff]
          %718 = vst [vmem:[%s616 + $0x190] sm:$0xff] %v717
          %v719 = vld [vmem:[%s615 + $0x198] sm:$0xff]
          %720 = vst [vmem:[%s616 + $0x198] sm:$0xff] %v719
          %v721 = vld [vmem:[%s615 + $0x1a0] sm:$0xff]
          %722 = vst [vmem:[%s616 + $0x1a0] sm:$0xff] %v721
          %v723 = vld [vmem:[%s615 + $0x1a8] sm:$0xff]
          %724 = vst [vmem:[%s616 + $0x1a8] sm:$0xff] %v723
          %v725 = vld [vmem:[%s615 + $0x1b0] sm:$0xff]
          %726 = vst [vmem:[%s616 + $0x1b0] sm:$0xff] %v725
          %v727 = vld [vmem:[%s615 + $0x1b8] sm:$0xff]
          %728 = vst [vmem:[%s616 + $0x1b8] sm:$0xff] %v727
          %v729 = vld [vmem:[%s615 + $0x1c0] sm:$0xff]
          %730 = vst [vmem:[%s616 + $0x1c0] sm:$0xff] %v729
          %v731 = vld [vmem:[%s615 + $0x1c8] sm:$0xff]
          %732 = vst [vmem:[%s616 + $0x1c8] sm:$0xff] %v731
          %v733 = vld [vmem:[%s615 + $0x1d0] sm:$0xff]
          %734 = vst [vmem:[%s616 + $0x1d0] sm:$0xff] %v733
          %v735 = vld [vmem:[%s615 + $0x1d8] sm:$0xff]
          %736 = vst [vmem:[%s616 + $0x1d8] sm:$0xff] %v735
          %v737 = vld [vmem:[%s615 + $0x1e0] sm:$0xff]
          %738 = vst [vmem:[%s616 + $0x1e0] sm:$0xff] %v737
          %v739 = vld [vmem:[%s615 + $0x1e8] sm:$0xff]
          %740 = vst [vmem:[%s616 + $0x1e8] sm:$0xff] %v739
          %v741 = vld [vmem:[%s615 + $0x1f0] sm:$0xff]
          %742 = vst [vmem:[%s616 + $0x1f0] sm:$0xff] %v741
          %v743 = vld [vmem:[%s615 + $0x1f8] sm:$0xff]
          %744 = vst [vmem:[%s616 + $0x1f8] sm:$0xff] %v743
          %v745 = vld [vmem:[%s615 + $0x200] sm:$0xff]
          %746 = vst [vmem:[%s616 + $0x200] sm:$0xff] %v745
          %v747 = vld [vmem:[%s615 + $0x208] sm:$0xff]
          %748 = vst [vmem:[%s616 + $0x208] sm:$0xff] %v747
          %v749 = vld [vmem:[%s615 + $0x210] sm:$0xff]
          %750 = vst [vmem:[%s616 + $0x210] sm:$0xff] %v749
          %v751 = vld [vmem:[%s615 + $0x218] sm:$0xff]
          %752 = vst [vmem:[%s616 + $0x218] sm:$0xff] %v751
          %v753 = vld [vmem:[%s615 + $0x220] sm:$0xff]
          %754 = vst [vmem:[%s616 + $0x220] sm:$0xff] %v753
          %v755 = vld [vmem:[%s615 + $0x228] sm:$0xff]
          %756 = vst [vmem:[%s616 + $0x228] sm:$0xff] %v755
          %v757 = vld [vmem:[%s615 + $0x230] sm:$0xff]
          %758 = vst [vmem:[%s616 + $0x230] sm:$0xff] %v757
          %v759 = vld [vmem:[%s615 + $0x238] sm:$0xff]
          %760 = vst [vmem:[%s616 + $0x238] sm:$0xff] %v759
          %v761 = vld [vmem:[%s615 + $0x240] sm:$0xff]
          %762 = vst [vmem:[%s616 + $0x240] sm:$0xff] %v761
          %v763 = vld [vmem:[%s615 + $0x248] sm:$0xff]
          %764 = vst [vmem:[%s616 + $0x248] sm:$0xff] %v763
          %v765 = vld [vmem:[%s615 + $0x250] sm:$0xff]
          %766 = vst [vmem:[%s616 + $0x250] sm:$0xff] %v765
          %v767 = vld [vmem:[%s615 + $0x258] sm:$0xff]
          %768 = vst [vmem:[%s616 + $0x258] sm:$0xff] %v767
          %v769 = vld [vmem:[%s615 + $0x260] sm:$0xff]
          %770 = vst [vmem:[%s616 + $0x260] sm:$0xff] %v769
          %v771 = vld [vmem:[%s615 + $0x268] sm:$0xff]
          %772 = vst [vmem:[%s616 + $0x268] sm:$0xff] %v771
          %v773 = vld [vmem:[%s615 + $0x270] sm:$0xff]
          %774 = vst [vmem:[%s616 + $0x270] sm:$0xff] %v773
          %v775 = vld [vmem:[%s615 + $0x278] sm:$0xff]
          %776 = vst [vmem:[%s616 + $0x278] sm:$0xff] %v775
          %v777 = vld [vmem:[%s615 + $0x280] sm:$0xff]
          %778 = vst [vmem:[%s616 + $0x280] sm:$0xff] %v777
          %v779 = vld [vmem:[%s615 + $0x288] sm:$0xff]
          %780 = vst [vmem:[%s616 + $0x288] sm:$0xff] %v779
          %v781 = vld [vmem:[%s615 + $0x290] sm:$0xff]
          %782 = vst [vmem:[%s616 + $0x290] sm:$0xff] %v781
          %v783 = vld [vmem:[%s615 + $0x298] sm:$0xff]
          %784 = vst [vmem:[%s616 + $0x298] sm:$0xff] %v783
          %v785 = vld [vmem:[%s615 + $0x2a0] sm:$0xff]
          %786 = vst [vmem:[%s616 + $0x2a0] sm:$0xff] %v785
          %v787 = vld [vmem:[%s615 + $0x2a8] sm:$0xff]
          %788 = vst [vmem:[%s616 + $0x2a8] sm:$0xff] %v787
          %v789 = vld [vmem:[%s615 + $0x2b0] sm:$0xff]
          %790 = vst [vmem:[%s616 + $0x2b0] sm:$0xff] %v789
          %v791 = vld [vmem:[%s615 + $0x2b8] sm:$0xff]
          %792 = vst [vmem:[%s616 + $0x2b8] sm:$0xff] %v791
          %v793 = vld [vmem:[%s615 + $0x2c0] sm:$0xff]
          %794 = vst [vmem:[%s616 + $0x2c0] sm:$0xff] %v793
          %v795 = vld [vmem:[%s615 + $0x2c8] sm:$0xff]
          %796 = vst [vmem:[%s616 + $0x2c8] sm:$0xff] %v795
          %v797 = vld [vmem:[%s615 + $0x2d0] sm:$0xff]
          %798 = vst [vmem:[%s616 + $0x2d0] sm:$0xff] %v797
          %v799 = vld [vmem:[%s615 + $0x2d8] sm:$0xff]
          %800 = vst [vmem:[%s616 + $0x2d8] sm:$0xff] %v799
          %v801 = vld [vmem:[%s615 + $0x2e0] sm:$0xff]
          %802 = vst [vmem:[%s616 + $0x2e0] sm:$0xff] %v801
          %v803 = vld [vmem:[%s615 + $0x2e8] sm:$0xff]
          %804 = vst [vmem:[%s616 + $0x2e8] sm:$0xff] %v803
          %v805 = vld [vmem:[%s615 + $0x2f0] sm:$0xff]
          %806 = vst [vmem:[%s616 + $0x2f0] sm:$0xff] %v805
          %v807 = vld [vmem:[%s615 + $0x2f8] sm:$0xff]
          %808 = vst [vmem:[%s616 + $0x2f8] sm:$0xff] %v807
          %v809 = vld [vmem:[%s615 + $0x300] sm:$0xff]
          %810 = vst [vmem:[%s616 + $0x300] sm:$0xff] %v809
          %v811 = vld [vmem:[%s615 + $0x308] sm:$0xff]
          %812 = vst [vmem:[%s616 + $0x308] sm:$0xff] %v811
          %v813 = vld [vmem:[%s615 + $0x310] sm:$0xff]
          %814 = vst [vmem:[%s616 + $0x310] sm:$0xff] %v813
          %v815 = vld [vmem:[%s615 + $0x318] sm:$0xff]
          %816 = vst [vmem:[%s616 + $0x318] sm:$0xff] %v815
          %v817 = vld [vmem:[%s615 + $0x320] sm:$0xff]
          %818 = vst [vmem:[%s616 + $0x320] sm:$0xff] %v817
          %v819 = vld [vmem:[%s615 + $0x328] sm:$0xff]
          %820 = vst [vmem:[%s616 + $0x328] sm:$0xff] %v819
          %v821 = vld [vmem:[%s615 + $0x330] sm:$0xff]
          %822 = vst [vmem:[%s616 + $0x330] sm:$0xff] %v821
          %v823 = vld [vmem:[%s615 + $0x338] sm:$0xff]
          %824 = vst [vmem:[%s616 + $0x338] sm:$0xff] %v823
          %v825 = vld [vmem:[%s615 + $0x340] sm:$0xff]
          %826 = vst [vmem:[%s616 + $0x340] sm:$0xff] %v825
          %v827 = vld [vmem:[%s615 + $0x348] sm:$0xff]
          %828 = vst [vmem:[%s616 + $0x348] sm:$0xff] %v827
          %v829 = vld [vmem:[%s615 + $0x350] sm:$0xff]
          %830 = vst [vmem:[%s616 + $0x350] sm:$0xff] %v829
          %v831 = vld [vmem:[%s615 + $0x358] sm:$0xff]
          %832 = vst [vmem:[%s616 + $0x358] sm:$0xff] %v831
          %v833 = vld [vmem:[%s615 + $0x360] sm:$0xff]
          %834 = vst [vmem:[%s616 + $0x360] sm:$0xff] %v833
          %v835 = vld [vmem:[%s615 + $0x368] sm:$0xff]
          %836 = vst [vmem:[%s616 + $0x368] sm:$0xff] %v835
          %v837 = vld [vmem:[%s615 + $0x370] sm:$0xff]
          %838 = vst [vmem:[%s616 + $0x370] sm:$0xff] %v837
          %v839 = vld [vmem:[%s615 + $0x378] sm:$0xff]
          %840 = vst [vmem:[%s616 + $0x378] sm:$0xff] %v839
          %v841 = vld [vmem:[%s615 + $0x380] sm:$0xff]
          %842 = vst [vmem:[%s616 + $0x380] sm:$0xff] %v841
          %v843 = vld [vmem:[%s615 + $0x388] sm:$0xff]
          %844 = vst [vmem:[%s616 + $0x388] sm:$0xff] %v843
          %v845 = vld [vmem:[%s615 + $0x390] sm:$0xff]
          %846 = vst [vmem:[%s616 + $0x390] sm:$0xff] %v845
          %v847 = vld [vmem:[%s615 + $0x398] sm:$0xff]
          %848 = vst [vmem:[%s616 + $0x398] sm:$0xff] %v847
          %v849 = vld [vmem:[%s615 + $0x3a0] sm:$0xff]
          %850 = vst [vmem:[%s616 + $0x3a0] sm:$0xff] %v849
          %v851 = vld [vmem:[%s615 + $0x3a8] sm:$0xff]
          %852 = vst [vmem:[%s616 + $0x3a8] sm:$0xff] %v851
          %v853 = vld [vmem:[%s615 + $0x3b0] sm:$0xff]
          %854 = vst [vmem:[%s616 + $0x3b0] sm:$0xff] %v853
          %v855 = vld [vmem:[%s615 + $0x3b8] sm:$0xff]
          %856 = vst [vmem:[%s616 + $0x3b8] sm:$0xff] %v855
          %v857 = vld [vmem:[%s615 + $0x3c0] sm:$0xff]
          %858 = vst [vmem:[%s616 + $0x3c0] sm:$0xff] %v857
          %v859 = vld [vmem:[%s615 + $0x3c8] sm:$0xff]
          %860 = vst [vmem:[%s616 + $0x3c8] sm:$0xff] %v859
          %v861 = vld [vmem:[%s615 + $0x3d0] sm:$0xff]
          %862 = vst [vmem:[%s616 + $0x3d0] sm:$0xff] %v861
          %v863 = vld [vmem:[%s615 + $0x3d8] sm:$0xff]
          %864 = vst [vmem:[%s616 + $0x3d8] sm:$0xff] %v863
          %v865 = vld [vmem:[%s615 + $0x3e0] sm:$0xff]
          %866 = vst [vmem:[%s616 + $0x3e0] sm:$0xff] %v865
          %v867 = vld [vmem:[%s615 + $0x3e8] sm:$0xff]
          %868 = vst [vmem:[%s616 + $0x3e8] sm:$0xff] %v867
          %v869 = vld [vmem:[%s615 + $0x3f0] sm:$0xff]
          %870 = vst [vmem:[%s616 + $0x3f0] sm:$0xff] %v869
          %v871 = vld [vmem:[%s615 + $0x3f8] sm:$0xff]
          %872 = vst [vmem:[%s616 + $0x3f8] sm:$0xff] %v871
          %v873 = vld [vmem:[%s615 + $0x400] sm:$0xff]
          %874 = vst [vmem:[%s616 + $0x400] sm:$0xff] %v873
          %v875 = vld [vmem:[%s615 + $0x408] sm:$0xff]
          %876 = vst [vmem:[%s616 + $0x408] sm:$0xff] %v875
          %v877 = vld [vmem:[%s615 + $0x410] sm:$0xff]
          %878 = vst [vmem:[%s616 + $0x410] sm:$0xff] %v877
          %v879 = vld [vmem:[%s615 + $0x418] sm:$0xff]
          %880 = vst [vmem:[%s616 + $0x418] sm:$0xff] %v879
          %v881 = vld [vmem:[%s615 + $0x420] sm:$0xff]
          %882 = vst [vmem:[%s616 + $0x420] sm:$0xff] %v881
          %v883 = vld [vmem:[%s615 + $0x428] sm:$0xff]
          %884 = vst [vmem:[%s616 + $0x428] sm:$0xff] %v883
          %v885 = vld [vmem:[%s615 + $0x430] sm:$0xff]
          %886 = vst [vmem:[%s616 + $0x430] sm:$0xff] %v885
          %v887 = vld [vmem:[%s615 + $0x438] sm:$0xff]
          %888 = vst [vmem:[%s616 + $0x438] sm:$0xff] %v887
          %v889 = vld [vmem:[%s615 + $0x440] sm:$0xff]
          %890 = vst [vmem:[%s616 + $0x440] sm:$0xff] %v889
          %v891 = vld [vmem:[%s615 + $0x448] sm:$0xff]
          %892 = vst [vmem:[%s616 + $0x448] sm:$0xff] %v891
          %v893 = vld [vmem:[%s615 + $0x450] sm:$0xff]
          %894 = vst [vmem:[%s616 + $0x450] sm:$0xff] %v893
          %v895 = vld [vmem:[%s615 + $0x458] sm:$0xff]
          %896 = vst [vmem:[%s616 + $0x458] sm:$0xff] %v895
          %v897 = vld [vmem:[%s615 + $0x460] sm:$0xff]
          %898 = vst [vmem:[%s616 + $0x460] sm:$0xff] %v897
          %v899 = vld [vmem:[%s615 + $0x468] sm:$0xff]
          %900 = vst [vmem:[%s616 + $0x468] sm:$0xff] %v899
          %v901 = vld [vmem:[%s615 + $0x470] sm:$0xff]
          %902 = vst [vmem:[%s616 + $0x470] sm:$0xff] %v901
          %v903 = vld [vmem:[%s615 + $0x478] sm:$0xff]
          %904 = vst [vmem:[%s616 + $0x478] sm:$0xff] %v903
          %v905 = vld [vmem:[%s615 + $0x480] sm:$0xff]
          %906 = vst [vmem:[%s616 + $0x480] sm:$0xff] %v905
          %v907 = vld [vmem:[%s615 + $0x488] sm:$0xff]
          %908 = vst [vmem:[%s616 + $0x488] sm:$0xff] %v907
          %v909 = vld [vmem:[%s615 + $0x490] sm:$0xff]
          %910 = vst [vmem:[%s616 + $0x490] sm:$0xff] %v909
          %v911 = vld [vmem:[%s615 + $0x498] sm:$0xff]
          %912 = vst [vmem:[%s616 + $0x498] sm:$0xff] %v911
          %v913 = vld [vmem:[%s615 + $0x4a0] sm:$0xff]
          %914 = vst [vmem:[%s616 + $0x4a0] sm:$0xff] %v913
          %v915 = vld [vmem:[%s615 + $0x4a8] sm:$0xff]
          %916 = vst [vmem:[%s616 + $0x4a8] sm:$0xff] %v915
          %v917 = vld [vmem:[%s615 + $0x4b0] sm:$0xff]
          %918 = vst [vmem:[%s616 + $0x4b0] sm:$0xff] %v917
          %v919 = vld [vmem:[%s615 + $0x4b8] sm:$0xff]
          %920 = vst [vmem:[%s616 + $0x4b8] sm:$0xff] %v919
          %v921 = vld [vmem:[%s615 + $0x4c0] sm:$0xff]
          %922 = vst [vmem:[%s616 + $0x4c0] sm:$0xff] %v921
          %v923 = vld [vmem:[%s615 + $0x4c8] sm:$0xff]
          %924 = vst [vmem:[%s616 + $0x4c8] sm:$0xff] %v923
          %v925 = vld [vmem:[%s615 + $0x4d0] sm:$0xff]
          %926 = vst [vmem:[%s616 + $0x4d0] sm:$0xff] %v925
          %v927 = vld [vmem:[%s615 + $0x4d8] sm:$0xff]
          %928 = vst [vmem:[%s616 + $0x4d8] sm:$0xff] %v927
          %v929 = vld [vmem:[%s615 + $0x4e0] sm:$0xff]
          %930 = vst [vmem:[%s616 + $0x4e0] sm:$0xff] %v929
          %v931 = vld [vmem:[%s615 + $0x4e8] sm:$0xff]
          %932 = vst [vmem:[%s616 + $0x4e8] sm:$0xff] %v931
          %v933 = vld [vmem:[%s615 + $0x4f0] sm:$0xff]
          %934 = vst [vmem:[%s616 + $0x4f0] sm:$0xff] %v933
          %v935 = vld [vmem:[%s615 + $0x4f8] sm:$0xff]
          %936 = vst [vmem:[%s616 + $0x4f8] sm:$0xff] %v935
          %v937 = vld [vmem:[%s615 + $0x500] sm:$0xff]
          %938 = vst [vmem:[%s616 + $0x500] sm:$0xff] %v937
          %v939 = vld [vmem:[%s615 + $0x508] sm:$0xff]
          %940 = vst [vmem:[%s616 + $0x508] sm:$0xff] %v939
          %v941 = vld [vmem:[%s615 + $0x510] sm:$0xff]
          %942 = vst [vmem:[%s616 + $0x510] sm:$0xff] %v941
          %v943 = vld [vmem:[%s615 + $0x518] sm:$0xff]
          %944 = vst [vmem:[%s616 + $0x518] sm:$0xff] %v943
          %v945 = vld [vmem:[%s615 + $0x520] sm:$0xff]
          %946 = vst [vmem:[%s616 + $0x520] sm:$0xff] %v945
          %v947 = vld [vmem:[%s615 + $0x528] sm:$0xff]
          %948 = vst [vmem:[%s616 + $0x528] sm:$0xff] %v947
          %v949 = vld [vmem:[%s615 + $0x530] sm:$0xff]
          %950 = vst [vmem:[%s616 + $0x530] sm:$0xff] %v949
          %v951 = vld [vmem:[%s615 + $0x538] sm:$0xff]
          %952 = vst [vmem:[%s616 + $0x538] sm:$0xff] %v951
          %v953 = vld [vmem:[%s615 + $0x540] sm:$0xff]
          %954 = vst [vmem:[%s616 + $0x540] sm:$0xff] %v953
          %v955 = vld [vmem:[%s615 + $0x548] sm:$0xff]
          %956 = vst [vmem:[%s616 + $0x548] sm:$0xff] %v955
          %v957 = vld [vmem:[%s615 + $0x550] sm:$0xff]
          %958 = vst [vmem:[%s616 + $0x550] sm:$0xff] %v957
          %v959 = vld [vmem:[%s615 + $0x558] sm:$0xff]
          %960 = vst [vmem:[%s616 + $0x558] sm:$0xff] %v959
          %v961 = vld [vmem:[%s615 + $0x560] sm:$0xff]
          %962 = vst [vmem:[%s616 + $0x560] sm:$0xff] %v961
          %v963 = vld [vmem:[%s615 + $0x568] sm:$0xff]
          %964 = vst [vmem:[%s616 + $0x568] sm:$0xff] %v963
          %v965 = vld [vmem:[%s615 + $0x570] sm:$0xff]
          %966 = vst [vmem:[%s616 + $0x570] sm:$0xff] %v965
          %v967 = vld [vmem:[%s615 + $0x578] sm:$0xff]
          %968 = vst [vmem:[%s616 + $0x578] sm:$0xff] %v967
          %v969 = vld [vmem:[%s615 + $0x580] sm:$0xff]
          %970 = vst [vmem:[%s616 + $0x580] sm:$0xff] %v969
          %v971 = vld [vmem:[%s615 + $0x588] sm:$0xff]
          %972 = vst [vmem:[%s616 + $0x588] sm:$0xff] %v971
          %v973 = vld [vmem:[%s615 + $0x590] sm:$0xff]
          %974 = vst [vmem:[%s616 + $0x590] sm:$0xff] %v973
          %v975 = vld [vmem:[%s615 + $0x598] sm:$0xff]
          %976 = vst [vmem:[%s616 + $0x598] sm:$0xff] %v975
          %v977 = vld [vmem:[%s615 + $0x5a0] sm:$0xff]
          %978 = vst [vmem:[%s616 + $0x5a0] sm:$0xff] %v977
          %v979 = vld [vmem:[%s615 + $0x5a8] sm:$0xff]
          %980 = vst [vmem:[%s616 + $0x5a8] sm:$0xff] %v979
          %v981 = vld [vmem:[%s615 + $0x5b0] sm:$0xff]
          %982 = vst [vmem:[%s616 + $0x5b0] sm:$0xff] %v981
          %v983 = vld [vmem:[%s615 + $0x5b8] sm:$0xff]
          %984 = vst [vmem:[%s616 + $0x5b8] sm:$0xff] %v983
          %v985 = vld [vmem:[%s615 + $0x5c0] sm:$0xff]
          %986 = vst [vmem:[%s616 + $0x5c0] sm:$0xff] %v985
          %v987 = vld [vmem:[%s615 + $0x5c8] sm:$0xff]
          %988 = vst [vmem:[%s616 + $0x5c8] sm:$0xff] %v987
          %v989 = vld [vmem:[%s615 + $0x5d0] sm:$0xff]
          %990 = vst [vmem:[%s616 + $0x5d0] sm:$0xff] %v989
          %v991 = vld [vmem:[%s615 + $0x5d8] sm:$0xff]
          %992 = vst [vmem:[%s616 + $0x5d8] sm:$0xff] %v991
          %v993 = vld [vmem:[%s615 + $0x5e0] sm:$0xff]
          %994 = vst [vmem:[%s616 + $0x5e0] sm:$0xff] %v993
          %v995 = vld [vmem:[%s615 + $0x5e8] sm:$0xff]
          %996 = vst [vmem:[%s616 + $0x5e8] sm:$0xff] %v995
          %v997 = vld [vmem:[%s615 + $0x5f0] sm:$0xff]
          %998 = vst [vmem:[%s616 + $0x5f0] sm:$0xff] %v997
          %v999 = vld [vmem:[%s615 + $0x5f8] sm:$0xff]
          %1000 = vst [vmem:[%s616 + $0x5f8] sm:$0xff] %v999
          %v1001 = vld [vmem:[%s615 + $0x600] sm:$0xff]
          %1002 = vst [vmem:[%s616 + $0x600] sm:$0xff] %v1001
          %v1003 = vld [vmem:[%s615 + $0x608] sm:$0xff]
          %1004 = vst [vmem:[%s616 + $0x608] sm:$0xff] %v1003
          %v1005 = vld [vmem:[%s615 + $0x610] sm:$0xff]
          %1006 = vst [vmem:[%s616 + $0x610] sm:$0xff] %v1005
          %v1007 = vld [vmem:[%s615 + $0x618] sm:$0xff]
          %1008 = vst [vmem:[%s616 + $0x618] sm:$0xff] %v1007
          %v1009 = vld [vmem:[%s615 + $0x620] sm:$0xff]
          %1010 = vst [vmem:[%s616 + $0x620] sm:$0xff] %v1009
          %v1011 = vld [vmem:[%s615 + $0x628] sm:$0xff]
          %1012 = vst [vmem:[%s616 + $0x628] sm:$0xff] %v1011
          %v1013 = vld [vmem:[%s615 + $0x630] sm:$0xff]
          %1014 = vst [vmem:[%s616 + $0x630] sm:$0xff] %v1013
          %v1015 = vld [vmem:[%s615 + $0x638] sm:$0xff]
          %1016 = vst [vmem:[%s616 + $0x638] sm:$0xff] %v1015
          %v1017 = vld [vmem:[%s615 + $0x640] sm:$0xff]
          %1018 = vst [vmem:[%s616 + $0x640] sm:$0xff] %v1017
          %v1019 = vld [vmem:[%s615 + $0x648] sm:$0xff]
          %1020 = vst [vmem:[%s616 + $0x648] sm:$0xff] %v1019
          %v1021 = vld [vmem:[%s615 + $0x650] sm:$0xff]
          %1022 = vst [vmem:[%s616 + $0x650] sm:$0xff] %v1021
          %v1023 = vld [vmem:[%s615 + $0x658] sm:$0xff]
          %1024 = vst [vmem:[%s616 + $0x658] sm:$0xff] %v1023
          %v1025 = vld [vmem:[%s615 + $0x660] sm:$0xff]
          %1026 = vst [vmem:[%s616 + $0x660] sm:$0xff] %v1025
          %v1027 = vld [vmem:[%s615 + $0x668] sm:$0xff]
          %1028 = vst [vmem:[%s616 + $0x668] sm:$0xff] %v1027
          %v1029 = vld [vmem:[%s615 + $0x670] sm:$0xff]
          %1030 = vst [vmem:[%s616 + $0x670] sm:$0xff] %v1029
          %v1031 = vld [vmem:[%s615 + $0x678] sm:$0xff]
          %1032 = vst [vmem:[%s616 + $0x678] sm:$0xff] %v1031
          %v1033 = vld [vmem:[%s615 + $0x680] sm:$0xff]
          %1034 = vst [vmem:[%s616 + $0x680] sm:$0xff] %v1033
          %v1035 = vld [vmem:[%s615 + $0x688] sm:$0xff]
          %1036 = vst [vmem:[%s616 + $0x688] sm:$0xff] %v1035
          %v1037 = vld [vmem:[%s615 + $0x690] sm:$0xff]
          %1038 = vst [vmem:[%s616 + $0x690] sm:$0xff] %v1037
          %v1039 = vld [vmem:[%s615 + $0x698] sm:$0xff]
          %1040 = vst [vmem:[%s616 + $0x698] sm:$0xff] %v1039
          %v1041 = vld [vmem:[%s615 + $0x6a0] sm:$0xff]
          %1042 = vst [vmem:[%s616 + $0x6a0] sm:$0xff] %v1041
          %v1043 = vld [vmem:[%s615 + $0x6a8] sm:$0xff]
          %1044 = vst [vmem:[%s616 + $0x6a8] sm:$0xff] %v1043
          %v1045 = vld [vmem:[%s615 + $0x6b0] sm:$0xff]
          %1046 = vst [vmem:[%s616 + $0x6b0] sm:$0xff] %v1045
          %v1047 = vld [vmem:[%s615 + $0x6b8] sm:$0xff]
          %1048 = vst [vmem:[%s616 + $0x6b8] sm:$0xff] %v1047
          %v1049 = vld [vmem:[%s615 + $0x6c0] sm:$0xff]
          %1050 = vst [vmem:[%s616 + $0x6c0] sm:$0xff] %v1049
          %v1051 = vld [vmem:[%s615 + $0x6c8] sm:$0xff]
          %1052 = vst [vmem:[%s616 + $0x6c8] sm:$0xff] %v1051
          %v1053 = vld [vmem:[%s615 + $0x6d0] sm:$0xff]
          %1054 = vst [vmem:[%s616 + $0x6d0] sm:$0xff] %v1053
          %v1055 = vld [vmem:[%s615 + $0x6d8] sm:$0xff]
          %1056 = vst [vmem:[%s616 + $0x6d8] sm:$0xff] %v1055
          %v1057 = vld [vmem:[%s615 + $0x6e0] sm:$0xff]
          %1058 = vst [vmem:[%s616 + $0x6e0] sm:$0xff] %v1057
          %v1059 = vld [vmem:[%s615 + $0x6e8] sm:$0xff]
          %1060 = vst [vmem:[%s616 + $0x6e8] sm:$0xff] %v1059
          %v1061 = vld [vmem:[%s615 + $0x6f0] sm:$0xff]
          %1062 = vst [vmem:[%s616 + $0x6f0] sm:$0xff] %v1061
          %v1063 = vld [vmem:[%s615 + $0x6f8] sm:$0xff]
          %1064 = vst [vmem:[%s616 + $0x6f8] sm:$0xff] %v1063
          %v1065 = vld [vmem:[%s615 + $0x700] sm:$0xff]
          %1066 = vst [vmem:[%s616 + $0x700] sm:$0xff] %v1065
          %v1067 = vld [vmem:[%s615 + $0x708] sm:$0xff]
          %1068 = vst [vmem:[%s616 + $0x708] sm:$0xff] %v1067
          %v1069 = vld [vmem:[%s615 + $0x710] sm:$0xff]
          %1070 = vst [vmem:[%s616 + $0x710] sm:$0xff] %v1069
          %v1071 = vld [vmem:[%s615 + $0x718] sm:$0xff]
          %1072 = vst [vmem:[%s616 + $0x718] sm:$0xff] %v1071
          %v1073 = vld [vmem:[%s615 + $0x720] sm:$0xff]
          %1074 = vst [vmem:[%s616 + $0x720] sm:$0xff] %v1073
          %v1075 = vld [vmem:[%s615 + $0x728] sm:$0xff]
          %1076 = vst [vmem:[%s616 + $0x728] sm:$0xff] %v1075
          %v1077 = vld [vmem:[%s615 + $0x730] sm:$0xff]
          %1078 = vst [vmem:[%s616 + $0x730] sm:$0xff] %v1077
          %v1079 = vld [vmem:[%s615 + $0x738] sm:$0xff]
          %1080 = vst [vmem:[%s616 + $0x738] sm:$0xff] %v1079
          %v1081 = vld [vmem:[%s615 + $0x740] sm:$0xff]
          %1082 = vst [vmem:[%s616 + $0x740] sm:$0xff] %v1081
          %v1083 = vld [vmem:[%s615 + $0x748] sm:$0xff]
          %1084 = vst [vmem:[%s616 + $0x748] sm:$0xff] %v1083
          %v1085 = vld [vmem:[%s615 + $0x750] sm:$0xff]
          %1086 = vst [vmem:[%s616 + $0x750] sm:$0xff] %v1085
          %v1087 = vld [vmem:[%s615 + $0x758] sm:$0xff]
          %1088 = vst [vmem:[%s616 + $0x758] sm:$0xff] %v1087
          %v1089 = vld [vmem:[%s615 + $0x760] sm:$0xff]
          %1090 = vst [vmem:[%s616 + $0x760] sm:$0xff] %v1089
          %v1091 = vld [vmem:[%s615 + $0x768] sm:$0xff]
          %1092 = vst [vmem:[%s616 + $0x768] sm:$0xff] %v1091
          %v1093 = vld [vmem:[%s615 + $0x770] sm:$0xff]
          %1094 = vst [vmem:[%s616 + $0x770] sm:$0xff] %v1093
          %v1095 = vld [vmem:[%s615 + $0x778] sm:$0xff]
          %1096 = vst [vmem:[%s616 + $0x778] sm:$0xff] %v1095
          %v1097 = vld [vmem:[%s615 + $0x780] sm:$0xff]
          %1098 = vst [vmem:[%s616 + $0x780] sm:$0xff] %v1097
          %v1099 = vld [vmem:[%s615 + $0x788] sm:$0xff]
          %1100 = vst [vmem:[%s616 + $0x788] sm:$0xff] %v1099
          %v1101 = vld [vmem:[%s615 + $0x790] sm:$0xff]
          %1102 = vst [vmem:[%s616 + $0x790] sm:$0xff] %v1101
          %v1103 = vld [vmem:[%s615 + $0x798] sm:$0xff]
          %1104 = vst [vmem:[%s616 + $0x798] sm:$0xff] %v1103
          %v1105 = vld [vmem:[%s615 + $0x7a0] sm:$0xff]
          %1106 = vst [vmem:[%s616 + $0x7a0] sm:$0xff] %v1105
          %v1107 = vld [vmem:[%s615 + $0x7a8] sm:$0xff]
          %1108 = vst [vmem:[%s616 + $0x7a8] sm:$0xff] %v1107
          %v1109 = vld [vmem:[%s615 + $0x7b0] sm:$0xff]
          %1110 = vst [vmem:[%s616 + $0x7b0] sm:$0xff] %v1109
          %v1111 = vld [vmem:[%s615 + $0x7b8] sm:$0xff]
          %1112 = vst [vmem:[%s616 + $0x7b8] sm:$0xff] %v1111
          %v1113 = vld [vmem:[%s615 + $0x7c0] sm:$0xff]
          %1114 = vst [vmem:[%s616 + $0x7c0] sm:$0xff] %v1113
          %v1115 = vld [vmem:[%s615 + $0x7c8] sm:$0xff]
          %1116 = vst [vmem:[%s616 + $0x7c8] sm:$0xff] %v1115
          %v1117 = vld [vmem:[%s615 + $0x7d0] sm:$0xff]
          %1118 = vst [vmem:[%s616 + $0x7d0] sm:$0xff] %v1117
          %v1119 = vld [vmem:[%s615 + $0x7d8] sm:$0xff]
          %1120 = vst [vmem:[%s616 + $0x7d8] sm:$0xff] %v1119
          %v1121 = vld [vmem:[%s615 + $0x7e0] sm:$0xff]
          %1122 = vst [vmem:[%s616 + $0x7e0] sm:$0xff] %v1121
          %v1123 = vld [vmem:[%s615 + $0x7e8] sm:$0xff]
          %1124 = vst [vmem:[%s616 + $0x7e8] sm:$0xff] %v1123
          %v1125 = vld [vmem:[%s615 + $0x7f0] sm:$0xff]
          %1126 = vst [vmem:[%s616 + $0x7f0] sm:$0xff] %v1125
          %v1127 = vld [vmem:[%s615 + $0x7f8] sm:$0xff]
          %1128 = vst [vmem:[%s616 + $0x7f8] sm:$0xff] %v1127
          %v1129 = vld [vmem:[%s615 + $0x800] sm:$0xff]
          %1130 = vst [vmem:[%s616 + $0x800] sm:$0xff] %v1129
          %v1131 = vld [vmem:[%s615 + $0x808] sm:$0xff]
          %1132 = vst [vmem:[%s616 + $0x808] sm:$0xff] %v1131
          %v1133 = vld [vmem:[%s615 + $0x810] sm:$0xff]
          %1134 = vst [vmem:[%s616 + $0x810] sm:$0xff] %v1133
          %v1135 = vld [vmem:[%s615 + $0x818] sm:$0xff]
          %1136 = vst [vmem:[%s616 + $0x818] sm:$0xff] %v1135
          %v1137 = vld [vmem:[%s615 + $0x820] sm:$0xff]
          %1138 = vst [vmem:[%s616 + $0x820] sm:$0xff] %v1137
          %v1139 = vld [vmem:[%s615 + $0x828] sm:$0xff]
          %1140 = vst [vmem:[%s616 + $0x828] sm:$0xff] %v1139
          %v1141 = vld [vmem:[%s615 + $0x830] sm:$0xff]
          %1142 = vst [vmem:[%s616 + $0x830] sm:$0xff] %v1141
          %v1143 = vld [vmem:[%s615 + $0x838] sm:$0xff]
          %1144 = vst [vmem:[%s616 + $0x838] sm:$0xff] %v1143
          %v1145 = vld [vmem:[%s615 + $0x840] sm:$0xff]
          %1146 = vst [vmem:[%s616 + $0x840] sm:$0xff] %v1145
          %v1147 = vld [vmem:[%s615 + $0x848] sm:$0xff]
          %1148 = vst [vmem:[%s616 + $0x848] sm:$0xff] %v1147
          %v1149 = vld [vmem:[%s615 + $0x850] sm:$0xff]
          %1150 = vst [vmem:[%s616 + $0x850] sm:$0xff] %v1149
          %v1151 = vld [vmem:[%s615 + $0x858] sm:$0xff]
          %1152 = vst [vmem:[%s616 + $0x858] sm:$0xff] %v1151
          %v1153 = vld [vmem:[%s615 + $0x860] sm:$0xff]
          %1154 = vst [vmem:[%s616 + $0x860] sm:$0xff] %v1153
          %v1155 = vld [vmem:[%s615 + $0x868] sm:$0xff]
          %1156 = vst [vmem:[%s616 + $0x868] sm:$0xff] %v1155
          %v1157 = vld [vmem:[%s615 + $0x870] sm:$0xff]
          %1158 = vst [vmem:[%s616 + $0x870] sm:$0xff] %v1157
          %v1159 = vld [vmem:[%s615 + $0x878] sm:$0xff]
          %1160 = vst [vmem:[%s616 + $0x878] sm:$0xff] %v1159
          %v1161 = vld [vmem:[%s615 + $0x880] sm:$0xff]
          %1162 = vst [vmem:[%s616 + $0x880] sm:$0xff] %v1161
          %v1163 = vld [vmem:[%s615 + $0x888] sm:$0xff]
          %1164 = vst [vmem:[%s616 + $0x888] sm:$0xff] %v1163
          %v1165 = vld [vmem:[%s615 + $0x890] sm:$0xff]
          %1166 = vst [vmem:[%s616 + $0x890] sm:$0xff] %v1165
          %v1167 = vld [vmem:[%s615 + $0x898] sm:$0xff]
          %1168 = vst [vmem:[%s616 + $0x898] sm:$0xff] %v1167
          %v1169 = vld [vmem:[%s615 + $0x8a0] sm:$0xff]
          %1170 = vst [vmem:[%s616 + $0x8a0] sm:$0xff] %v1169
          %v1171 = vld [vmem:[%s615 + $0x8a8] sm:$0xff]
          %1172 = vst [vmem:[%s616 + $0x8a8] sm:$0xff] %v1171
          %v1173 = vld [vmem:[%s615 + $0x8b0] sm:$0xff]
          %1174 = vst [vmem:[%s616 + $0x8b0] sm:$0xff] %v1173
          %v1175 = vld [vmem:[%s615 + $0x8b8] sm:$0xff]
          %1176 = vst [vmem:[%s616 + $0x8b8] sm:$0xff] %v1175
          %v1177 = vld [vmem:[%s615 + $0x8c0] sm:$0xff]
          %1178 = vst [vmem:[%s616 + $0x8c0] sm:$0xff] %v1177
          %v1179 = vld [vmem:[%s615 + $0x8c8] sm:$0xff]
          %1180 = vst [vmem:[%s616 + $0x8c8] sm:$0xff] %v1179
          %v1181 = vld [vmem:[%s615 + $0x8d0] sm:$0xff]
          %1182 = vst [vmem:[%s616 + $0x8d0] sm:$0xff] %v1181
          %v1183 = vld [vmem:[%s615 + $0x8d8] sm:$0xff]
          %1184 = vst [vmem:[%s616 + $0x8d8] sm:$0xff] %v1183
          %v1185 = vld [vmem:[%s615 + $0x8e0] sm:$0xff]
          %1186 = vst [vmem:[%s616 + $0x8e0] sm:$0xff] %v1185
          %v1187 = vld [vmem:[%s615 + $0x8e8] sm:$0xff]
          %1188 = vst [vmem:[%s616 + $0x8e8] sm:$0xff] %v1187
          %v1189 = vld [vmem:[%s615 + $0x8f0] sm:$0xff]
          %1190 = vst [vmem:[%s616 + $0x8f0] sm:$0xff] %v1189
          %v1191 = vld [vmem:[%s615 + $0x8f8] sm:$0xff]
          %1192 = vst [vmem:[%s616 + $0x8f8] sm:$0xff] %v1191
          %v1193 = vld [vmem:[%s615 + $0x900] sm:$0xff]
          %1194 = vst [vmem:[%s616 + $0x900] sm:$0xff] %v1193
          %v1195 = vld [vmem:[%s615 + $0x908] sm:$0xff]
          %1196 = vst [vmem:[%s616 + $0x908] sm:$0xff] %v1195
          %v1197 = vld [vmem:[%s615 + $0x910] sm:$0xff]
          %1198 = vst [vmem:[%s616 + $0x910] sm:$0xff] %v1197
          %v1199 = vld [vmem:[%s615 + $0x918] sm:$0xff]
          %1200 = vst [vmem:[%s616 + $0x918] sm:$0xff] %v1199
          %v1201 = vld [vmem:[%s615 + $0x920] sm:$0xff]
          %1202 = vst [vmem:[%s616 + $0x920] sm:$0xff] %v1201
          %v1203 = vld [vmem:[%s615 + $0x928] sm:$0xff]
          %1204 = vst [vmem:[%s616 + $0x928] sm:$0xff] %v1203
          %v1205 = vld [vmem:[%s615 + $0x930] sm:$0xff]
          %1206 = vst [vmem:[%s616 + $0x930] sm:$0xff] %v1205
          %v1207 = vld [vmem:[%s615 + $0x938] sm:$0xff]
          %1208 = vst [vmem:[%s616 + $0x938] sm:$0xff] %v1207
          %v1209 = vld [vmem:[%s615 + $0x940] sm:$0xff]
          %1210 = vst [vmem:[%s616 + $0x940] sm:$0xff] %v1209
          %v1211 = vld [vmem:[%s615 + $0x948] sm:$0xff]
          %1212 = vst [vmem:[%s616 + $0x948] sm:$0xff] %v1211
          %v1213 = vld [vmem:[%s615 + $0x950] sm:$0xff]
          %1214 = vst [vmem:[%s616 + $0x950] sm:$0xff] %v1213
          %v1215 = vld [vmem:[%s615 + $0x958] sm:$0xff]
          %1216 = vst [vmem:[%s616 + $0x958] sm:$0xff] %v1215
          %v1217 = vld [vmem:[%s615 + $0x960] sm:$0xff]
          %1218 = vst [vmem:[%s616 + $0x960] sm:$0xff] %v1217
          %v1219 = vld [vmem:[%s615 + $0x968] sm:$0xff]
          %1220 = vst [vmem:[%s616 + $0x968] sm:$0xff] %v1219
          %v1221 = vld [vmem:[%s615 + $0x970] sm:$0xff]
          %1222 = vst [vmem:[%s616 + $0x970] sm:$0xff] %v1221
          %v1223 = vld [vmem:[%s615 + $0x978] sm:$0xff]
          %1224 = vst [vmem:[%s616 + $0x978] sm:$0xff] %v1223
          %v1225 = vld [vmem:[%s615 + $0x980] sm:$0xff]
          %1226 = vst [vmem:[%s616 + $0x980] sm:$0xff] %v1225
          %v1227 = vld [vmem:[%s615 + $0x988] sm:$0xff]
          %1228 = vst [vmem:[%s616 + $0x988] sm:$0xff] %v1227
          %v1229 = vld [vmem:[%s615 + $0x990] sm:$0xff]
          %1230 = vst [vmem:[%s616 + $0x990] sm:$0xff] %v1229
          %v1231 = vld [vmem:[%s615 + $0x998] sm:$0xff]
          %1232 = vst [vmem:[%s616 + $0x998] sm:$0xff] %v1231
          %v1233 = vld [vmem:[%s615 + $0x9a0] sm:$0xff]
          %1234 = vst [vmem:[%s616 + $0x9a0] sm:$0xff] %v1233
          %v1235 = vld [vmem:[%s615 + $0x9a8] sm:$0xff]
          %1236 = vst [vmem:[%s616 + $0x9a8] sm:$0xff] %v1235
          %v1237 = vld [vmem:[%s615 + $0x9b0] sm:$0xff]
          %1238 = vst [vmem:[%s616 + $0x9b0] sm:$0xff] %v1237
          %v1239 = vld [vmem:[%s615 + $0x9b8] sm:$0xff]
          %1240 = vst [vmem:[%s616 + $0x9b8] sm:$0xff] %v1239
          %v1241 = vld [vmem:[%s615 + $0x9c0] sm:$0xff]
          %1242 = vst [vmem:[%s616 + $0x9c0] sm:$0xff] %v1241
          %v1243 = vld [vmem:[%s615 + $0x9c8] sm:$0xff]
          %1244 = vst [vmem:[%s616 + $0x9c8] sm:$0xff] %v1243
          %v1245 = vld [vmem:[%s615 + $0x9d0] sm:$0xff]
          %1246 = vst [vmem:[%s616 + $0x9d0] sm:$0xff] %v1245
          %v1247 = vld [vmem:[%s615 + $0x9d8] sm:$0xff]
          %1248 = vst [vmem:[%s616 + $0x9d8] sm:$0xff] %v1247
          %v1249 = vld [vmem:[%s615 + $0x9e0] sm:$0xff]
          %1250 = vst [vmem:[%s616 + $0x9e0] sm:$0xff] %v1249
          %v1251 = vld [vmem:[%s615 + $0x9e8] sm:$0xff]
          %1252 = vst [vmem:[%s616 + $0x9e8] sm:$0xff] %v1251
          %v1253 = vld [vmem:[%s615 + $0x9f0] sm:$0xff]
          %1254 = vst [vmem:[%s616 + $0x9f0] sm:$0xff] %v1253
          %v1255 = vld [vmem:[%s615 + $0x9f8] sm:$0xff]
          %1256 = vst [vmem:[%s616 + $0x9f8] sm:$0xff] %v1255
          %v1257 = vld [vmem:[%s615 + $0xa00] sm:$0xff]
          %1258 = vst [vmem:[%s616 + $0xa00] sm:$0xff] %v1257
          %v1259 = vld [vmem:[%s615 + $0xa08] sm:$0xff]
          %1260 = vst [vmem:[%s616 + $0xa08] sm:$0xff] %v1259
          %v1261 = vld [vmem:[%s615 + $0xa10] sm:$0xff]
          %1262 = vst [vmem:[%s616 + $0xa10] sm:$0xff] %v1261
          %v1263 = vld [vmem:[%s615 + $0xa18] sm:$0xff]
          %1264 = vst [vmem:[%s616 + $0xa18] sm:$0xff] %v1263
          %v1265 = vld [vmem:[%s615 + $0xa20] sm:$0xff]
          %1266 = vst [vmem:[%s616 + $0xa20] sm:$0xff] %v1265
          %v1267 = vld [vmem:[%s615 + $0xa28] sm:$0xff]
          %1268 = vst [vmem:[%s616 + $0xa28] sm:$0xff] %v1267
          %v1269 = vld [vmem:[%s615 + $0xa30] sm:$0xff]
          %1270 = vst [vmem:[%s616 + $0xa30] sm:$0xff] %v1269
          %v1271 = vld [vmem:[%s615 + $0xa38] sm:$0xff]
          %1272 = vst [vmem:[%s616 + $0xa38] sm:$0xff] %v1271
          %v1273 = vld [vmem:[%s615 + $0xa40] sm:$0xff]
          %1274 = vst [vmem:[%s616 + $0xa40] sm:$0xff] %v1273
          %v1275 = vld [vmem:[%s615 + $0xa48] sm:$0xff]
          %1276 = vst [vmem:[%s616 + $0xa48] sm:$0xff] %v1275
          %v1277 = vld [vmem:[%s615 + $0xa50] sm:$0xff]
          %1278 = vst [vmem:[%s616 + $0xa50] sm:$0xff] %v1277
          %v1279 = vld [vmem:[%s615 + $0xa58] sm:$0xff]
          %1280 = vst [vmem:[%s616 + $0xa58] sm:$0xff] %v1279
          %v1281 = vld [vmem:[%s615 + $0xa60] sm:$0xff]
          %1282 = vst [vmem:[%s616 + $0xa60] sm:$0xff] %v1281
          %v1283 = vld [vmem:[%s615 + $0xa68] sm:$0xff]
          %1284 = vst [vmem:[%s616 + $0xa68] sm:$0xff] %v1283
          %v1285 = vld [vmem:[%s615 + $0xa70] sm:$0xff]
          %1286 = vst [vmem:[%s616 + $0xa70] sm:$0xff] %v1285
          %v1287 = vld [vmem:[%s615 + $0xa78] sm:$0xff]
          %1288 = vst [vmem:[%s616 + $0xa78] sm:$0xff] %v1287
          %v1289 = vld [vmem:[%s615 + $0xa80] sm:$0xff]
          %1290 = vst [vmem:[%s616 + $0xa80] sm:$0xff] %v1289
          %v1291 = vld [vmem:[%s615 + $0xa88] sm:$0xff]
          %1292 = vst [vmem:[%s616 + $0xa88] sm:$0xff] %v1291
          %v1293 = vld [vmem:[%s615 + $0xa90] sm:$0xff]
          %1294 = vst [vmem:[%s616 + $0xa90] sm:$0xff] %v1293
          %v1295 = vld [vmem:[%s615 + $0xa98] sm:$0xff]
          %1296 = vst [vmem:[%s616 + $0xa98] sm:$0xff] %v1295
          %v1297 = vld [vmem:[%s615 + $0xaa0] sm:$0xff]
          %1298 = vst [vmem:[%s616 + $0xaa0] sm:$0xff] %v1297
          %v1299 = vld [vmem:[%s615 + $0xaa8] sm:$0xff]
          %1300 = vst [vmem:[%s616 + $0xaa8] sm:$0xff] %v1299
          %v1301 = vld [vmem:[%s615 + $0xab0] sm:$0xff]
          %1302 = vst [vmem:[%s616 + $0xab0] sm:$0xff] %v1301
          %v1303 = vld [vmem:[%s615 + $0xab8] sm:$0xff]
          %1304 = vst [vmem:[%s616 + $0xab8] sm:$0xff] %v1303
          %v1305 = vld [vmem:[%s615 + $0xac0] sm:$0xff]
          %1306 = vst [vmem:[%s616 + $0xac0] sm:$0xff] %v1305
          %v1307 = vld [vmem:[%s615 + $0xac8] sm:$0xff]
          %1308 = vst [vmem:[%s616 + $0xac8] sm:$0xff] %v1307
          %v1309 = vld [vmem:[%s615 + $0xad0] sm:$0xff]
          %1310 = vst [vmem:[%s616 + $0xad0] sm:$0xff] %v1309
          %v1311 = vld [vmem:[%s615 + $0xad8] sm:$0xff]
          %1312 = vst [vmem:[%s616 + $0xad8] sm:$0xff] %v1311
          %v1313 = vld [vmem:[%s615 + $0xae0] sm:$0xff]
          %1314 = vst [vmem:[%s616 + $0xae0] sm:$0xff] %v1313
          %v1315 = vld [vmem:[%s615 + $0xae8] sm:$0xff]
          %1316 = vst [vmem:[%s616 + $0xae8] sm:$0xff] %v1315
          %v1317 = vld [vmem:[%s615 + $0xaf0] sm:$0xff]
          %1318 = vst [vmem:[%s616 + $0xaf0] sm:$0xff] %v1317
          %v1319 = vld [vmem:[%s615 + $0xaf8] sm:$0xff]
          %1320 = vst [vmem:[%s616 + $0xaf8] sm:$0xff] %v1319
          %v1321 = vld [vmem:[%s615 + $0xb00] sm:$0xff]
          %1322 = vst [vmem:[%s616 + $0xb00] sm:$0xff] %v1321
          %v1323 = vld [vmem:[%s615 + $0xb08] sm:$0xff]
          %1324 = vst [vmem:[%s616 + $0xb08] sm:$0xff] %v1323
          %v1325 = vld [vmem:[%s615 + $0xb10] sm:$0xff]
          %1326 = vst [vmem:[%s616 + $0xb10] sm:$0xff] %v1325
          %v1327 = vld [vmem:[%s615 + $0xb18] sm:$0xff]
          %1328 = vst [vmem:[%s616 + $0xb18] sm:$0xff] %v1327
          %v1329 = vld [vmem:[%s615 + $0xb20] sm:$0xff]
          %1330 = vst [vmem:[%s616 + $0xb20] sm:$0xff] %v1329
          %v1331 = vld [vmem:[%s615 + $0xb28] sm:$0xff]
          %1332 = vst [vmem:[%s616 + $0xb28] sm:$0xff] %v1331
          %v1333 = vld [vmem:[%s615 + $0xb30] sm:$0xff]
          %1334 = vst [vmem:[%s616 + $0xb30] sm:$0xff] %v1333
          %v1335 = vld [vmem:[%s615 + $0xb38] sm:$0xff]
          %1336 = vst [vmem:[%s616 + $0xb38] sm:$0xff] %v1335
          %v1337 = vld [vmem:[%s615 + $0xb40] sm:$0xff]
          %1338 = vst [vmem:[%s616 + $0xb40] sm:$0xff] %v1337
          %v1339 = vld [vmem:[%s615 + $0xb48] sm:$0xff]
          %1340 = vst [vmem:[%s616 + $0xb48] sm:$0xff] %v1339
          %v1341 = vld [vmem:[%s615 + $0xb50] sm:$0xff]
          %1342 = vst [vmem:[%s616 + $0xb50] sm:$0xff] %v1341
          %v1343 = vld [vmem:[%s615 + $0xb58] sm:$0xff]
          %1344 = vst [vmem:[%s616 + $0xb58] sm:$0xff] %v1343
          %v1345 = vld [vmem:[%s615 + $0xb60] sm:$0xff]
          %1346 = vst [vmem:[%s616 + $0xb60] sm:$0xff] %v1345
          %v1347 = vld [vmem:[%s615 + $0xb68] sm:$0xff]
          %1348 = vst [vmem:[%s616 + $0xb68] sm:$0xff] %v1347
          %v1349 = vld [vmem:[%s615 + $0xb70] sm:$0xff]
          %1350 = vst [vmem:[%s616 + $0xb70] sm:$0xff] %v1349
          %v1351 = vld [vmem:[%s615 + $0xb78] sm:$0xff]
          %1352 = vst [vmem:[%s616 + $0xb78] sm:$0xff] %v1351
          %v1353 = vld [vmem:[%s615 + $0xb80] sm:$0xff]
          %1354 = vst [vmem:[%s616 + $0xb80] sm:$0xff] %v1353
          %v1355 = vld [vmem:[%s615 + $0xb88] sm:$0xff]
          %1356 = vst [vmem:[%s616 + $0xb88] sm:$0xff] %v1355
          %v1357 = vld [vmem:[%s615 + $0xb90] sm:$0xff]
          %1358 = vst [vmem:[%s616 + $0xb90] sm:$0xff] %v1357
          %v1359 = vld [vmem:[%s615 + $0xb98] sm:$0xff]
          %1360 = vst [vmem:[%s616 + $0xb98] sm:$0xff] %v1359
          %v1361 = vld [vmem:[%s615 + $0xba0] sm:$0xff]
          %1362 = vst [vmem:[%s616 + $0xba0] sm:$0xff] %v1361
          %v1363 = vld [vmem:[%s615 + $0xba8] sm:$0xff]
          %1364 = vst [vmem:[%s616 + $0xba8] sm:$0xff] %v1363
          %v1365 = vld [vmem:[%s615 + $0xbb0] sm:$0xff]
          %1366 = vst [vmem:[%s616 + $0xbb0] sm:$0xff] %v1365
          %v1367 = vld [vmem:[%s615 + $0xbb8] sm:$0xff]
          %1368 = vst [vmem:[%s616 + $0xbb8] sm:$0xff] %v1367
          %v1369 = vld [vmem:[%s615 + $0xbc0] sm:$0xff]
          %1370 = vst [vmem:[%s616 + $0xbc0] sm:$0xff] %v1369
          %v1371 = vld [vmem:[%s615 + $0xbc8] sm:$0xff]
          %1372 = vst [vmem:[%s616 + $0xbc8] sm:$0xff] %v1371
          %v1373 = vld [vmem:[%s615 + $0xbd0] sm:$0xff]
          %1374 = vst [vmem:[%s616 + $0xbd0] sm:$0xff] %v1373
          %v1375 = vld [vmem:[%s615 + $0xbd8] sm:$0xff]
          %1376 = vst [vmem:[%s616 + $0xbd8] sm:$0xff] %v1375
          %v1377 = vld [vmem:[%s615 + $0xbe0] sm:$0xff]
          %1378 = vst [vmem:[%s616 + $0xbe0] sm:$0xff] %v1377
          %v1379 = vld [vmem:[%s615 + $0xbe8] sm:$0xff]
          %1380 = vst [vmem:[%s616 + $0xbe8] sm:$0xff] %v1379
          %v1381 = vld [vmem:[%s615 + $0xbf0] sm:$0xff]
          %1382 = vst [vmem:[%s616 + $0xbf0] sm:$0xff] %v1381
          %v1383 = vld [vmem:[%s615 + $0xbf8] sm:$0xff]
          %1384 = vst [vmem:[%s616 + $0xbf8] sm:$0xff] %v1383
          %v1385 = vld [vmem:[%s615 + $0xc00] sm:$0xff]
          %1386 = vst [vmem:[%s616 + $0xc00] sm:$0xff] %v1385
          %v1387 = vld [vmem:[%s615 + $0xc08] sm:$0xff]
          %1388 = vst [vmem:[%s616 + $0xc08] sm:$0xff] %v1387
          %v1389 = vld [vmem:[%s615 + $0xc10] sm:$0xff]
          %1390 = vst [vmem:[%s616 + $0xc10] sm:$0xff] %v1389
          %v1391 = vld [vmem:[%s615 + $0xc18] sm:$0xff]
          %1392 = vst [vmem:[%s616 + $0xc18] sm:$0xff] %v1391
          %v1393 = vld [vmem:[%s615 + $0xc20] sm:$0xff]
          %1394 = vst [vmem:[%s616 + $0xc20] sm:$0xff] %v1393
          %v1395 = vld [vmem:[%s615 + $0xc28] sm:$0xff]
          %1396 = vst [vmem:[%s616 + $0xc28] sm:$0xff] %v1395
          %v1397 = vld [vmem:[%s615 + $0xc30] sm:$0xff]
          %1398 = vst [vmem:[%s616 + $0xc30] sm:$0xff] %v1397
          %v1399 = vld [vmem:[%s615 + $0xc38] sm:$0xff]
          %1400 = vst [vmem:[%s616 + $0xc38] sm:$0xff] %v1399
          %v1401 = vld [vmem:[%s615 + $0xc40] sm:$0xff]
          %1402 = vst [vmem:[%s616 + $0xc40] sm:$0xff] %v1401
          %v1403 = vld [vmem:[%s615 + $0xc48] sm:$0xff]
          %1404 = vst [vmem:[%s616 + $0xc48] sm:$0xff] %v1403
          %v1405 = vld [vmem:[%s615 + $0xc50] sm:$0xff]
          %1406 = vst [vmem:[%s616 + $0xc50] sm:$0xff] %v1405
          %v1407 = vld [vmem:[%s615 + $0xc58] sm:$0xff]
          %1408 = vst [vmem:[%s616 + $0xc58] sm:$0xff] %v1407
          %v1409 = vld [vmem:[%s615 + $0xc60] sm:$0xff]
          %1410 = vst [vmem:[%s616 + $0xc60] sm:$0xff] %v1409
          %v1411 = vld [vmem:[%s615 + $0xc68] sm:$0xff]
          %1412 = vst [vmem:[%s616 + $0xc68] sm:$0xff] %v1411
          %v1413 = vld [vmem:[%s615 + $0xc70] sm:$0xff]
          %1414 = vst [vmem:[%s616 + $0xc70] sm:$0xff] %v1413
          %v1415 = vld [vmem:[%s615 + $0xc78] sm:$0xff]
          %1416 = vst [vmem:[%s616 + $0xc78] sm:$0xff] %v1415
          %v1417 = vld [vmem:[%s615 + $0xc80] sm:$0xff]
          %1418 = vst [vmem:[%s616 + $0xc80] sm:$0xff] %v1417
          %v1419 = vld [vmem:[%s615 + $0xc88] sm:$0xff]
          %1420 = vst [vmem:[%s616 + $0xc88] sm:$0xff] %v1419
          %v1421 = vld [vmem:[%s615 + $0xc90] sm:$0xff]
          %1422 = vst [vmem:[%s616 + $0xc90] sm:$0xff] %v1421
          %v1423 = vld [vmem:[%s615 + $0xc98] sm:$0xff]
          %1424 = vst [vmem:[%s616 + $0xc98] sm:$0xff] %v1423
          %v1425 = vld [vmem:[%s615 + $0xca0] sm:$0xff]
          %1426 = vst [vmem:[%s616 + $0xca0] sm:$0xff] %v1425
          %v1427 = vld [vmem:[%s615 + $0xca8] sm:$0xff]
          %1428 = vst [vmem:[%s616 + $0xca8] sm:$0xff] %v1427
          %v1429 = vld [vmem:[%s615 + $0xcb0] sm:$0xff]
          %1430 = vst [vmem:[%s616 + $0xcb0] sm:$0xff] %v1429
          %v1431 = vld [vmem:[%s615 + $0xcb8] sm:$0xff]
          %1432 = vst [vmem:[%s616 + $0xcb8] sm:$0xff] %v1431
          %v1433 = vld [vmem:[%s615 + $0xcc0] sm:$0xff]
          %1434 = vst [vmem:[%s616 + $0xcc0] sm:$0xff] %v1433
          %v1435 = vld [vmem:[%s615 + $0xcc8] sm:$0xff]
          %1436 = vst [vmem:[%s616 + $0xcc8] sm:$0xff] %v1435
          %v1437 = vld [vmem:[%s615 + $0xcd0] sm:$0xff]
          %1438 = vst [vmem:[%s616 + $0xcd0] sm:$0xff] %v1437
          %v1439 = vld [vmem:[%s615 + $0xcd8] sm:$0xff]
          %1440 = vst [vmem:[%s616 + $0xcd8] sm:$0xff] %v1439
          %v1441 = vld [vmem:[%s615 + $0xce0] sm:$0xff]
          %1442 = vst [vmem:[%s616 + $0xce0] sm:$0xff] %v1441
          %v1443 = vld [vmem:[%s615 + $0xce8] sm:$0xff]
          %1444 = vst [vmem:[%s616 + $0xce8] sm:$0xff] %v1443
          %v1445 = vld [vmem:[%s615 + $0xcf0] sm:$0xff]
          %1446 = vst [vmem:[%s616 + $0xcf0] sm:$0xff] %v1445
          %v1447 = vld [vmem:[%s615 + $0xcf8] sm:$0xff]
          %1448 = vst [vmem:[%s616 + $0xcf8] sm:$0xff] %v1447
          %v1449 = vld [vmem:[%s615 + $0xd00] sm:$0xff]
          %1450 = vst [vmem:[%s616 + $0xd00] sm:$0xff] %v1449
          %v1451 = vld [vmem:[%s615 + $0xd08] sm:$0xff]
          %1452 = vst [vmem:[%s616 + $0xd08] sm:$0xff] %v1451
          %v1453 = vld [vmem:[%s615 + $0xd10] sm:$0xff]
          %1454 = vst [vmem:[%s616 + $0xd10] sm:$0xff] %v1453
          %v1455 = vld [vmem:[%s615 + $0xd18] sm:$0xff]
          %1456 = vst [vmem:[%s616 + $0xd18] sm:$0xff] %v1455
          %v1457 = vld [vmem:[%s615 + $0xd20] sm:$0xff]
          %1458 = vst [vmem:[%s616 + $0xd20] sm:$0xff] %v1457
          %v1459 = vld [vmem:[%s615 + $0xd28] sm:$0xff]
          %1460 = vst [vmem:[%s616 + $0xd28] sm:$0xff] %v1459
          %v1461 = vld [vmem:[%s615 + $0xd30] sm:$0xff]
          %1462 = vst [vmem:[%s616 + $0xd30] sm:$0xff] %v1461
          %v1463 = vld [vmem:[%s615 + $0xd38] sm:$0xff]
          %1464 = vst [vmem:[%s616 + $0xd38] sm:$0xff] %v1463
          %v1465 = vld [vmem:[%s615 + $0xd40] sm:$0xff]
          %1466 = vst [vmem:[%s616 + $0xd40] sm:$0xff] %v1465
          %v1467 = vld [vmem:[%s615 + $0xd48] sm:$0xff]
          %1468 = vst [vmem:[%s616 + $0xd48] sm:$0xff] %v1467
          %v1469 = vld [vmem:[%s615 + $0xd50] sm:$0xff]
          %1470 = vst [vmem:[%s616 + $0xd50] sm:$0xff] %v1469
          %v1471 = vld [vmem:[%s615 + $0xd58] sm:$0xff]
          %1472 = vst [vmem:[%s616 + $0xd58] sm:$0xff] %v1471
          %v1473 = vld [vmem:[%s615 + $0xd60] sm:$0xff]
          %1474 = vst [vmem:[%s616 + $0xd60] sm:$0xff] %v1473
          %v1475 = vld [vmem:[%s615 + $0xd68] sm:$0xff]
          %1476 = vst [vmem:[%s616 + $0xd68] sm:$0xff] %v1475
          %v1477 = vld [vmem:[%s615 + $0xd70] sm:$0xff]
          %1478 = vst [vmem:[%s616 + $0xd70] sm:$0xff] %v1477
          %v1479 = vld [vmem:[%s615 + $0xd78] sm:$0xff]
          %1480 = vst [vmem:[%s616 + $0xd78] sm:$0xff] %v1479
          %v1481 = vld [vmem:[%s615 + $0xd80] sm:$0xff]
          %1482 = vst [vmem:[%s616 + $0xd80] sm:$0xff] %v1481
          %v1483 = vld [vmem:[%s615 + $0xd88] sm:$0xff]
          %1484 = vst [vmem:[%s616 + $0xd88] sm:$0xff] %v1483
          %v1485 = vld [vmem:[%s615 + $0xd90] sm:$0xff]
          %1486 = vst [vmem:[%s616 + $0xd90] sm:$0xff] %v1485
          %v1487 = vld [vmem:[%s615 + $0xd98] sm:$0xff]
          %1488 = vst [vmem:[%s616 + $0xd98] sm:$0xff] %v1487
          %v1489 = vld [vmem:[%s615 + $0xda0] sm:$0xff]
          %1490 = vst [vmem:[%s616 + $0xda0] sm:$0xff] %v1489
          %v1491 = vld [vmem:[%s615 + $0xda8] sm:$0xff]
          %1492 = vst [vmem:[%s616 + $0xda8] sm:$0xff] %v1491
          %v1493 = vld [vmem:[%s615 + $0xdb0] sm:$0xff]
          %1494 = vst [vmem:[%s616 + $0xdb0] sm:$0xff] %v1493
          %v1495 = vld [vmem:[%s615 + $0xdb8] sm:$0xff]
          %1496 = vst [vmem:[%s616 + $0xdb8] sm:$0xff] %v1495
          %v1497 = vld [vmem:[%s615 + $0xdc0] sm:$0xff]
          %1498 = vst [vmem:[%s616 + $0xdc0] sm:$0xff] %v1497
          %v1499 = vld [vmem:[%s615 + $0xdc8] sm:$0xff]
          %1500 = vst [vmem:[%s616 + $0xdc8] sm:$0xff] %v1499
          %v1501 = vld [vmem:[%s615 + $0xdd0] sm:$0xff]
          %1502 = vst [vmem:[%s616 + $0xdd0] sm:$0xff] %v1501
          %v1503 = vld [vmem:[%s615 + $0xdd8] sm:$0xff]
          %1504 = vst [vmem:[%s616 + $0xdd8] sm:$0xff] %v1503
          %v1505 = vld [vmem:[%s615 + $0xde0] sm:$0xff]
          %1506 = vst [vmem:[%s616 + $0xde0] sm:$0xff] %v1505
          %v1507 = vld [vmem:[%s615 + $0xde8] sm:$0xff]
          %1508 = vst [vmem:[%s616 + $0xde8] sm:$0xff] %v1507
          %v1509 = vld [vmem:[%s615 + $0xdf0] sm:$0xff]
          %1510 = vst [vmem:[%s616 + $0xdf0] sm:$0xff] %v1509
          %v1511 = vld [vmem:[%s615 + $0xdf8] sm:$0xff]
          %1512 = vst [vmem:[%s616 + $0xdf8] sm:$0xff] %v1511
        $region87: #{generator_forward.1} parent=81 // loop_footer
          %s614 = sadd.s32 1, %s610
        $region88: #{generator_forward.1} parent=81 // loop_footer_branch
          %609 = sbr.rel target = $region84
        $region89: #{generator_forward.1} parent=81 // loop_exit
          _
      $region82: #{generator_forward.1} parent=66 // pred_fallthru
        _
      %p1513 = pneg %p605
      // Predicated region
      $region90: #{generator_forward.1} parent=66 // pred_check
        _
      $region91: #{generator_forward.1} parent=66 // pred_check_branch
        %1515 = sbr.rel (%p605) target = $region93
      $region92: #{generator_forward.1} parent=66 // pred_region
        %s1516 = sand.u32 3584, 7
      $region93: #{generator_forward.1} parent=66 // pred_fallthru
        _
    $region67: #{generator_forward.1} parent=1 // pred_fallthru
      _
    // Predicated region
    $region68: #{generator_forward.1} parent=1 // pred_check
      %p589 = pneg %p585
    $region69: #{generator_forward.1} parent=1 // pred_check_branch
      %591 = sbr.rel (%p589) target = $region71
    $region70: #{generator_forward.1} parent=1 // pred_region
      %s592 = sshll.u32 1, 3584
      %s593 = ssub.s32 %s592, 1
      loop: start=0, step=1, limit=1
      $region72: #{generator_forward.1} parent=70 // loop_pre_header
        _
      $region73: #{generator_forward.1} parent=70 // loop_header
        %s595 = sphi 0, %s599
        %p596 = scmp.ge.s32.totalorder %s595, 1
        %s600 = sphi %s7, %s7
        %s601 = sphi [#allocation3], [#allocation3]
      $region74: #{generator_forward.1} parent=70 // loop_header_branch
        %598 = sbr.rel (%p596) target = $region78
      $region75: #{generator_forward.1} parent=70 // loop_body
        %v602 = vld [vmem:[%s600] sm:%s593]
        %603 = vst [vmem:[%s601] sm:%s593] %v602
      $region76: #{generator_forward.1} parent=70 // loop_footer
        %s599 = sadd.s32 1, %s595
      $region77: #{generator_forward.1} parent=70 // loop_footer_branch
        %594 = sbr.rel target = $region73
      $region78: #{generator_forward.1} parent=70 // loop_exit
        _
    $region71: #{generator_forward.1} parent=1 // pred_fallthru
      _
    // Predicated region
    $region94: #{generator_forward.1} parent=1 // pred_check
      _
    $region95: #{generator_forward.1} parent=1 // pred_check_branch
      %1519 = sbr.rel (0) target = $region97
    $region96: #{generator_forward.1} parent=1 // pred_region
      %1520 = vsyncadd %s583, 57344
    $region97: #{generator_forward.1} parent=1 // pred_fallthru
      _
    %v1521 = vld [vmem:[%s0] sm:$0xf]
    %v1522 = vld [vmem:[%s0 + $0x4] sm:$0xf]
    %v1523 = vld [vmem:[%s0 + $0x8] sm:$0xf]
    %v1524 = vld [vmem:[%s0 + $0xc] sm:$0xf]
    %v1525 = vld [vmem:[%s0 + $0x10] sm:$0xf]
    %v1526 = vld [vmem:[%s0 + $0x14] sm:$0xf]
    %v1527 = vld [vmem:[%s0 + $0x18] sm:$0xf]
    %v1528 = vld [vmem:[%s0 + $0x1c] sm:$0xf]
    %v1529 = vld [vmem:[%s1] sm:$0xff]
    %v1530 = vld [vmem:[%s1 + $0x8] sm:$0xff]
    %v1531 = vld [vmem:[%s1 + $0x10] sm:$0xff]
    %v1532 = vld [vmem:[%s1 + $0x18] sm:$0xff]
    %v1533 = vld [vmem:[%s1 + $0x20] sm:$0xff]
    %v1534 = vld [vmem:[%s1 + $0x28] sm:$0xff]
    %v1535 = vld [vmem:[%s1 + $0x30] sm:$0xff]
    %v1536 = vld [vmem:[%s1 + $0x38] sm:$0xff]
    %v1537 = vld [vmem:[%s1 + $0x40] sm:$0xff]
    %v1538 = vld [vmem:[%s1 + $0x48] sm:$0xff]
    %v1539 = vld [vmem:[%s1 + $0x50] sm:$0xff]
    %v1540 = vld [vmem:[%s1 + $0x58] sm:$0xff]
    %v1541 = vld [vmem:[%s1 + $0x60] sm:$0xff]
    %v1542 = vld [vmem:[%s1 + $0x68] sm:$0xff]
    %v1543 = vld [vmem:[%s1 + $0x70] sm:$0xff]
    %v1544 = vld [vmem:[%s1 + $0x78] sm:$0xff]
    %v1545 = vld [vmem:[%s2] sm:$0x3]
    %v1547 = vlaneseq
    %v1548 = vshrl.u32 %v1547, 7
    %v1549 = vsub.s32 0, %v1548
    %v1550 = vrot.slane %v1545, %v1549
    %v1551 = vlaneseq
    %v1552 = vshrl.u32 %v1551, 7
    %v1553 = vsub.s32 1, %v1552
    %v1554 = vrot.slane %v1545, %v1553
    %v1565 = vunpack.c.l.b16 %v1521
    %v1566 = vunpack.c.l.b16 %v1522
    %v1567 = vunpack.c.l.b16 %v1523
    %v1568 = vunpack.c.l.b16 %v1524
    %v1569 = vunpack.c.l.b16 %v1525
    %v1570 = vunpack.c.l.b16 %v1526
    %v1571 = vunpack.c.l.b16 %v1527
    %v1572 = vunpack.c.l.b16 %v1528
    %v1573 = vpack.c.b16 %v1566, %v1565
    %v1574 = vpack.c.b16 %v1568, %v1567
    %v1575 = vpack.c.b16 %v1570, %v1569
    %v1576 = vpack.c.b16 %v1572, %v1571
    %v1597 = vunpack.c.l.b16 %v1529
    %v1598 = vunpack.c.h.b16 %v1529
    %v1599 = vunpack.c.l.b16 %v1530
    %v1600 = vunpack.c.h.b16 %v1530
    %v1601 = vunpack.c.l.b16 %v1531
    %v1602 = vunpack.c.h.b16 %v1531
    %v1603 = vunpack.c.l.b16 %v1532
    %v1604 = vunpack.c.h.b16 %v1532
    %v1605 = vunpack.c.l.b16 %v1533
    %v1606 = vunpack.c.h.b16 %v1533
    %v1607 = vunpack.c.l.b16 %v1534
    %v1608 = vunpack.c.h.b16 %v1534
    %v1609 = vunpack.c.l.b16 %v1535
    %v1610 = vunpack.c.h.b16 %v1535
    %v1611 = vunpack.c.l.b16 %v1536
    %v1612 = vunpack.c.h.b16 %v1536
    %v1613 = vunpack.c.l.b16 %v1537
    %v1614 = vunpack.c.h.b16 %v1537
    %v1615 = vunpack.c.l.b16 %v1538
    %v1616 = vunpack.c.h.b16 %v1538
    %v1617 = vunpack.c.l.b16 %v1539
    %v1618 = vunpack.c.h.b16 %v1539
    %v1619 = vunpack.c.l.b16 %v1540
    %v1620 = vunpack.c.h.b16 %v1540
    %v1621 = vunpack.c.l.b16 %v1541
    %v1622 = vunpack.c.h.b16 %v1541
    %v1623 = vunpack.c.l.b16 %v1542
    %v1624 = vunpack.c.h.b16 %v1542
    %v1625 = vunpack.c.l.b16 %v1543
    %v1626 = vunpack.c.h.b16 %v1543
    %v1627 = vunpack.c.l.b16 %v1544
    %v1628 = vunpack.c.h.b16 %v1544
    %v1629 = vpack.c.b16 %v1599, %v1597
    %v1630 = vpack.c.b16 %v1600, %v1598
    %v1631 = vpack.c.b16 %v1603, %v1601
    %v1632 = vpack.c.b16 %v1604, %v1602
    %v1633 = vpack.c.b16 %v1607, %v1605
    %v1634 = vpack.c.b16 %v1608, %v1606
    %v1635 = vpack.c.b16 %v1611, %v1609
    %v1636 = vpack.c.b16 %v1612, %v1610
    %v1637 = vpack.c.b16 %v1615, %v1613
    %v1638 = vpack.c.b16 %v1616, %v1614
    %v1639 = vpack.c.b16 %v1619, %v1617
    %v1640 = vpack.c.b16 %v1620, %v1618
    %v1641 = vpack.c.b16 %v1623, %v1621
    %v1642 = vpack.c.b16 %v1624, %v1622
    %v1643 = vpack.c.b16 %v1627, %v1625
    %v1644 = vpack.c.b16 %v1628, %v1626
    %1661 = vmatprep.subr.bf16.mxu0 %v1644
    %1662 = vmatpush1.bf16.msra.mxu0 %v1643
    %1663 = vmatprep.subr.bf16.mxu0 %v1642
    %1664 = vmatpush1.bf16.msra.mxu0 %v1641
    %1665 = vmatprep.subr.bf16.mxu0 %v1640
    %1666 = vmatpush1.bf16.msra.mxu0 %v1639
    %1667 = vmatprep.subr.bf16.mxu0 %v1638
    %1668 = vmatpush1.bf16.msra.mxu0 %v1637
    %1669 = vmatprep.subr.bf16.mxu0 %v1636
    %1670 = vmatpush1.bf16.msra.mxu0 %v1635
    %1671 = vmatprep.subr.bf16.mxu0 %v1634
    %1672 = vmatpush1.bf16.msra.mxu0 %v1633
    %1673 = vmatprep.subr.bf16.mxu0 %v1632
    %1674 = vmatpush1.bf16.msra.mxu0 %v1631
    %1675 = vmatprep.subr.bf16.mxu0 %v1630
    %1676 = vmatpush1.bf16.msra.mxu0 %v1629
    %1677 = vmatprep.subr.bf16.mxu0 0
    %1678 = vmatpush2.bf16.msra.mxu0 0
    %1679 = vmatprep.subr.bf16.mxu0 0
    %1680 = vmatpush2.bf16.msra.mxu0 0
    %1681 = vmatprep.subr.bf16.mxu0 0
    %1682 = vmatpush2.bf16.msra.mxu0 0
    %1683 = vmatprep.subr.bf16.mxu0 0
    %1684 = vmatpush2.bf16.msra.mxu0 0
    %1685 = vmatprep.subr.bf16.mxu0 0
    %1686 = vmatpush2.bf16.msra.mxu0 0
    %1687 = vmatprep.subr.bf16.mxu0 0
    %1688 = vmatpush2.bf16.msra.mxu0 0
    %1689 = vmatprep.subr.bf16.mxu0 0
    %1690 = vmatpush2.bf16.msra.mxu0 0
    %1691 = vmatprep.subr.bf16.mxu0 0
    %1692 = vmatpush2.bf16.msra.mxu0 0
    %1693 = vmatprep.mubr.bf16.mxu0 0
    %1694 = vmatmul.mubr.bf16.gmra.mxu0 %v1573
    %v1695 = vpop.f32.mrf.mxu0
    %v1696 = vadd.f32 %v1550, %v1695
    %v1697 = vpop.f32.mrf.mxu0
    %v1698 = vadd.f32 %v1554, %v1697
    %v1699 = vpop.f32.mrf.mxu0
    %v1700 = vadd.f32 %v1550, %v1699
    %v1701 = vpop.f32.mrf.mxu0
    %v1702 = vadd.f32 %v1554, %v1701
    %1703 = vmatprep.mubr.bf16.mxu0 0
    %1704 = vmatmul.mubr.bf16.gmra.mxu0 %v1574
    %v1705 = vpop.f32.mrf.mxu0
    %v1706 = vadd.f32 %v1550, %v1705
    %v1707 = vpop.f32.mrf.mxu0
    %v1708 = vadd.f32 %v1554, %v1707
    %v1709 = vpop.f32.mrf.mxu0
    %v1710 = vadd.f32 %v1550, %v1709
    %v1711 = vpop.f32.mrf.mxu0
    %v1712 = vadd.f32 %v1554, %v1711
    %1713 = vmatprep.mubr.bf16.mxu0 0
    %1714 = vmatmul.mubr.bf16.gmra.mxu0 %v1575
    %v1715 = vpop.f32.mrf.mxu0
    %v1716 = vadd.f32 %v1550, %v1715
    %v1717 = vpop.f32.mrf.mxu0
    %v1718 = vadd.f32 %v1554, %v1717
    %v1719 = vpop.f32.mrf.mxu0
    %v1720 = vadd.f32 %v1550, %v1719
    %v1721 = vpop.f32.mrf.mxu0
    %v1722 = vadd.f32 %v1554, %v1721
    %1723 = vmatprep.mubr.bf16.mxu0 0
    %1724 = vmatmul.mubr.bf16.gmra.mxu0 %v1576
    %v1725 = vpop.f32.mrf.mxu0
    %v1726 = vadd.f32 %v1550, %v1725
    %v1727 = vpop.f32.mrf.mxu0
    %v1728 = vadd.f32 %v1554, %v1727
    %v1729 = vpop.f32.mrf.mxu0
    %v1730 = vadd.f32 %v1550, %v1729
    %v1731 = vpop.f32.mrf.mxu0
    %v1732 = vadd.f32 %v1554, %v1731
    %1733 = vdwg.mxu0
    %vm1734 = vcmp.ge.f32.partialorder %v1696, 0.0
    %vm1735 = vcmp.ge.f32.partialorder %v1698, 0.0
    %vm1736 = vcmp.ge.f32.partialorder %v1700, 0.0
    %vm1737 = vcmp.ge.f32.partialorder %v1702, 0.0
    %vm1738 = vcmp.ge.f32.partialorder %v1706, 0.0
    %vm1739 = vcmp.ge.f32.partialorder %v1708, 0.0
    %vm1740 = vcmp.ge.f32.partialorder %v1710, 0.0
    %vm1741 = vcmp.ge.f32.partialorder %v1712, 0.0
    %vm1742 = vcmp.ge.f32.partialorder %v1716, 0.0
    %vm1743 = vcmp.ge.f32.partialorder %v1718, 0.0
    %vm1744 = vcmp.ge.f32.partialorder %v1720, 0.0
    %vm1745 = vcmp.ge.f32.partialorder %v1722, 0.0
    %vm1746 = vcmp.ge.f32.partialorder %v1726, 0.0
    %vm1747 = vcmp.ge.f32.partialorder %v1728, 0.0
    %vm1748 = vcmp.ge.f32.partialorder %v1730, 0.0
    %vm1749 = vcmp.ge.f32.partialorder %v1732, 0.0
    %v1750 = vmul.f32 %v1696, 0.2
    %v1751 = vmul.f32 %v1698, 0.2
    %v1752 = vmul.f32 %v1700, 0.2
    %v1753 = vmul.f32 %v1702, 0.2
    %v1754 = vmul.f32 %v1706, 0.2
    %v1755 = vmul.f32 %v1708, 0.2
    %v1756 = vmul.f32 %v1710, 0.2
    %v1757 = vmul.f32 %v1712, 0.2
    %v1758 = vmul.f32 %v1716, 0.2
    %v1759 = vmul.f32 %v1718, 0.2
    %v1760 = vmul.f32 %v1720, 0.2
    %v1761 = vmul.f32 %v1722, 0.2
    %v1762 = vmul.f32 %v1726, 0.2
    %v1763 = vmul.f32 %v1728, 0.2
    %v1764 = vmul.f32 %v1730, 0.2
    %v1765 = vmul.f32 %v1732, 0.2
    %v1766 = vsel %vm1734, %v1696, %v1750
    %v1767 = vsel %vm1735, %v1698, %v1751
    %v1768 = vsel %vm1736, %v1700, %v1752
    %v1769 = vsel %vm1737, %v1702, %v1753
    %v1770 = vsel %vm1738, %v1706, %v1754
    %v1771 = vsel %vm1739, %v1708, %v1755
    %v1772 = vsel %vm1740, %v1710, %v1756
    %v1773 = vsel %vm1741, %v1712, %v1757
    %v1774 = vsel %vm1742, %v1716, %v1758
    %v1775 = vsel %vm1743, %v1718, %v1759
    %v1776 = vsel %vm1744, %v1720, %v1760
    %v1777 = vsel %vm1745, %v1722, %v1761
    %v1778 = vsel %vm1746, %v1726, %v1762
    %v1779 = vsel %vm1747, %v1728, %v1763
    %v1780 = vsel %vm1748, %v1730, %v1764
    %v1781 = vsel %vm1749, %v1732, %v1765
    %v1782 = vpack.c.bf16 %v1768, %v1766
    %v1783 = vpack.c.bf16 %v1769, %v1767
    %v1784 = vpack.c.bf16 %v1772, %v1770
    %v1785 = vpack.c.bf16 %v1773, %v1771
    %v1786 = vpack.c.bf16 %v1776, %v1774
    %v1787 = vpack.c.bf16 %v1777, %v1775
    %v1788 = vpack.c.bf16 %v1780, %v1778
    %v1789 = vpack.c.bf16 %v1781, %v1779
    %v1790 = vld [vmem:[%s3] sm:$0xff]
    %v1791 = vld [vmem:[%s3 + $0x8] sm:$0xff]
    %v1792 = vld [vmem:[%s3 + $0x10] sm:$0xff]
    %v1793 = vld [vmem:[%s3 + $0x18] sm:$0xff]
    %v1794 = vld [vmem:[%s3 + $0x20] sm:$0xff]
    %v1795 = vld [vmem:[%s3 + $0x28] sm:$0xff]
    %v1796 = vld [vmem:[%s3 + $0x30] sm:$0xff]
    %v1797 = vld [vmem:[%s3 + $0x38] sm:$0xff]
    %v1798 = vld [vmem:[%s3 + $0x40] sm:$0xff]
    %v1799 = vld [vmem:[%s3 + $0x48] sm:$0xff]
    %v1800 = vld [vmem:[%s3 + $0x50] sm:$0xff]
    %v1801 = vld [vmem:[%s3 + $0x58] sm:$0xff]
    %v1802 = vld [vmem:[%s3 + $0x60] sm:$0xff]
    %v1803 = vld [vmem:[%s3 + $0x68] sm:$0xff]
    %v1804 = vld [vmem:[%s3 + $0x70] sm:$0xff]
    %v1805 = vld [vmem:[%s3 + $0x78] sm:$0xff]
    %v1806 = vld [vmem:[%s3 + $0x80] sm:$0xff]
    %v1807 = vld [vmem:[%s3 + $0x88] sm:$0xff]
    %v1808 = vld [vmem:[%s3 + $0x90] sm:$0xff]
    %v1809 = vld [vmem:[%s3 + $0x98] sm:$0xff]
    %v1810 = vld [vmem:[%s3 + $0xa0] sm:$0xff]
    %v1811 = vld [vmem:[%s3 + $0xa8] sm:$0xff]
    %v1812 = vld [vmem:[%s3 + $0xb0] sm:$0xff]
    %v1813 = vld [vmem:[%s3 + $0xb8] sm:$0xff]
    %v1814 = vld [vmem:[%s3 + $0xc0] sm:$0xff]
    %v1815 = vld [vmem:[%s3 + $0xc8] sm:$0xff]
    %v1816 = vld [vmem:[%s3 + $0xd0] sm:$0xff]
    %v1817 = vld [vmem:[%s3 + $0xd8] sm:$0xff]
    %v1818 = vld [vmem:[%s3 + $0xe0] sm:$0xff]
    %v1819 = vld [vmem:[%s3 + $0xe8] sm:$0xff]
    %v1820 = vld [vmem:[%s3 + $0xf0] sm:$0xff]
    %v1821 = vld [vmem:[%s3 + $0xf8] sm:$0xff]
    %v1822 = vld [vmem:[%s3 + $0x100] sm:$0xff]
    %v1823 = vld [vmem:[%s3 + $0x108] sm:$0xff]
    %v1824 = vld [vmem:[%s3 + $0x110] sm:$0xff]
    %v1825 = vld [vmem:[%s3 + $0x118] sm:$0xff]
    %v1826 = vld [vmem:[%s3 + $0x120] sm:$0xff]
    %v1827 = vld [vmem:[%s3 + $0x128] sm:$0xff]
    %v1828 = vld [vmem:[%s3 + $0x130] sm:$0xff]
    %v1829 = vld [vmem:[%s3 + $0x138] sm:$0xff]
    %v1830 = vld [vmem:[%s3 + $0x140] sm:$0xff]
    %v1831 = vld [vmem:[%s3 + $0x148] sm:$0xff]
    %v1832 = vld [vmem:[%s3 + $0x150] sm:$0xff]
    %v1833 = vld [vmem:[%s3 + $0x158] sm:$0xff]
    %v1834 = vld [vmem:[%s3 + $0x160] sm:$0xff]
    %v1835 = vld [vmem:[%s3 + $0x168] sm:$0xff]
    %v1836 = vld [vmem:[%s3 + $0x170] sm:$0xff]
    %v1837 = vld [vmem:[%s3 + $0x178] sm:$0xff]
    %v1838 = vld [vmem:[%s3 + $0x180] sm:$0xff]
    %v1839 = vld [vmem:[%s3 + $0x188] sm:$0xff]
    %v1840 = vld [vmem:[%s3 + $0x190] sm:$0xff]
    %v1841 = vld [vmem:[%s3 + $0x198] sm:$0xff]
    %v1842 = vld [vmem:[%s3 + $0x1a0] sm:$0xff]
    %v1843 = vld [vmem:[%s3 + $0x1a8] sm:$0xff]
    %v1844 = vld [vmem:[%s3 + $0x1b0] sm:$0xff]
    %v1845 = vld [vmem:[%s3 + $0x1b8] sm:$0xff]
    %v1846 = vld [vmem:[%s3 + $0x1c0] sm:$0xff]
    %v1847 = vld [vmem:[%s3 + $0x1c8] sm:$0xff]
    %v1848 = vld [vmem:[%s3 + $0x1d0] sm:$0xff]
    %v1849 = vld [vmem:[%s3 + $0x1d8] sm:$0xff]
    %v1850 = vld [vmem:[%s3 + $0x1e0] sm:$0xff]
    %v1851 = vld [vmem:[%s3 + $0x1e8] sm:$0xff]
    %v1852 = vld [vmem:[%s3 + $0x1f0] sm:$0xff]
    %v1853 = vld [vmem:[%s3 + $0x1f8] sm:$0xff]
    %v1854 = vld [vmem:[%s4] sm:$0xf]
    %v1856 = vlaneseq
    %v1857 = vshrl.u32 %v1856, 7
    %v1858 = vsub.s32 0, %v1857
    %v1859 = vrot.slane %v1854, %v1858
    %v1860 = vlaneseq
    %v1861 = vshrl.u32 %v1860, 7
    %v1862 = vsub.s32 1, %v1861
    %v1863 = vrot.slane %v1854, %v1862
    %v1864 = vlaneseq
    %v1865 = vshrl.u32 %v1864, 7
    %v1866 = vsub.s32 2, %v1865
    %v1867 = vrot.slane %v1854, %v1866
    %v1868 = vlaneseq
    %v1869 = vshrl.u32 %v1868, 7
    %v1870 = vsub.s32 3, %v1869
    %v1871 = vrot.slane %v1854, %v1870
    %v1940 = vunpack.c.l.b16 %v1790
    %v1941 = vunpack.c.h.b16 %v1790
    %v1942 = vunpack.c.l.b16 %v1791
    %v1943 = vunpack.c.h.b16 %v1791
    %v1944 = vunpack.c.l.b16 %v1792
    %v1945 = vunpack.c.h.b16 %v1792
    %v1946 = vunpack.c.l.b16 %v1793
    %v1947 = vunpack.c.h.b16 %v1793
    %v1948 = vunpack.c.l.b16 %v1794
    %v1949 = vunpack.c.h.b16 %v1794
    %v1950 = vunpack.c.l.b16 %v1795
    %v1951 = vunpack.c.h.b16 %v1795
    %v1952 = vunpack.c.l.b16 %v1796
    %v1953 = vunpack.c.h.b16 %v1796
    %v1954 = vunpack.c.l.b16 %v1797
    %v1955 = vunpack.c.h.b16 %v1797
    %v1956 = vunpack.c.l.b16 %v1798
    %v1957 = vunpack.c.h.b16 %v1798
    %v1958 = vunpack.c.l.b16 %v1799
    %v1959 = vunpack.c.h.b16 %v1799
    %v1960 = vunpack.c.l.b16 %v1800
    %v1961 = vunpack.c.h.b16 %v1800
    %v1962 = vunpack.c.l.b16 %v1801
    %v1963 = vunpack.c.h.b16 %v1801
    %v1964 = vunpack.c.l.b16 %v1802
    %v1965 = vunpack.c.h.b16 %v1802
    %v1966 = vunpack.c.l.b16 %v1803
    %v1967 = vunpack.c.h.b16 %v1803
    %v1968 = vunpack.c.l.b16 %v1804
    %v1969 = vunpack.c.h.b16 %v1804
    %v1970 = vunpack.c.l.b16 %v1805
    %v1971 = vunpack.c.h.b16 %v1805
    %v1972 = vunpack.c.l.b16 %v1806
    %v1973 = vunpack.c.h.b16 %v1806
    %v1974 = vunpack.c.l.b16 %v1807
    %v1975 = vunpack.c.h.b16 %v1807
    %v1976 = vunpack.c.l.b16 %v1808
    %v1977 = vunpack.c.h.b16 %v1808
    %v1978 = vunpack.c.l.b16 %v1809
    %v1979 = vunpack.c.h.b16 %v1809
    %v1980 = vunpack.c.l.b16 %v1810
    %v1981 = vunpack.c.h.b16 %v1810
    %v1982 = vunpack.c.l.b16 %v1811
    %v1983 = vunpack.c.h.b16 %v1811
    %v1984 = vunpack.c.l.b16 %v1812
    %v1985 = vunpack.c.h.b16 %v1812
    %v1986 = vunpack.c.l.b16 %v1813
    %v1987 = vunpack.c.h.b16 %v1813
    %v1988 = vunpack.c.l.b16 %v1814
    %v1989 = vunpack.c.h.b16 %v1814
    %v1990 = vunpack.c.l.b16 %v1815
    %v1991 = vunpack.c.h.b16 %v1815
    %v1992 = vunpack.c.l.b16 %v1816
    %v1993 = vunpack.c.h.b16 %v1816
    %v1994 = vunpack.c.l.b16 %v1817
    %v1995 = vunpack.c.h.b16 %v1817
    %v1996 = vunpack.c.l.b16 %v1818
    %v1997 = vunpack.c.h.b16 %v1818
    %v1998 = vunpack.c.l.b16 %v1819
    %v1999 = vunpack.c.h.b16 %v1819
    %v2000 = vunpack.c.l.b16 %v1820
    %v2001 = vunpack.c.h.b16 %v1820
    %v2002 = vunpack.c.l.b16 %v1821
    %v2003 = vunpack.c.h.b16 %v1821
    %v2004 = vunpack.c.l.b16 %v1822
    %v2005 = vunpack.c.h.b16 %v1822
    %v2006 = vunpack.c.l.b16 %v1823
    %v2007 = vunpack.c.h.b16 %v1823
    %v2008 = vunpack.c.l.b16 %v1824
    %v2009 = vunpack.c.h.b16 %v1824
    %v2010 = vunpack.c.l.b16 %v1825
    %v2011 = vunpack.c.h.b16 %v1825
    %v2012 = vunpack.c.l.b16 %v1826
    %v2013 = vunpack.c.h.b16 %v1826
    %v2014 = vunpack.c.l.b16 %v1827
    %v2015 = vunpack.c.h.b16 %v1827
    %v2016 = vunpack.c.l.b16 %v1828
    %v2017 = vunpack.c.h.b16 %v1828
    %v2018 = vunpack.c.l.b16 %v1829
    %v2019 = vunpack.c.h.b16 %v1829
    %v2020 = vunpack.c.l.b16 %v1830
    %v2021 = vunpack.c.h.b16 %v1830
    %v2022 = vunpack.c.l.b16 %v1831
    %v2023 = vunpack.c.h.b16 %v1831
    %v2024 = vunpack.c.l.b16 %v1832
    %v2025 = vunpack.c.h.b16 %v1832
    %v2026 = vunpack.c.l.b16 %v1833
    %v2027 = vunpack.c.h.b16 %v1833
    %v2028 = vunpack.c.l.b16 %v1834
    %v2029 = vunpack.c.h.b16 %v1834
    %v2030 = vunpack.c.l.b16 %v1835
    %v2031 = vunpack.c.h.b16 %v1835
    %v2032 = vunpack.c.l.b16 %v1836
    %v2033 = vunpack.c.h.b16 %v1836
    %v2034 = vunpack.c.l.b16 %v1837
    %v2035 = vunpack.c.h.b16 %v1837
    %v2036 = vunpack.c.l.b16 %v1838
    %v2037 = vunpack.c.h.b16 %v1838
    %v2038 = vunpack.c.l.b16 %v1839
    %v2039 = vunpack.c.h.b16 %v1839
    %v2040 = vunpack.c.l.b16 %v1840
    %v2041 = vunpack.c.h.b16 %v1840
    %v2042 = vunpack.c.l.b16 %v1841
    %v2043 = vunpack.c.h.b16 %v1841
    %v2044 = vunpack.c.l.b16 %v1842
    %v2045 = vunpack.c.h.b16 %v1842
    %v2046 = vunpack.c.l.b16 %v1843
    %v2047 = vunpack.c.h.b16 %v1843
    %v2048 = vunpack.c.l.b16 %v1844
    %v2049 = vunpack.c.h.b16 %v1844
    %v2050 = vunpack.c.l.b16 %v1845
    %v2051 = vunpack.c.h.b16 %v1845
    %v2052 = vunpack.c.l.b16 %v1846
    %v2053 = vunpack.c.h.b16 %v1846
    %v2054 = vunpack.c.l.b16 %v1847
    %v2055 = vunpack.c.h.b16 %v1847
    %v2056 = vunpack.c.l.b16 %v1848
    %v2057 = vunpack.c.h.b16 %v1848
    %v2058 = vunpack.c.l.b16 %v1849
    %v2059 = vunpack.c.h.b16 %v1849
    %v2060 = vunpack.c.l.b16 %v1850
    %v2061 = vunpack.c.h.b16 %v1850
    %v2062 = vunpack.c.l.b16 %v1851
    %v2063 = vunpack.c.h.b16 %v1851
    %v2064 = vunpack.c.l.b16 %v1852
    %v2065 = vunpack.c.h.b16 %v1852
    %v2066 = vunpack.c.l.b16 %v1853
    %v2067 = vunpack.c.h.b16 %v1853
    %v2068 = vpack.c.b16 %v1944, %v1940
    %v2069 = vpack.c.b16 %v1945, %v1941
    %v2070 = vpack.c.b16 %v1946, %v1942
    %v2071 = vpack.c.b16 %v1947, %v1943
    %v2072 = vpack.c.b16 %v1952, %v1948
    %v2073 = vpack.c.b16 %v1953, %v1949
    %v2074 = vpack.c.b16 %v1954, %v1950
    %v2075 = vpack.c.b16 %v1955, %v1951
    %v2076 = vpack.c.b16 %v1960, %v1956
    %v2077 = vpack.c.b16 %v1961, %v1957
    %v2078 = vpack.c.b16 %v1962, %v1958
    %v2079 = vpack.c.b16 %v1963, %v1959
    %v2080 = vpack.c.b16 %v1968, %v1964
    %v2081 = vpack.c.b16 %v1969, %v1965
    %v2082 = vpack.c.b16 %v1970, %v1966
    %v2083 = vpack.c.b16 %v1971, %v1967
    %v2084 = vpack.c.b16 %v1976, %v1972
    %v2085 = vpack.c.b16 %v1977, %v1973
    %v2086 = vpack.c.b16 %v1978, %v1974
    %v2087 = vpack.c.b16 %v1979, %v1975
    %v2088 = vpack.c.b16 %v1984, %v1980
    %v2089 = vpack.c.b16 %v1985, %v1981
    %v2090 = vpack.c.b16 %v1986, %v1982
    %v2091 = vpack.c.b16 %v1987, %v1983
    %v2092 = vpack.c.b16 %v1992, %v1988
    %v2093 = vpack.c.b16 %v1993, %v1989
    %v2094 = vpack.c.b16 %v1994, %v1990
    %v2095 = vpack.c.b16 %v1995, %v1991
    %v2096 = vpack.c.b16 %v2000, %v1996
    %v2097 = vpack.c.b16 %v2001, %v1997
    %v2098 = vpack.c.b16 %v2002, %v1998
    %v2099 = vpack.c.b16 %v2003, %v1999
    %v2100 = vpack.c.b16 %v2008, %v2004
    %v2101 = vpack.c.b16 %v2009, %v2005
    %v2102 = vpack.c.b16 %v2010, %v2006
    %v2103 = vpack.c.b16 %v2011, %v2007
    %v2104 = vpack.c.b16 %v2016, %v2012
    %v2105 = vpack.c.b16 %v2017, %v2013
    %v2106 = vpack.c.b16 %v2018, %v2014
    %v2107 = vpack.c.b16 %v2019, %v2015
    %v2108 = vpack.c.b16 %v2024, %v2020
    %v2109 = vpack.c.b16 %v2025, %v2021
    %v2110 = vpack.c.b16 %v2026, %v2022
    %v2111 = vpack.c.b16 %v2027, %v2023
    %v2112 = vpack.c.b16 %v2032, %v2028
    %v2113 = vpack.c.b16 %v2033, %v2029
    %v2114 = vpack.c.b16 %v2034, %v2030
    %v2115 = vpack.c.b16 %v2035, %v2031
    %v2116 = vpack.c.b16 %v2040, %v2036
    %v2117 = vpack.c.b16 %v2041, %v2037
    %v2118 = vpack.c.b16 %v2042, %v2038
    %v2119 = vpack.c.b16 %v2043, %v2039
    %v2120 = vpack.c.b16 %v2048, %v2044
    %v2121 = vpack.c.b16 %v2049, %v2045
    %v2122 = vpack.c.b16 %v2050, %v2046
    %v2123 = vpack.c.b16 %v2051, %v2047
    %v2124 = vpack.c.b16 %v2056, %v2052
    %v2125 = vpack.c.b16 %v2057, %v2053
    %v2126 = vpack.c.b16 %v2058, %v2054
    %v2127 = vpack.c.b16 %v2059, %v2055
    %v2128 = vpack.c.b16 %v2064, %v2060
    %v2129 = vpack.c.b16 %v2065, %v2061
    %v2130 = vpack.c.b16 %v2066, %v2062
    %v2131 = vpack.c.b16 %v2067, %v2063
    %2196 = vmatprep.subr.bf16.mxu0 %v2097
    %2197 = vmatpush1.bf16.msra.mxu0 %v2096
    %2198 = vmatprep.subr.bf16.mxu0 %v2093
    %2199 = vmatpush1.bf16.msra.mxu0 %v2092
    %2200 = vmatprep.subr.bf16.mxu0 %v2089
    %2201 = vmatpush1.bf16.msra.mxu0 %v2088
    %2202 = vmatprep.subr.bf16.mxu0 %v2085
    %2203 = vmatpush1.bf16.msra.mxu0 %v2084
    %2204 = vmatprep.subr.bf16.mxu0 %v2081
    %2205 = vmatpush1.bf16.msra.mxu0 %v2080
    %2206 = vmatprep.subr.bf16.mxu0 %v2077
    %2207 = vmatpush1.bf16.msra.mxu0 %v2076
    %2208 = vmatprep.subr.bf16.mxu0 %v2073
    %2209 = vmatpush1.bf16.msra.mxu0 %v2072
    %2210 = vmatprep.subr.bf16.mxu0 %v2069
    %2211 = vmatpush1.bf16.msra.mxu0 %v2068
    %2212 = vmatprep.subr.bf16.mxu0 %v2129
    %2213 = vmatpush2.bf16.msra.mxu0 %v2128
    %2214 = vmatprep.subr.bf16.mxu0 %v2125
    %2215 = vmatpush2.bf16.msra.mxu0 %v2124
    %2216 = vmatprep.subr.bf16.mxu0 %v2121
    %2217 = vmatpush2.bf16.msra.mxu0 %v2120
    %2218 = vmatprep.subr.bf16.mxu0 %v2117
    %2219 = vmatpush2.bf16.msra.mxu0 %v2116
    %2220 = vmatprep.subr.bf16.mxu0 %v2113
    %2221 = vmatpush2.bf16.msra.mxu0 %v2112
    %2222 = vmatprep.subr.bf16.mxu0 %v2109
    %2223 = vmatpush2.bf16.msra.mxu0 %v2108
    %2224 = vmatprep.subr.bf16.mxu0 %v2105
    %2225 = vmatpush2.bf16.msra.mxu0 %v2104
    %2226 = vmatprep.subr.bf16.mxu0 %v2101
    %2227 = vmatpush2.bf16.msra.mxu0 %v2100
    %2228 = vmatprep.mubr.bf16.mxu0 %v1783
    %2229 = vmatmul.mubr.bf16.gmra.mxu0 %v1782
    %v2230 = vpop.f32.mrf.mxu0
    %v2231 = vadd.f32 %v1859, %v2230
    %v2232 = vpop.f32.mrf.mxu0
    %v2233 = vadd.f32 %v1863, %v2232
    %v2234 = vpop.f32.mrf.mxu0
    %v2235 = vadd.f32 %v1859, %v2234
    %v2236 = vpop.f32.mrf.mxu0
    %v2237 = vadd.f32 %v1863, %v2236
    %2238 = vmatprep.mubr.bf16.mxu0 %v1785
    %2239 = vmatmul.mubr.bf16.gmra.mxu0 %v1784
    %v2240 = vpop.f32.mrf.mxu0
    %v2241 = vadd.f32 %v1859, %v2240
    %v2242 = vpop.f32.mrf.mxu0
    %v2243 = vadd.f32 %v1863, %v2242
    %v2244 = vpop.f32.mrf.mxu0
    %v2245 = vadd.f32 %v1859, %v2244
    %v2246 = vpop.f32.mrf.mxu0
    %v2247 = vadd.f32 %v1863, %v2246
    %2248 = vmatprep.mubr.bf16.mxu0 %v1787
    %2249 = vmatmul.mubr.bf16.gmra.mxu0 %v1786
    %v2250 = vpop.f32.mrf.mxu0
    %v2251 = vadd.f32 %v1859, %v2250
    %v2252 = vpop.f32.mrf.mxu0
    %v2253 = vadd.f32 %v1863, %v2252
    %v2254 = vpop.f32.mrf.mxu0
    %v2255 = vadd.f32 %v1859, %v2254
    %v2256 = vpop.f32.mrf.mxu0
    %v2257 = vadd.f32 %v1863, %v2256
    %2258 = vmatprep.mubr.bf16.mxu0 %v1789
    %2259 = vmatmul.mubr.bf16.gmra.mxu0 %v1788
    %v2260 = vpop.f32.mrf.mxu0
    %v2261 = vadd.f32 %v1859, %v2260
    %v2262 = vpop.f32.mrf.mxu0
    %v2263 = vadd.f32 %v1863, %v2262
    %v2264 = vpop.f32.mrf.mxu0
    %v2265 = vadd.f32 %v1859, %v2264
    %v2266 = vpop.f32.mrf.mxu0
    %v2267 = vadd.f32 %v1863, %v2266
    %2268 = vdwg.mxu0
    %2269 = vmatprep.subr.bf16.mxu0 %v2099
    %2270 = vmatpush1.bf16.msra.mxu0 %v2098
    %2271 = vmatprep.subr.bf16.mxu0 %v2095
    %2272 = vmatpush1.bf16.msra.mxu0 %v2094
    %2273 = vmatprep.subr.bf16.mxu0 %v2091
    %2274 = vmatpush1.bf16.msra.mxu0 %v2090
    %2275 = vmatprep.subr.bf16.mxu0 %v2087
    %2276 = vmatpush1.bf16.msra.mxu0 %v2086
    %2277 = vmatprep.subr.bf16.mxu0 %v2083
    %2278 = vmatpush1.bf16.msra.mxu0 %v2082
    %2279 = vmatprep.subr.bf16.mxu0 %v2079
    %2280 = vmatpush1.bf16.msra.mxu0 %v2078
    %2281 = vmatprep.subr.bf16.mxu0 %v2075
    %2282 = vmatpush1.bf16.msra.mxu0 %v2074
    %2283 = vmatprep.subr.bf16.mxu0 %v2071
    %2284 = vmatpush1.bf16.msra.mxu0 %v2070
    %2285 = vmatprep.subr.bf16.mxu0 %v2131
    %2286 = vmatpush2.bf16.msra.mxu0 %v2130
    %2287 = vmatprep.subr.bf16.mxu0 %v2127
    %2288 = vmatpush2.bf16.msra.mxu0 %v2126
    %2289 = vmatprep.subr.bf16.mxu0 %v2123
    %2290 = vmatpush2.bf16.msra.mxu0 %v2122
    %2291 = vmatprep.subr.bf16.mxu0 %v2119
    %2292 = vmatpush2.bf16.msra.mxu0 %v2118
    %2293 = vmatprep.subr.bf16.mxu0 %v2115
    %2294 = vmatpush2.bf16.msra.mxu0 %v2114
    %2295 = vmatprep.subr.bf16.mxu0 %v2111
    %2296 = vmatpush2.bf16.msra.mxu0 %v2110
    %2297 = vmatprep.subr.bf16.mxu0 %v2107
    %2298 = vmatpush2.bf16.msra.mxu0 %v2106
    %2299 = vmatprep.subr.bf16.mxu0 %v2103
    %2300 = vmatpush2.bf16.msra.mxu0 %v2102
    %2301 = vmatprep.mubr.bf16.mxu0 %v1783
    %2302 = vmatmul.mubr.bf16.gmra.mxu0 %v1782
    %v2303 = vpop.f32.mrf.mxu0
    %v2304 = vadd.f32 %v1867, %v2303
    %v2305 = vpop.f32.mrf.mxu0
    %v2306 = vadd.f32 %v1871, %v2305
    %v2307 = vpop.f32.mrf.mxu0
    %v2308 = vadd.f32 %v1867, %v2307
    %v2309 = vpop.f32.mrf.mxu0
    %v2310 = vadd.f32 %v1871, %v2309
    %2311 = vmatprep.mubr.bf16.mxu0 %v1785
    %2312 = vmatmul.mubr.bf16.gmra.mxu0 %v1784
    %v2313 = vpop.f32.mrf.mxu0
    %v2314 = vadd.f32 %v1867, %v2313
    %v2315 = vpop.f32.mrf.mxu0
    %v2316 = vadd.f32 %v1871, %v2315
    %v2317 = vpop.f32.mrf.mxu0
    %v2318 = vadd.f32 %v1867, %v2317
    %v2319 = vpop.f32.mrf.mxu0
    %v2320 = vadd.f32 %v1871, %v2319
    %2321 = vmatprep.mubr.bf16.mxu0 %v1787
    %2322 = vmatmul.mubr.bf16.gmra.mxu0 %v1786
    %v2323 = vpop.f32.mrf.mxu0
    %v2324 = vadd.f32 %v1867, %v2323
    %v2325 = vpop.f32.mrf.mxu0
    %v2326 = vadd.f32 %v1871, %v2325
    %v2327 = vpop.f32.mrf.mxu0
    %v2328 = vadd.f32 %v1867, %v2327
    %v2329 = vpop.f32.mrf.mxu0
    %v2330 = vadd.f32 %v1871, %v2329
    %2331 = vmatprep.mubr.bf16.mxu0 %v1789
    %2332 = vmatmul.mubr.bf16.gmra.mxu0 %v1788
    %v2333 = vpop.f32.mrf.mxu0
    %v2334 = vadd.f32 %v1867, %v2333
    %v2335 = vpop.f32.mrf.mxu0
    %v2336 = vadd.f32 %v1871, %v2335
    %v2337 = vpop.f32.mrf.mxu0
    %v2338 = vadd.f32 %v1867, %v2337
    %v2339 = vpop.f32.mrf.mxu0
    %v2340 = vadd.f32 %v1871, %v2339
    %2341 = vdwg.mxu0
    %vm2342 = vcmp.ge.f32.partialorder %v2231, 0.0
    %vm2343 = vcmp.ge.f32.partialorder %v2233, 0.0
    %vm2344 = vcmp.ge.f32.partialorder %v2304, 0.0
    %vm2345 = vcmp.ge.f32.partialorder %v2306, 0.0
    %vm2346 = vcmp.ge.f32.partialorder %v2235, 0.0
    %vm2347 = vcmp.ge.f32.partialorder %v2237, 0.0
    %vm2348 = vcmp.ge.f32.partialorder %v2308, 0.0
    %vm2349 = vcmp.ge.f32.partialorder %v2310, 0.0
    %vm2350 = vcmp.ge.f32.partialorder %v2241, 0.0
    %vm2351 = vcmp.ge.f32.partialorder %v2243, 0.0
    %vm2352 = vcmp.ge.f32.partialorder %v2314, 0.0
    %vm2353 = vcmp.ge.f32.partialorder %v2316, 0.0
    %vm2354 = vcmp.ge.f32.partialorder %v2245, 0.0
    %vm2355 = vcmp.ge.f32.partialorder %v2247, 0.0
    %vm2356 = vcmp.ge.f32.partialorder %v2318, 0.0
    %vm2357 = vcmp.ge.f32.partialorder %v2320, 0.0
    %vm2358 = vcmp.ge.f32.partialorder %v2251, 0.0
    %vm2359 = vcmp.ge.f32.partialorder %v2253, 0.0
    %vm2360 = vcmp.ge.f32.partialorder %v2324, 0.0
    %vm2361 = vcmp.ge.f32.partialorder %v2326, 0.0
    %vm2362 = vcmp.ge.f32.partialorder %v2255, 0.0
    %vm2363 = vcmp.ge.f32.partialorder %v2257, 0.0
    %vm2364 = vcmp.ge.f32.partialorder %v2328, 0.0
    %vm2365 = vcmp.ge.f32.partialorder %v2330, 0.0
    %vm2366 = vcmp.ge.f32.partialorder %v2261, 0.0
    %vm2367 = vcmp.ge.f32.partialorder %v2263, 0.0
    %vm2368 = vcmp.ge.f32.partialorder %v2334, 0.0
    %vm2369 = vcmp.ge.f32.partialorder %v2336, 0.0
    %vm2370 = vcmp.ge.f32.partialorder %v2265, 0.0
    %vm2371 = vcmp.ge.f32.partialorder %v2267, 0.0
    %vm2372 = vcmp.ge.f32.partialorder %v2338, 0.0
    %vm2373 = vcmp.ge.f32.partialorder %v2340, 0.0
    %v2374 = vmul.f32 %v2231, 0.2
    %v2375 = vmul.f32 %v2233, 0.2
    %v2376 = vmul.f32 %v2304, 0.2
    %v2377 = vmul.f32 %v2306, 0.2
    %v2378 = vmul.f32 %v2235, 0.2
    %v2379 = vmul.f32 %v2237, 0.2
    %v2380 = vmul.f32 %v2308, 0.2
    %v2381 = vmul.f32 %v2310, 0.2
    %v2382 = vmul.f32 %v2241, 0.2
    %v2383 = vmul.f32 %v2243, 0.2
    %v2384 = vmul.f32 %v2314, 0.2
    %v2385 = vmul.f32 %v2316, 0.2
    %v2386 = vmul.f32 %v2245, 0.2
    %v2387 = vmul.f32 %v2247, 0.2
    %v2388 = vmul.f32 %v2318, 0.2
    %v2389 = vmul.f32 %v2320, 0.2
    %v2390 = vmul.f32 %v2251, 0.2
    %v2391 = vmul.f32 %v2253, 0.2
    %v2392 = vmul.f32 %v2324, 0.2
    %v2393 = vmul.f32 %v2326, 0.2
    %v2394 = vmul.f32 %v2255, 0.2
    %v2395 = vmul.f32 %v2257, 0.2
    %v2396 = vmul.f32 %v2328, 0.2
    %v2397 = vmul.f32 %v2330, 0.2
    %v2398 = vmul.f32 %v2261, 0.2
    %v2399 = vmul.f32 %v2263, 0.2
    %v2400 = vmul.f32 %v2334, 0.2
    %v2401 = vmul.f32 %v2336, 0.2
    %v2402 = vmul.f32 %v2265, 0.2
    %v2403 = vmul.f32 %v2267, 0.2
    %v2404 = vmul.f32 %v2338, 0.2
    %v2405 = vmul.f32 %v2340, 0.2
    %v2406 = vsel %vm2342, %v2231, %v2374
    %v2407 = vsel %vm2343, %v2233, %v2375
    %v2408 = vsel %vm2344, %v2304, %v2376
    %v2409 = vsel %vm2345, %v2306, %v2377
    %v2410 = vsel %vm2346, %v2235, %v2378
    %v2411 = vsel %vm2347, %v2237, %v2379
    %v2412 = vsel %vm2348, %v2308, %v2380
    %v2413 = vsel %vm2349, %v2310, %v2381
    %v2414 = vsel %vm2350, %v2241, %v2382
    %v2415 = vsel %vm2351, %v2243, %v2383
    %v2416 = vsel %vm2352, %v2314, %v2384
    %v2417 = vsel %vm2353, %v2316, %v2385
    %v2418 = vsel %vm2354, %v2245, %v2386
    %v2419 = vsel %vm2355, %v2247, %v2387
    %v2420 = vsel %vm2356, %v2318, %v2388
    %v2421 = vsel %vm2357, %v2320, %v2389
    %v2422 = vsel %vm2358, %v2251, %v2390
    %v2423 = vsel %vm2359, %v2253, %v2391
    %v2424 = vsel %vm2360, %v2324, %v2392
    %v2425 = vsel %vm2361, %v2326, %v2393
    %v2426 = vsel %vm2362, %v2255, %v2394
    %v2427 = vsel %vm2363, %v2257, %v2395
    %v2428 = vsel %vm2364, %v2328, %v2396
    %v2429 = vsel %vm2365, %v2330, %v2397
    %v2430 = vsel %vm2366, %v2261, %v2398
    %v2431 = vsel %vm2367, %v2263, %v2399
    %v2432 = vsel %vm2368, %v2334, %v2400
    %v2433 = vsel %vm2369, %v2336, %v2401
    %v2434 = vsel %vm2370, %v2265, %v2402
    %v2435 = vsel %vm2371, %v2267, %v2403
    %v2436 = vsel %vm2372, %v2338, %v2404
    %v2437 = vsel %vm2373, %v2340, %v2405
    %v2438 = vpack.c.bf16 %v2410, %v2406
    %v2439 = vpack.c.bf16 %v2411, %v2407
    %v2440 = vpack.c.bf16 %v2412, %v2408
    %v2441 = vpack.c.bf16 %v2413, %v2409
    %v2442 = vpack.c.bf16 %v2418, %v2414
    %v2443 = vpack.c.bf16 %v2419, %v2415
    %v2444 = vpack.c.bf16 %v2420, %v2416
    %v2445 = vpack.c.bf16 %v2421, %v2417
    %v2446 = vpack.c.bf16 %v2426, %v2422
    %v2447 = vpack.c.bf16 %v2427, %v2423
    %v2448 = vpack.c.bf16 %v2428, %v2424
    %v2449 = vpack.c.bf16 %v2429, %v2425
    %v2450 = vpack.c.bf16 %v2434, %v2430
    %v2451 = vpack.c.bf16 %v2435, %v2431
    %v2452 = vpack.c.bf16 %v2436, %v2432
    %v2453 = vpack.c.bf16 %v2437, %v2433
    %s2454 = smul.u32 4, 64
    %s2455 = smul.u32 %s2454, 8
    %s2456 = sshll.u32 %s2455, 4
    %2457 = dma.done [#allocation4], %s2456
    %v2458 = vld [vmem:[#allocation2] sm:$0xff]
    %v2459 = vld [vmem:[#allocation2 + $0x8] sm:$0xff]
    %v2460 = vld [vmem:[#allocation2 + $0x10] sm:$0xff]
    %v2461 = vld [vmem:[#allocation2 + $0x18] sm:$0xff]
    %v2462 = vld [vmem:[#allocation2 + $0x20] sm:$0xff]
    %v2463 = vld [vmem:[#allocation2 + $0x28] sm:$0xff]
    %v2464 = vld [vmem:[#allocation2 + $0x30] sm:$0xff]
    %v2465 = vld [vmem:[#allocation2 + $0x38] sm:$0xff]
    %v2466 = vld [vmem:[#allocation2 + $0x40] sm:$0xff]
    %v2467 = vld [vmem:[#allocation2 + $0x48] sm:$0xff]
    %v2468 = vld [vmem:[#allocation2 + $0x50] sm:$0xff]
    %v2469 = vld [vmem:[#allocation2 + $0x58] sm:$0xff]
    %v2470 = vld [vmem:[#allocation2 + $0x60] sm:$0xff]
    %v2471 = vld [vmem:[#allocation2 + $0x68] sm:$0xff]
    %v2472 = vld [vmem:[#allocation2 + $0x70] sm:$0xff]
    %v2473 = vld [vmem:[#allocation2 + $0x78] sm:$0xff]
    %v2474 = vld [vmem:[#allocation2 + $0x80] sm:$0xff]
    %v2475 = vld [vmem:[#allocation2 + $0x88] sm:$0xff]
    %v2476 = vld [vmem:[#allocation2 + $0x90] sm:$0xff]
    %v2477 = vld [vmem:[#allocation2 + $0x98] sm:$0xff]
    %v2478 = vld [vmem:[#allocation2 + $0xa0] sm:$0xff]
    %v2479 = vld [vmem:[#allocation2 + $0xa8] sm:$0xff]
    %v2480 = vld [vmem:[#allocation2 + $0xb0] sm:$0xff]
    %v2481 = vld [vmem:[#allocation2 + $0xb8] sm:$0xff]
    %v2482 = vld [vmem:[#allocation2 + $0xc0] sm:$0xff]
    %v2483 = vld [vmem:[#allocation2 + $0xc8] sm:$0xff]
    %v2484 = vld [vmem:[#allocation2 + $0xd0] sm:$0xff]
    %v2485 = vld [vmem:[#allocation2 + $0xd8] sm:$0xff]
    %v2486 = vld [vmem:[#allocation2 + $0xe0] sm:$0xff]
    %v2487 = vld [vmem:[#allocation2 + $0xe8] sm:$0xff]
    %v2488 = vld [vmem:[#allocation2 + $0xf0] sm:$0xff]
    %v2489 = vld [vmem:[#allocation2 + $0xf8] sm:$0xff]
    %v2490 = vld [vmem:[#allocation2 + $0x100] sm:$0xff]
    %v2491 = vld [vmem:[#allocation2 + $0x108] sm:$0xff]
    %v2492 = vld [vmem:[#allocation2 + $0x110] sm:$0xff]
    %v2493 = vld [vmem:[#allocation2 + $0x118] sm:$0xff]
    %v2494 = vld [vmem:[#allocation2 + $0x120] sm:$0xff]
    %v2495 = vld [vmem:[#allocation2 + $0x128] sm:$0xff]
    %v2496 = vld [vmem:[#allocation2 + $0x130] sm:$0xff]
    %v2497 = vld [vmem:[#allocation2 + $0x138] sm:$0xff]
    %v2498 = vld [vmem:[#allocation2 + $0x140] sm:$0xff]
    %v2499 = vld [vmem:[#allocation2 + $0x148] sm:$0xff]
    %v2500 = vld [vmem:[#allocation2 + $0x150] sm:$0xff]
    %v2501 = vld [vmem:[#allocation2 + $0x158] sm:$0xff]
    %v2502 = vld [vmem:[#allocation2 + $0x160] sm:$0xff]
    %v2503 = vld [vmem:[#allocation2 + $0x168] sm:$0xff]
    %v2504 = vld [vmem:[#allocation2 + $0x170] sm:$0xff]
    %v2505 = vld [vmem:[#allocation2 + $0x178] sm:$0xff]
    %v2506 = vld [vmem:[#allocation2 + $0x180] sm:$0xff]
    %v2507 = vld [vmem:[#allocation2 + $0x188] sm:$0xff]
    %v2508 = vld [vmem:[#allocation2 + $0x190] sm:$0xff]
    %v2509 = vld [vmem:[#allocation2 + $0x198] sm:$0xff]
    %v2510 = vld [vmem:[#allocation2 + $0x1a0] sm:$0xff]
    %v2511 = vld [vmem:[#allocation2 + $0x1a8] sm:$0xff]
    %v2512 = vld [vmem:[#allocation2 + $0x1b0] sm:$0xff]
    %v2513 = vld [vmem:[#allocation2 + $0x1b8] sm:$0xff]
    %v2514 = vld [vmem:[#allocation2 + $0x1c0] sm:$0xff]
    %v2515 = vld [vmem:[#allocation2 + $0x1c8] sm:$0xff]
    %v2516 = vld [vmem:[#allocation2 + $0x1d0] sm:$0xff]
    %v2517 = vld [vmem:[#allocation2 + $0x1d8] sm:$0xff]
    %v2518 = vld [vmem:[#allocation2 + $0x1e0] sm:$0xff]
    %v2519 = vld [vmem:[#allocation2 + $0x1e8] sm:$0xff]
    %v2520 = vld [vmem:[#allocation2 + $0x1f0] sm:$0xff]
    %v2521 = vld [vmem:[#allocation2 + $0x1f8] sm:$0xff]
    %v2522 = vld [vmem:[#allocation2 + $0x200] sm:$0xff]
    %v2523 = vld [vmem:[#allocation2 + $0x208] sm:$0xff]
    %v2524 = vld [vmem:[#allocation2 + $0x210] sm:$0xff]
    %v2525 = vld [vmem:[#allocation2 + $0x218] sm:$0xff]
    %v2526 = vld [vmem:[#allocation2 + $0x220] sm:$0xff]
    %v2527 = vld [vmem:[#allocation2 + $0x228] sm:$0xff]
    %v2528 = vld [vmem:[#allocation2 + $0x230] sm:$0xff]
    %v2529 = vld [vmem:[#allocation2 + $0x238] sm:$0xff]
    %v2530 = vld [vmem:[#allocation2 + $0x240] sm:$0xff]
    %v2531 = vld [vmem:[#allocation2 + $0x248] sm:$0xff]
    %v2532 = vld [vmem:[#allocation2 + $0x250] sm:$0xff]
    %v2533 = vld [vmem:[#allocation2 + $0x258] sm:$0xff]
    %v2534 = vld [vmem:[#allocation2 + $0x260] sm:$0xff]
    %v2535 = vld [vmem:[#allocation2 + $0x268] sm:$0xff]
    %v2536 = vld [vmem:[#allocation2 + $0x270] sm:$0xff]
    %v2537 = vld [vmem:[#allocation2 + $0x278] sm:$0xff]
    %v2538 = vld [vmem:[#allocation2 + $0x280] sm:$0xff]
    %v2539 = vld [vmem:[#allocation2 + $0x288] sm:$0xff]
    %v2540 = vld [vmem:[#allocation2 + $0x290] sm:$0xff]
    %v2541 = vld [vmem:[#allocation2 + $0x298] sm:$0xff]
    %v2542 = vld [vmem:[#allocation2 + $0x2a0] sm:$0xff]
    %v2543 = vld [vmem:[#allocation2 + $0x2a8] sm:$0xff]
    %v2544 = vld [vmem:[#allocation2 + $0x2b0] sm:$0xff]
    %v2545 = vld [vmem:[#allocation2 + $0x2b8] sm:$0xff]
    %v2546 = vld [vmem:[#allocation2 + $0x2c0] sm:$0xff]
    %v2547 = vld [vmem:[#allocation2 + $0x2c8] sm:$0xff]
    %v2548 = vld [vmem:[#allocation2 + $0x2d0] sm:$0xff]
    %v2549 = vld [vmem:[#allocation2 + $0x2d8] sm:$0xff]
    %v2550 = vld [vmem:[#allocation2 + $0x2e0] sm:$0xff]
    %v2551 = vld [vmem:[#allocation2 + $0x2e8] sm:$0xff]
    %v2552 = vld [vmem:[#allocation2 + $0x2f0] sm:$0xff]
    %v2553 = vld [vmem:[#allocation2 + $0x2f8] sm:$0xff]
    %v2554 = vld [vmem:[#allocation2 + $0x300] sm:$0xff]
    %v2555 = vld [vmem:[#allocation2 + $0x308] sm:$0xff]
    %v2556 = vld [vmem:[#allocation2 + $0x310] sm:$0xff]
    %v2557 = vld [vmem:[#allocation2 + $0x318] sm:$0xff]
    %v2558 = vld [vmem:[#allocation2 + $0x320] sm:$0xff]
    %v2559 = vld [vmem:[#allocation2 + $0x328] sm:$0xff]
    %v2560 = vld [vmem:[#allocation2 + $0x330] sm:$0xff]
    %v2561 = vld [vmem:[#allocation2 + $0x338] sm:$0xff]
    %v2562 = vld [vmem:[#allocation2 + $0x340] sm:$0xff]
    %v2563 = vld [vmem:[#allocation2 + $0x348] sm:$0xff]
    %v2564 = vld [vmem:[#allocation2 + $0x350] sm:$0xff]
    %v2565 = vld [vmem:[#allocation2 + $0x358] sm:$0xff]
    %v2566 = vld [vmem:[#allocation2 + $0x360] sm:$0xff]
    %v2567 = vld [vmem:[#allocation2 + $0x368] sm:$0xff]
    %v2568 = vld [vmem:[#allocation2 + $0x370] sm:$0xff]
    %v2569 = vld [vmem:[#allocation2 + $0x378] sm:$0xff]
    %v2570 = vld [vmem:[#allocation2 + $0x380] sm:$0xff]
    %v2571 = vld [vmem:[#allocation2 + $0x388] sm:$0xff]
    %v2572 = vld [vmem:[#allocation2 + $0x390] sm:$0xff]
    %v2573 = vld [vmem:[#allocation2 + $0x398] sm:$0xff]
    %v2574 = vld [vmem:[#allocation2 + $0x3a0] sm:$0xff]
    %v2575 = vld [vmem:[#allocation2 + $0x3a8] sm:$0xff]
    %v2576 = vld [vmem:[#allocation2 + $0x3b0] sm:$0xff]
    %v2577 = vld [vmem:[#allocation2 + $0x3b8] sm:$0xff]
    %v2578 = vld [vmem:[#allocation2 + $0x3c0] sm:$0xff]
    %v2579 = vld [vmem:[#allocation2 + $0x3c8] sm:$0xff]
    %v2580 = vld [vmem:[#allocation2 + $0x3d0] sm:$0xff]
    %v2581 = vld [vmem:[#allocation2 + $0x3d8] sm:$0xff]
    %v2582 = vld [vmem:[#allocation2 + $0x3e0] sm:$0xff]
    %v2583 = vld [vmem:[#allocation2 + $0x3e8] sm:$0xff]
    %v2584 = vld [vmem:[#allocation2 + $0x3f0] sm:$0xff]
    %v2585 = vld [vmem:[#allocation2 + $0x3f8] sm:$0xff]
    %v2586 = vld [vmem:[#allocation2 + $0x400] sm:$0xff]
    %v2587 = vld [vmem:[#allocation2 + $0x408] sm:$0xff]
    %v2588 = vld [vmem:[#allocation2 + $0x410] sm:$0xff]
    %v2589 = vld [vmem:[#allocation2 + $0x418] sm:$0xff]
    %v2590 = vld [vmem:[#allocation2 + $0x420] sm:$0xff]
    %v2591 = vld [vmem:[#allocation2 + $0x428] sm:$0xff]
    %v2592 = vld [vmem:[#allocation2 + $0x430] sm:$0xff]
    %v2593 = vld [vmem:[#allocation2 + $0x438] sm:$0xff]
    %v2594 = vld [vmem:[#allocation2 + $0x440] sm:$0xff]
    %v2595 = vld [vmem:[#allocation2 + $0x448] sm:$0xff]
    %v2596 = vld [vmem:[#allocation2 + $0x450] sm:$0xff]
    %v2597 = vld [vmem:[#allocation2 + $0x458] sm:$0xff]
    %v2598 = vld [vmem:[#allocation2 + $0x460] sm:$0xff]
    %v2599 = vld [vmem:[#allocation2 + $0x468] sm:$0xff]
    %v2600 = vld [vmem:[#allocation2 + $0x470] sm:$0xff]
    %v2601 = vld [vmem:[#allocation2 + $0x478] sm:$0xff]
    %v2602 = vld [vmem:[#allocation2 + $0x480] sm:$0xff]
    %v2603 = vld [vmem:[#allocation2 + $0x488] sm:$0xff]
    %v2604 = vld [vmem:[#allocation2 + $0x490] sm:$0xff]
    %v2605 = vld [vmem:[#allocation2 + $0x498] sm:$0xff]
    %v2606 = vld [vmem:[#allocation2 + $0x4a0] sm:$0xff]
    %v2607 = vld [vmem:[#allocation2 + $0x4a8] sm:$0xff]
    %v2608 = vld [vmem:[#allocation2 + $0x4b0] sm:$0xff]
    %v2609 = vld [vmem:[#allocation2 + $0x4b8] sm:$0xff]
    %v2610 = vld [vmem:[#allocation2 + $0x4c0] sm:$0xff]
    %v2611 = vld [vmem:[#allocation2 + $0x4c8] sm:$0xff]
    %v2612 = vld [vmem:[#allocation2 + $0x4d0] sm:$0xff]
    %v2613 = vld [vmem:[#allocation2 + $0x4d8] sm:$0xff]
    %v2614 = vld [vmem:[#allocation2 + $0x4e0] sm:$0xff]
    %v2615 = vld [vmem:[#allocation2 + $0x4e8] sm:$0xff]
    %v2616 = vld [vmem:[#allocation2 + $0x4f0] sm:$0xff]
    %v2617 = vld [vmem:[#allocation2 + $0x4f8] sm:$0xff]
    %v2618 = vld [vmem:[#allocation2 + $0x500] sm:$0xff]
    %v2619 = vld [vmem:[#allocation2 + $0x508] sm:$0xff]
    %v2620 = vld [vmem:[#allocation2 + $0x510] sm:$0xff]
    %v2621 = vld [vmem:[#allocation2 + $0x518] sm:$0xff]
    %v2622 = vld [vmem:[#allocation2 + $0x520] sm:$0xff]
    %v2623 = vld [vmem:[#allocation2 + $0x528] sm:$0xff]
    %v2624 = vld [vmem:[#allocation2 + $0x530] sm:$0xff]
    %v2625 = vld [vmem:[#allocation2 + $0x538] sm:$0xff]
    %v2626 = vld [vmem:[#allocation2 + $0x540] sm:$0xff]
    %v2627 = vld [vmem:[#allocation2 + $0x548] sm:$0xff]
    %v2628 = vld [vmem:[#allocation2 + $0x550] sm:$0xff]
    %v2629 = vld [vmem:[#allocation2 + $0x558] sm:$0xff]
    %v2630 = vld [vmem:[#allocation2 + $0x560] sm:$0xff]
    %v2631 = vld [vmem:[#allocation2 + $0x568] sm:$0xff]
    %v2632 = vld [vmem:[#allocation2 + $0x570] sm:$0xff]
    %v2633 = vld [vmem:[#allocation2 + $0x578] sm:$0xff]
    %v2634 = vld [vmem:[#allocation2 + $0x580] sm:$0xff]
    %v2635 = vld [vmem:[#allocation2 + $0x588] sm:$0xff]
    %v2636 = vld [vmem:[#allocation2 + $0x590] sm:$0xff]
    %v2637 = vld [vmem:[#allocation2 + $0x598] sm:$0xff]
    %v2638 = vld [vmem:[#allocation2 + $0x5a0] sm:$0xff]
    %v2639 = vld [vmem:[#allocation2 + $0x5a8] sm:$0xff]
    %v2640 = vld [vmem:[#allocation2 + $0x5b0] sm:$0xff]
    %v2641 = vld [vmem:[#allocation2 + $0x5b8] sm:$0xff]
    %v2642 = vld [vmem:[#allocation2 + $0x5c0] sm:$0xff]
    %v2643 = vld [vmem:[#allocation2 + $0x5c8] sm:$0xff]
    %v2644 = vld [vmem:[#allocation2 + $0x5d0] sm:$0xff]
    %v2645 = vld [vmem:[#allocation2 + $0x5d8] sm:$0xff]
    %v2646 = vld [vmem:[#allocation2 + $0x5e0] sm:$0xff]
    %v2647 = vld [vmem:[#allocation2 + $0x5e8] sm:$0xff]
    %v2648 = vld [vmem:[#allocation2 + $0x5f0] sm:$0xff]
    %v2649 = vld [vmem:[#allocation2 + $0x5f8] sm:$0xff]
    %v2650 = vld [vmem:[#allocation2 + $0x600] sm:$0xff]
    %v2651 = vld [vmem:[#allocation2 + $0x608] sm:$0xff]
    %v2652 = vld [vmem:[#allocation2 + $0x610] sm:$0xff]
    %v2653 = vld [vmem:[#allocation2 + $0x618] sm:$0xff]
    %v2654 = vld [vmem:[#allocation2 + $0x620] sm:$0xff]
    %v2655 = vld [vmem:[#allocation2 + $0x628] sm:$0xff]
    %v2656 = vld [vmem:[#allocation2 + $0x630] sm:$0xff]
    %v2657 = vld [vmem:[#allocation2 + $0x638] sm:$0xff]
    %v2658 = vld [vmem:[#allocation2 + $0x640] sm:$0xff]
    %v2659 = vld [vmem:[#allocation2 + $0x648] sm:$0xff]
    %v2660 = vld [vmem:[#allocation2 + $0x650] sm:$0xff]
    %v2661 = vld [vmem:[#allocation2 + $0x658] sm:$0xff]
    %v2662 = vld [vmem:[#allocation2 + $0x660] sm:$0xff]
    %v2663 = vld [vmem:[#allocation2 + $0x668] sm:$0xff]
    %v2664 = vld [vmem:[#allocation2 + $0x670] sm:$0xff]
    %v2665 = vld [vmem:[#allocation2 + $0x678] sm:$0xff]
    %v2666 = vld [vmem:[#allocation2 + $0x680] sm:$0xff]
    %v2667 = vld [vmem:[#allocation2 + $0x688] sm:$0xff]
    %v2668 = vld [vmem:[#allocation2 + $0x690] sm:$0xff]
    %v2669 = vld [vmem:[#allocation2 + $0x698] sm:$0xff]
    %v2670 = vld [vmem:[#allocation2 + $0x6a0] sm:$0xff]
    %v2671 = vld [vmem:[#allocation2 + $0x6a8] sm:$0xff]
    %v2672 = vld [vmem:[#allocation2 + $0x6b0] sm:$0xff]
    %v2673 = vld [vmem:[#allocation2 + $0x6b8] sm:$0xff]
    %v2674 = vld [vmem:[#allocation2 + $0x6c0] sm:$0xff]
    %v2675 = vld [vmem:[#allocation2 + $0x6c8] sm:$0xff]
    %v2676 = vld [vmem:[#allocation2 + $0x6d0] sm:$0xff]
    %v2677 = vld [vmem:[#allocation2 + $0x6d8] sm:$0xff]
    %v2678 = vld [vmem:[#allocation2 + $0x6e0] sm:$0xff]
    %v2679 = vld [vmem:[#allocation2 + $0x6e8] sm:$0xff]
    %v2680 = vld [vmem:[#allocation2 + $0x6f0] sm:$0xff]
    %v2681 = vld [vmem:[#allocation2 + $0x6f8] sm:$0xff]
    %v2682 = vld [vmem:[#allocation2 + $0x700] sm:$0xff]
    %v2683 = vld [vmem:[#allocation2 + $0x708] sm:$0xff]
    %v2684 = vld [vmem:[#allocation2 + $0x710] sm:$0xff]
    %v2685 = vld [vmem:[#allocation2 + $0x718] sm:$0xff]
    %v2686 = vld [vmem:[#allocation2 + $0x720] sm:$0xff]
    %v2687 = vld [vmem:[#allocation2 + $0x728] sm:$0xff]
    %v2688 = vld [vmem:[#allocation2 + $0x730] sm:$0xff]
    %v2689 = vld [vmem:[#allocation2 + $0x738] sm:$0xff]
    %v2690 = vld [vmem:[#allocation2 + $0x740] sm:$0xff]
    %v2691 = vld [vmem:[#allocation2 + $0x748] sm:$0xff]
    %v2692 = vld [vmem:[#allocation2 + $0x750] sm:$0xff]
    %v2693 = vld [vmem:[#allocation2 + $0x758] sm:$0xff]
    %v2694 = vld [vmem:[#allocation2 + $0x760] sm:$0xff]
    %v2695 = vld [vmem:[#allocation2 + $0x768] sm:$0xff]
    %v2696 = vld [vmem:[#allocation2 + $0x770] sm:$0xff]
    %v2697 = vld [vmem:[#allocation2 + $0x778] sm:$0xff]
    %v2698 = vld [vmem:[#allocation2 + $0x780] sm:$0xff]
    %v2699 = vld [vmem:[#allocation2 + $0x788] sm:$0xff]
    %v2700 = vld [vmem:[#allocation2 + $0x790] sm:$0xff]
    %v2701 = vld [vmem:[#allocation2 + $0x798] sm:$0xff]
    %v2702 = vld [vmem:[#allocation2 + $0x7a0] sm:$0xff]
    %v2703 = vld [vmem:[#allocation2 + $0x7a8] sm:$0xff]
    %v2704 = vld [vmem:[#allocation2 + $0x7b0] sm:$0xff]
    %v2705 = vld [vmem:[#allocation2 + $0x7b8] sm:$0xff]
    %v2706 = vld [vmem:[#allocation2 + $0x7c0] sm:$0xff]
    %v2707 = vld [vmem:[#allocation2 + $0x7c8] sm:$0xff]
    %v2708 = vld [vmem:[#allocation2 + $0x7d0] sm:$0xff]
    %v2709 = vld [vmem:[#allocation2 + $0x7d8] sm:$0xff]
    %v2710 = vld [vmem:[#allocation2 + $0x7e0] sm:$0xff]
    %v2711 = vld [vmem:[#allocation2 + $0x7e8] sm:$0xff]
    %v2712 = vld [vmem:[#allocation2 + $0x7f0] sm:$0xff]
    %v2713 = vld [vmem:[#allocation2 + $0x7f8] sm:$0xff]
    %v2714 = vld [vmem:[%s6] sm:$0xff]
    %v2716 = vlaneseq
    %v2717 = vshrl.u32 %v2716, 7
    %v2718 = vsub.s32 0, %v2717
    %v2719 = vrot.slane %v2714, %v2718
    %v2720 = vlaneseq
    %v2721 = vshrl.u32 %v2720, 7
    %v2722 = vsub.s32 1, %v2721
    %v2723 = vrot.slane %v2714, %v2722
    %v2724 = vlaneseq
    %v2725 = vshrl.u32 %v2724, 7
    %v2726 = vsub.s32 2, %v2725
    %v2727 = vrot.slane %v2714, %v2726
    %v2728 = vlaneseq
    %v2729 = vshrl.u32 %v2728, 7
    %v2730 = vsub.s32 3, %v2729
    %v2731 = vrot.slane %v2714, %v2730
    %v2732 = vlaneseq
    %v2733 = vshrl.u32 %v2732, 7
    %v2734 = vsub.s32 4, %v2733
    %v2735 = vrot.slane %v2714, %v2734
    %v2736 = vlaneseq
    %v2737 = vshrl.u32 %v2736, 7
    %v2738 = vsub.s32 5, %v2737
    %v2739 = vrot.slane %v2714, %v2738
    %v2740 = vlaneseq
    %v2741 = vshrl.u32 %v2740, 7
    %v2742 = vsub.s32 6, %v2741
    %v2743 = vrot.slane %v2714, %v2742
    %v2744 = vlaneseq
    %v2745 = vshrl.u32 %v2744, 7
    %v2746 = vsub.s32 7, %v2745
    %v2747 = vrot.slane %v2714, %v2746
    %v3012 = vunpack.c.l.b16 %v2458
    %v3013 = vunpack.c.h.b16 %v2458
    %v3014 = vunpack.c.l.b16 %v2459
    %v3015 = vunpack.c.h.b16 %v2459
    %v3016 = vunpack.c.l.b16 %v2460
    %v3017 = vunpack.c.h.b16 %v2460
    %v3018 = vunpack.c.l.b16 %v2461
    %v3019 = vunpack.c.h.b16 %v2461
    %v3020 = vunpack.c.l.b16 %v2462
    %v3021 = vunpack.c.h.b16 %v2462
    %v3022 = vunpack.c.l.b16 %v2463
    %v3023 = vunpack.c.h.b16 %v2463
    %v3024 = vunpack.c.l.b16 %v2464
    %v3025 = vunpack.c.h.b16 %v2464
    %v3026 = vunpack.c.l.b16 %v2465
    %v3027 = vunpack.c.h.b16 %v2465
    %v3028 = vunpack.c.l.b16 %v2466
    %v3029 = vunpack.c.h.b16 %v2466
    %v3030 = vunpack.c.l.b16 %v2467
    %v3031 = vunpack.c.h.b16 %v2467
    %v3032 = vunpack.c.l.b16 %v2468
    %v3033 = vunpack.c.h.b16 %v2468
    %v3034 = vunpack.c.l.b16 %v2469
    %v3035 = vunpack.c.h.b16 %v2469
    %v3036 = vunpack.c.l.b16 %v2470
    %v3037 = vunpack.c.h.b16 %v2470
    %v3038 = vunpack.c.l.b16 %v2471
    %v3039 = vunpack.c.h.b16 %v2471
    %v3040 = vunpack.c.l.b16 %v2472
    %v3041 = vunpack.c.h.b16 %v2472
    %v3042 = vunpack.c.l.b16 %v2473
    %v3043 = vunpack.c.h.b16 %v2473
    %v3044 = vunpack.c.l.b16 %v2474
    %v3045 = vunpack.c.h.b16 %v2474
    %v3046 = vunpack.c.l.b16 %v2475
    %v3047 = vunpack.c.h.b16 %v2475
    %v3048 = vunpack.c.l.b16 %v2476
    %v3049 = vunpack.c.h.b16 %v2476
    %v3050 = vunpack.c.l.b16 %v2477
    %v3051 = vunpack.c.h.b16 %v2477
    %v3052 = vunpack.c.l.b16 %v2478
    %v3053 = vunpack.c.h.b16 %v2478
    %v3054 = vunpack.c.l.b16 %v2479
    %v3055 = vunpack.c.h.b16 %v2479
    %v3056 = vunpack.c.l.b16 %v2480
    %v3057 = vunpack.c.h.b16 %v2480
    %v3058 = vunpack.c.l.b16 %v2481
    %v3059 = vunpack.c.h.b16 %v2481
    %v3060 = vunpack.c.l.b16 %v2482
    %v3061 = vunpack.c.h.b16 %v2482
    %v3062 = vunpack.c.l.b16 %v2483
    %v3063 = vunpack.c.h.b16 %v2483
    %v3064 = vunpack.c.l.b16 %v2484
    %v3065 = vunpack.c.h.b16 %v2484
    %v3066 = vunpack.c.l.b16 %v2485
    %v3067 = vunpack.c.h.b16 %v2485
    %v3068 = vunpack.c.l.b16 %v2486
    %v3069 = vunpack.c.h.b16 %v2486
    %v3070 = vunpack.c.l.b16 %v2487
    %v3071 = vunpack.c.h.b16 %v2487
    %v3072 = vunpack.c.l.b16 %v2488
    %v3073 = vunpack.c.h.b16 %v2488
    %v3074 = vunpack.c.l.b16 %v2489
    %v3075 = vunpack.c.h.b16 %v2489
    %v3076 = vunpack.c.l.b16 %v2490
    %v3077 = vunpack.c.h.b16 %v2490
    %v3078 = vunpack.c.l.b16 %v2491
    %v3079 = vunpack.c.h.b16 %v2491
    %v3080 = vunpack.c.l.b16 %v2492
    %v3081 = vunpack.c.h.b16 %v2492
    %v3082 = vunpack.c.l.b16 %v2493
    %v3083 = vunpack.c.h.b16 %v2493
    %v3084 = vunpack.c.l.b16 %v2494
    %v3085 = vunpack.c.h.b16 %v2494
    %v3086 = vunpack.c.l.b16 %v2495
    %v3087 = vunpack.c.h.b16 %v2495
    %v3088 = vunpack.c.l.b16 %v2496
    %v3089 = vunpack.c.h.b16 %v2496
    %v3090 = vunpack.c.l.b16 %v2497
    %v3091 = vunpack.c.h.b16 %v2497
    %v3092 = vunpack.c.l.b16 %v2498
    %v3093 = vunpack.c.h.b16 %v2498
    %v3094 = vunpack.c.l.b16 %v2499
    %v3095 = vunpack.c.h.b16 %v2499
    %v3096 = vunpack.c.l.b16 %v2500
    %v3097 = vunpack.c.h.b16 %v2500
    %v3098 = vunpack.c.l.b16 %v2501
    %v3099 = vunpack.c.h.b16 %v2501
    %v3100 = vunpack.c.l.b16 %v2502
    %v3101 = vunpack.c.h.b16 %v2502
    %v3102 = vunpack.c.l.b16 %v2503
    %v3103 = vunpack.c.h.b16 %v2503
    %v3104 = vunpack.c.l.b16 %v2504
    %v3105 = vunpack.c.h.b16 %v2504
    %v3106 = vunpack.c.l.b16 %v2505
    %v3107 = vunpack.c.h.b16 %v2505
    %v3108 = vunpack.c.l.b16 %v2506
    %v3109 = vunpack.c.h.b16 %v2506
    %v3110 = vunpack.c.l.b16 %v2507
    %v3111 = vunpack.c.h.b16 %v2507
    %v3112 = vunpack.c.l.b16 %v2508
    %v3113 = vunpack.c.h.b16 %v2508
    %v3114 = vunpack.c.l.b16 %v2509
    %v3115 = vunpack.c.h.b16 %v2509
    %v3116 = vunpack.c.l.b16 %v2510
    %v3117 = vunpack.c.h.b16 %v2510
    %v3118 = vunpack.c.l.b16 %v2511
    %v3119 = vunpack.c.h.b16 %v2511
    %v3120 = vunpack.c.l.b16 %v2512
    %v3121 = vunpack.c.h.b16 %v2512
    %v3122 = vunpack.c.l.b16 %v2513
    %v3123 = vunpack.c.h.b16 %v2513
    %v3124 = vunpack.c.l.b16 %v2514
    %v3125 = vunpack.c.h.b16 %v2514
    %v3126 = vunpack.c.l.b16 %v2515
    %v3127 = vunpack.c.h.b16 %v2515
    %v3128 = vunpack.c.l.b16 %v2516
    %v3129 = vunpack.c.h.b16 %v2516
    %v3130 = vunpack.c.l.b16 %v2517
    %v3131 = vunpack.c.h.b16 %v2517
    %v3132 = vunpack.c.l.b16 %v2518
    %v3133 = vunpack.c.h.b16 %v2518
    %v3134 = vunpack.c.l.b16 %v2519
    %v3135 = vunpack.c.h.b16 %v2519
    %v3136 = vunpack.c.l.b16 %v2520
    %v3137 = vunpack.c.h.b16 %v2520
    %v3138 = vunpack.c.l.b16 %v2521
    %v3139 = vunpack.c.h.b16 %v2521
    %v3140 = vunpack.c.l.b16 %v2522
    %v3141 = vunpack.c.h.b16 %v2522
    %v3142 = vunpack.c.l.b16 %v2523
    %v3143 = vunpack.c.h.b16 %v2523
    %v3144 = vunpack.c.l.b16 %v2524
    %v3145 = vunpack.c.h.b16 %v2524
    %v3146 = vunpack.c.l.b16 %v2525
    %v3147 = vunpack.c.h.b16 %v2525
    %v3148 = vunpack.c.l.b16 %v2526
    %v3149 = vunpack.c.h.b16 %v2526
    %v3150 = vunpack.c.l.b16 %v2527
    %v3151 = vunpack.c.h.b16 %v2527
    %v3152 = vunpack.c.l.b16 %v2528
    %v3153 = vunpack.c.h.b16 %v2528
    %v3154 = vunpack.c.l.b16 %v2529
    %v3155 = vunpack.c.h.b16 %v2529
    %v3156 = vunpack.c.l.b16 %v2530
    %v3157 = vunpack.c.h.b16 %v2530
    %v3158 = vunpack.c.l.b16 %v2531
    %v3159 = vunpack.c.h.b16 %v2531
    %v3160 = vunpack.c.l.b16 %v2532
    %v3161 = vunpack.c.h.b16 %v2532
    %v3162 = vunpack.c.l.b16 %v2533
    %v3163 = vunpack.c.h.b16 %v2533
    %v3164 = vunpack.c.l.b16 %v2534
    %v3165 = vunpack.c.h.b16 %v2534
    %v3166 = vunpack.c.l.b16 %v2535
    %v3167 = vunpack.c.h.b16 %v2535
    %v3168 = vunpack.c.l.b16 %v2536
    %v3169 = vunpack.c.h.b16 %v2536
    %v3170 = vunpack.c.l.b16 %v2537
    %v3171 = vunpack.c.h.b16 %v2537
    %v3172 = vunpack.c.l.b16 %v2538
    %v3173 = vunpack.c.h.b16 %v2538
    %v3174 = vunpack.c.l.b16 %v2539
    %v3175 = vunpack.c.h.b16 %v2539
    %v3176 = vunpack.c.l.b16 %v2540
    %v3177 = vunpack.c.h.b16 %v2540
    %v3178 = vunpack.c.l.b16 %v2541
    %v3179 = vunpack.c.h.b16 %v2541
    %v3180 = vunpack.c.l.b16 %v2542
    %v3181 = vunpack.c.h.b16 %v2542
    %v3182 = vunpack.c.l.b16 %v2543
    %v3183 = vunpack.c.h.b16 %v2543
    %v3184 = vunpack.c.l.b16 %v2544
    %v3185 = vunpack.c.h.b16 %v2544
    %v3186 = vunpack.c.l.b16 %v2545
    %v3187 = vunpack.c.h.b16 %v2545
    %v3188 = vunpack.c.l.b16 %v2546
    %v3189 = vunpack.c.h.b16 %v2546
    %v3190 = vunpack.c.l.b16 %v2547
    %v3191 = vunpack.c.h.b16 %v2547
    %v3192 = vunpack.c.l.b16 %v2548
    %v3193 = vunpack.c.h.b16 %v2548
    %v3194 = vunpack.c.l.b16 %v2549
    %v3195 = vunpack.c.h.b16 %v2549
    %v3196 = vunpack.c.l.b16 %v2550
    %v3197 = vunpack.c.h.b16 %v2550
    %v3198 = vunpack.c.l.b16 %v2551
    %v3199 = vunpack.c.h.b16 %v2551
    %v3200 = vunpack.c.l.b16 %v2552
    %v3201 = vunpack.c.h.b16 %v2552
    %v3202 = vunpack.c.l.b16 %v2553
    %v3203 = vunpack.c.h.b16 %v2553
    %v3204 = vunpack.c.l.b16 %v2554
    %v3205 = vunpack.c.h.b16 %v2554
    %v3206 = vunpack.c.l.b16 %v2555
    %v3207 = vunpack.c.h.b16 %v2555
    %v3208 = vunpack.c.l.b16 %v2556
    %v3209 = vunpack.c.h.b16 %v2556
    %v3210 = vunpack.c.l.b16 %v2557
    %v3211 = vunpack.c.h.b16 %v2557
    %v3212 = vunpack.c.l.b16 %v2558
    %v3213 = vunpack.c.h.b16 %v2558
    %v3214 = vunpack.c.l.b16 %v2559
    %v3215 = vunpack.c.h.b16 %v2559
    %v3216 = vunpack.c.l.b16 %v2560
    %v3217 = vunpack.c.h.b16 %v2560
    %v3218 = vunpack.c.l.b16 %v2561
    %v3219 = vunpack.c.h.b16 %v2561
    %v3220 = vunpack.c.l.b16 %v2562
    %v3221 = vunpack.c.h.b16 %v2562
    %v3222 = vunpack.c.l.b16 %v2563
    %v3223 = vunpack.c.h.b16 %v2563
    %v3224 = vunpack.c.l.b16 %v2564
    %v3225 = vunpack.c.h.b16 %v2564
    %v3226 = vunpack.c.l.b16 %v2565
    %v3227 = vunpack.c.h.b16 %v2565
    %v3228 = vunpack.c.l.b16 %v2566
    %v3229 = vunpack.c.h.b16 %v2566
    %v3230 = vunpack.c.l.b16 %v2567
    %v3231 = vunpack.c.h.b16 %v2567
    %v3232 = vunpack.c.l.b16 %v2568
    %v3233 = vunpack.c.h.b16 %v2568
    %v3234 = vunpack.c.l.b16 %v2569
    %v3235 = vunpack.c.h.b16 %v2569
    %v3236 = vunpack.c.l.b16 %v2570
    %v3237 = vunpack.c.h.b16 %v2570
    %v3238 = vunpack.c.l.b16 %v2571
    %v3239 = vunpack.c.h.b16 %v2571
    %v3240 = vunpack.c.l.b16 %v2572
    %v3241 = vunpack.c.h.b16 %v2572
    %v3242 = vunpack.c.l.b16 %v2573
    %v3243 = vunpack.c.h.b16 %v2573
    %v3244 = vunpack.c.l.b16 %v2574
    %v3245 = vunpack.c.h.b16 %v2574
    %v3246 = vunpack.c.l.b16 %v2575
    %v3247 = vunpack.c.h.b16 %v2575
    %v3248 = vunpack.c.l.b16 %v2576
    %v3249 = vunpack.c.h.b16 %v2576
    %v3250 = vunpack.c.l.b16 %v2577
    %v3251 = vunpack.c.h.b16 %v2577
    %v3252 = vunpack.c.l.b16 %v2578
    %v3253 = vunpack.c.h.b16 %v2578
    %v3254 = vunpack.c.l.b16 %v2579
    %v3255 = vunpack.c.h.b16 %v2579
    %v3256 = vunpack.c.l.b16 %v2580
    %v3257 = vunpack.c.h.b16 %v2580
    %v3258 = vunpack.c.l.b16 %v2581
    %v3259 = vunpack.c.h.b16 %v2581
    %v3260 = vunpack.c.l.b16 %v2582
    %v3261 = vunpack.c.h.b16 %v2582
    %v3262 = vunpack.c.l.b16 %v2583
    %v3263 = vunpack.c.h.b16 %v2583
    %v3264 = vunpack.c.l.b16 %v2584
    %v3265 = vunpack.c.h.b16 %v2584
    %v3266 = vunpack.c.l.b16 %v2585
    %v3267 = vunpack.c.h.b16 %v2585
    %v3268 = vunpack.c.l.b16 %v2586
    %v3269 = vunpack.c.h.b16 %v2586
    %v3270 = vunpack.c.l.b16 %v2587
    %v3271 = vunpack.c.h.b16 %v2587
    %v3272 = vunpack.c.l.b16 %v2588
    %v3273 = vunpack.c.h.b16 %v2588
    %v3274 = vunpack.c.l.b16 %v2589
    %v3275 = vunpack.c.h.b16 %v2589
    %v3276 = vunpack.c.l.b16 %v2590
    %v3277 = vunpack.c.h.b16 %v2590
    %v3278 = vunpack.c.l.b16 %v2591
    %v3279 = vunpack.c.h.b16 %v2591
    %v3280 = vunpack.c.l.b16 %v2592
    %v3281 = vunpack.c.h.b16 %v2592
    %v3282 = vunpack.c.l.b16 %v2593
    %v3283 = vunpack.c.h.b16 %v2593
    %v3284 = vunpack.c.l.b16 %v2594
    %v3285 = vunpack.c.h.b16 %v2594
    %v3286 = vunpack.c.l.b16 %v2595
    %v3287 = vunpack.c.h.b16 %v2595
    %v3288 = vunpack.c.l.b16 %v2596
    %v3289 = vunpack.c.h.b16 %v2596
    %v3290 = vunpack.c.l.b16 %v2597
    %v3291 = vunpack.c.h.b16 %v2597
    %v3292 = vunpack.c.l.b16 %v2598
    %v3293 = vunpack.c.h.b16 %v2598
    %v3294 = vunpack.c.l.b16 %v2599
    %v3295 = vunpack.c.h.b16 %v2599
    %v3296 = vunpack.c.l.b16 %v2600
    %v3297 = vunpack.c.h.b16 %v2600
    %v3298 = vunpack.c.l.b16 %v2601
    %v3299 = vunpack.c.h.b16 %v2601
    %v3300 = vunpack.c.l.b16 %v2602
    %v3301 = vunpack.c.h.b16 %v2602
    %v3302 = vunpack.c.l.b16 %v2603
    %v3303 = vunpack.c.h.b16 %v2603
    %v3304 = vunpack.c.l.b16 %v2604
    %v3305 = vunpack.c.h.b16 %v2604
    %v3306 = vunpack.c.l.b16 %v2605
    %v3307 = vunpack.c.h.b16 %v2605
    %v3308 = vunpack.c.l.b16 %v2606
    %v3309 = vunpack.c.h.b16 %v2606
    %v3310 = vunpack.c.l.b16 %v2607
    %v3311 = vunpack.c.h.b16 %v2607
    %v3312 = vunpack.c.l.b16 %v2608
    %v3313 = vunpack.c.h.b16 %v2608
    %v3314 = vunpack.c.l.b16 %v2609
    %v3315 = vunpack.c.h.b16 %v2609
    %v3316 = vunpack.c.l.b16 %v2610
    %v3317 = vunpack.c.h.b16 %v2610
    %v3318 = vunpack.c.l.b16 %v2611
    %v3319 = vunpack.c.h.b16 %v2611
    %v3320 = vunpack.c.l.b16 %v2612
    %v3321 = vunpack.c.h.b16 %v2612
    %v3322 = vunpack.c.l.b16 %v2613
    %v3323 = vunpack.c.h.b16 %v2613
    %v3324 = vunpack.c.l.b16 %v2614
    %v3325 = vunpack.c.h.b16 %v2614
    %v3326 = vunpack.c.l.b16 %v2615
    %v3327 = vunpack.c.h.b16 %v2615
    %v3328 = vunpack.c.l.b16 %v2616
    %v3329 = vunpack.c.h.b16 %v2616
    %v3330 = vunpack.c.l.b16 %v2617
    %v3331 = vunpack.c.h.b16 %v2617
    %v3332 = vunpack.c.l.b16 %v2618
    %v3333 = vunpack.c.h.b16 %v2618
    %v3334 = vunpack.c.l.b16 %v2619
    %v3335 = vunpack.c.h.b16 %v2619
    %v3336 = vunpack.c.l.b16 %v2620
    %v3337 = vunpack.c.h.b16 %v2620
    %v3338 = vunpack.c.l.b16 %v2621
    %v3339 = vunpack.c.h.b16 %v2621
    %v3340 = vunpack.c.l.b16 %v2622
    %v3341 = vunpack.c.h.b16 %v2622
    %v3342 = vunpack.c.l.b16 %v2623
    %v3343 = vunpack.c.h.b16 %v2623
    %v3344 = vunpack.c.l.b16 %v2624
    %v3345 = vunpack.c.h.b16 %v2624
    %v3346 = vunpack.c.l.b16 %v2625
    %v3347 = vunpack.c.h.b16 %v2625
    %v3348 = vunpack.c.l.b16 %v2626
    %v3349 = vunpack.c.h.b16 %v2626
    %v3350 = vunpack.c.l.b16 %v2627
    %v3351 = vunpack.c.h.b16 %v2627
    %v3352 = vunpack.c.l.b16 %v2628
    %v3353 = vunpack.c.h.b16 %v2628
    %v3354 = vunpack.c.l.b16 %v2629
    %v3355 = vunpack.c.h.b16 %v2629
    %v3356 = vunpack.c.l.b16 %v2630
    %v3357 = vunpack.c.h.b16 %v2630
    %v3358 = vunpack.c.l.b16 %v2631
    %v3359 = vunpack.c.h.b16 %v2631
    %v3360 = vunpack.c.l.b16 %v2632
    %v3361 = vunpack.c.h.b16 %v2632
    %v3362 = vunpack.c.l.b16 %v2633
    %v3363 = vunpack.c.h.b16 %v2633
    %v3364 = vunpack.c.l.b16 %v2634
    %v3365 = vunpack.c.h.b16 %v2634
    %v3366 = vunpack.c.l.b16 %v2635
    %v3367 = vunpack.c.h.b16 %v2635
    %v3368 = vunpack.c.l.b16 %v2636
    %v3369 = vunpack.c.h.b16 %v2636
    %v3370 = vunpack.c.l.b16 %v2637
    %v3371 = vunpack.c.h.b16 %v2637
    %v3372 = vunpack.c.l.b16 %v2638
    %v3373 = vunpack.c.h.b16 %v2638
    %v3374 = vunpack.c.l.b16 %v2639
    %v3375 = vunpack.c.h.b16 %v2639
    %v3376 = vunpack.c.l.b16 %v2640
    %v3377 = vunpack.c.h.b16 %v2640
    %v3378 = vunpack.c.l.b16 %v2641
    %v3379 = vunpack.c.h.b16 %v2641
    %v3380 = vunpack.c.l.b16 %v2642
    %v3381 = vunpack.c.h.b16 %v2642
    %v3382 = vunpack.c.l.b16 %v2643
    %v3383 = vunpack.c.h.b16 %v2643
    %v3384 = vunpack.c.l.b16 %v2644
    %v3385 = vunpack.c.h.b16 %v2644
    %v3386 = vunpack.c.l.b16 %v2645
    %v3387 = vunpack.c.h.b16 %v2645
    %v3388 = vunpack.c.l.b16 %v2646
    %v3389 = vunpack.c.h.b16 %v2646
    %v3390 = vunpack.c.l.b16 %v2647
    %v3391 = vunpack.c.h.b16 %v2647
    %v3392 = vunpack.c.l.b16 %v2648
    %v3393 = vunpack.c.h.b16 %v2648
    %v3394 = vunpack.c.l.b16 %v2649
    %v3395 = vunpack.c.h.b16 %v2649
    %v3396 = vunpack.c.l.b16 %v2650
    %v3397 = vunpack.c.h.b16 %v2650
    %v3398 = vunpack.c.l.b16 %v2651
    %v3399 = vunpack.c.h.b16 %v2651
    %v3400 = vunpack.c.l.b16 %v2652
    %v3401 = vunpack.c.h.b16 %v2652
    %v3402 = vunpack.c.l.b16 %v2653
    %v3403 = vunpack.c.h.b16 %v2653
    %v3404 = vunpack.c.l.b16 %v2654
    %v3405 = vunpack.c.h.b16 %v2654
    %v3406 = vunpack.c.l.b16 %v2655
    %v3407 = vunpack.c.h.b16 %v2655
    %v3408 = vunpack.c.l.b16 %v2656
    %v3409 = vunpack.c.h.b16 %v2656
    %v3410 = vunpack.c.l.b16 %v2657
    %v3411 = vunpack.c.h.b16 %v2657
    %v3412 = vunpack.c.l.b16 %v2658
    %v3413 = vunpack.c.h.b16 %v2658
    %v3414 = vunpack.c.l.b16 %v2659
    %v3415 = vunpack.c.h.b16 %v2659
    %v3416 = vunpack.c.l.b16 %v2660
    %v3417 = vunpack.c.h.b16 %v2660
    %v3418 = vunpack.c.l.b16 %v2661
    %v3419 = vunpack.c.h.b16 %v2661
    %v3420 = vunpack.c.l.b16 %v2662
    %v3421 = vunpack.c.h.b16 %v2662
    %v3422 = vunpack.c.l.b16 %v2663
    %v3423 = vunpack.c.h.b16 %v2663
    %v3424 = vunpack.c.l.b16 %v2664
    %v3425 = vunpack.c.h.b16 %v2664
    %v3426 = vunpack.c.l.b16 %v2665
    %v3427 = vunpack.c.h.b16 %v2665
    %v3428 = vunpack.c.l.b16 %v2666
    %v3429 = vunpack.c.h.b16 %v2666
    %v3430 = vunpack.c.l.b16 %v2667
    %v3431 = vunpack.c.h.b16 %v2667
    %v3432 = vunpack.c.l.b16 %v2668
    %v3433 = vunpack.c.h.b16 %v2668
    %v3434 = vunpack.c.l.b16 %v2669
    %v3435 = vunpack.c.h.b16 %v2669
    %v3436 = vunpack.c.l.b16 %v2670
    %v3437 = vunpack.c.h.b16 %v2670
    %v3438 = vunpack.c.l.b16 %v2671
    %v3439 = vunpack.c.h.b16 %v2671
    %v3440 = vunpack.c.l.b16 %v2672
    %v3441 = vunpack.c.h.b16 %v2672
    %v3442 = vunpack.c.l.b16 %v2673
    %v3443 = vunpack.c.h.b16 %v2673
    %v3444 = vunpack.c.l.b16 %v2674
    %v3445 = vunpack.c.h.b16 %v2674
    %v3446 = vunpack.c.l.b16 %v2675
    %v3447 = vunpack.c.h.b16 %v2675
    %v3448 = vunpack.c.l.b16 %v2676
    %v3449 = vunpack.c.h.b16 %v2676
    %v3450 = vunpack.c.l.b16 %v2677
    %v3451 = vunpack.c.h.b16 %v2677
    %v3452 = vunpack.c.l.b16 %v2678
    %v3453 = vunpack.c.h.b16 %v2678
    %v3454 = vunpack.c.l.b16 %v2679
    %v3455 = vunpack.c.h.b16 %v2679
    %v3456 = vunpack.c.l.b16 %v2680
    %v3457 = vunpack.c.h.b16 %v2680
    %v3458 = vunpack.c.l.b16 %v2681
    %v3459 = vunpack.c.h.b16 %v2681
    %v3460 = vunpack.c.l.b16 %v2682
    %v3461 = vunpack.c.h.b16 %v2682
    %v3462 = vunpack.c.l.b16 %v2683
    %v3463 = vunpack.c.h.b16 %v2683
    %v3464 = vunpack.c.l.b16 %v2684
    %v3465 = vunpack.c.h.b16 %v2684
    %v3466 = vunpack.c.l.b16 %v2685
    %v3467 = vunpack.c.h.b16 %v2685
    %v3468 = vunpack.c.l.b16 %v2686
    %v3469 = vunpack.c.h.b16 %v2686
    %v3470 = vunpack.c.l.b16 %v2687
    %v3471 = vunpack.c.h.b16 %v2687
    %v3472 = vunpack.c.l.b16 %v2688
    %v3473 = vunpack.c.h.b16 %v2688
    %v3474 = vunpack.c.l.b16 %v2689
    %v3475 = vunpack.c.h.b16 %v2689
    %v3476 = vunpack.c.l.b16 %v2690
    %v3477 = vunpack.c.h.b16 %v2690
    %v3478 = vunpack.c.l.b16 %v2691
    %v3479 = vunpack.c.h.b16 %v2691
    %v3480 = vunpack.c.l.b16 %v2692
    %v3481 = vunpack.c.h.b16 %v2692
    %v3482 = vunpack.c.l.b16 %v2693
    %v3483 = vunpack.c.h.b16 %v2693
    %v3484 = vunpack.c.l.b16 %v2694
    %v3485 = vunpack.c.h.b16 %v2694
    %v3486 = vunpack.c.l.b16 %v2695
    %v3487 = vunpack.c.h.b16 %v2695
    %v3488 = vunpack.c.l.b16 %v2696
    %v3489 = vunpack.c.h.b16 %v2696
    %v3490 = vunpack.c.l.b16 %v2697
    %v3491 = vunpack.c.h.b16 %v2697
    %v3492 = vunpack.c.l.b16 %v2698
    %v3493 = vunpack.c.h.b16 %v2698
    %v3494 = vunpack.c.l.b16 %v2699
    %v3495 = vunpack.c.h.b16 %v2699
    %v3496 = vunpack.c.l.b16 %v2700
    %v3497 = vunpack.c.h.b16 %v2700
    %v3498 = vunpack.c.l.b16 %v2701
    %v3499 = vunpack.c.h.b16 %v2701
    %v3500 = vunpack.c.l.b16 %v2702
    %v3501 = vunpack.c.h.b16 %v2702
    %v3502 = vunpack.c.l.b16 %v2703
    %v3503 = vunpack.c.h.b16 %v2703
    %v3504 = vunpack.c.l.b16 %v2704
    %v3505 = vunpack.c.h.b16 %v2704
    %v3506 = vunpack.c.l.b16 %v2705
    %v3507 = vunpack.c.h.b16 %v2705
    %v3508 = vunpack.c.l.b16 %v2706
    %v3509 = vunpack.c.h.b16 %v2706
    %v3510 = vunpack.c.l.b16 %v2707
    %v3511 = vunpack.c.h.b16 %v2707
    %v3512 = vunpack.c.l.b16 %v2708
    %v3513 = vunpack.c.h.b16 %v2708
    %v3514 = vunpack.c.l.b16 %v2709
    %v3515 = vunpack.c.h.b16 %v2709
    %v3516 = vunpack.c.l.b16 %v2710
    %v3517 = vunpack.c.h.b16 %v2710
    %v3518 = vunpack.c.l.b16 %v2711
    %v3519 = vunpack.c.h.b16 %v2711
    %v3520 = vunpack.c.l.b16 %v2712
    %v3521 = vunpack.c.h.b16 %v2712
    %v3522 = vunpack.c.l.b16 %v2713
    %v3523 = vunpack.c.h.b16 %v2713
    %v3524 = vpack.c.b16 %v3020, %v3012
    %v3525 = vpack.c.b16 %v3021, %v3013
    %v3526 = vpack.c.b16 %v3022, %v3014
    %v3527 = vpack.c.b16 %v3023, %v3015
    %v3528 = vpack.c.b16 %v3024, %v3016
    %v3529 = vpack.c.b16 %v3025, %v3017
    %v3530 = vpack.c.b16 %v3026, %v3018
    %v3531 = vpack.c.b16 %v3027, %v3019
    %v3532 = vpack.c.b16 %v3036, %v3028
    %v3533 = vpack.c.b16 %v3037, %v3029
    %v3534 = vpack.c.b16 %v3038, %v3030
    %v3535 = vpack.c.b16 %v3039, %v3031
    %v3536 = vpack.c.b16 %v3040, %v3032
    %v3537 = vpack.c.b16 %v3041, %v3033
    %v3538 = vpack.c.b16 %v3042, %v3034
    %v3539 = vpack.c.b16 %v3043, %v3035
    %v3540 = vpack.c.b16 %v3052, %v3044
    %v3541 = vpack.c.b16 %v3053, %v3045
    %v3542 = vpack.c.b16 %v3054, %v3046
    %v3543 = vpack.c.b16 %v3055, %v3047
    %v3544 = vpack.c.b16 %v3056, %v3048
    %v3545 = vpack.c.b16 %v3057, %v3049
    %v3546 = vpack.c.b16 %v3058, %v3050
    %v3547 = vpack.c.b16 %v3059, %v3051
    %v3548 = vpack.c.b16 %v3068, %v3060
    %v3549 = vpack.c.b16 %v3069, %v3061
    %v3550 = vpack.c.b16 %v3070, %v3062
    %v3551 = vpack.c.b16 %v3071, %v3063
    %v3552 = vpack.c.b16 %v3072, %v3064
    %v3553 = vpack.c.b16 %v3073, %v3065
    %v3554 = vpack.c.b16 %v3074, %v3066
    %v3555 = vpack.c.b16 %v3075, %v3067
    %v3556 = vpack.c.b16 %v3084, %v3076
    %v3557 = vpack.c.b16 %v3085, %v3077
    %v3558 = vpack.c.b16 %v3086, %v3078
    %v3559 = vpack.c.b16 %v3087, %v3079
    %v3560 = vpack.c.b16 %v3088, %v3080
    %v3561 = vpack.c.b16 %v3089, %v3081
    %v3562 = vpack.c.b16 %v3090, %v3082
    %v3563 = vpack.c.b16 %v3091, %v3083
    %v3564 = vpack.c.b16 %v3100, %v3092
    %v3565 = vpack.c.b16 %v3101, %v3093
    %v3566 = vpack.c.b16 %v3102, %v3094
    %v3567 = vpack.c.b16 %v3103, %v3095
    %v3568 = vpack.c.b16 %v3104, %v3096
    %v3569 = vpack.c.b16 %v3105, %v3097
    %v3570 = vpack.c.b16 %v3106, %v3098
    %v3571 = vpack.c.b16 %v3107, %v3099
    %v3572 = vpack.c.b16 %v3116, %v3108
    %v3573 = vpack.c.b16 %v3117, %v3109
    %v3574 = vpack.c.b16 %v3118, %v3110
    %v3575 = vpack.c.b16 %v3119, %v3111
    %v3576 = vpack.c.b16 %v3120, %v3112
    %v3577 = vpack.c.b16 %v3121, %v3113
    %v3578 = vpack.c.b16 %v3122, %v3114
    %v3579 = vpack.c.b16 %v3123, %v3115
    %v3580 = vpack.c.b16 %v3132, %v3124
    %v3581 = vpack.c.b16 %v3133, %v3125
    %v3582 = vpack.c.b16 %v3134, %v3126
    %v3583 = vpack.c.b16 %v3135, %v3127
    %v3584 = vpack.c.b16 %v3136, %v3128
    %v3585 = vpack.c.b16 %v3137, %v3129
    %v3586 = vpack.c.b16 %v3138, %v3130
    %v3587 = vpack.c.b16 %v3139, %v3131
    %v3588 = vpack.c.b16 %v3148, %v3140
    %v3589 = vpack.c.b16 %v3149, %v3141
    %v3590 = vpack.c.b16 %v3150, %v3142
    %v3591 = vpack.c.b16 %v3151, %v3143
    %v3592 = vpack.c.b16 %v3152, %v3144
    %v3593 = vpack.c.b16 %v3153, %v3145
    %v3594 = vpack.c.b16 %v3154, %v3146
    %v3595 = vpack.c.b16 %v3155, %v3147
    %v3596 = vpack.c.b16 %v3164, %v3156
    %v3597 = vpack.c.b16 %v3165, %v3157
    %v3598 = vpack.c.b16 %v3166, %v3158
    %v3599 = vpack.c.b16 %v3167, %v3159
    %v3600 = vpack.c.b16 %v3168, %v3160
    %v3601 = vpack.c.b16 %v3169, %v3161
    %v3602 = vpack.c.b16 %v3170, %v3162
    %v3603 = vpack.c.b16 %v3171, %v3163
    %v3604 = vpack.c.b16 %v3180, %v3172
    %v3605 = vpack.c.b16 %v3181, %v3173
    %v3606 = vpack.c.b16 %v3182, %v3174
    %v3607 = vpack.c.b16 %v3183, %v3175
    %v3608 = vpack.c.b16 %v3184, %v3176
    %v3609 = vpack.c.b16 %v3185, %v3177
    %v3610 = vpack.c.b16 %v3186, %v3178
    %v3611 = vpack.c.b16 %v3187, %v3179
    %v3612 = vpack.c.b16 %v3196, %v3188
    %v3613 = vpack.c.b16 %v3197, %v3189
    %v3614 = vpack.c.b16 %v3198, %v3190
    %v3615 = vpack.c.b16 %v3199, %v3191
    %v3616 = vpack.c.b16 %v3200, %v3192
    %v3617 = vpack.c.b16 %v3201, %v3193
    %v3618 = vpack.c.b16 %v3202, %v3194
    %v3619 = vpack.c.b16 %v3203, %v3195
    %v3620 = vpack.c.b16 %v3212, %v3204
    %v3621 = vpack.c.b16 %v3213, %v3205
    %v3622 = vpack.c.b16 %v3214, %v3206
    %v3623 = vpack.c.b16 %v3215, %v3207
    %v3624 = vpack.c.b16 %v3216, %v3208
    %v3625 = vpack.c.b16 %v3217, %v3209
    %v3626 = vpack.c.b16 %v3218, %v3210
    %v3627 = vpack.c.b16 %v3219, %v3211
    %v3628 = vpack.c.b16 %v3228, %v3220
    %v3629 = vpack.c.b16 %v3229, %v3221
    %v3630 = vpack.c.b16 %v3230, %v3222
    %v3631 = vpack.c.b16 %v3231, %v3223
    %v3632 = vpack.c.b16 %v3232, %v3224
    %v3633 = vpack.c.b16 %v3233, %v3225
    %v3634 = vpack.c.b16 %v3234, %v3226
    %v3635 = vpack.c.b16 %v3235, %v3227
    %v3636 = vpack.c.b16 %v3244, %v3236
    %v3637 = vpack.c.b16 %v3245, %v3237
    %v3638 = vpack.c.b16 %v3246, %v3238
    %v3639 = vpack.c.b16 %v3247, %v3239
    %v3640 = vpack.c.b16 %v3248, %v3240
    %v3641 = vpack.c.b16 %v3249, %v3241
    %v3642 = vpack.c.b16 %v3250, %v3242
    %v3643 = vpack.c.b16 %v3251, %v3243
    %v3644 = vpack.c.b16 %v3260, %v3252
    %v3645 = vpack.c.b16 %v3261, %v3253
    %v3646 = vpack.c.b16 %v3262, %v3254
    %v3647 = vpack.c.b16 %v3263, %v3255
    %v3648 = vpack.c.b16 %v3264, %v3256
    %v3649 = vpack.c.b16 %v3265, %v3257
    %v3650 = vpack.c.b16 %v3266, %v3258
    %v3651 = vpack.c.b16 %v3267, %v3259
    %v3652 = vpack.c.b16 %v3276, %v3268
    %v3653 = vpack.c.b16 %v3277, %v3269
    %v3654 = vpack.c.b16 %v3278, %v3270
    %v3655 = vpack.c.b16 %v3279, %v3271
    %v3656 = vpack.c.b16 %v3280, %v3272
    %v3657 = vpack.c.b16 %v3281, %v3273
    %v3658 = vpack.c.b16 %v3282, %v3274
    %v3659 = vpack.c.b16 %v3283, %v3275
    %v3660 = vpack.c.b16 %v3292, %v3284
    %v3661 = vpack.c.b16 %v3293, %v3285
    %v3662 = vpack.c.b16 %v3294, %v3286
    %v3663 = vpack.c.b16 %v3295, %v3287
    %v3664 = vpack.c.b16 %v3296, %v3288
    %v3665 = vpack.c.b16 %v3297, %v3289
    %v3666 = vpack.c.b16 %v3298, %v3290
    %v3667 = vpack.c.b16 %v3299, %v3291
    %v3668 = vpack.c.b16 %v3308, %v3300
    %v3669 = vpack.c.b16 %v3309, %v3301
    %v3670 = vpack.c.b16 %v3310, %v3302
    %v3671 = vpack.c.b16 %v3311, %v3303
    %v3672 = vpack.c.b16 %v3312, %v3304
    %v3673 = vpack.c.b16 %v3313, %v3305
    %v3674 = vpack.c.b16 %v3314, %v3306
    %v3675 = vpack.c.b16 %v3315, %v3307
    %v3676 = vpack.c.b16 %v3324, %v3316
    %v3677 = vpack.c.b16 %v3325, %v3317
    %v3678 = vpack.c.b16 %v3326, %v3318
    %v3679 = vpack.c.b16 %v3327, %v3319
    %v3680 = vpack.c.b16 %v3328, %v3320
    %v3681 = vpack.c.b16 %v3329, %v3321
    %v3682 = vpack.c.b16 %v3330, %v3322
    %v3683 = vpack.c.b16 %v3331, %v3323
    %v3684 = vpack.c.b16 %v3340, %v3332
    %v3685 = vpack.c.b16 %v3341, %v3333
    %v3686 = vpack.c.b16 %v3342, %v3334
    %v3687 = vpack.c.b16 %v3343, %v3335
    %v3688 = vpack.c.b16 %v3344, %v3336
    %v3689 = vpack.c.b16 %v3345, %v3337
    %v3690 = vpack.c.b16 %v3346, %v3338
    %v3691 = vpack.c.b16 %v3347, %v3339
    %v3692 = vpack.c.b16 %v3356, %v3348
    %v3693 = vpack.c.b16 %v3357, %v3349
    %v3694 = vpack.c.b16 %v3358, %v3350
    %v3695 = vpack.c.b16 %v3359, %v3351
    %v3696 = vpack.c.b16 %v3360, %v3352
    %v3697 = vpack.c.b16 %v3361, %v3353
    %v3698 = vpack.c.b16 %v3362, %v3354
    %v3699 = vpack.c.b16 %v3363, %v3355
    %v3700 = vpack.c.b16 %v3372, %v3364
    %v3701 = vpack.c.b16 %v3373, %v3365
    %v3702 = vpack.c.b16 %v3374, %v3366
    %v3703 = vpack.c.b16 %v3375, %v3367
    %v3704 = vpack.c.b16 %v3376, %v3368
    %v3705 = vpack.c.b16 %v3377, %v3369
    %v3706 = vpack.c.b16 %v3378, %v3370
    %v3707 = vpack.c.b16 %v3379, %v3371
    %v3708 = vpack.c.b16 %v3388, %v3380
    %v3709 = vpack.c.b16 %v3389, %v3381
    %v3710 = vpack.c.b16 %v3390, %v3382
    %v3711 = vpack.c.b16 %v3391, %v3383
    %v3712 = vpack.c.b16 %v3392, %v3384
    %v3713 = vpack.c.b16 %v3393, %v3385
    %v3714 = vpack.c.b16 %v3394, %v3386
    %v3715 = vpack.c.b16 %v3395, %v3387
    %v3716 = vpack.c.b16 %v3404, %v3396
    %v3717 = vpack.c.b16 %v3405, %v3397
    %v3718 = vpack.c.b16 %v3406, %v3398
    %v3719 = vpack.c.b16 %v3407, %v3399
    %v3720 = vpack.c.b16 %v3408, %v3400
    %v3721 = vpack.c.b16 %v3409, %v3401
    %v3722 = vpack.c.b16 %v3410, %v3402
    %v3723 = vpack.c.b16 %v3411, %v3403
    %v3724 = vpack.c.b16 %v3420, %v3412
    %v3725 = vpack.c.b16 %v3421, %v3413
    %v3726 = vpack.c.b16 %v3422, %v3414
    %v3727 = vpack.c.b16 %v3423, %v3415
    %v3728 = vpack.c.b16 %v3424, %v3416
    %v3729 = vpack.c.b16 %v3425, %v3417
    %v3730 = vpack.c.b16 %v3426, %v3418
    %v3731 = vpack.c.b16 %v3427, %v3419
    %v3732 = vpack.c.b16 %v3436, %v3428
    %v3733 = vpack.c.b16 %v3437, %v3429
    %v3734 = vpack.c.b16 %v3438, %v3430
    %v3735 = vpack.c.b16 %v3439, %v3431
    %v3736 = vpack.c.b16 %v3440, %v3432
    %v3737 = vpack.c.b16 %v3441, %v3433
    %v3738 = vpack.c.b16 %v3442, %v3434
    %v3739 = vpack.c.b16 %v3443, %v3435
    %v3740 = vpack.c.b16 %v3452, %v3444
    %v3741 = vpack.c.b16 %v3453, %v3445
    %v3742 = vpack.c.b16 %v3454, %v3446
    %v3743 = vpack.c.b16 %v3455, %v3447
    %v3744 = vpack.c.b16 %v3456, %v3448
    %v3745 = vpack.c.b16 %v3457, %v3449
    %v3746 = vpack.c.b16 %v3458, %v3450
    %v3747 = vpack.c.b16 %v3459, %v3451
    %v3748 = vpack.c.b16 %v3468, %v3460
    %v3749 = vpack.c.b16 %v3469, %v3461
    %v3750 = vpack.c.b16 %v3470, %v3462
    %v3751 = vpack.c.b16 %v3471, %v3463
    %v3752 = vpack.c.b16 %v3472, %v3464
    %v3753 = vpack.c.b16 %v3473, %v3465
    %v3754 = vpack.c.b16 %v3474, %v3466
    %v3755 = vpack.c.b16 %v3475, %v3467
    %v3756 = vpack.c.b16 %v3484, %v3476
    %v3757 = vpack.c.b16 %v3485, %v3477
    %v3758 = vpack.c.b16 %v3486, %v3478
    %v3759 = vpack.c.b16 %v3487, %v3479
    %v3760 = vpack.c.b16 %v3488, %v3480
    %v3761 = vpack.c.b16 %v3489, %v3481
    %v3762 = vpack.c.b16 %v3490, %v3482
    %v3763 = vpack.c.b16 %v3491, %v3483
    %v3764 = vpack.c.b16 %v3500, %v3492
    %v3765 = vpack.c.b16 %v3501, %v3493
    %v3766 = vpack.c.b16 %v3502, %v3494
    %v3767 = vpack.c.b16 %v3503, %v3495
    %v3768 = vpack.c.b16 %v3504, %v3496
    %v3769 = vpack.c.b16 %v3505, %v3497
    %v3770 = vpack.c.b16 %v3506, %v3498
    %v3771 = vpack.c.b16 %v3507, %v3499
    %v3772 = vpack.c.b16 %v3516, %v3508
    %v3773 = vpack.c.b16 %v3517, %v3509
    %v3774 = vpack.c.b16 %v3518, %v3510
    %v3775 = vpack.c.b16 %v3519, %v3511
    %v3776 = vpack.c.b16 %v3520, %v3512
    %v3777 = vpack.c.b16 %v3521, %v3513
    %v3778 = vpack.c.b16 %v3522, %v3514
    %v3779 = vpack.c.b16 %v3523, %v3515
    %4036 = vmatprep.subr.bf16.mxu0 %v3581
    %4037 = vmatpush1.bf16.msra.mxu0 %v3580
    %4038 = vmatprep.subr.bf16.mxu0 %v3573
    %4039 = vmatpush1.bf16.msra.mxu0 %v3572
    %4040 = vmatprep.subr.bf16.mxu0 %v3565
    %4041 = vmatpush1.bf16.msra.mxu0 %v3564
    %4042 = vmatprep.subr.bf16.mxu0 %v3557
    %4043 = vmatpush1.bf16.msra.mxu0 %v3556
    %4044 = vmatprep.subr.bf16.mxu0 %v3549
    %4045 = vmatpush1.bf16.msra.mxu0 %v3548
    %4046 = vmatprep.subr.bf16.mxu0 %v3541
    %4047 = vmatpush1.bf16.msra.mxu0 %v3540
    %4048 = vmatprep.subr.bf16.mxu0 %v3533
    %4049 = vmatpush1.bf16.msra.mxu0 %v3532
    %4050 = vmatprep.subr.bf16.mxu0 %v3525
    %4051 = vmatpush1.bf16.msra.mxu0 %v3524
    %4052 = vmatprep.subr.bf16.mxu0 %v3645
    %4053 = vmatpush2.bf16.msra.mxu0 %v3644
    %4054 = vmatprep.subr.bf16.mxu0 %v3637
    %4055 = vmatpush2.bf16.msra.mxu0 %v3636
    %4056 = vmatprep.subr.bf16.mxu0 %v3629
    %4057 = vmatpush2.bf16.msra.mxu0 %v3628
    %4058 = vmatprep.subr.bf16.mxu0 %v3621
    %4059 = vmatpush2.bf16.msra.mxu0 %v3620
    %4060 = vmatprep.subr.bf16.mxu0 %v3613
    %4061 = vmatpush2.bf16.msra.mxu0 %v3612
    %4062 = vmatprep.subr.bf16.mxu0 %v3605
    %4063 = vmatpush2.bf16.msra.mxu0 %v3604
    %4064 = vmatprep.subr.bf16.mxu0 %v3597
    %4065 = vmatpush2.bf16.msra.mxu0 %v3596
    %4066 = vmatprep.subr.bf16.mxu0 %v3589
    %4067 = vmatpush2.bf16.msra.mxu0 %v3588
    %4068 = vmatprep.mubr.bf16.mxu0 %v2439
    %4069 = vmatmul.mubr.bf16.gmra.mxu0 %v2438
    %v4070 = vpop.f32.mrf.mxu0
    %v4071 = vadd.f32 %v2719, %v4070
    %v4072 = vpop.f32.mrf.mxu0
    %v4073 = vadd.f32 %v2723, %v4072
    %v4074 = vpop.f32.mrf.mxu0
    %v4075 = vadd.f32 %v2719, %v4074
    %v4076 = vpop.f32.mrf.mxu0
    %v4077 = vadd.f32 %v2723, %v4076
    %4078 = vmatprep.mubr.bf16.mxu0 %v2443
    %4079 = vmatmul.mubr.bf16.gmra.mxu0 %v2442
    %v4080 = vpop.f32.mrf.mxu0
    %v4081 = vadd.f32 %v2719, %v4080
    %v4082 = vpop.f32.mrf.mxu0
    %v4083 = vadd.f32 %v2723, %v4082
    %v4084 = vpop.f32.mrf.mxu0
    %v4085 = vadd.f32 %v2719, %v4084
    %v4086 = vpop.f32.mrf.mxu0
    %v4087 = vadd.f32 %v2723, %v4086
    %4088 = vmatprep.mubr.bf16.mxu0 %v2447
    %4089 = vmatmul.mubr.bf16.gmra.mxu0 %v2446
    %v4090 = vpop.f32.mrf.mxu0
    %v4091 = vadd.f32 %v2719, %v4090
    %v4092 = vpop.f32.mrf.mxu0
    %v4093 = vadd.f32 %v2723, %v4092
    %v4094 = vpop.f32.mrf.mxu0
    %v4095 = vadd.f32 %v2719, %v4094
    %v4096 = vpop.f32.mrf.mxu0
    %v4097 = vadd.f32 %v2723, %v4096
    %4098 = vmatprep.mubr.bf16.mxu0 %v2451
    %4099 = vmatmul.mubr.bf16.gmra.mxu0 %v2450
    %v4100 = vpop.f32.mrf.mxu0
    %v4101 = vadd.f32 %v2719, %v4100
    %v4102 = vpop.f32.mrf.mxu0
    %v4103 = vadd.f32 %v2723, %v4102
    %v4104 = vpop.f32.mrf.mxu0
    %v4105 = vadd.f32 %v2719, %v4104
    %v4106 = vpop.f32.mrf.mxu0
    %v4107 = vadd.f32 %v2723, %v4106
    %4108 = vdwg.mxu0
    %4109 = vmatprep.subr.bf16.mxu0 %v3709
    %4110 = vmatpush1.bf16.msra.mxu0 %v3708
    %4111 = vmatprep.subr.bf16.mxu0 %v3701
    %4112 = vmatpush1.bf16.msra.mxu0 %v3700
    %4113 = vmatprep.subr.bf16.mxu0 %v3693
    %4114 = vmatpush1.bf16.msra.mxu0 %v3692
    %4115 = vmatprep.subr.bf16.mxu0 %v3685
    %4116 = vmatpush1.bf16.msra.mxu0 %v3684
    %4117 = vmatprep.subr.bf16.mxu0 %v3677
    %4118 = vmatpush1.bf16.msra.mxu0 %v3676
    %4119 = vmatprep.subr.bf16.mxu0 %v3669
    %4120 = vmatpush1.bf16.msra.mxu0 %v3668
    %4121 = vmatprep.subr.bf16.mxu0 %v3661
    %4122 = vmatpush1.bf16.msra.mxu0 %v3660
    %4123 = vmatprep.subr.bf16.mxu0 %v3653
    %4124 = vmatpush1.bf16.msra.mxu0 %v3652
    %4125 = vmatprep.subr.bf16.mxu0 %v3773
    %4126 = vmatpush2.bf16.msra.mxu0 %v3772
    %4127 = vmatprep.subr.bf16.mxu0 %v3765
    %4128 = vmatpush2.bf16.msra.mxu0 %v3764
    %4129 = vmatprep.subr.bf16.mxu0 %v3757
    %4130 = vmatpush2.bf16.msra.mxu0 %v3756
    %4131 = vmatprep.subr.bf16.mxu0 %v3749
    %4132 = vmatpush2.bf16.msra.mxu0 %v3748
    %4133 = vmatprep.subr.bf16.mxu0 %v3741
    %4134 = vmatpush2.bf16.msra.mxu0 %v3740
    %4135 = vmatprep.subr.bf16.mxu0 %v3733
    %4136 = vmatpush2.bf16.msra.mxu0 %v3732
    %4137 = vmatprep.subr.bf16.mxu0 %v3725
    %4138 = vmatpush2.bf16.msra.mxu0 %v3724
    %4139 = vmatprep.subr.bf16.mxu0 %v3717
    %4140 = vmatpush2.bf16.msra.mxu0 %v3716
    %4141 = vmatprep.mubr.bf16.mxu0 %v2441
    %4142 = vmatmul.mubr.bf16.gmra.mxu0 %v2440
    %v4143 = vpop.f32.mrf.mxu0
    %v4144 = vadd.f32 %v4071, %v4143
    %v4145 = vpop.f32.mrf.mxu0
    %v4146 = vadd.f32 %v4073, %v4145
    %v4147 = vpop.f32.mrf.mxu0
    %v4148 = vadd.f32 %v4075, %v4147
    %v4149 = vpop.f32.mrf.mxu0
    %v4150 = vadd.f32 %v4077, %v4149
    %4151 = vmatprep.mubr.bf16.mxu0 %v2445
    %4152 = vmatmul.mubr.bf16.gmra.mxu0 %v2444
    %v4153 = vpop.f32.mrf.mxu0
    %v4154 = vadd.f32 %v4081, %v4153
    %v4155 = vpop.f32.mrf.mxu0
    %v4156 = vadd.f32 %v4083, %v4155
    %v4157 = vpop.f32.mrf.mxu0
    %v4158 = vadd.f32 %v4085, %v4157
    %v4159 = vpop.f32.mrf.mxu0
    %v4160 = vadd.f32 %v4087, %v4159
    %4161 = vmatprep.mubr.bf16.mxu0 %v2449
    %4162 = vmatmul.mubr.bf16.gmra.mxu0 %v2448
    %v4163 = vpop.f32.mrf.mxu0
    %v4164 = vadd.f32 %v4091, %v4163
    %v4165 = vpop.f32.mrf.mxu0
    %v4166 = vadd.f32 %v4093, %v4165
    %v4167 = vpop.f32.mrf.mxu0
    %v4168 = vadd.f32 %v4095, %v4167
    %v4169 = vpop.f32.mrf.mxu0
    %v4170 = vadd.f32 %v4097, %v4169
    %4171 = vmatprep.mubr.bf16.mxu0 %v2453
    %4172 = vmatmul.mubr.bf16.gmra.mxu0 %v2452
    %v4173 = vpop.f32.mrf.mxu0
    %v4174 = vadd.f32 %v4101, %v4173
    %v4175 = vpop.f32.mrf.mxu0
    %v4176 = vadd.f32 %v4103, %v4175
    %v4177 = vpop.f32.mrf.mxu0
    %v4178 = vadd.f32 %v4105, %v4177
    %v4179 = vpop.f32.mrf.mxu0
    %v4180 = vadd.f32 %v4107, %v4179
    %4181 = vdwg.mxu0
    %4182 = vmatprep.subr.bf16.mxu0 %v3583
    %4183 = vmatpush1.bf16.msra.mxu0 %v3582
    %4184 = vmatprep.subr.bf16.mxu0 %v3575
    %4185 = vmatpush1.bf16.msra.mxu0 %v3574
    %4186 = vmatprep.subr.bf16.mxu0 %v3567
    %4187 = vmatpush1.bf16.msra.mxu0 %v3566
    %4188 = vmatprep.subr.bf16.mxu0 %v3559
    %4189 = vmatpush1.bf16.msra.mxu0 %v3558
    %4190 = vmatprep.subr.bf16.mxu0 %v3551
    %4191 = vmatpush1.bf16.msra.mxu0 %v3550
    %4192 = vmatprep.subr.bf16.mxu0 %v3543
    %4193 = vmatpush1.bf16.msra.mxu0 %v3542
    %4194 = vmatprep.subr.bf16.mxu0 %v3535
    %4195 = vmatpush1.bf16.msra.mxu0 %v3534
    %4196 = vmatprep.subr.bf16.mxu0 %v3527
    %4197 = vmatpush1.bf16.msra.mxu0 %v3526
    %4198 = vmatprep.subr.bf16.mxu0 %v3647
    %4199 = vmatpush2.bf16.msra.mxu0 %v3646
    %4200 = vmatprep.subr.bf16.mxu0 %v3639
    %4201 = vmatpush2.bf16.msra.mxu0 %v3638
    %4202 = vmatprep.subr.bf16.mxu0 %v3631
    %4203 = vmatpush2.bf16.msra.mxu0 %v3630
    %4204 = vmatprep.subr.bf16.mxu0 %v3623
    %4205 = vmatpush2.bf16.msra.mxu0 %v3622
    %4206 = vmatprep.subr.bf16.mxu0 %v3615
    %4207 = vmatpush2.bf16.msra.mxu0 %v3614
    %4208 = vmatprep.subr.bf16.mxu0 %v3607
    %4209 = vmatpush2.bf16.msra.mxu0 %v3606
    %4210 = vmatprep.subr.bf16.mxu0 %v3599
    %4211 = vmatpush2.bf16.msra.mxu0 %v3598
    %4212 = vmatprep.subr.bf16.mxu0 %v3591
    %4213 = vmatpush2.bf16.msra.mxu0 %v3590
    %4214 = vmatprep.mubr.bf16.mxu0 %v2439
    %4215 = vmatmul.mubr.bf16.gmra.mxu0 %v2438
    %v4216 = vpop.f32.mrf.mxu0
    %v4217 = vadd.f32 %v2727, %v4216
    %v4218 = vpop.f32.mrf.mxu0
    %v4219 = vadd.f32 %v2731, %v4218
    %v4220 = vpop.f32.mrf.mxu0
    %v4221 = vadd.f32 %v2727, %v4220
    %v4222 = vpop.f32.mrf.mxu0
    %v4223 = vadd.f32 %v2731, %v4222
    %4224 = vmatprep.mubr.bf16.mxu0 %v2443
    %4225 = vmatmul.mubr.bf16.gmra.mxu0 %v2442
    %v4226 = vpop.f32.mrf.mxu0
    %v4227 = vadd.f32 %v2727, %v4226
    %v4228 = vpop.f32.mrf.mxu0
    %v4229 = vadd.f32 %v2731, %v4228
    %v4230 = vpop.f32.mrf.mxu0
    %v4231 = vadd.f32 %v2727, %v4230
    %v4232 = vpop.f32.mrf.mxu0
    %v4233 = vadd.f32 %v2731, %v4232
    %4234 = vmatprep.mubr.bf16.mxu0 %v2447
    %4235 = vmatmul.mubr.bf16.gmra.mxu0 %v2446
    %v4236 = vpop.f32.mrf.mxu0
    %v4237 = vadd.f32 %v2727, %v4236
    %v4238 = vpop.f32.mrf.mxu0
    %v4239 = vadd.f32 %v2731, %v4238
    %v4240 = vpop.f32.mrf.mxu0
    %v4241 = vadd.f32 %v2727, %v4240
    %v4242 = vpop.f32.mrf.mxu0
    %v4243 = vadd.f32 %v2731, %v4242
    %4244 = vmatprep.mubr.bf16.mxu0 %v2451
    %4245 = vmatmul.mubr.bf16.gmra.mxu0 %v2450
    %v4246 = vpop.f32.mrf.mxu0
    %v4247 = vadd.f32 %v2727, %v4246
    %v4248 = vpop.f32.mrf.mxu0
    %v4249 = vadd.f32 %v2731, %v4248
    %v4250 = vpop.f32.mrf.mxu0
    %v4251 = vadd.f32 %v2727, %v4250
    %v4252 = vpop.f32.mrf.mxu0
    %v4253 = vadd.f32 %v2731, %v4252
    %4254 = vdwg.mxu0
    %4255 = vmatprep.subr.bf16.mxu0 %v3711
    %4256 = vmatpush1.bf16.msra.mxu0 %v3710
    %4257 = vmatprep.subr.bf16.mxu0 %v3703
    %4258 = vmatpush1.bf16.msra.mxu0 %v3702
    %4259 = vmatprep.subr.bf16.mxu0 %v3695
    %4260 = vmatpush1.bf16.msra.mxu0 %v3694
    %4261 = vmatprep.subr.bf16.mxu0 %v3687
    %4262 = vmatpush1.bf16.msra.mxu0 %v3686
    %4263 = vmatprep.subr.bf16.mxu0 %v3679
    %4264 = vmatpush1.bf16.msra.mxu0 %v3678
    %4265 = vmatprep.subr.bf16.mxu0 %v3671
    %4266 = vmatpush1.bf16.msra.mxu0 %v3670
    %4267 = vmatprep.subr.bf16.mxu0 %v3663
    %4268 = vmatpush1.bf16.msra.mxu0 %v3662
    %4269 = vmatprep.subr.bf16.mxu0 %v3655
    %4270 = vmatpush1.bf16.msra.mxu0 %v3654
    %4271 = vmatprep.subr.bf16.mxu0 %v3775
    %4272 = vmatpush2.bf16.msra.mxu0 %v3774
    %4273 = vmatprep.subr.bf16.mxu0 %v3767
    %4274 = vmatpush2.bf16.msra.mxu0 %v3766
    %4275 = vmatprep.subr.bf16.mxu0 %v3759
    %4276 = vmatpush2.bf16.msra.mxu0 %v3758
    %4277 = vmatprep.subr.bf16.mxu0 %v3751
    %4278 = vmatpush2.bf16.msra.mxu0 %v3750
    %4279 = vmatprep.subr.bf16.mxu0 %v3743
    %4280 = vmatpush2.bf16.msra.mxu0 %v3742
    %4281 = vmatprep.subr.bf16.mxu0 %v3735
    %4282 = vmatpush2.bf16.msra.mxu0 %v3734
    %4283 = vmatprep.subr.bf16.mxu0 %v3727
    %4284 = vmatpush2.bf16.msra.mxu0 %v3726
    %4285 = vmatprep.subr.bf16.mxu0 %v3719
    %4286 = vmatpush2.bf16.msra.mxu0 %v3718
    %4287 = vmatprep.mubr.bf16.mxu0 %v2441
    %4288 = vmatmul.mubr.bf16.gmra.mxu0 %v2440
    %v4289 = vpop.f32.mrf.mxu0
    %v4290 = vadd.f32 %v4217, %v4289
    %v4291 = vpop.f32.mrf.mxu0
    %v4292 = vadd.f32 %v4219, %v4291
    %v4293 = vpop.f32.mrf.mxu0
    %v4294 = vadd.f32 %v4221, %v4293
    %v4295 = vpop.f32.mrf.mxu0
    %v4296 = vadd.f32 %v4223, %v4295
    %4297 = vmatprep.mubr.bf16.mxu0 %v2445
    %4298 = vmatmul.mubr.bf16.gmra.mxu0 %v2444
    %v4299 = vpop.f32.mrf.mxu0
    %v4300 = vadd.f32 %v4227, %v4299
    %v4301 = vpop.f32.mrf.mxu0
    %v4302 = vadd.f32 %v4229, %v4301
    %v4303 = vpop.f32.mrf.mxu0
    %v4304 = vadd.f32 %v4231, %v4303
    %v4305 = vpop.f32.mrf.mxu0
    %v4306 = vadd.f32 %v4233, %v4305
    %4307 = vmatprep.mubr.bf16.mxu0 %v2449
    %4308 = vmatmul.mubr.bf16.gmra.mxu0 %v2448
    %v4309 = vpop.f32.mrf.mxu0
    %v4310 = vadd.f32 %v4237, %v4309
    %v4311 = vpop.f32.mrf.mxu0
    %v4312 = vadd.f32 %v4239, %v4311
    %v4313 = vpop.f32.mrf.mxu0
    %v4314 = vadd.f32 %v4241, %v4313
    %v4315 = vpop.f32.mrf.mxu0
    %v4316 = vadd.f32 %v4243, %v4315
    %4317 = vmatprep.mubr.bf16.mxu0 %v2453
    %4318 = vmatmul.mubr.bf16.gmra.mxu0 %v2452
    %v4319 = vpop.f32.mrf.mxu0
    %v4320 = vadd.f32 %v4247, %v4319
    %v4321 = vpop.f32.mrf.mxu0
    %v4322 = vadd.f32 %v4249, %v4321
    %v4323 = vpop.f32.mrf.mxu0
    %v4324 = vadd.f32 %v4251, %v4323
    %v4325 = vpop.f32.mrf.mxu0
    %v4326 = vadd.f32 %v4253, %v4325
    %4327 = vdwg.mxu0
    %4328 = vmatprep.subr.bf16.mxu0 %v3585
    %4329 = vmatpush1.bf16.msra.mxu0 %v3584
    %4330 = vmatprep.subr.bf16.mxu0 %v3577
    %4331 = vmatpush1.bf16.msra.mxu0 %v3576
    %4332 = vmatprep.subr.bf16.mxu0 %v3569
    %4333 = vmatpush1.bf16.msra.mxu0 %v3568
    %4334 = vmatprep.subr.bf16.mxu0 %v3561
    %4335 = vmatpush1.bf16.msra.mxu0 %v3560
    %4336 = vmatprep.subr.bf16.mxu0 %v3553
    %4337 = vmatpush1.bf16.msra.mxu0 %v3552
    %4338 = vmatprep.subr.bf16.mxu0 %v3545
    %4339 = vmatpush1.bf16.msra.mxu0 %v3544
    %4340 = vmatprep.subr.bf16.mxu0 %v3537
    %4341 = vmatpush1.bf16.msra.mxu0 %v3536
    %4342 = vmatprep.subr.bf16.mxu0 %v3529
    %4343 = vmatpush1.bf16.msra.mxu0 %v3528
    %4344 = vmatprep.subr.bf16.mxu0 %v3649
    %4345 = vmatpush2.bf16.msra.mxu0 %v3648
    %4346 = vmatprep.subr.bf16.mxu0 %v3641
    %4347 = vmatpush2.bf16.msra.mxu0 %v3640
    %4348 = vmatprep.subr.bf16.mxu0 %v3633
    %4349 = vmatpush2.bf16.msra.mxu0 %v3632
    %4350 = vmatprep.subr.bf16.mxu0 %v3625
    %4351 = vmatpush2.bf16.msra.mxu0 %v3624
    %4352 = vmatprep.subr.bf16.mxu0 %v3617
    %4353 = vmatpush2.bf16.msra.mxu0 %v3616
    %4354 = vmatprep.subr.bf16.mxu0 %v3609
    %4355 = vmatpush2.bf16.msra.mxu0 %v3608
    %4356 = vmatprep.subr.bf16.mxu0 %v3601
    %4357 = vmatpush2.bf16.msra.mxu0 %v3600
    %4358 = vmatprep.subr.bf16.mxu0 %v3593
    %4359 = vmatpush2.bf16.msra.mxu0 %v3592
    %4360 = vmatprep.mubr.bf16.mxu0 %v2439
    %4361 = vmatmul.mubr.bf16.gmra.mxu0 %v2438
    %v4362 = vpop.f32.mrf.mxu0
    %v4363 = vadd.f32 %v2735, %v4362
    %v4364 = vpop.f32.mrf.mxu0
    %v4365 = vadd.f32 %v2739, %v4364
    %v4366 = vpop.f32.mrf.mxu0
    %v4367 = vadd.f32 %v2735, %v4366
    %v4368 = vpop.f32.mrf.mxu0
    %v4369 = vadd.f32 %v2739, %v4368
    %4370 = vmatprep.mubr.bf16.mxu0 %v2443
    %4371 = vmatmul.mubr.bf16.gmra.mxu0 %v2442
    %v4372 = vpop.f32.mrf.mxu0
    %v4373 = vadd.f32 %v2735, %v4372
    %v4374 = vpop.f32.mrf.mxu0
    %v4375 = vadd.f32 %v2739, %v4374
    %v4376 = vpop.f32.mrf.mxu0
    %v4377 = vadd.f32 %v2735, %v4376
    %v4378 = vpop.f32.mrf.mxu0
    %v4379 = vadd.f32 %v2739, %v4378
    %4380 = vmatprep.mubr.bf16.mxu0 %v2447
    %4381 = vmatmul.mubr.bf16.gmra.mxu0 %v2446
    %v4382 = vpop.f32.mrf.mxu0
    %v4383 = vadd.f32 %v2735, %v4382
    %v4384 = vpop.f32.mrf.mxu0
    %v4385 = vadd.f32 %v2739, %v4384
    %v4386 = vpop.f32.mrf.mxu0
    %v4387 = vadd.f32 %v2735, %v4386
    %v4388 = vpop.f32.mrf.mxu0
    %v4389 = vadd.f32 %v2739, %v4388
    %4390 = vmatprep.mubr.bf16.mxu0 %v2451
    %4391 = vmatmul.mubr.bf16.gmra.mxu0 %v2450
    %v4392 = vpop.f32.mrf.mxu0
    %v4393 = vadd.f32 %v2735, %v4392
    %v4394 = vpop.f32.mrf.mxu0
    %v4395 = vadd.f32 %v2739, %v4394
    %v4396 = vpop.f32.mrf.mxu0
    %v4397 = vadd.f32 %v2735, %v4396
    %v4398 = vpop.f32.mrf.mxu0
    %v4399 = vadd.f32 %v2739, %v4398
    %4400 = vdwg.mxu0
    %4401 = vmatprep.subr.bf16.mxu0 %v3713
    %4402 = vmatpush1.bf16.msra.mxu0 %v3712
    %4403 = vmatprep.subr.bf16.mxu0 %v3705
    %4404 = vmatpush1.bf16.msra.mxu0 %v3704
    %4405 = vmatprep.subr.bf16.mxu0 %v3697
    %4406 = vmatpush1.bf16.msra.mxu0 %v3696
    %4407 = vmatprep.subr.bf16.mxu0 %v3689
    %4408 = vmatpush1.bf16.msra.mxu0 %v3688
    %4409 = vmatprep.subr.bf16.mxu0 %v3681
    %4410 = vmatpush1.bf16.msra.mxu0 %v3680
    %4411 = vmatprep.subr.bf16.mxu0 %v3673
    %4412 = vmatpush1.bf16.msra.mxu0 %v3672
    %4413 = vmatprep.subr.bf16.mxu0 %v3665
    %4414 = vmatpush1.bf16.msra.mxu0 %v3664
    %4415 = vmatprep.subr.bf16.mxu0 %v3657
    %4416 = vmatpush1.bf16.msra.mxu0 %v3656
    %4417 = vmatprep.subr.bf16.mxu0 %v3777
    %4418 = vmatpush2.bf16.msra.mxu0 %v3776
    %4419 = vmatprep.subr.bf16.mxu0 %v3769
    %4420 = vmatpush2.bf16.msra.mxu0 %v3768
    %4421 = vmatprep.subr.bf16.mxu0 %v3761
    %4422 = vmatpush2.bf16.msra.mxu0 %v3760
    %4423 = vmatprep.subr.bf16.mxu0 %v3753
    %4424 = vmatpush2.bf16.msra.mxu0 %v3752
    %4425 = vmatprep.subr.bf16.mxu0 %v3745
    %4426 = vmatpush2.bf16.msra.mxu0 %v3744
    %4427 = vmatprep.subr.bf16.mxu0 %v3737
    %4428 = vmatpush2.bf16.msra.mxu0 %v3736
    %4429 = vmatprep.subr.bf16.mxu0 %v3729
    %4430 = vmatpush2.bf16.msra.mxu0 %v3728
    %4431 = vmatprep.subr.bf16.mxu0 %v3721
    %4432 = vmatpush2.bf16.msra.mxu0 %v3720
    %4433 = vmatprep.mubr.bf16.mxu0 %v2441
    %4434 = vmatmul.mubr.bf16.gmra.mxu0 %v2440
    %v4435 = vpop.f32.mrf.mxu0
    %v4436 = vadd.f32 %v4363, %v4435
    %v4437 = vpop.f32.mrf.mxu0
    %v4438 = vadd.f32 %v4365, %v4437
    %v4439 = vpop.f32.mrf.mxu0
    %v4440 = vadd.f32 %v4367, %v4439
    %v4441 = vpop.f32.mrf.mxu0
    %v4442 = vadd.f32 %v4369, %v4441
    %4443 = vmatprep.mubr.bf16.mxu0 %v2445
    %4444 = vmatmul.mubr.bf16.gmra.mxu0 %v2444
    %v4445 = vpop.f32.mrf.mxu0
    %v4446 = vadd.f32 %v4373, %v4445
    %v4447 = vpop.f32.mrf.mxu0
    %v4448 = vadd.f32 %v4375, %v4447
    %v4449 = vpop.f32.mrf.mxu0
    %v4450 = vadd.f32 %v4377, %v4449
    %v4451 = vpop.f32.mrf.mxu0
    %v4452 = vadd.f32 %v4379, %v4451
    %4453 = vmatprep.mubr.bf16.mxu0 %v2449
    %4454 = vmatmul.mubr.bf16.gmra.mxu0 %v2448
    %v4455 = vpop.f32.mrf.mxu0
    %v4456 = vadd.f32 %v4383, %v4455
    %v4457 = vpop.f32.mrf.mxu0
    %v4458 = vadd.f32 %v4385, %v4457
    %v4459 = vpop.f32.mrf.mxu0
    %v4460 = vadd.f32 %v4387, %v4459
    %v4461 = vpop.f32.mrf.mxu0
    %v4462 = vadd.f32 %v4389, %v4461
    %4463 = vmatprep.mubr.bf16.mxu0 %v2453
    %4464 = vmatmul.mubr.bf16.gmra.mxu0 %v2452
    %v4465 = vpop.f32.mrf.mxu0
    %v4466 = vadd.f32 %v4393, %v4465
    %v4467 = vpop.f32.mrf.mxu0
    %v4468 = vadd.f32 %v4395, %v4467
    %v4469 = vpop.f32.mrf.mxu0
    %v4470 = vadd.f32 %v4397, %v4469
    %v4471 = vpop.f32.mrf.mxu0
    %v4472 = vadd.f32 %v4399, %v4471
    %4473 = vdwg.mxu0
    %4474 = vmatprep.subr.bf16.mxu0 %v3587
    %4475 = vmatpush1.bf16.msra.mxu0 %v3586
    %4476 = vmatprep.subr.bf16.mxu0 %v3579
    %4477 = vmatpush1.bf16.msra.mxu0 %v3578
    %4478 = vmatprep.subr.bf16.mxu0 %v3571
    %4479 = vmatpush1.bf16.msra.mxu0 %v3570
    %4480 = vmatprep.subr.bf16.mxu0 %v3563
    %4481 = vmatpush1.bf16.msra.mxu0 %v3562
    %4482 = vmatprep.subr.bf16.mxu0 %v3555
    %4483 = vmatpush1.bf16.msra.mxu0 %v3554
    %4484 = vmatprep.subr.bf16.mxu0 %v3547
    %4485 = vmatpush1.bf16.msra.mxu0 %v3546
    %4486 = vmatprep.subr.bf16.mxu0 %v3539
    %4487 = vmatpush1.bf16.msra.mxu0 %v3538
    %4488 = vmatprep.subr.bf16.mxu0 %v3531
    %4489 = vmatpush1.bf16.msra.mxu0 %v3530
    %4490 = vmatprep.subr.bf16.mxu0 %v3651
    %4491 = vmatpush2.bf16.msra.mxu0 %v3650
    %4492 = vmatprep.subr.bf16.mxu0 %v3643
    %4493 = vmatpush2.bf16.msra.mxu0 %v3642
    %4494 = vmatprep.subr.bf16.mxu0 %v3635
    %4495 = vmatpush2.bf16.msra.mxu0 %v3634
    %4496 = vmatprep.subr.bf16.mxu0 %v3627
    %4497 = vmatpush2.bf16.msra.mxu0 %v3626
    %4498 = vmatprep.subr.bf16.mxu0 %v3619
    %4499 = vmatpush2.bf16.msra.mxu0 %v3618
    %4500 = vmatprep.subr.bf16.mxu0 %v3611
    %4501 = vmatpush2.bf16.msra.mxu0 %v3610
    %4502 = vmatprep.subr.bf16.mxu0 %v3603
    %4503 = vmatpush2.bf16.msra.mxu0 %v3602
    %4504 = vmatprep.subr.bf16.mxu0 %v3595
    %4505 = vmatpush2.bf16.msra.mxu0 %v3594
    %4506 = vmatprep.mubr.bf16.mxu0 %v2439
    %4507 = vmatmul.mubr.bf16.gmra.mxu0 %v2438
    %v4508 = vpop.f32.mrf.mxu0
    %v4509 = vadd.f32 %v2743, %v4508
    %v4510 = vpop.f32.mrf.mxu0
    %v4511 = vadd.f32 %v2747, %v4510
    %v4512 = vpop.f32.mrf.mxu0
    %v4513 = vadd.f32 %v2743, %v4512
    %v4514 = vpop.f32.mrf.mxu0
    %v4515 = vadd.f32 %v2747, %v4514
    %4516 = vmatprep.mubr.bf16.mxu0 %v2443
    %4517 = vmatmul.mubr.bf16.gmra.mxu0 %v2442
    %v4518 = vpop.f32.mrf.mxu0
    %v4519 = vadd.f32 %v2743, %v4518
    %v4520 = vpop.f32.mrf.mxu0
    %v4521 = vadd.f32 %v2747, %v4520
    %v4522 = vpop.f32.mrf.mxu0
    %v4523 = vadd.f32 %v2743, %v4522
    %v4524 = vpop.f32.mrf.mxu0
    %v4525 = vadd.f32 %v2747, %v4524
    %4526 = vmatprep.mubr.bf16.mxu0 %v2447
    %4527 = vmatmul.mubr.bf16.gmra.mxu0 %v2446
    %v4528 = vpop.f32.mrf.mxu0
    %v4529 = vadd.f32 %v2743, %v4528
    %v4530 = vpop.f32.mrf.mxu0
    %v4531 = vadd.f32 %v2747, %v4530
    %v4532 = vpop.f32.mrf.mxu0
    %v4533 = vadd.f32 %v2743, %v4532
    %v4534 = vpop.f32.mrf.mxu0
    %v4535 = vadd.f32 %v2747, %v4534
    %4536 = vmatprep.mubr.bf16.mxu0 %v2451
    %4537 = vmatmul.mubr.bf16.gmra.mxu0 %v2450
    %v4538 = vpop.f32.mrf.mxu0
    %v4539 = vadd.f32 %v2743, %v4538
    %v4540 = vpop.f32.mrf.mxu0
    %v4541 = vadd.f32 %v2747, %v4540
    %v4542 = vpop.f32.mrf.mxu0
    %v4543 = vadd.f32 %v2743, %v4542
    %v4544 = vpop.f32.mrf.mxu0
    %v4545 = vadd.f32 %v2747, %v4544
    %4546 = vdwg.mxu0
    %4547 = vmatprep.subr.bf16.mxu0 %v3715
    %4548 = vmatpush1.bf16.msra.mxu0 %v3714
    %4549 = vmatprep.subr.bf16.mxu0 %v3707
    %4550 = vmatpush1.bf16.msra.mxu0 %v3706
    %4551 = vmatprep.subr.bf16.mxu0 %v3699
    %4552 = vmatpush1.bf16.msra.mxu0 %v3698
    %4553 = vmatprep.subr.bf16.mxu0 %v3691
    %4554 = vmatpush1.bf16.msra.mxu0 %v3690
    %4555 = vmatprep.subr.bf16.mxu0 %v3683
    %4556 = vmatpush1.bf16.msra.mxu0 %v3682
    %4557 = vmatprep.subr.bf16.mxu0 %v3675
    %4558 = vmatpush1.bf16.msra.mxu0 %v3674
    %4559 = vmatprep.subr.bf16.mxu0 %v3667
    %4560 = vmatpush1.bf16.msra.mxu0 %v3666
    %4561 = vmatprep.subr.bf16.mxu0 %v3659
    %4562 = vmatpush1.bf16.msra.mxu0 %v3658
    %4563 = vmatprep.subr.bf16.mxu0 %v3779
    %4564 = vmatpush2.bf16.msra.mxu0 %v3778
    %4565 = vmatprep.subr.bf16.mxu0 %v3771
    %4566 = vmatpush2.bf16.msra.mxu0 %v3770
    %4567 = vmatprep.subr.bf16.mxu0 %v3763
    %4568 = vmatpush2.bf16.msra.mxu0 %v3762
    %4569 = vmatprep.subr.bf16.mxu0 %v3755
    %4570 = vmatpush2.bf16.msra.mxu0 %v3754
    %4571 = vmatprep.subr.bf16.mxu0 %v3747
    %4572 = vmatpush2.bf16.msra.mxu0 %v3746
    %4573 = vmatprep.subr.bf16.mxu0 %v3739
    %4574 = vmatpush2.bf16.msra.mxu0 %v3738
    %4575 = vmatprep.subr.bf16.mxu0 %v3731
    %4576 = vmatpush2.bf16.msra.mxu0 %v3730
    %4577 = vmatprep.subr.bf16.mxu0 %v3723
    %4578 = vmatpush2.bf16.msra.mxu0 %v3722
    %4579 = vmatprep.mubr.bf16.mxu0 %v2441
    %4580 = vmatmul.mubr.bf16.gmra.mxu0 %v2440
    %v4581 = vpop.f32.mrf.mxu0
    %v4582 = vadd.f32 %v4509, %v4581
    %v4583 = vpop.f32.mrf.mxu0
    %v4584 = vadd.f32 %v4511, %v4583
    %v4585 = vpop.f32.mrf.mxu0
    %v4586 = vadd.f32 %v4513, %v4585
    %v4587 = vpop.f32.mrf.mxu0
    %v4588 = vadd.f32 %v4515, %v4587
    %4589 = vmatprep.mubr.bf16.mxu0 %v2445
    %4590 = vmatmul.mubr.bf16.gmra.mxu0 %v2444
    %v4591 = vpop.f32.mrf.mxu0
    %v4592 = vadd.f32 %v4519, %v4591
    %v4593 = vpop.f32.mrf.mxu0
    %v4594 = vadd.f32 %v4521, %v4593
    %v4595 = vpop.f32.mrf.mxu0
    %v4596 = vadd.f32 %v4523, %v4595
    %v4597 = vpop.f32.mrf.mxu0
    %v4598 = vadd.f32 %v4525, %v4597
    %4599 = vmatprep.mubr.bf16.mxu0 %v2449
    %4600 = vmatmul.mubr.bf16.gmra.mxu0 %v2448
    %v4601 = vpop.f32.mrf.mxu0
    %v4602 = vadd.f32 %v4529, %v4601
    %v4603 = vpop.f32.mrf.mxu0
    %v4604 = vadd.f32 %v4531, %v4603
    %v4605 = vpop.f32.mrf.mxu0
    %v4606 = vadd.f32 %v4533, %v4605
    %v4607 = vpop.f32.mrf.mxu0
    %v4608 = vadd.f32 %v4535, %v4607
    %4609 = vmatprep.mubr.bf16.mxu0 %v2453
    %4610 = vmatmul.mubr.bf16.gmra.mxu0 %v2452
    %v4611 = vpop.f32.mrf.mxu0
    %v4612 = vadd.f32 %v4539, %v4611
    %v4613 = vpop.f32.mrf.mxu0
    %v4614 = vadd.f32 %v4541, %v4613
    %v4615 = vpop.f32.mrf.mxu0
    %v4616 = vadd.f32 %v4543, %v4615
    %v4617 = vpop.f32.mrf.mxu0
    %v4618 = vadd.f32 %v4545, %v4617
    %4619 = vdwg.mxu0
    %vm4620 = vcmp.ge.f32.partialorder %v4144, 0.0
    %vm4621 = vcmp.ge.f32.partialorder %v4146, 0.0
    %vm4622 = vcmp.ge.f32.partialorder %v4290, 0.0
    %vm4623 = vcmp.ge.f32.partialorder %v4292, 0.0
    %vm4624 = vcmp.ge.f32.partialorder %v4436, 0.0
    %vm4625 = vcmp.ge.f32.partialorder %v4438, 0.0
    %vm4626 = vcmp.ge.f32.partialorder %v4582, 0.0
    %vm4627 = vcmp.ge.f32.partialorder %v4584, 0.0
    %vm4628 = vcmp.ge.f32.partialorder %v4148, 0.0
    %vm4629 = vcmp.ge.f32.partialorder %v4150, 0.0
    %vm4630 = vcmp.ge.f32.partialorder %v4294, 0.0
    %vm4631 = vcmp.ge.f32.partialorder %v4296, 0.0
    %vm4632 = vcmp.ge.f32.partialorder %v4440, 0.0
    %vm4633 = vcmp.ge.f32.partialorder %v4442, 0.0
    %vm4634 = vcmp.ge.f32.partialorder %v4586, 0.0
    %vm4635 = vcmp.ge.f32.partialorder %v4588, 0.0
    %vm4636 = vcmp.ge.f32.partialorder %v4154, 0.0
    %vm4637 = vcmp.ge.f32.partialorder %v4156, 0.0
    %vm4638 = vcmp.ge.f32.partialorder %v4300, 0.0
    %vm4639 = vcmp.ge.f32.partialorder %v4302, 0.0
    %vm4640 = vcmp.ge.f32.partialorder %v4446, 0.0
    %vm4641 = vcmp.ge.f32.partialorder %v4448, 0.0
    %vm4642 = vcmp.ge.f32.partialorder %v4592, 0.0
    %vm4643 = vcmp.ge.f32.partialorder %v4594, 0.0
    %vm4644 = vcmp.ge.f32.partialorder %v4158, 0.0
    %vm4645 = vcmp.ge.f32.partialorder %v4160, 0.0
    %vm4646 = vcmp.ge.f32.partialorder %v4304, 0.0
    %vm4647 = vcmp.ge.f32.partialorder %v4306, 0.0
    %vm4648 = vcmp.ge.f32.partialorder %v4450, 0.0
    %vm4649 = vcmp.ge.f32.partialorder %v4452, 0.0
    %vm4650 = vcmp.ge.f32.partialorder %v4596, 0.0
    %vm4651 = vcmp.ge.f32.partialorder %v4598, 0.0
    %vm4652 = vcmp.ge.f32.partialorder %v4164, 0.0
    %vm4653 = vcmp.ge.f32.partialorder %v4166, 0.0
    %vm4654 = vcmp.ge.f32.partialorder %v4310, 0.0
    %vm4655 = vcmp.ge.f32.partialorder %v4312, 0.0
    %vm4656 = vcmp.ge.f32.partialorder %v4456, 0.0
    %vm4657 = vcmp.ge.f32.partialorder %v4458, 0.0
    %vm4658 = vcmp.ge.f32.partialorder %v4602, 0.0
    %vm4659 = vcmp.ge.f32.partialorder %v4604, 0.0
    %vm4660 = vcmp.ge.f32.partialorder %v4168, 0.0
    %vm4661 = vcmp.ge.f32.partialorder %v4170, 0.0
    %vm4662 = vcmp.ge.f32.partialorder %v4314, 0.0
    %vm4663 = vcmp.ge.f32.partialorder %v4316, 0.0
    %vm4664 = vcmp.ge.f32.partialorder %v4460, 0.0
    %vm4665 = vcmp.ge.f32.partialorder %v4462, 0.0
    %vm4666 = vcmp.ge.f32.partialorder %v4606, 0.0
    %vm4667 = vcmp.ge.f32.partialorder %v4608, 0.0
    %vm4668 = vcmp.ge.f32.partialorder %v4174, 0.0
    %vm4669 = vcmp.ge.f32.partialorder %v4176, 0.0
    %vm4670 = vcmp.ge.f32.partialorder %v4320, 0.0
    %vm4671 = vcmp.ge.f32.partialorder %v4322, 0.0
    %vm4672 = vcmp.ge.f32.partialorder %v4466, 0.0
    %vm4673 = vcmp.ge.f32.partialorder %v4468, 0.0
    %vm4674 = vcmp.ge.f32.partialorder %v4612, 0.0
    %vm4675 = vcmp.ge.f32.partialorder %v4614, 0.0
    %vm4676 = vcmp.ge.f32.partialorder %v4178, 0.0
    %vm4677 = vcmp.ge.f32.partialorder %v4180, 0.0
    %vm4678 = vcmp.ge.f32.partialorder %v4324, 0.0
    %vm4679 = vcmp.ge.f32.partialorder %v4326, 0.0
    %vm4680 = vcmp.ge.f32.partialorder %v4470, 0.0
    %vm4681 = vcmp.ge.f32.partialorder %v4472, 0.0
    %vm4682 = vcmp.ge.f32.partialorder %v4616, 0.0
    %vm4683 = vcmp.ge.f32.partialorder %v4618, 0.0
    %v4684 = vmul.f32 %v4144, 0.2
    %v4685 = vmul.f32 %v4146, 0.2
    %v4686 = vmul.f32 %v4290, 0.2
    %v4687 = vmul.f32 %v4292, 0.2
    %v4688 = vmul.f32 %v4436, 0.2
    %v4689 = vmul.f32 %v4438, 0.2
    %v4690 = vmul.f32 %v4582, 0.2
    %v4691 = vmul.f32 %v4584, 0.2
    %v4692 = vmul.f32 %v4148, 0.2
    %v4693 = vmul.f32 %v4150, 0.2
    %v4694 = vmul.f32 %v4294, 0.2
    %v4695 = vmul.f32 %v4296, 0.2
    %v4696 = vmul.f32 %v4440, 0.2
    %v4697 = vmul.f32 %v4442, 0.2
    %v4698 = vmul.f32 %v4586, 0.2
    %v4699 = vmul.f32 %v4588, 0.2
    %v4700 = vmul.f32 %v4154, 0.2
    %v4701 = vmul.f32 %v4156, 0.2
    %v4702 = vmul.f32 %v4300, 0.2
    %v4703 = vmul.f32 %v4302, 0.2
    %v4704 = vmul.f32 %v4446, 0.2
    %v4705 = vmul.f32 %v4448, 0.2
    %v4706 = vmul.f32 %v4592, 0.2
    %v4707 = vmul.f32 %v4594, 0.2
    %v4708 = vmul.f32 %v4158, 0.2
    %v4709 = vmul.f32 %v4160, 0.2
    %v4710 = vmul.f32 %v4304, 0.2
    %v4711 = vmul.f32 %v4306, 0.2
    %v4712 = vmul.f32 %v4450, 0.2
    %v4713 = vmul.f32 %v4452, 0.2
    %v4714 = vmul.f32 %v4596, 0.2
    %v4715 = vmul.f32 %v4598, 0.2
    %v4716 = vmul.f32 %v4164, 0.2
    %v4717 = vmul.f32 %v4166, 0.2
    %v4718 = vmul.f32 %v4310, 0.2
    %v4719 = vmul.f32 %v4312, 0.2
    %v4720 = vmul.f32 %v4456, 0.2
    %v4721 = vmul.f32 %v4458, 0.2
    %v4722 = vmul.f32 %v4602, 0.2
    %v4723 = vmul.f32 %v4604, 0.2
    %v4724 = vmul.f32 %v4168, 0.2
    %v4725 = vmul.f32 %v4170, 0.2
    %v4726 = vmul.f32 %v4314, 0.2
    %v4727 = vmul.f32 %v4316, 0.2
    %v4728 = vmul.f32 %v4460, 0.2
    %v4729 = vmul.f32 %v4462, 0.2
    %v4730 = vmul.f32 %v4606, 0.2
    %v4731 = vmul.f32 %v4608, 0.2
    %v4732 = vmul.f32 %v4174, 0.2
    %v4733 = vmul.f32 %v4176, 0.2
    %v4734 = vmul.f32 %v4320, 0.2
    %v4735 = vmul.f32 %v4322, 0.2
    %v4736 = vmul.f32 %v4466, 0.2
    %v4737 = vmul.f32 %v4468, 0.2
    %v4738 = vmul.f32 %v4612, 0.2
    %v4739 = vmul.f32 %v4614, 0.2
    %v4740 = vmul.f32 %v4178, 0.2
    %v4741 = vmul.f32 %v4180, 0.2
    %v4742 = vmul.f32 %v4324, 0.2
    %v4743 = vmul.f32 %v4326, 0.2
    %v4744 = vmul.f32 %v4470, 0.2
    %v4745 = vmul.f32 %v4472, 0.2
    %v4746 = vmul.f32 %v4616, 0.2
    %v4747 = vmul.f32 %v4618, 0.2
    %v4748 = vsel %vm4620, %v4144, %v4684
    %v4749 = vsel %vm4621, %v4146, %v4685
    %v4750 = vsel %vm4622, %v4290, %v4686
    %v4751 = vsel %vm4623, %v4292, %v4687
    %v4752 = vsel %vm4624, %v4436, %v4688
    %v4753 = vsel %vm4625, %v4438, %v4689
    %v4754 = vsel %vm4626, %v4582, %v4690
    %v4755 = vsel %vm4627, %v4584, %v4691
    %v4756 = vsel %vm4628, %v4148, %v4692
    %v4757 = vsel %vm4629, %v4150, %v4693
    %v4758 = vsel %vm4630, %v4294, %v4694
    %v4759 = vsel %vm4631, %v4296, %v4695
    %v4760 = vsel %vm4632, %v4440, %v4696
    %v4761 = vsel %vm4633, %v4442, %v4697
    %v4762 = vsel %vm4634, %v4586, %v4698
    %v4763 = vsel %vm4635, %v4588, %v4699
    %v4764 = vsel %vm4636, %v4154, %v4700
    %v4765 = vsel %vm4637, %v4156, %v4701
    %v4766 = vsel %vm4638, %v4300, %v4702
    %v4767 = vsel %vm4639, %v4302, %v4703
    %v4768 = vsel %vm4640, %v4446, %v4704
    %v4769 = vsel %vm4641, %v4448, %v4705
    %v4770 = vsel %vm4642, %v4592, %v4706
    %v4771 = vsel %vm4643, %v4594, %v4707
    %v4772 = vsel %vm4644, %v4158, %v4708
    %v4773 = vsel %vm4645, %v4160, %v4709
    %v4774 = vsel %vm4646, %v4304, %v4710
    %v4775 = vsel %vm4647, %v4306, %v4711
    %v4776 = vsel %vm4648, %v4450, %v4712
    %v4777 = vsel %vm4649, %v4452, %v4713
    %v4778 = vsel %vm4650, %v4596, %v4714
    %v4779 = vsel %vm4651, %v4598, %v4715
    %v4780 = vsel %vm4652, %v4164, %v4716
    %v4781 = vsel %vm4653, %v4166, %v4717
    %v4782 = vsel %vm4654, %v4310, %v4718
    %v4783 = vsel %vm4655, %v4312, %v4719
    %v4784 = vsel %vm4656, %v4456, %v4720
    %v4785 = vsel %vm4657, %v4458, %v4721
    %v4786 = vsel %vm4658, %v4602, %v4722
    %v4787 = vsel %vm4659, %v4604, %v4723
    %v4788 = vsel %vm4660, %v4168, %v4724
    %v4789 = vsel %vm4661, %v4170, %v4725
    %v4790 = vsel %vm4662, %v4314, %v4726
    %v4791 = vsel %vm4663, %v4316, %v4727
    %v4792 = vsel %vm4664, %v4460, %v4728
    %v4793 = vsel %vm4665, %v4462, %v4729
    %v4794 = vsel %vm4666, %v4606, %v4730
    %v4795 = vsel %vm4667, %v4608, %v4731
    %v4796 = vsel %vm4668, %v4174, %v4732
    %v4797 = vsel %vm4669, %v4176, %v4733
    %v4798 = vsel %vm4670, %v4320, %v4734
    %v4799 = vsel %vm4671, %v4322, %v4735
    %v4800 = vsel %vm4672, %v4466, %v4736
    %v4801 = vsel %vm4673, %v4468, %v4737
    %v4802 = vsel %vm4674, %v4612, %v4738
    %v4803 = vsel %vm4675, %v4614, %v4739
    %v4804 = vsel %vm4676, %v4178, %v4740
    %v4805 = vsel %vm4677, %v4180, %v4741
    %v4806 = vsel %vm4678, %v4324, %v4742
    %v4807 = vsel %vm4679, %v4326, %v4743
    %v4808 = vsel %vm4680, %v4470, %v4744
    %v4809 = vsel %vm4681, %v4472, %v4745
    %v4810 = vsel %vm4682, %v4616, %v4746
    %v4811 = vsel %vm4683, %v4618, %v4747
    %v4812 = vpack.c.bf16 %v4756, %v4748
    %v4813 = vpack.c.bf16 %v4757, %v4749
    %v4814 = vpack.c.bf16 %v4758, %v4750
    %v4815 = vpack.c.bf16 %v4759, %v4751
    %v4816 = vpack.c.bf16 %v4760, %v4752
    %v4817 = vpack.c.bf16 %v4761, %v4753
    %v4818 = vpack.c.bf16 %v4762, %v4754
    %v4819 = vpack.c.bf16 %v4763, %v4755
    %v4820 = vpack.c.bf16 %v4772, %v4764
    %v4821 = vpack.c.bf16 %v4773, %v4765
    %v4822 = vpack.c.bf16 %v4774, %v4766
    %v4823 = vpack.c.bf16 %v4775, %v4767
    %v4824 = vpack.c.bf16 %v4776, %v4768
    %v4825 = vpack.c.bf16 %v4777, %v4769
    %v4826 = vpack.c.bf16 %v4778, %v4770
    %v4827 = vpack.c.bf16 %v4779, %v4771
    %v4828 = vpack.c.bf16 %v4788, %v4780
    %v4829 = vpack.c.bf16 %v4789, %v4781
    %v4830 = vpack.c.bf16 %v4790, %v4782
    %v4831 = vpack.c.bf16 %v4791, %v4783
    %v4832 = vpack.c.bf16 %v4792, %v4784
    %v4833 = vpack.c.bf16 %v4793, %v4785
    %v4834 = vpack.c.bf16 %v4794, %v4786
    %v4835 = vpack.c.bf16 %v4795, %v4787
    %v4836 = vpack.c.bf16 %v4804, %v4796
    %v4837 = vpack.c.bf16 %v4805, %v4797
    %v4838 = vpack.c.bf16 %v4806, %v4798
    %v4839 = vpack.c.bf16 %v4807, %v4799
    %v4840 = vpack.c.bf16 %v4808, %v4800
    %v4841 = vpack.c.bf16 %v4809, %v4801
    %v4842 = vpack.c.bf16 %v4810, %v4802
    %v4843 = vpack.c.bf16 %v4811, %v4803
    %s4844 = smul.u32 4, 128
    %s4845 = smul.u32 %s4844, 7
    %s4846 = sshll.u32 %s4845, 4
    %4847 = dma.done %s583, %s4846
    %v4848 = vld [vmem:[#allocation3] sm:$0xff]
    %v4849 = vld [vmem:[#allocation3 + $0x8] sm:$0xff]
    %v4850 = vld [vmem:[#allocation3 + $0x10] sm:$0xff]
    %v4851 = vld [vmem:[#allocation3 + $0x18] sm:$0xf]
    %v4852 = vld [vmem:[#allocation3 + $0x1c] sm:$0xff]
    %v4853 = vld [vmem:[#allocation3 + $0x24] sm:$0xff]
    %v4854 = vld [vmem:[#allocation3 + $0x2c] sm:$0xff]
    %v4855 = vld [vmem:[#allocation3 + $0x34] sm:$0xf]
    %v4856 = vld [vmem:[#allocation3 + $0x38] sm:$0xff]
    %v4857 = vld [vmem:[#allocation3 + $0x40] sm:$0xff]
    %v4858 = vld [vmem:[#allocation3 + $0x48] sm:$0xff]
    %v4859 = vld [vmem:[#allocation3 + $0x50] sm:$0xf]
    %v4860 = vld [vmem:[#allocation3 + $0x54] sm:$0xff]
    %v4861 = vld [vmem:[#allocation3 + $0x5c] sm:$0xff]
    %v4862 = vld [vmem:[#allocation3 + $0x64] sm:$0xff]
    %v4863 = vld [vmem:[#allocation3 + $0x6c] sm:$0xf]
    %v4864 = vld [vmem:[#allocation3 + $0x70] sm:$0xff]
    %v4865 = vld [vmem:[#allocation3 + $0x78] sm:$0xff]
    %v4866 = vld [vmem:[#allocation3 + $0x80] sm:$0xff]
    %v4867 = vld [vmem:[#allocation3 + $0x88] sm:$0xf]
    %v4868 = vld [vmem:[#allocation3 + $0x8c] sm:$0xff]
    %v4869 = vld [vmem:[#allocation3 + $0x94] sm:$0xff]
    %v4870 = vld [vmem:[#allocation3 + $0x9c] sm:$0xff]
    %v4871 = vld [vmem:[#allocation3 + $0xa4] sm:$0xf]
    %v4872 = vld [vmem:[#allocation3 + $0xa8] sm:$0xff]
    %v4873 = vld [vmem:[#allocation3 + $0xb0] sm:$0xff]
    %v4874 = vld [vmem:[#allocation3 + $0xb8] sm:$0xff]
    %v4875 = vld [vmem:[#allocation3 + $0xc0] sm:$0xf]
    %v4876 = vld [vmem:[#allocation3 + $0xc4] sm:$0xff]
    %v4877 = vld [vmem:[#allocation3 + $0xcc] sm:$0xff]
    %v4878 = vld [vmem:[#allocation3 + $0xd4] sm:$0xff]
    %v4879 = vld [vmem:[#allocation3 + $0xdc] sm:$0xf]
    %v4880 = vld [vmem:[#allocation3 + $0xe0] sm:$0xff]
    %v4881 = vld [vmem:[#allocation3 + $0xe8] sm:$0xff]
    %v4882 = vld [vmem:[#allocation3 + $0xf0] sm:$0xff]
    %v4883 = vld [vmem:[#allocation3 + $0xf8] sm:$0xf]
    %v4884 = vld [vmem:[#allocation3 + $0xfc] sm:$0xff]
    %v4885 = vld [vmem:[#allocation3 + $0x104] sm:$0xff]
    %v4886 = vld [vmem:[#allocation3 + $0x10c] sm:$0xff]
    %v4887 = vld [vmem:[#allocation3 + $0x114] sm:$0xf]
    %v4888 = vld [vmem:[#allocation3 + $0x118] sm:$0xff]
    %v4889 = vld [vmem:[#allocation3 + $0x120] sm:$0xff]
    %v4890 = vld [vmem:[#allocation3 + $0x128] sm:$0xff]
    %v4891 = vld [vmem:[#allocation3 + $0x130] sm:$0xf]
    %v4892 = vld [vmem:[#allocation3 + $0x134] sm:$0xff]
    %v4893 = vld [vmem:[#allocation3 + $0x13c] sm:$0xff]
    %v4894 = vld [vmem:[#allocation3 + $0x144] sm:$0xff]
    %v4895 = vld [vmem:[#allocation3 + $0x14c] sm:$0xf]
    %v4896 = vld [vmem:[#allocation3 + $0x150] sm:$0xff]
    %v4897 = vld [vmem:[#allocation3 + $0x158] sm:$0xff]
    %v4898 = vld [vmem:[#allocation3 + $0x160] sm:$0xff]
    %v4899 = vld [vmem:[#allocation3 + $0x168] sm:$0xf]
    %v4900 = vld [vmem:[#allocation3 + $0x16c] sm:$0xff]
    %v4901 = vld [vmem:[#allocation3 + $0x174] sm:$0xff]
    %v4902 = vld [vmem:[#allocation3 + $0x17c] sm:$0xff]
    %v4903 = vld [vmem:[#allocation3 + $0x184] sm:$0xf]
    %v4904 = vld [vmem:[#allocation3 + $0x188] sm:$0xff]
    %v4905 = vld [vmem:[#allocation3 + $0x190] sm:$0xff]
    %v4906 = vld [vmem:[#allocation3 + $0x198] sm:$0xff]
    %v4907 = vld [vmem:[#allocation3 + $0x1a0] sm:$0xf]
    %v4908 = vld [vmem:[#allocation3 + $0x1a4] sm:$0xff]
    %v4909 = vld [vmem:[#allocation3 + $0x1ac] sm:$0xff]
    %v4910 = vld [vmem:[#allocation3 + $0x1b4] sm:$0xff]
    %v4911 = vld [vmem:[#allocation3 + $0x1bc] sm:$0xf]
    %v4912 = vld [vmem:[#allocation3 + $0x1c0] sm:$0xff]
    %v4913 = vld [vmem:[#allocation3 + $0x1c8] sm:$0xff]
    %v4914 = vld [vmem:[#allocation3 + $0x1d0] sm:$0xff]
    %v4915 = vld [vmem:[#allocation3 + $0x1d8] sm:$0xf]
    %v4916 = vld [vmem:[#allocation3 + $0x1dc] sm:$0xff]
    %v4917 = vld [vmem:[#allocation3 + $0x1e4] sm:$0xff]
    %v4918 = vld [vmem:[#allocation3 + $0x1ec] sm:$0xff]
    %v4919 = vld [vmem:[#allocation3 + $0x1f4] sm:$0xf]
    %v4920 = vld [vmem:[#allocation3 + $0x1f8] sm:$0xff]
    %v4921 = vld [vmem:[#allocation3 + $0x200] sm:$0xff]
    %v4922 = vld [vmem:[#allocation3 + $0x208] sm:$0xff]
    %v4923 = vld [vmem:[#allocation3 + $0x210] sm:$0xf]
    %v4924 = vld [vmem:[#allocation3 + $0x214] sm:$0xff]
    %v4925 = vld [vmem:[#allocation3 + $0x21c] sm:$0xff]
    %v4926 = vld [vmem:[#allocation3 + $0x224] sm:$0xff]
    %v4927 = vld [vmem:[#allocation3 + $0x22c] sm:$0xf]
    %v4928 = vld [vmem:[#allocation3 + $0x230] sm:$0xff]
    %v4929 = vld [vmem:[#allocation3 + $0x238] sm:$0xff]
    %v4930 = vld [vmem:[#allocation3 + $0x240] sm:$0xff]
    %v4931 = vld [vmem:[#allocation3 + $0x248] sm:$0xf]
    %v4932 = vld [vmem:[#allocation3 + $0x24c] sm:$0xff]
    %v4933 = vld [vmem:[#allocation3 + $0x254] sm:$0xff]
    %v4934 = vld [vmem:[#allocation3 + $0x25c] sm:$0xff]
    %v4935 = vld [vmem:[#allocation3 + $0x264] sm:$0xf]
    %v4936 = vld [vmem:[#allocation3 + $0x268] sm:$0xff]
    %v4937 = vld [vmem:[#allocation3 + $0x270] sm:$0xff]
    %v4938 = vld [vmem:[#allocation3 + $0x278] sm:$0xff]
    %v4939 = vld [vmem:[#allocation3 + $0x280] sm:$0xf]
    %v4940 = vld [vmem:[#allocation3 + $0x284] sm:$0xff]
    %v4941 = vld [vmem:[#allocation3 + $0x28c] sm:$0xff]
    %v4942 = vld [vmem:[#allocation3 + $0x294] sm:$0xff]
    %v4943 = vld [vmem:[#allocation3 + $0x29c] sm:$0xf]
    %v4944 = vld [vmem:[#allocation3 + $0x2a0] sm:$0xff]
    %v4945 = vld [vmem:[#allocation3 + $0x2a8] sm:$0xff]
    %v4946 = vld [vmem:[#allocation3 + $0x2b0] sm:$0xff]
    %v4947 = vld [vmem:[#allocation3 + $0x2b8] sm:$0xf]
    %v4948 = vld [vmem:[#allocation3 + $0x2bc] sm:$0xff]
    %v4949 = vld [vmem:[#allocation3 + $0x2c4] sm:$0xff]
    %v4950 = vld [vmem:[#allocation3 + $0x2cc] sm:$0xff]
    %v4951 = vld [vmem:[#allocation3 + $0x2d4] sm:$0xf]
    %v4952 = vld [vmem:[#allocation3 + $0x2d8] sm:$0xff]
    %v4953 = vld [vmem:[#allocation3 + $0x2e0] sm:$0xff]
    %v4954 = vld [vmem:[#allocation3 + $0x2e8] sm:$0xff]
    %v4955 = vld [vmem:[#allocation3 + $0x2f0] sm:$0xf]
    %v4956 = vld [vmem:[#allocation3 + $0x2f4] sm:$0xff]
    %v4957 = vld [vmem:[#allocation3 + $0x2fc] sm:$0xff]
    %v4958 = vld [vmem:[#allocation3 + $0x304] sm:$0xff]
    %v4959 = vld [vmem:[#allocation3 + $0x30c] sm:$0xf]
    %v4960 = vld [vmem:[#allocation3 + $0x310] sm:$0xff]
    %v4961 = vld [vmem:[#allocation3 + $0x318] sm:$0xff]
    %v4962 = vld [vmem:[#allocation3 + $0x320] sm:$0xff]
    %v4963 = vld [vmem:[#allocation3 + $0x328] sm:$0xf]
    %v4964 = vld [vmem:[#allocation3 + $0x32c] sm:$0xff]
    %v4965 = vld [vmem:[#allocation3 + $0x334] sm:$0xff]
    %v4966 = vld [vmem:[#allocation3 + $0x33c] sm:$0xff]
    %v4967 = vld [vmem:[#allocation3 + $0x344] sm:$0xf]
    %v4968 = vld [vmem:[#allocation3 + $0x348] sm:$0xff]
    %v4969 = vld [vmem:[#allocation3 + $0x350] sm:$0xff]
    %v4970 = vld [vmem:[#allocation3 + $0x358] sm:$0xff]
    %v4971 = vld [vmem:[#allocation3 + $0x360] sm:$0xf]
    %v4972 = vld [vmem:[#allocation3 + $0x364] sm:$0xff]
    %v4973 = vld [vmem:[#allocation3 + $0x36c] sm:$0xff]
    %v4974 = vld [vmem:[#allocation3 + $0x374] sm:$0xff]
    %v4975 = vld [vmem:[#allocation3 + $0x37c] sm:$0xf]
    %v4976 = vld [vmem:[#allocation3 + $0x380] sm:$0xff]
    %v4977 = vld [vmem:[#allocation3 + $0x388] sm:$0xff]
    %v4978 = vld [vmem:[#allocation3 + $0x390] sm:$0xff]
    %v4979 = vld [vmem:[#allocation3 + $0x398] sm:$0xf]
    %v4980 = vld [vmem:[#allocation3 + $0x39c] sm:$0xff]
    %v4981 = vld [vmem:[#allocation3 + $0x3a4] sm:$0xff]
    %v4982 = vld [vmem:[#allocation3 + $0x3ac] sm:$0xff]
    %v4983 = vld [vmem:[#allocation3 + $0x3b4] sm:$0xf]
    %v4984 = vld [vmem:[#allocation3 + $0x3b8] sm:$0xff]
    %v4985 = vld [vmem:[#allocation3 + $0x3c0] sm:$0xff]
    %v4986 = vld [vmem:[#allocation3 + $0x3c8] sm:$0xff]
    %v4987 = vld [vmem:[#allocation3 + $0x3d0] sm:$0xf]
    %v4988 = vld [vmem:[#allocation3 + $0x3d4] sm:$0xff]
    %v4989 = vld [vmem:[#allocation3 + $0x3dc] sm:$0xff]
    %v4990 = vld [vmem:[#allocation3 + $0x3e4] sm:$0xff]
    %v4991 = vld [vmem:[#allocation3 + $0x3ec] sm:$0xf]
    %v4992 = vld [vmem:[#allocation3 + $0x3f0] sm:$0xff]
    %v4993 = vld [vmem:[#allocation3 + $0x3f8] sm:$0xff]
    %v4994 = vld [vmem:[#allocation3 + $0x400] sm:$0xff]
    %v4995 = vld [vmem:[#allocation3 + $0x408] sm:$0xf]
    %v4996 = vld [vmem:[#allocation3 + $0x40c] sm:$0xff]
    %v4997 = vld [vmem:[#allocation3 + $0x414] sm:$0xff]
    %v4998 = vld [vmem:[#allocation3 + $0x41c] sm:$0xff]
    %v4999 = vld [vmem:[#allocation3 + $0x424] sm:$0xf]
    %v5000 = vld [vmem:[#allocation3 + $0x428] sm:$0xff]
    %v5001 = vld [vmem:[#allocation3 + $0x430] sm:$0xff]
    %v5002 = vld [vmem:[#allocation3 + $0x438] sm:$0xff]
    %v5003 = vld [vmem:[#allocation3 + $0x440] sm:$0xf]
    %v5004 = vld [vmem:[#allocation3 + $0x444] sm:$0xff]
    %v5005 = vld [vmem:[#allocation3 + $0x44c] sm:$0xff]
    %v5006 = vld [vmem:[#allocation3 + $0x454] sm:$0xff]
    %v5007 = vld [vmem:[#allocation3 + $0x45c] sm:$0xf]
    %v5008 = vld [vmem:[#allocation3 + $0x460] sm:$0xff]
    %v5009 = vld [vmem:[#allocation3 + $0x468] sm:$0xff]
    %v5010 = vld [vmem:[#allocation3 + $0x470] sm:$0xff]
    %v5011 = vld [vmem:[#allocation3 + $0x478] sm:$0xf]
    %v5012 = vld [vmem:[#allocation3 + $0x47c] sm:$0xff]
    %v5013 = vld [vmem:[#allocation3 + $0x484] sm:$0xff]
    %v5014 = vld [vmem:[#allocation3 + $0x48c] sm:$0xff]
    %v5015 = vld [vmem:[#allocation3 + $0x494] sm:$0xf]
    %v5016 = vld [vmem:[#allocation3 + $0x498] sm:$0xff]
    %v5017 = vld [vmem:[#allocation3 + $0x4a0] sm:$0xff]
    %v5018 = vld [vmem:[#allocation3 + $0x4a8] sm:$0xff]
    %v5019 = vld [vmem:[#allocation3 + $0x4b0] sm:$0xf]
    %v5020 = vld [vmem:[#allocation3 + $0x4b4] sm:$0xff]
    %v5021 = vld [vmem:[#allocation3 + $0x4bc] sm:$0xff]
    %v5022 = vld [vmem:[#allocation3 + $0x4c4] sm:$0xff]
    %v5023 = vld [vmem:[#allocation3 + $0x4cc] sm:$0xf]
    %v5024 = vld [vmem:[#allocation3 + $0x4d0] sm:$0xff]
    %v5025 = vld [vmem:[#allocation3 + $0x4d8] sm:$0xff]
    %v5026 = vld [vmem:[#allocation3 + $0x4e0] sm:$0xff]
    %v5027 = vld [vmem:[#allocation3 + $0x4e8] sm:$0xf]
    %v5028 = vld [vmem:[#allocation3 + $0x4ec] sm:$0xff]
    %v5029 = vld [vmem:[#allocation3 + $0x4f4] sm:$0xff]
    %v5030 = vld [vmem:[#allocation3 + $0x4fc] sm:$0xff]
    %v5031 = vld [vmem:[#allocation3 + $0x504] sm:$0xf]
    %v5032 = vld [vmem:[#allocation3 + $0x508] sm:$0xff]
    %v5033 = vld [vmem:[#allocation3 + $0x510] sm:$0xff]
    %v5034 = vld [vmem:[#allocation3 + $0x518] sm:$0xff]
    %v5035 = vld [vmem:[#allocation3 + $0x520] sm:$0xf]
    %v5036 = vld [vmem:[#allocation3 + $0x524] sm:$0xff]
    %v5037 = vld [vmem:[#allocation3 + $0x52c] sm:$0xff]
    %v5038 = vld [vmem:[#allocation3 + $0x534] sm:$0xff]
    %v5039 = vld [vmem:[#allocation3 + $0x53c] sm:$0xf]
    %v5040 = vld [vmem:[#allocation3 + $0x540] sm:$0xff]
    %v5041 = vld [vmem:[#allocation3 + $0x548] sm:$0xff]
    %v5042 = vld [vmem:[#allocation3 + $0x550] sm:$0xff]
    %v5043 = vld [vmem:[#allocation3 + $0x558] sm:$0xf]
    %v5044 = vld [vmem:[#allocation3 + $0x55c] sm:$0xff]
    %v5045 = vld [vmem:[#allocation3 + $0x564] sm:$0xff]
    %v5046 = vld [vmem:[#allocation3 + $0x56c] sm:$0xff]
    %v5047 = vld [vmem:[#allocation3 + $0x574] sm:$0xf]
    %v5048 = vld [vmem:[#allocation3 + $0x578] sm:$0xff]
    %v5049 = vld [vmem:[#allocation3 + $0x580] sm:$0xff]
    %v5050 = vld [vmem:[#allocation3 + $0x588] sm:$0xff]
    %v5051 = vld [vmem:[#allocation3 + $0x590] sm:$0xf]
    %v5052 = vld [vmem:[#allocation3 + $0x594] sm:$0xff]
    %v5053 = vld [vmem:[#allocation3 + $0x59c] sm:$0xff]
    %v5054 = vld [vmem:[#allocation3 + $0x5a4] sm:$0xff]
    %v5055 = vld [vmem:[#allocation3 + $0x5ac] sm:$0xf]
    %v5056 = vld [vmem:[#allocation3 + $0x5b0] sm:$0xff]
    %v5057 = vld [vmem:[#allocation3 + $0x5b8] sm:$0xff]
    %v5058 = vld [vmem:[#allocation3 + $0x5c0] sm:$0xff]
    %v5059 = vld [vmem:[#allocation3 + $0x5c8] sm:$0xf]
    %v5060 = vld [vmem:[#allocation3 + $0x5cc] sm:$0xff]
    %v5061 = vld [vmem:[#allocation3 + $0x5d4] sm:$0xff]
    %v5062 = vld [vmem:[#allocation3 + $0x5dc] sm:$0xff]
    %v5063 = vld [vmem:[#allocation3 + $0x5e4] sm:$0xf]
    %v5064 = vld [vmem:[#allocation3 + $0x5e8] sm:$0xff]
    %v5065 = vld [vmem:[#allocation3 + $0x5f0] sm:$0xff]
    %v5066 = vld [vmem:[#allocation3 + $0x5f8] sm:$0xff]
    %v5067 = vld [vmem:[#allocation3 + $0x600] sm:$0xf]
    %v5068 = vld [vmem:[#allocation3 + $0x604] sm:$0xff]
    %v5069 = vld [vmem:[#allocation3 + $0x60c] sm:$0xff]
    %v5070 = vld [vmem:[#allocation3 + $0x614] sm:$0xff]
    %v5071 = vld [vmem:[#allocation3 + $0x61c] sm:$0xf]
    %v5072 = vld [vmem:[#allocation3 + $0x620] sm:$0xff]
    %v5073 = vld [vmem:[#allocation3 + $0x628] sm:$0xff]
    %v5074 = vld [vmem:[#allocation3 + $0x630] sm:$0xff]
    %v5075 = vld [vmem:[#allocation3 + $0x638] sm:$0xf]
    %v5076 = vld [vmem:[#allocation3 + $0x63c] sm:$0xff]
    %v5077 = vld [vmem:[#allocation3 + $0x644] sm:$0xff]
    %v5078 = vld [vmem:[#allocation3 + $0x64c] sm:$0xff]
    %v5079 = vld [vmem:[#allocation3 + $0x654] sm:$0xf]
    %v5080 = vld [vmem:[#allocation3 + $0x658] sm:$0xff]
    %v5081 = vld [vmem:[#allocation3 + $0x660] sm:$0xff]
    %v5082 = vld [vmem:[#allocation3 + $0x668] sm:$0xff]
    %v5083 = vld [vmem:[#allocation3 + $0x670] sm:$0xf]
    %v5084 = vld [vmem:[#allocation3 + $0x674] sm:$0xff]
    %v5085 = vld [vmem:[#allocation3 + $0x67c] sm:$0xff]
    %v5086 = vld [vmem:[#allocation3 + $0x684] sm:$0xff]
    %v5087 = vld [vmem:[#allocation3 + $0x68c] sm:$0xf]
    %v5088 = vld [vmem:[#allocation3 + $0x690] sm:$0xff]
    %v5089 = vld [vmem:[#allocation3 + $0x698] sm:$0xff]
    %v5090 = vld [vmem:[#allocation3 + $0x6a0] sm:$0xff]
    %v5091 = vld [vmem:[#allocation3 + $0x6a8] sm:$0xf]
    %v5092 = vld [vmem:[#allocation3 + $0x6ac] sm:$0xff]
    %v5093 = vld [vmem:[#allocation3 + $0x6b4] sm:$0xff]
    %v5094 = vld [vmem:[#allocation3 + $0x6bc] sm:$0xff]
    %v5095 = vld [vmem:[#allocation3 + $0x6c4] sm:$0xf]
    %v5096 = vld [vmem:[#allocation3 + $0x6c8] sm:$0xff]
    %v5097 = vld [vmem:[#allocation3 + $0x6d0] sm:$0xff]
    %v5098 = vld [vmem:[#allocation3 + $0x6d8] sm:$0xff]
    %v5099 = vld [vmem:[#allocation3 + $0x6e0] sm:$0xf]
    %v5100 = vld [vmem:[#allocation3 + $0x6e4] sm:$0xff]
    %v5101 = vld [vmem:[#allocation3 + $0x6ec] sm:$0xff]
    %v5102 = vld [vmem:[#allocation3 + $0x6f4] sm:$0xff]
    %v5103 = vld [vmem:[#allocation3 + $0x6fc] sm:$0xf]
    %v5104 = vld [vmem:[#allocation3 + $0x700] sm:$0xff]
    %v5105 = vld [vmem:[#allocation3 + $0x708] sm:$0xff]
    %v5106 = vld [vmem:[#allocation3 + $0x710] sm:$0xff]
    %v5107 = vld [vmem:[#allocation3 + $0x718] sm:$0xf]
    %v5108 = vld [vmem:[#allocation3 + $0x71c] sm:$0xff]
    %v5109 = vld [vmem:[#allocation3 + $0x724] sm:$0xff]
    %v5110 = vld [vmem:[#allocation3 + $0x72c] sm:$0xff]
    %v5111 = vld [vmem:[#allocation3 + $0x734] sm:$0xf]
    %v5112 = vld [vmem:[#allocation3 + $0x738] sm:$0xff]
    %v5113 = vld [vmem:[#allocation3 + $0x740] sm:$0xff]
    %v5114 = vld [vmem:[#allocation3 + $0x748] sm:$0xff]
    %v5115 = vld [vmem:[#allocation3 + $0x750] sm:$0xf]
    %v5116 = vld [vmem:[#allocation3 + $0x754] sm:$0xff]
    %v5117 = vld [vmem:[#allocation3 + $0x75c] sm:$0xff]
    %v5118 = vld [vmem:[#allocation3 + $0x764] sm:$0xff]
    %v5119 = vld [vmem:[#allocation3 + $0x76c] sm:$0xf]
    %v5120 = vld [vmem:[#allocation3 + $0x770] sm:$0xff]
    %v5121 = vld [vmem:[#allocation3 + $0x778] sm:$0xff]
    %v5122 = vld [vmem:[#allocation3 + $0x780] sm:$0xff]
    %v5123 = vld [vmem:[#allocation3 + $0x788] sm:$0xf]
    %v5124 = vld [vmem:[#allocation3 + $0x78c] sm:$0xff]
    %v5125 = vld [vmem:[#allocation3 + $0x794] sm:$0xff]
    %v5126 = vld [vmem:[#allocation3 + $0x79c] sm:$0xff]
    %v5127 = vld [vmem:[#allocation3 + $0x7a4] sm:$0xf]
    %v5128 = vld [vmem:[#allocation3 + $0x7a8] sm:$0xff]
    %v5129 = vld [vmem:[#allocation3 + $0x7b0] sm:$0xff]
    %v5130 = vld [vmem:[#allocation3 + $0x7b8] sm:$0xff]
    %v5131 = vld [vmem:[#allocation3 + $0x7c0] sm:$0xf]
    %v5132 = vld [vmem:[#allocation3 + $0x7c4] sm:$0xff]
    %v5133 = vld [vmem:[#allocation3 + $0x7cc] sm:$0xff]
    %v5134 = vld [vmem:[#allocation3 + $0x7d4] sm:$0xff]
    %v5135 = vld [vmem:[#allocation3 + $0x7dc] sm:$0xf]
    %v5136 = vld [vmem:[#allocation3 + $0x7e0] sm:$0xff]
    %v5137 = vld [vmem:[#allocation3 + $0x7e8] sm:$0xff]
    %v5138 = vld [vmem:[#allocation3 + $0x7f0] sm:$0xff]
    %v5139 = vld [vmem:[#allocation3 + $0x7f8] sm:$0xf]
    %v5140 = vld [vmem:[#allocation3 + $0x7fc] sm:$0xff]
    %v5141 = vld [vmem:[#allocation3 + $0x804] sm:$0xff]
    %v5142 = vld [vmem:[#allocation3 + $0x80c] sm:$0xff]
    %v5143 = vld [vmem:[#allocation3 + $0x814] sm:$0xf]
    %v5144 = vld [vmem:[#allocation3 + $0x818] sm:$0xff]
    %v5145 = vld [vmem:[#allocation3 + $0x820] sm:$0xff]
    %v5146 = vld [vmem:[#allocation3 + $0x828] sm:$0xff]
    %v5147 = vld [vmem:[#allocation3 + $0x830] sm:$0xf]
    %v5148 = vld [vmem:[#allocation3 + $0x834] sm:$0xff]
    %v5149 = vld [vmem:[#allocation3 + $0x83c] sm:$0xff]
    %v5150 = vld [vmem:[#allocation3 + $0x844] sm:$0xff]
    %v5151 = vld [vmem:[#allocation3 + $0x84c] sm:$0xf]
    %v5152 = vld [vmem:[#allocation3 + $0x850] sm:$0xff]
    %v5153 = vld [vmem:[#allocation3 + $0x858] sm:$0xff]
    %v5154 = vld [vmem:[#allocation3 + $0x860] sm:$0xff]
    %v5155 = vld [vmem:[#allocation3 + $0x868] sm:$0xf]
    %v5156 = vld [vmem:[#allocation3 + $0x86c] sm:$0xff]
    %v5157 = vld [vmem:[#allocation3 + $0x874] sm:$0xff]
    %v5158 = vld [vmem:[#allocation3 + $0x87c] sm:$0xff]
    %v5159 = vld [vmem:[#allocation3 + $0x884] sm:$0xf]
    %v5160 = vld [vmem:[#allocation3 + $0x888] sm:$0xff]
    %v5161 = vld [vmem:[#allocation3 + $0x890] sm:$0xff]
    %v5162 = vld [vmem:[#allocation3 + $0x898] sm:$0xff]
    %v5163 = vld [vmem:[#allocation3 + $0x8a0] sm:$0xf]
    %v5164 = vld [vmem:[#allocation3 + $0x8a4] sm:$0xff]
    %v5165 = vld [vmem:[#allocation3 + $0x8ac] sm:$0xff]
    %v5166 = vld [vmem:[#allocation3 + $0x8b4] sm:$0xff]
    %v5167 = vld [vmem:[#allocation3 + $0x8bc] sm:$0xf]
    %v5168 = vld [vmem:[#allocation3 + $0x8c0] sm:$0xff]
    %v5169 = vld [vmem:[#allocation3 + $0x8c8] sm:$0xff]
    %v5170 = vld [vmem:[#allocation3 + $0x8d0] sm:$0xff]
    %v5171 = vld [vmem:[#allocation3 + $0x8d8] sm:$0xf]
    %v5172 = vld [vmem:[#allocation3 + $0x8dc] sm:$0xff]
    %v5173 = vld [vmem:[#allocation3 + $0x8e4] sm:$0xff]
    %v5174 = vld [vmem:[#allocation3 + $0x8ec] sm:$0xff]
    %v5175 = vld [vmem:[#allocation3 + $0x8f4] sm:$0xf]
    %v5176 = vld [vmem:[#allocation3 + $0x8f8] sm:$0xff]
    %v5177 = vld [vmem:[#allocation3 + $0x900] sm:$0xff]
    %v5178 = vld [vmem:[#allocation3 + $0x908] sm:$0xff]
    %v5179 = vld [vmem:[#allocation3 + $0x910] sm:$0xf]
    %v5180 = vld [vmem:[#allocation3 + $0x914] sm:$0xff]
    %v5181 = vld [vmem:[#allocation3 + $0x91c] sm:$0xff]
    %v5182 = vld [vmem:[#allocation3 + $0x924] sm:$0xff]
    %v5183 = vld [vmem:[#allocation3 + $0x92c] sm:$0xf]
    %v5184 = vld [vmem:[#allocation3 + $0x930] sm:$0xff]
    %v5185 = vld [vmem:[#allocation3 + $0x938] sm:$0xff]
    %v5186 = vld [vmem:[#allocation3 + $0x940] sm:$0xff]
    %v5187 = vld [vmem:[#allocation3 + $0x948] sm:$0xf]
    %v5188 = vld [vmem:[#allocation3 + $0x94c] sm:$0xff]
    %v5189 = vld [vmem:[#allocation3 + $0x954] sm:$0xff]
    %v5190 = vld [vmem:[#allocation3 + $0x95c] sm:$0xff]
    %v5191 = vld [vmem:[#allocation3 + $0x964] sm:$0xf]
    %v5192 = vld [vmem:[#allocation3 + $0x968] sm:$0xff]
    %v5193 = vld [vmem:[#allocation3 + $0x970] sm:$0xff]
    %v5194 = vld [vmem:[#allocation3 + $0x978] sm:$0xff]
    %v5195 = vld [vmem:[#allocation3 + $0x980] sm:$0xf]
    %v5196 = vld [vmem:[#allocation3 + $0x984] sm:$0xff]
    %v5197 = vld [vmem:[#allocation3 + $0x98c] sm:$0xff]
    %v5198 = vld [vmem:[#allocation3 + $0x994] sm:$0xff]
    %v5199 = vld [vmem:[#allocation3 + $0x99c] sm:$0xf]
    %v5200 = vld [vmem:[#allocation3 + $0x9a0] sm:$0xff]
    %v5201 = vld [vmem:[#allocation3 + $0x9a8] sm:$0xff]
    %v5202 = vld [vmem:[#allocation3 + $0x9b0] sm:$0xff]
    %v5203 = vld [vmem:[#allocation3 + $0x9b8] sm:$0xf]
    %v5204 = vld [vmem:[#allocation3 + $0x9bc] sm:$0xff]
    %v5205 = vld [vmem:[#allocation3 + $0x9c4] sm:$0xff]
    %v5206 = vld [vmem:[#allocation3 + $0x9cc] sm:$0xff]
    %v5207 = vld [vmem:[#allocation3 + $0x9d4] sm:$0xf]
    %v5208 = vld [vmem:[#allocation3 + $0x9d8] sm:$0xff]
    %v5209 = vld [vmem:[#allocation3 + $0x9e0] sm:$0xff]
    %v5210 = vld [vmem:[#allocation3 + $0x9e8] sm:$0xff]
    %v5211 = vld [vmem:[#allocation3 + $0x9f0] sm:$0xf]
    %v5212 = vld [vmem:[#allocation3 + $0x9f4] sm:$0xff]
    %v5213 = vld [vmem:[#allocation3 + $0x9fc] sm:$0xff]
    %v5214 = vld [vmem:[#allocation3 + $0xa04] sm:$0xff]
    %v5215 = vld [vmem:[#allocation3 + $0xa0c] sm:$0xf]
    %v5216 = vld [vmem:[#allocation3 + $0xa10] sm:$0xff]
    %v5217 = vld [vmem:[#allocation3 + $0xa18] sm:$0xff]
    %v5218 = vld [vmem:[#allocation3 + $0xa20] sm:$0xff]
    %v5219 = vld [vmem:[#allocation3 + $0xa28] sm:$0xf]
    %v5220 = vld [vmem:[#allocation3 + $0xa2c] sm:$0xff]
    %v5221 = vld [vmem:[#allocation3 + $0xa34] sm:$0xff]
    %v5222 = vld [vmem:[#allocation3 + $0xa3c] sm:$0xff]
    %v5223 = vld [vmem:[#allocation3 + $0xa44] sm:$0xf]
    %v5224 = vld [vmem:[#allocation3 + $0xa48] sm:$0xff]
    %v5225 = vld [vmem:[#allocation3 + $0xa50] sm:$0xff]
    %v5226 = vld [vmem:[#allocation3 + $0xa58] sm:$0xff]
    %v5227 = vld [vmem:[#allocation3 + $0xa60] sm:$0xf]
    %v5228 = vld [vmem:[#allocation3 + $0xa64] sm:$0xff]
    %v5229 = vld [vmem:[#allocation3 + $0xa6c] sm:$0xff]
    %v5230 = vld [vmem:[#allocation3 + $0xa74] sm:$0xff]
    %v5231 = vld [vmem:[#allocation3 + $0xa7c] sm:$0xf]
    %v5232 = vld [vmem:[#allocation3 + $0xa80] sm:$0xff]
    %v5233 = vld [vmem:[#allocation3 + $0xa88] sm:$0xff]
    %v5234 = vld [vmem:[#allocation3 + $0xa90] sm:$0xff]
    %v5235 = vld [vmem:[#allocation3 + $0xa98] sm:$0xf]
    %v5236 = vld [vmem:[#allocation3 + $0xa9c] sm:$0xff]
    %v5237 = vld [vmem:[#allocation3 + $0xaa4] sm:$0xff]
    %v5238 = vld [vmem:[#allocation3 + $0xaac] sm:$0xff]
    %v5239 = vld [vmem:[#allocation3 + $0xab4] sm:$0xf]
    %v5240 = vld [vmem:[#allocation3 + $0xab8] sm:$0xff]
    %v5241 = vld [vmem:[#allocation3 + $0xac0] sm:$0xff]
    %v5242 = vld [vmem:[#allocation3 + $0xac8] sm:$0xff]
    %v5243 = vld [vmem:[#allocation3 + $0xad0] sm:$0xf]
    %v5244 = vld [vmem:[#allocation3 + $0xad4] sm:$0xff]
    %v5245 = vld [vmem:[#allocation3 + $0xadc] sm:$0xff]
    %v5246 = vld [vmem:[#allocation3 + $0xae4] sm:$0xff]
    %v5247 = vld [vmem:[#allocation3 + $0xaec] sm:$0xf]
    %v5248 = vld [vmem:[#allocation3 + $0xaf0] sm:$0xff]
    %v5249 = vld [vmem:[#allocation3 + $0xaf8] sm:$0xff]
    %v5250 = vld [vmem:[#allocation3 + $0xb00] sm:$0xff]
    %v5251 = vld [vmem:[#allocation3 + $0xb08] sm:$0xf]
    %v5252 = vld [vmem:[#allocation3 + $0xb0c] sm:$0xff]
    %v5253 = vld [vmem:[#allocation3 + $0xb14] sm:$0xff]
    %v5254 = vld [vmem:[#allocation3 + $0xb1c] sm:$0xff]
    %v5255 = vld [vmem:[#allocation3 + $0xb24] sm:$0xf]
    %v5256 = vld [vmem:[#allocation3 + $0xb28] sm:$0xff]
    %v5257 = vld [vmem:[#allocation3 + $0xb30] sm:$0xff]
    %v5258 = vld [vmem:[#allocation3 + $0xb38] sm:$0xff]
    %v5259 = vld [vmem:[#allocation3 + $0xb40] sm:$0xf]
    %v5260 = vld [vmem:[#allocation3 + $0xb44] sm:$0xff]
    %v5261 = vld [vmem:[#allocation3 + $0xb4c] sm:$0xff]
    %v5262 = vld [vmem:[#allocation3 + $0xb54] sm:$0xff]
    %v5263 = vld [vmem:[#allocation3 + $0xb5c] sm:$0xf]
    %v5264 = vld [vmem:[#allocation3 + $0xb60] sm:$0xff]
    %v5265 = vld [vmem:[#allocation3 + $0xb68] sm:$0xff]
    %v5266 = vld [vmem:[#allocation3 + $0xb70] sm:$0xff]
    %v5267 = vld [vmem:[#allocation3 + $0xb78] sm:$0xf]
    %v5268 = vld [vmem:[#allocation3 + $0xb7c] sm:$0xff]
    %v5269 = vld [vmem:[#allocation3 + $0xb84] sm:$0xff]
    %v5270 = vld [vmem:[#allocation3 + $0xb8c] sm:$0xff]
    %v5271 = vld [vmem:[#allocation3 + $0xb94] sm:$0xf]
    %v5272 = vld [vmem:[#allocation3 + $0xb98] sm:$0xff]
    %v5273 = vld [vmem:[#allocation3 + $0xba0] sm:$0xff]
    %v5274 = vld [vmem:[#allocation3 + $0xba8] sm:$0xff]
    %v5275 = vld [vmem:[#allocation3 + $0xbb0] sm:$0xf]
    %v5276 = vld [vmem:[#allocation3 + $0xbb4] sm:$0xff]
    %v5277 = vld [vmem:[#allocation3 + $0xbbc] sm:$0xff]
    %v5278 = vld [vmem:[#allocation3 + $0xbc4] sm:$0xff]
    %v5279 = vld [vmem:[#allocation3 + $0xbcc] sm:$0xf]
    %v5280 = vld [vmem:[#allocation3 + $0xbd0] sm:$0xff]
    %v5281 = vld [vmem:[#allocation3 + $0xbd8] sm:$0xff]
    %v5282 = vld [vmem:[#allocation3 + $0xbe0] sm:$0xff]
    %v5283 = vld [vmem:[#allocation3 + $0xbe8] sm:$0xf]
    %v5284 = vld [vmem:[#allocation3 + $0xbec] sm:$0xff]
    %v5285 = vld [vmem:[#allocation3 + $0xbf4] sm:$0xff]
    %v5286 = vld [vmem:[#allocation3 + $0xbfc] sm:$0xff]
    %v5287 = vld [vmem:[#allocation3 + $0xc04] sm:$0xf]
    %v5288 = vld [vmem:[#allocation3 + $0xc08] sm:$0xff]
    %v5289 = vld [vmem:[#allocation3 + $0xc10] sm:$0xff]
    %v5290 = vld [vmem:[#allocation3 + $0xc18] sm:$0xff]
    %v5291 = vld [vmem:[#allocation3 + $0xc20] sm:$0xf]
    %v5292 = vld [vmem:[#allocation3 + $0xc24] sm:$0xff]
    %v5293 = vld [vmem:[#allocation3 + $0xc2c] sm:$0xff]
    %v5294 = vld [vmem:[#allocation3 + $0xc34] sm:$0xff]
    %v5295 = vld [vmem:[#allocation3 + $0xc3c] sm:$0xf]
    %v5296 = vld [vmem:[#allocation3 + $0xc40] sm:$0xff]
    %v5297 = vld [vmem:[#allocation3 + $0xc48] sm:$0xff]
    %v5298 = vld [vmem:[#allocation3 + $0xc50] sm:$0xff]
    %v5299 = vld [vmem:[#allocation3 + $0xc58] sm:$0xf]
    %v5300 = vld [vmem:[#allocation3 + $0xc5c] sm:$0xff]
    %v5301 = vld [vmem:[#allocation3 + $0xc64] sm:$0xff]
    %v5302 = vld [vmem:[#allocation3 + $0xc6c] sm:$0xff]
    %v5303 = vld [vmem:[#allocation3 + $0xc74] sm:$0xf]
    %v5304 = vld [vmem:[#allocation3 + $0xc78] sm:$0xff]
    %v5305 = vld [vmem:[#allocation3 + $0xc80] sm:$0xff]
    %v5306 = vld [vmem:[#allocation3 + $0xc88] sm:$0xff]
    %v5307 = vld [vmem:[#allocation3 + $0xc90] sm:$0xf]
    %v5308 = vld [vmem:[#allocation3 + $0xc94] sm:$0xff]
    %v5309 = vld [vmem:[#allocation3 + $0xc9c] sm:$0xff]
    %v5310 = vld [vmem:[#allocation3 + $0xca4] sm:$0xff]
    %v5311 = vld [vmem:[#allocation3 + $0xcac] sm:$0xf]
    %v5312 = vld [vmem:[#allocation3 + $0xcb0] sm:$0xff]
    %v5313 = vld [vmem:[#allocation3 + $0xcb8] sm:$0xff]
    %v5314 = vld [vmem:[#allocation3 + $0xcc0] sm:$0xff]
    %v5315 = vld [vmem:[#allocation3 + $0xcc8] sm:$0xf]
    %v5316 = vld [vmem:[#allocation3 + $0xccc] sm:$0xff]
    %v5317 = vld [vmem:[#allocation3 + $0xcd4] sm:$0xff]
    %v5318 = vld [vmem:[#allocation3 + $0xcdc] sm:$0xff]
    %v5319 = vld [vmem:[#allocation3 + $0xce4] sm:$0xf]
    %v5320 = vld [vmem:[#allocation3 + $0xce8] sm:$0xff]
    %v5321 = vld [vmem:[#allocation3 + $0xcf0] sm:$0xff]
    %v5322 = vld [vmem:[#allocation3 + $0xcf8] sm:$0xff]
    %v5323 = vld [vmem:[#allocation3 + $0xd00] sm:$0xf]
    %v5324 = vld [vmem:[#allocation3 + $0xd04] sm:$0xff]
    %v5325 = vld [vmem:[#allocation3 + $0xd0c] sm:$0xff]
    %v5326 = vld [vmem:[#allocation3 + $0xd14] sm:$0xff]
    %v5327 = vld [vmem:[#allocation3 + $0xd1c] sm:$0xf]
    %v5328 = vld [vmem:[#allocation3 + $0xd20] sm:$0xff]
    %v5329 = vld [vmem:[#allocation3 + $0xd28] sm:$0xff]
    %v5330 = vld [vmem:[#allocation3 + $0xd30] sm:$0xff]
    %v5331 = vld [vmem:[#allocation3 + $0xd38] sm:$0xf]
    %v5332 = vld [vmem:[#allocation3 + $0xd3c] sm:$0xff]
    %v5333 = vld [vmem:[#allocation3 + $0xd44] sm:$0xff]
    %v5334 = vld [vmem:[#allocation3 + $0xd4c] sm:$0xff]
    %v5335 = vld [vmem:[#allocation3 + $0xd54] sm:$0xf]
    %v5336 = vld [vmem:[#allocation3 + $0xd58] sm:$0xff]
    %v5337 = vld [vmem:[#allocation3 + $0xd60] sm:$0xff]
    %v5338 = vld [vmem:[#allocation3 + $0xd68] sm:$0xff]
    %v5339 = vld [vmem:[#allocation3 + $0xd70] sm:$0xf]
    %v5340 = vld [vmem:[#allocation3 + $0xd74] sm:$0xff]
    %v5341 = vld [vmem:[#allocation3 + $0xd7c] sm:$0xff]
    %v5342 = vld [vmem:[#allocation3 + $0xd84] sm:$0xff]
    %v5343 = vld [vmem:[#allocation3 + $0xd8c] sm:$0xf]
    %v5344 = vld [vmem:[#allocation3 + $0xd90] sm:$0xff]
    %v5345 = vld [vmem:[#allocation3 + $0xd98] sm:$0xff]
    %v5346 = vld [vmem:[#allocation3 + $0xda0] sm:$0xff]
    %v5347 = vld [vmem:[#allocation3 + $0xda8] sm:$0xf]
    %v5348 = vld [vmem:[#allocation3 + $0xdac] sm:$0xff]
    %v5349 = vld [vmem:[#allocation3 + $0xdb4] sm:$0xff]
    %v5350 = vld [vmem:[#allocation3 + $0xdbc] sm:$0xff]
    %v5351 = vld [vmem:[#allocation3 + $0xdc4] sm:$0xf]
    %v5352 = vld [vmem:[#allocation3 + $0xdc8] sm:$0xff]
    %v5353 = vld [vmem:[#allocation3 + $0xdd0] sm:$0xff]
    %v5354 = vld [vmem:[#allocation3 + $0xdd8] sm:$0xff]
    %v5355 = vld [vmem:[#allocation3 + $0xde0] sm:$0xf]
    %v5356 = vld [vmem:[#allocation3 + $0xde4] sm:$0xff]
    %v5357 = vld [vmem:[#allocation3 + $0xdec] sm:$0xff]
    %v5358 = vld [vmem:[#allocation3 + $0xdf4] sm:$0xff]
    %v5359 = vld [vmem:[#allocation3 + $0xdfc] sm:$0xf]
    %v5360 = vld [vmem:[%s8] sm:$0xff]
    %v5362 = vlaneseq
    %v5363 = vshrl.u32 %v5362, 7
    %v5364 = vsub.s32 0, %v5363
    %v5365 = vrot.slane %v5360, %v5364
    %v5366 = vlaneseq
    %v5367 = vshrl.u32 %v5366, 7
    %v5368 = vsub.s32 1, %v5367
    %v5369 = vrot.slane %v5360, %v5368
    %v5370 = vlaneseq
    %v5371 = vshrl.u32 %v5370, 7
    %v5372 = vsub.s32 2, %v5371
    %v5373 = vrot.slane %v5360, %v5372
    %v5374 = vlaneseq
    %v5375 = vshrl.u32 %v5374, 7
    %v5376 = vsub.s32 3, %v5375
    %v5377 = vrot.slane %v5360, %v5376
    %v5378 = vlaneseq
    %v5379 = vshrl.u32 %v5378, 7
    %v5380 = vsub.s32 4, %v5379
    %v5381 = vrot.slane %v5360, %v5380
    %v5382 = vlaneseq
    %v5383 = vshrl.u32 %v5382, 7
    %v5384 = vsub.s32 5, %v5383
    %v5385 = vrot.slane %v5360, %v5384
    %v5386 = vlaneseq
    %v5387 = vshrl.u32 %v5386, 7
    %v5388 = vsub.s32 6, %v5387
    %v5389 = vrot.slane %v5360, %v5388
    %v5909 = vunpack.c.l.b16 %v4848
    %v5910 = vunpack.c.h.b16 %v4848
    %v5911 = vunpack.c.l.b16 %v4849
    %v5912 = vunpack.c.h.b16 %v4849
    %v5913 = vunpack.c.l.b16 %v4850
    %v5914 = vunpack.c.h.b16 %v4850
    %v5915 = vunpack.c.l.b16 %v4851
    %v5916 = vunpack.c.l.b16 %v4852
    %v5917 = vunpack.c.h.b16 %v4852
    %v5918 = vunpack.c.l.b16 %v4853
    %v5919 = vunpack.c.h.b16 %v4853
    %v5920 = vunpack.c.l.b16 %v4854
    %v5921 = vunpack.c.h.b16 %v4854
    %v5922 = vunpack.c.l.b16 %v4855
    %v5923 = vunpack.c.l.b16 %v4856
    %v5924 = vunpack.c.h.b16 %v4856
    %v5925 = vunpack.c.l.b16 %v4857
    %v5926 = vunpack.c.h.b16 %v4857
    %v5927 = vunpack.c.l.b16 %v4858
    %v5928 = vunpack.c.h.b16 %v4858
    %v5929 = vunpack.c.l.b16 %v4859
    %v5930 = vunpack.c.l.b16 %v4860
    %v5931 = vunpack.c.h.b16 %v4860
    %v5932 = vunpack.c.l.b16 %v4861
    %v5933 = vunpack.c.h.b16 %v4861
    %v5934 = vunpack.c.l.b16 %v4862
    %v5935 = vunpack.c.h.b16 %v4862
    %v5936 = vunpack.c.l.b16 %v4863
    %v5937 = vunpack.c.l.b16 %v4864
    %v5938 = vunpack.c.h.b16 %v4864
    %v5939 = vunpack.c.l.b16 %v4865
    %v5940 = vunpack.c.h.b16 %v4865
    %v5941 = vunpack.c.l.b16 %v4866
    %v5942 = vunpack.c.h.b16 %v4866
    %v5943 = vunpack.c.l.b16 %v4867
    %v5944 = vunpack.c.l.b16 %v4868
    %v5945 = vunpack.c.h.b16 %v4868
    %v5946 = vunpack.c.l.b16 %v4869
    %v5947 = vunpack.c.h.b16 %v4869
    %v5948 = vunpack.c.l.b16 %v4870
    %v5949 = vunpack.c.h.b16 %v4870
    %v5950 = vunpack.c.l.b16 %v4871
    %v5951 = vunpack.c.l.b16 %v4872
    %v5952 = vunpack.c.h.b16 %v4872
    %v5953 = vunpack.c.l.b16 %v4873
    %v5954 = vunpack.c.h.b16 %v4873
    %v5955 = vunpack.c.l.b16 %v4874
    %v5956 = vunpack.c.h.b16 %v4874
    %v5957 = vunpack.c.l.b16 %v4875
    %v5958 = vunpack.c.l.b16 %v4876
    %v5959 = vunpack.c.h.b16 %v4876
    %v5960 = vunpack.c.l.b16 %v4877
    %v5961 = vunpack.c.h.b16 %v4877
    %v5962 = vunpack.c.l.b16 %v4878
    %v5963 = vunpack.c.h.b16 %v4878
    %v5964 = vunpack.c.l.b16 %v4879
    %v5965 = vunpack.c.l.b16 %v4880
    %v5966 = vunpack.c.h.b16 %v4880
    %v5967 = vunpack.c.l.b16 %v4881
    %v5968 = vunpack.c.h.b16 %v4881
    %v5969 = vunpack.c.l.b16 %v4882
    %v5970 = vunpack.c.h.b16 %v4882
    %v5971 = vunpack.c.l.b16 %v4883
    %v5972 = vunpack.c.l.b16 %v4884
    %v5973 = vunpack.c.h.b16 %v4884
    %v5974 = vunpack.c.l.b16 %v4885
    %v5975 = vunpack.c.h.b16 %v4885
    %v5976 = vunpack.c.l.b16 %v4886
    %v5977 = vunpack.c.h.b16 %v4886
    %v5978 = vunpack.c.l.b16 %v4887
    %v5979 = vunpack.c.l.b16 %v4888
    %v5980 = vunpack.c.h.b16 %v4888
    %v5981 = vunpack.c.l.b16 %v4889
    %v5982 = vunpack.c.h.b16 %v4889
    %v5983 = vunpack.c.l.b16 %v4890
    %v5984 = vunpack.c.h.b16 %v4890
    %v5985 = vunpack.c.l.b16 %v4891
    %v5986 = vunpack.c.l.b16 %v4892
    %v5987 = vunpack.c.h.b16 %v4892
    %v5988 = vunpack.c.l.b16 %v4893
    %v5989 = vunpack.c.h.b16 %v4893
    %v5990 = vunpack.c.l.b16 %v4894
    %v5991 = vunpack.c.h.b16 %v4894
    %v5992 = vunpack.c.l.b16 %v4895
    %v5993 = vunpack.c.l.b16 %v4896
    %v5994 = vunpack.c.h.b16 %v4896
    %v5995 = vunpack.c.l.b16 %v4897
    %v5996 = vunpack.c.h.b16 %v4897
    %v5997 = vunpack.c.l.b16 %v4898
    %v5998 = vunpack.c.h.b16 %v4898
    %v5999 = vunpack.c.l.b16 %v4899
    %v6000 = vunpack.c.l.b16 %v4900
    %v6001 = vunpack.c.h.b16 %v4900
    %v6002 = vunpack.c.l.b16 %v4901
    %v6003 = vunpack.c.h.b16 %v4901
    %v6004 = vunpack.c.l.b16 %v4902
    %v6005 = vunpack.c.h.b16 %v4902
    %v6006 = vunpack.c.l.b16 %v4903
    %v6007 = vunpack.c.l.b16 %v4904
    %v6008 = vunpack.c.h.b16 %v4904
    %v6009 = vunpack.c.l.b16 %v4905
    %v6010 = vunpack.c.h.b16 %v4905
    %v6011 = vunpack.c.l.b16 %v4906
    %v6012 = vunpack.c.h.b16 %v4906
    %v6013 = vunpack.c.l.b16 %v4907
    %v6014 = vunpack.c.l.b16 %v4908
    %v6015 = vunpack.c.h.b16 %v4908
    %v6016 = vunpack.c.l.b16 %v4909
    %v6017 = vunpack.c.h.b16 %v4909
    %v6018 = vunpack.c.l.b16 %v4910
    %v6019 = vunpack.c.h.b16 %v4910
    %v6020 = vunpack.c.l.b16 %v4911
    %v6021 = vunpack.c.l.b16 %v4912
    %v6022 = vunpack.c.h.b16 %v4912
    %v6023 = vunpack.c.l.b16 %v4913
    %v6024 = vunpack.c.h.b16 %v4913
    %v6025 = vunpack.c.l.b16 %v4914
    %v6026 = vunpack.c.h.b16 %v4914
    %v6027 = vunpack.c.l.b16 %v4915
    %v6028 = vunpack.c.l.b16 %v4916
    %v6029 = vunpack.c.h.b16 %v4916
    %v6030 = vunpack.c.l.b16 %v4917
    %v6031 = vunpack.c.h.b16 %v4917
    %v6032 = vunpack.c.l.b16 %v4918
    %v6033 = vunpack.c.h.b16 %v4918
    %v6034 = vunpack.c.l.b16 %v4919
    %v6035 = vunpack.c.l.b16 %v4920
    %v6036 = vunpack.c.h.b16 %v4920
    %v6037 = vunpack.c.l.b16 %v4921
    %v6038 = vunpack.c.h.b16 %v4921
    %v6039 = vunpack.c.l.b16 %v4922
    %v6040 = vunpack.c.h.b16 %v4922
    %v6041 = vunpack.c.l.b16 %v4923
    %v6042 = vunpack.c.l.b16 %v4924
    %v6043 = vunpack.c.h.b16 %v4924
    %v6044 = vunpack.c.l.b16 %v4925
    %v6045 = vunpack.c.h.b16 %v4925
    %v6046 = vunpack.c.l.b16 %v4926
    %v6047 = vunpack.c.h.b16 %v4926
    %v6048 = vunpack.c.l.b16 %v4927
    %v6049 = vunpack.c.l.b16 %v4928
    %v6050 = vunpack.c.h.b16 %v4928
    %v6051 = vunpack.c.l.b16 %v4929
    %v6052 = vunpack.c.h.b16 %v4929
    %v6053 = vunpack.c.l.b16 %v4930
    %v6054 = vunpack.c.h.b16 %v4930
    %v6055 = vunpack.c.l.b16 %v4931
    %v6056 = vunpack.c.l.b16 %v4932
    %v6057 = vunpack.c.h.b16 %v4932
    %v6058 = vunpack.c.l.b16 %v4933
    %v6059 = vunpack.c.h.b16 %v4933
    %v6060 = vunpack.c.l.b16 %v4934
    %v6061 = vunpack.c.h.b16 %v4934
    %v6062 = vunpack.c.l.b16 %v4935
    %v6063 = vunpack.c.l.b16 %v4936
    %v6064 = vunpack.c.h.b16 %v4936
    %v6065 = vunpack.c.l.b16 %v4937
    %v6066 = vunpack.c.h.b16 %v4937
    %v6067 = vunpack.c.l.b16 %v4938
    %v6068 = vunpack.c.h.b16 %v4938
    %v6069 = vunpack.c.l.b16 %v4939
    %v6070 = vunpack.c.l.b16 %v4940
    %v6071 = vunpack.c.h.b16 %v4940
    %v6072 = vunpack.c.l.b16 %v4941
    %v6073 = vunpack.c.h.b16 %v4941
    %v6074 = vunpack.c.l.b16 %v4942
    %v6075 = vunpack.c.h.b16 %v4942
    %v6076 = vunpack.c.l.b16 %v4943
    %v6077 = vunpack.c.l.b16 %v4944
    %v6078 = vunpack.c.h.b16 %v4944
    %v6079 = vunpack.c.l.b16 %v4945
    %v6080 = vunpack.c.h.b16 %v4945
    %v6081 = vunpack.c.l.b16 %v4946
    %v6082 = vunpack.c.h.b16 %v4946
    %v6083 = vunpack.c.l.b16 %v4947
    %v6084 = vunpack.c.l.b16 %v4948
    %v6085 = vunpack.c.h.b16 %v4948
    %v6086 = vunpack.c.l.b16 %v4949
    %v6087 = vunpack.c.h.b16 %v4949
    %v6088 = vunpack.c.l.b16 %v4950
    %v6089 = vunpack.c.h.b16 %v4950
    %v6090 = vunpack.c.l.b16 %v4951
    %v6091 = vunpack.c.l.b16 %v4952
    %v6092 = vunpack.c.h.b16 %v4952
    %v6093 = vunpack.c.l.b16 %v4953
    %v6094 = vunpack.c.h.b16 %v4953
    %v6095 = vunpack.c.l.b16 %v4954
    %v6096 = vunpack.c.h.b16 %v4954
    %v6097 = vunpack.c.l.b16 %v4955
    %v6098 = vunpack.c.l.b16 %v4956
    %v6099 = vunpack.c.h.b16 %v4956
    %v6100 = vunpack.c.l.b16 %v4957
    %v6101 = vunpack.c.h.b16 %v4957
    %v6102 = vunpack.c.l.b16 %v4958
    %v6103 = vunpack.c.h.b16 %v4958
    %v6104 = vunpack.c.l.b16 %v4959
    %v6105 = vunpack.c.l.b16 %v4960
    %v6106 = vunpack.c.h.b16 %v4960
    %v6107 = vunpack.c.l.b16 %v4961
    %v6108 = vunpack.c.h.b16 %v4961
    %v6109 = vunpack.c.l.b16 %v4962
    %v6110 = vunpack.c.h.b16 %v4962
    %v6111 = vunpack.c.l.b16 %v4963
    %v6112 = vunpack.c.l.b16 %v4964
    %v6113 = vunpack.c.h.b16 %v4964
    %v6114 = vunpack.c.l.b16 %v4965
    %v6115 = vunpack.c.h.b16 %v4965
    %v6116 = vunpack.c.l.b16 %v4966
    %v6117 = vunpack.c.h.b16 %v4966
    %v6118 = vunpack.c.l.b16 %v4967
    %v6119 = vunpack.c.l.b16 %v4968
    %v6120 = vunpack.c.h.b16 %v4968
    %v6121 = vunpack.c.l.b16 %v4969
    %v6122 = vunpack.c.h.b16 %v4969
    %v6123 = vunpack.c.l.b16 %v4970
    %v6124 = vunpack.c.h.b16 %v4970
    %v6125 = vunpack.c.l.b16 %v4971
    %v6126 = vunpack.c.l.b16 %v4972
    %v6127 = vunpack.c.h.b16 %v4972
    %v6128 = vunpack.c.l.b16 %v4973
    %v6129 = vunpack.c.h.b16 %v4973
    %v6130 = vunpack.c.l.b16 %v4974
    %v6131 = vunpack.c.h.b16 %v4974
    %v6132 = vunpack.c.l.b16 %v4975
    %v6133 = vunpack.c.l.b16 %v4976
    %v6134 = vunpack.c.h.b16 %v4976
    %v6135 = vunpack.c.l.b16 %v4977
    %v6136 = vunpack.c.h.b16 %v4977
    %v6137 = vunpack.c.l.b16 %v4978
    %v6138 = vunpack.c.h.b16 %v4978
    %v6139 = vunpack.c.l.b16 %v4979
    %v6140 = vunpack.c.l.b16 %v4980
    %v6141 = vunpack.c.h.b16 %v4980
    %v6142 = vunpack.c.l.b16 %v4981
    %v6143 = vunpack.c.h.b16 %v4981
    %v6144 = vunpack.c.l.b16 %v4982
    %v6145 = vunpack.c.h.b16 %v4982
    %v6146 = vunpack.c.l.b16 %v4983
    %v6147 = vunpack.c.l.b16 %v4984
    %v6148 = vunpack.c.h.b16 %v4984
    %v6149 = vunpack.c.l.b16 %v4985
    %v6150 = vunpack.c.h.b16 %v4985
    %v6151 = vunpack.c.l.b16 %v4986
    %v6152 = vunpack.c.h.b16 %v4986
    %v6153 = vunpack.c.l.b16 %v4987
    %v6154 = vunpack.c.l.b16 %v4988
    %v6155 = vunpack.c.h.b16 %v4988
    %v6156 = vunpack.c.l.b16 %v4989
    %v6157 = vunpack.c.h.b16 %v4989
    %v6158 = vunpack.c.l.b16 %v4990
    %v6159 = vunpack.c.h.b16 %v4990
    %v6160 = vunpack.c.l.b16 %v4991
    %v6161 = vunpack.c.l.b16 %v4992
    %v6162 = vunpack.c.h.b16 %v4992
    %v6163 = vunpack.c.l.b16 %v4993
    %v6164 = vunpack.c.h.b16 %v4993
    %v6165 = vunpack.c.l.b16 %v4994
    %v6166 = vunpack.c.h.b16 %v4994
    %v6167 = vunpack.c.l.b16 %v4995
    %v6168 = vunpack.c.l.b16 %v4996
    %v6169 = vunpack.c.h.b16 %v4996
    %v6170 = vunpack.c.l.b16 %v4997
    %v6171 = vunpack.c.h.b16 %v4997
    %v6172 = vunpack.c.l.b16 %v4998
    %v6173 = vunpack.c.h.b16 %v4998
    %v6174 = vunpack.c.l.b16 %v4999
    %v6175 = vunpack.c.l.b16 %v5000
    %v6176 = vunpack.c.h.b16 %v5000
    %v6177 = vunpack.c.l.b16 %v5001
    %v6178 = vunpack.c.h.b16 %v5001
    %v6179 = vunpack.c.l.b16 %v5002
    %v6180 = vunpack.c.h.b16 %v5002
    %v6181 = vunpack.c.l.b16 %v5003
    %v6182 = vunpack.c.l.b16 %v5004
    %v6183 = vunpack.c.h.b16 %v5004
    %v6184 = vunpack.c.l.b16 %v5005
    %v6185 = vunpack.c.h.b16 %v5005
    %v6186 = vunpack.c.l.b16 %v5006
    %v6187 = vunpack.c.h.b16 %v5006
    %v6188 = vunpack.c.l.b16 %v5007
    %v6189 = vunpack.c.l.b16 %v5008
    %v6190 = vunpack.c.h.b16 %v5008
    %v6191 = vunpack.c.l.b16 %v5009
    %v6192 = vunpack.c.h.b16 %v5009
    %v6193 = vunpack.c.l.b16 %v5010
    %v6194 = vunpack.c.h.b16 %v5010
    %v6195 = vunpack.c.l.b16 %v5011
    %v6196 = vunpack.c.l.b16 %v5012
    %v6197 = vunpack.c.h.b16 %v5012
    %v6198 = vunpack.c.l.b16 %v5013
    %v6199 = vunpack.c.h.b16 %v5013
    %v6200 = vunpack.c.l.b16 %v5014
    %v6201 = vunpack.c.h.b16 %v5014
    %v6202 = vunpack.c.l.b16 %v5015
    %v6203 = vunpack.c.l.b16 %v5016
    %v6204 = vunpack.c.h.b16 %v5016
    %v6205 = vunpack.c.l.b16 %v5017
    %v6206 = vunpack.c.h.b16 %v5017
    %v6207 = vunpack.c.l.b16 %v5018
    %v6208 = vunpack.c.h.b16 %v5018
    %v6209 = vunpack.c.l.b16 %v5019
    %v6210 = vunpack.c.l.b16 %v5020
    %v6211 = vunpack.c.h.b16 %v5020
    %v6212 = vunpack.c.l.b16 %v5021
    %v6213 = vunpack.c.h.b16 %v5021
    %v6214 = vunpack.c.l.b16 %v5022
    %v6215 = vunpack.c.h.b16 %v5022
    %v6216 = vunpack.c.l.b16 %v5023
    %v6217 = vunpack.c.l.b16 %v5024
    %v6218 = vunpack.c.h.b16 %v5024
    %v6219 = vunpack.c.l.b16 %v5025
    %v6220 = vunpack.c.h.b16 %v5025
    %v6221 = vunpack.c.l.b16 %v5026
    %v6222 = vunpack.c.h.b16 %v5026
    %v6223 = vunpack.c.l.b16 %v5027
    %v6224 = vunpack.c.l.b16 %v5028
    %v6225 = vunpack.c.h.b16 %v5028
    %v6226 = vunpack.c.l.b16 %v5029
    %v6227 = vunpack.c.h.b16 %v5029
    %v6228 = vunpack.c.l.b16 %v5030
    %v6229 = vunpack.c.h.b16 %v5030
    %v6230 = vunpack.c.l.b16 %v5031
    %v6231 = vunpack.c.l.b16 %v5032
    %v6232 = vunpack.c.h.b16 %v5032
    %v6233 = vunpack.c.l.b16 %v5033
    %v6234 = vunpack.c.h.b16 %v5033
    %v6235 = vunpack.c.l.b16 %v5034
    %v6236 = vunpack.c.h.b16 %v5034
    %v6237 = vunpack.c.l.b16 %v5035
    %v6238 = vunpack.c.l.b16 %v5036
    %v6239 = vunpack.c.h.b16 %v5036
    %v6240 = vunpack.c.l.b16 %v5037
    %v6241 = vunpack.c.h.b16 %v5037
    %v6242 = vunpack.c.l.b16 %v5038
    %v6243 = vunpack.c.h.b16 %v5038
    %v6244 = vunpack.c.l.b16 %v5039
    %v6245 = vunpack.c.l.b16 %v5040
    %v6246 = vunpack.c.h.b16 %v5040
    %v6247 = vunpack.c.l.b16 %v5041
    %v6248 = vunpack.c.h.b16 %v5041
    %v6249 = vunpack.c.l.b16 %v5042
    %v6250 = vunpack.c.h.b16 %v5042
    %v6251 = vunpack.c.l.b16 %v5043
    %v6252 = vunpack.c.l.b16 %v5044
    %v6253 = vunpack.c.h.b16 %v5044
    %v6254 = vunpack.c.l.b16 %v5045
    %v6255 = vunpack.c.h.b16 %v5045
    %v6256 = vunpack.c.l.b16 %v5046
    %v6257 = vunpack.c.h.b16 %v5046
    %v6258 = vunpack.c.l.b16 %v5047
    %v6259 = vunpack.c.l.b16 %v5048
    %v6260 = vunpack.c.h.b16 %v5048
    %v6261 = vunpack.c.l.b16 %v5049
    %v6262 = vunpack.c.h.b16 %v5049
    %v6263 = vunpack.c.l.b16 %v5050
    %v6264 = vunpack.c.h.b16 %v5050
    %v6265 = vunpack.c.l.b16 %v5051
    %v6266 = vunpack.c.l.b16 %v5052
    %v6267 = vunpack.c.h.b16 %v5052
    %v6268 = vunpack.c.l.b16 %v5053
    %v6269 = vunpack.c.h.b16 %v5053
    %v6270 = vunpack.c.l.b16 %v5054
    %v6271 = vunpack.c.h.b16 %v5054
    %v6272 = vunpack.c.l.b16 %v5055
    %v6273 = vunpack.c.l.b16 %v5056
    %v6274 = vunpack.c.h.b16 %v5056
    %v6275 = vunpack.c.l.b16 %v5057
    %v6276 = vunpack.c.h.b16 %v5057
    %v6277 = vunpack.c.l.b16 %v5058
    %v6278 = vunpack.c.h.b16 %v5058
    %v6279 = vunpack.c.l.b16 %v5059
    %v6280 = vunpack.c.l.b16 %v5060
    %v6281 = vunpack.c.h.b16 %v5060
    %v6282 = vunpack.c.l.b16 %v5061
    %v6283 = vunpack.c.h.b16 %v5061
    %v6284 = vunpack.c.l.b16 %v5062
    %v6285 = vunpack.c.h.b16 %v5062
    %v6286 = vunpack.c.l.b16 %v5063
    %v6287 = vunpack.c.l.b16 %v5064
    %v6288 = vunpack.c.h.b16 %v5064
    %v6289 = vunpack.c.l.b16 %v5065
    %v6290 = vunpack.c.h.b16 %v5065
    %v6291 = vunpack.c.l.b16 %v5066
    %v6292 = vunpack.c.h.b16 %v5066
    %v6293 = vunpack.c.l.b16 %v5067
    %v6294 = vunpack.c.l.b16 %v5068
    %v6295 = vunpack.c.h.b16 %v5068
    %v6296 = vunpack.c.l.b16 %v5069
    %v6297 = vunpack.c.h.b16 %v5069
    %v6298 = vunpack.c.l.b16 %v5070
    %v6299 = vunpack.c.h.b16 %v5070
    %v6300 = vunpack.c.l.b16 %v5071
    %v6301 = vunpack.c.l.b16 %v5072
    %v6302 = vunpack.c.h.b16 %v5072
    %v6303 = vunpack.c.l.b16 %v5073
    %v6304 = vunpack.c.h.b16 %v5073
    %v6305 = vunpack.c.l.b16 %v5074
    %v6306 = vunpack.c.h.b16 %v5074
    %v6307 = vunpack.c.l.b16 %v5075
    %v6308 = vunpack.c.l.b16 %v5076
    %v6309 = vunpack.c.h.b16 %v5076
    %v6310 = vunpack.c.l.b16 %v5077
    %v6311 = vunpack.c.h.b16 %v5077
    %v6312 = vunpack.c.l.b16 %v5078
    %v6313 = vunpack.c.h.b16 %v5078
    %v6314 = vunpack.c.l.b16 %v5079
    %v6315 = vunpack.c.l.b16 %v5080
    %v6316 = vunpack.c.h.b16 %v5080
    %v6317 = vunpack.c.l.b16 %v5081
    %v6318 = vunpack.c.h.b16 %v5081
    %v6319 = vunpack.c.l.b16 %v5082
    %v6320 = vunpack.c.h.b16 %v5082
    %v6321 = vunpack.c.l.b16 %v5083
    %v6322 = vunpack.c.l.b16 %v5084
    %v6323 = vunpack.c.h.b16 %v5084
    %v6324 = vunpack.c.l.b16 %v5085
    %v6325 = vunpack.c.h.b16 %v5085
    %v6326 = vunpack.c.l.b16 %v5086
    %v6327 = vunpack.c.h.b16 %v5086
    %v6328 = vunpack.c.l.b16 %v5087
    %v6329 = vunpack.c.l.b16 %v5088
    %v6330 = vunpack.c.h.b16 %v5088
    %v6331 = vunpack.c.l.b16 %v5089
    %v6332 = vunpack.c.h.b16 %v5089
    %v6333 = vunpack.c.l.b16 %v5090
    %v6334 = vunpack.c.h.b16 %v5090
    %v6335 = vunpack.c.l.b16 %v5091
    %v6336 = vunpack.c.l.b16 %v5092
    %v6337 = vunpack.c.h.b16 %v5092
    %v6338 = vunpack.c.l.b16 %v5093
    %v6339 = vunpack.c.h.b16 %v5093
    %v6340 = vunpack.c.l.b16 %v5094
    %v6341 = vunpack.c.h.b16 %v5094
    %v6342 = vunpack.c.l.b16 %v5095
    %v6343 = vunpack.c.l.b16 %v5096
    %v6344 = vunpack.c.h.b16 %v5096
    %v6345 = vunpack.c.l.b16 %v5097
    %v6346 = vunpack.c.h.b16 %v5097
    %v6347 = vunpack.c.l.b16 %v5098
    %v6348 = vunpack.c.h.b16 %v5098
    %v6349 = vunpack.c.l.b16 %v5099
    %v6350 = vunpack.c.l.b16 %v5100
    %v6351 = vunpack.c.h.b16 %v5100
    %v6352 = vunpack.c.l.b16 %v5101
    %v6353 = vunpack.c.h.b16 %v5101
    %v6354 = vunpack.c.l.b16 %v5102
    %v6355 = vunpack.c.h.b16 %v5102
    %v6356 = vunpack.c.l.b16 %v5103
    %v6357 = vunpack.c.l.b16 %v5104
    %v6358 = vunpack.c.h.b16 %v5104
    %v6359 = vunpack.c.l.b16 %v5105
    %v6360 = vunpack.c.h.b16 %v5105
    %v6361 = vunpack.c.l.b16 %v5106
    %v6362 = vunpack.c.h.b16 %v5106
    %v6363 = vunpack.c.l.b16 %v5107
    %v6364 = vunpack.c.l.b16 %v5108
    %v6365 = vunpack.c.h.b16 %v5108
    %v6366 = vunpack.c.l.b16 %v5109
    %v6367 = vunpack.c.h.b16 %v5109
    %v6368 = vunpack.c.l.b16 %v5110
    %v6369 = vunpack.c.h.b16 %v5110
    %v6370 = vunpack.c.l.b16 %v5111
    %v6371 = vunpack.c.l.b16 %v5112
    %v6372 = vunpack.c.h.b16 %v5112
    %v6373 = vunpack.c.l.b16 %v5113
    %v6374 = vunpack.c.h.b16 %v5113
    %v6375 = vunpack.c.l.b16 %v5114
    %v6376 = vunpack.c.h.b16 %v5114
    %v6377 = vunpack.c.l.b16 %v5115
    %v6378 = vunpack.c.l.b16 %v5116
    %v6379 = vunpack.c.h.b16 %v5116
    %v6380 = vunpack.c.l.b16 %v5117
    %v6381 = vunpack.c.h.b16 %v5117
    %v6382 = vunpack.c.l.b16 %v5118
    %v6383 = vunpack.c.h.b16 %v5118
    %v6384 = vunpack.c.l.b16 %v5119
    %v6385 = vunpack.c.l.b16 %v5120
    %v6386 = vunpack.c.h.b16 %v5120
    %v6387 = vunpack.c.l.b16 %v5121
    %v6388 = vunpack.c.h.b16 %v5121
    %v6389 = vunpack.c.l.b16 %v5122
    %v6390 = vunpack.c.h.b16 %v5122
    %v6391 = vunpack.c.l.b16 %v5123
    %v6392 = vunpack.c.l.b16 %v5124
    %v6393 = vunpack.c.h.b16 %v5124
    %v6394 = vunpack.c.l.b16 %v5125
    %v6395 = vunpack.c.h.b16 %v5125
    %v6396 = vunpack.c.l.b16 %v5126
    %v6397 = vunpack.c.h.b16 %v5126
    %v6398 = vunpack.c.l.b16 %v5127
    %v6399 = vunpack.c.l.b16 %v5128
    %v6400 = vunpack.c.h.b16 %v5128
    %v6401 = vunpack.c.l.b16 %v5129
    %v6402 = vunpack.c.h.b16 %v5129
    %v6403 = vunpack.c.l.b16 %v5130
    %v6404 = vunpack.c.h.b16 %v5130
    %v6405 = vunpack.c.l.b16 %v5131
    %v6406 = vunpack.c.l.b16 %v5132
    %v6407 = vunpack.c.h.b16 %v5132
    %v6408 = vunpack.c.l.b16 %v5133
    %v6409 = vunpack.c.h.b16 %v5133
    %v6410 = vunpack.c.l.b16 %v5134
    %v6411 = vunpack.c.h.b16 %v5134
    %v6412 = vunpack.c.l.b16 %v5135
    %v6413 = vunpack.c.l.b16 %v5136
    %v6414 = vunpack.c.h.b16 %v5136
    %v6415 = vunpack.c.l.b16 %v5137
    %v6416 = vunpack.c.h.b16 %v5137
    %v6417 = vunpack.c.l.b16 %v5138
    %v6418 = vunpack.c.h.b16 %v5138
    %v6419 = vunpack.c.l.b16 %v5139
    %v6420 = vunpack.c.l.b16 %v5140
    %v6421 = vunpack.c.h.b16 %v5140
    %v6422 = vunpack.c.l.b16 %v5141
    %v6423 = vunpack.c.h.b16 %v5141
    %v6424 = vunpack.c.l.b16 %v5142
    %v6425 = vunpack.c.h.b16 %v5142
    %v6426 = vunpack.c.l.b16 %v5143
    %v6427 = vunpack.c.l.b16 %v5144
    %v6428 = vunpack.c.h.b16 %v5144
    %v6429 = vunpack.c.l.b16 %v5145
    %v6430 = vunpack.c.h.b16 %v5145
    %v6431 = vunpack.c.l.b16 %v5146
    %v6432 = vunpack.c.h.b16 %v5146
    %v6433 = vunpack.c.l.b16 %v5147
    %v6434 = vunpack.c.l.b16 %v5148
    %v6435 = vunpack.c.h.b16 %v5148
    %v6436 = vunpack.c.l.b16 %v5149
    %v6437 = vunpack.c.h.b16 %v5149
    %v6438 = vunpack.c.l.b16 %v5150
    %v6439 = vunpack.c.h.b16 %v5150
    %v6440 = vunpack.c.l.b16 %v5151
    %v6441 = vunpack.c.l.b16 %v5152
    %v6442 = vunpack.c.h.b16 %v5152
    %v6443 = vunpack.c.l.b16 %v5153
    %v6444 = vunpack.c.h.b16 %v5153
    %v6445 = vunpack.c.l.b16 %v5154
    %v6446 = vunpack.c.h.b16 %v5154
    %v6447 = vunpack.c.l.b16 %v5155
    %v6448 = vunpack.c.l.b16 %v5156
    %v6449 = vunpack.c.h.b16 %v5156
    %v6450 = vunpack.c.l.b16 %v5157
    %v6451 = vunpack.c.h.b16 %v5157
    %v6452 = vunpack.c.l.b16 %v5158
    %v6453 = vunpack.c.h.b16 %v5158
    %v6454 = vunpack.c.l.b16 %v5159
    %v6455 = vunpack.c.l.b16 %v5160
    %v6456 = vunpack.c.h.b16 %v5160
    %v6457 = vunpack.c.l.b16 %v5161
    %v6458 = vunpack.c.h.b16 %v5161
    %v6459 = vunpack.c.l.b16 %v5162
    %v6460 = vunpack.c.h.b16 %v5162
    %v6461 = vunpack.c.l.b16 %v5163
    %v6462 = vunpack.c.l.b16 %v5164
    %v6463 = vunpack.c.h.b16 %v5164
    %v6464 = vunpack.c.l.b16 %v5165
    %v6465 = vunpack.c.h.b16 %v5165
    %v6466 = vunpack.c.l.b16 %v5166
    %v6467 = vunpack.c.h.b16 %v5166
    %v6468 = vunpack.c.l.b16 %v5167
    %v6469 = vunpack.c.l.b16 %v5168
    %v6470 = vunpack.c.h.b16 %v5168
    %v6471 = vunpack.c.l.b16 %v5169
    %v6472 = vunpack.c.h.b16 %v5169
    %v6473 = vunpack.c.l.b16 %v5170
    %v6474 = vunpack.c.h.b16 %v5170
    %v6475 = vunpack.c.l.b16 %v5171
    %v6476 = vunpack.c.l.b16 %v5172
    %v6477 = vunpack.c.h.b16 %v5172
    %v6478 = vunpack.c.l.b16 %v5173
    %v6479 = vunpack.c.h.b16 %v5173
    %v6480 = vunpack.c.l.b16 %v5174
    %v6481 = vunpack.c.h.b16 %v5174
    %v6482 = vunpack.c.l.b16 %v5175
    %v6483 = vunpack.c.l.b16 %v5176
    %v6484 = vunpack.c.h.b16 %v5176
    %v6485 = vunpack.c.l.b16 %v5177
    %v6486 = vunpack.c.h.b16 %v5177
    %v6487 = vunpack.c.l.b16 %v5178
    %v6488 = vunpack.c.h.b16 %v5178
    %v6489 = vunpack.c.l.b16 %v5179
    %v6490 = vunpack.c.l.b16 %v5180
    %v6491 = vunpack.c.h.b16 %v5180
    %v6492 = vunpack.c.l.b16 %v5181
    %v6493 = vunpack.c.h.b16 %v5181
    %v6494 = vunpack.c.l.b16 %v5182
    %v6495 = vunpack.c.h.b16 %v5182
    %v6496 = vunpack.c.l.b16 %v5183
    %v6497 = vunpack.c.l.b16 %v5184
    %v6498 = vunpack.c.h.b16 %v5184
    %v6499 = vunpack.c.l.b16 %v5185
    %v6500 = vunpack.c.h.b16 %v5185
    %v6501 = vunpack.c.l.b16 %v5186
    %v6502 = vunpack.c.h.b16 %v5186
    %v6503 = vunpack.c.l.b16 %v5187
    %v6504 = vunpack.c.l.b16 %v5188
    %v6505 = vunpack.c.h.b16 %v5188
    %v6506 = vunpack.c.l.b16 %v5189
    %v6507 = vunpack.c.h.b16 %v5189
    %v6508 = vunpack.c.l.b16 %v5190
    %v6509 = vunpack.c.h.b16 %v5190
    %v6510 = vunpack.c.l.b16 %v5191
    %v6511 = vunpack.c.l.b16 %v5192
    %v6512 = vunpack.c.h.b16 %v5192
    %v6513 = vunpack.c.l.b16 %v5193
    %v6514 = vunpack.c.h.b16 %v5193
    %v6515 = vunpack.c.l.b16 %v5194
    %v6516 = vunpack.c.h.b16 %v5194
    %v6517 = vunpack.c.l.b16 %v5195
    %v6518 = vunpack.c.l.b16 %v5196
    %v6519 = vunpack.c.h.b16 %v5196
    %v6520 = vunpack.c.l.b16 %v5197
    %v6521 = vunpack.c.h.b16 %v5197
    %v6522 = vunpack.c.l.b16 %v5198
    %v6523 = vunpack.c.h.b16 %v5198
    %v6524 = vunpack.c.l.b16 %v5199
    %v6525 = vunpack.c.l.b16 %v5200
    %v6526 = vunpack.c.h.b16 %v5200
    %v6527 = vunpack.c.l.b16 %v5201
    %v6528 = vunpack.c.h.b16 %v5201
    %v6529 = vunpack.c.l.b16 %v5202
    %v6530 = vunpack.c.h.b16 %v5202
    %v6531 = vunpack.c.l.b16 %v5203
    %v6532 = vunpack.c.l.b16 %v5204
    %v6533 = vunpack.c.h.b16 %v5204
    %v6534 = vunpack.c.l.b16 %v5205
    %v6535 = vunpack.c.h.b16 %v5205
    %v6536 = vunpack.c.l.b16 %v5206
    %v6537 = vunpack.c.h.b16 %v5206
    %v6538 = vunpack.c.l.b16 %v5207
    %v6539 = vunpack.c.l.b16 %v5208
    %v6540 = vunpack.c.h.b16 %v5208
    %v6541 = vunpack.c.l.b16 %v5209
    %v6542 = vunpack.c.h.b16 %v5209
    %v6543 = vunpack.c.l.b16 %v5210
    %v6544 = vunpack.c.h.b16 %v5210
    %v6545 = vunpack.c.l.b16 %v5211
    %v6546 = vunpack.c.l.b16 %v5212
    %v6547 = vunpack.c.h.b16 %v5212
    %v6548 = vunpack.c.l.b16 %v5213
    %v6549 = vunpack.c.h.b16 %v5213
    %v6550 = vunpack.c.l.b16 %v5214
    %v6551 = vunpack.c.h.b16 %v5214
    %v6552 = vunpack.c.l.b16 %v5215
    %v6553 = vunpack.c.l.b16 %v5216
    %v6554 = vunpack.c.h.b16 %v5216
    %v6555 = vunpack.c.l.b16 %v5217
    %v6556 = vunpack.c.h.b16 %v5217
    %v6557 = vunpack.c.l.b16 %v5218
    %v6558 = vunpack.c.h.b16 %v5218
    %v6559 = vunpack.c.l.b16 %v5219
    %v6560 = vunpack.c.l.b16 %v5220
    %v6561 = vunpack.c.h.b16 %v5220
    %v6562 = vunpack.c.l.b16 %v5221
    %v6563 = vunpack.c.h.b16 %v5221
    %v6564 = vunpack.c.l.b16 %v5222
    %v6565 = vunpack.c.h.b16 %v5222
    %v6566 = vunpack.c.l.b16 %v5223
    %v6567 = vunpack.c.l.b16 %v5224
    %v6568 = vunpack.c.h.b16 %v5224
    %v6569 = vunpack.c.l.b16 %v5225
    %v6570 = vunpack.c.h.b16 %v5225
    %v6571 = vunpack.c.l.b16 %v5226
    %v6572 = vunpack.c.h.b16 %v5226
    %v6573 = vunpack.c.l.b16 %v5227
    %v6574 = vunpack.c.l.b16 %v5228
    %v6575 = vunpack.c.h.b16 %v5228
    %v6576 = vunpack.c.l.b16 %v5229
    %v6577 = vunpack.c.h.b16 %v5229
    %v6578 = vunpack.c.l.b16 %v5230
    %v6579 = vunpack.c.h.b16 %v5230
    %v6580 = vunpack.c.l.b16 %v5231
    %v6581 = vunpack.c.l.b16 %v5232
    %v6582 = vunpack.c.h.b16 %v5232
    %v6583 = vunpack.c.l.b16 %v5233
    %v6584 = vunpack.c.h.b16 %v5233
    %v6585 = vunpack.c.l.b16 %v5234
    %v6586 = vunpack.c.h.b16 %v5234
    %v6587 = vunpack.c.l.b16 %v5235
    %v6588 = vunpack.c.l.b16 %v5236
    %v6589 = vunpack.c.h.b16 %v5236
    %v6590 = vunpack.c.l.b16 %v5237
    %v6591 = vunpack.c.h.b16 %v5237
    %v6592 = vunpack.c.l.b16 %v5238
    %v6593 = vunpack.c.h.b16 %v5238
    %v6594 = vunpack.c.l.b16 %v5239
    %v6595 = vunpack.c.l.b16 %v5240
    %v6596 = vunpack.c.h.b16 %v5240
    %v6597 = vunpack.c.l.b16 %v5241
    %v6598 = vunpack.c.h.b16 %v5241
    %v6599 = vunpack.c.l.b16 %v5242
    %v6600 = vunpack.c.h.b16 %v5242
    %v6601 = vunpack.c.l.b16 %v5243
    %v6602 = vunpack.c.l.b16 %v5244
    %v6603 = vunpack.c.h.b16 %v5244
    %v6604 = vunpack.c.l.b16 %v5245
    %v6605 = vunpack.c.h.b16 %v5245
    %v6606 = vunpack.c.l.b16 %v5246
    %v6607 = vunpack.c.h.b16 %v5246
    %v6608 = vunpack.c.l.b16 %v5247
    %v6609 = vunpack.c.l.b16 %v5248
    %v6610 = vunpack.c.h.b16 %v5248
    %v6611 = vunpack.c.l.b16 %v5249
    %v6612 = vunpack.c.h.b16 %v5249
    %v6613 = vunpack.c.l.b16 %v5250
    %v6614 = vunpack.c.h.b16 %v5250
    %v6615 = vunpack.c.l.b16 %v5251
    %v6616 = vunpack.c.l.b16 %v5252
    %v6617 = vunpack.c.h.b16 %v5252
    %v6618 = vunpack.c.l.b16 %v5253
    %v6619 = vunpack.c.h.b16 %v5253
    %v6620 = vunpack.c.l.b16 %v5254
    %v6621 = vunpack.c.h.b16 %v5254
    %v6622 = vunpack.c.l.b16 %v5255
    %v6623 = vunpack.c.l.b16 %v5256
    %v6624 = vunpack.c.h.b16 %v5256
    %v6625 = vunpack.c.l.b16 %v5257
    %v6626 = vunpack.c.h.b16 %v5257
    %v6627 = vunpack.c.l.b16 %v5258
    %v6628 = vunpack.c.h.b16 %v5258
    %v6629 = vunpack.c.l.b16 %v5259
    %v6630 = vunpack.c.l.b16 %v5260
    %v6631 = vunpack.c.h.b16 %v5260
    %v6632 = vunpack.c.l.b16 %v5261
    %v6633 = vunpack.c.h.b16 %v5261
    %v6634 = vunpack.c.l.b16 %v5262
    %v6635 = vunpack.c.h.b16 %v5262
    %v6636 = vunpack.c.l.b16 %v5263
    %v6637 = vunpack.c.l.b16 %v5264
    %v6638 = vunpack.c.h.b16 %v5264
    %v6639 = vunpack.c.l.b16 %v5265
    %v6640 = vunpack.c.h.b16 %v5265
    %v6641 = vunpack.c.l.b16 %v5266
    %v6642 = vunpack.c.h.b16 %v5266
    %v6643 = vunpack.c.l.b16 %v5267
    %v6644 = vunpack.c.l.b16 %v5268
    %v6645 = vunpack.c.h.b16 %v5268
    %v6646 = vunpack.c.l.b16 %v5269
    %v6647 = vunpack.c.h.b16 %v5269
    %v6648 = vunpack.c.l.b16 %v5270
    %v6649 = vunpack.c.h.b16 %v5270
    %v6650 = vunpack.c.l.b16 %v5271
    %v6651 = vunpack.c.l.b16 %v5272
    %v6652 = vunpack.c.h.b16 %v5272
    %v6653 = vunpack.c.l.b16 %v5273
    %v6654 = vunpack.c.h.b16 %v5273
    %v6655 = vunpack.c.l.b16 %v5274
    %v6656 = vunpack.c.h.b16 %v5274
    %v6657 = vunpack.c.l.b16 %v5275
    %v6658 = vunpack.c.l.b16 %v5276
    %v6659 = vunpack.c.h.b16 %v5276
    %v6660 = vunpack.c.l.b16 %v5277
    %v6661 = vunpack.c.h.b16 %v5277
    %v6662 = vunpack.c.l.b16 %v5278
    %v6663 = vunpack.c.h.b16 %v5278
    %v6664 = vunpack.c.l.b16 %v5279
    %v6665 = vunpack.c.l.b16 %v5280
    %v6666 = vunpack.c.h.b16 %v5280
    %v6667 = vunpack.c.l.b16 %v5281
    %v6668 = vunpack.c.h.b16 %v5281
    %v6669 = vunpack.c.l.b16 %v5282
    %v6670 = vunpack.c.h.b16 %v5282
    %v6671 = vunpack.c.l.b16 %v5283
    %v6672 = vunpack.c.l.b16 %v5284
    %v6673 = vunpack.c.h.b16 %v5284
    %v6674 = vunpack.c.l.b16 %v5285
    %v6675 = vunpack.c.h.b16 %v5285
    %v6676 = vunpack.c.l.b16 %v5286
    %v6677 = vunpack.c.h.b16 %v5286
    %v6678 = vunpack.c.l.b16 %v5287
    %v6679 = vunpack.c.l.b16 %v5288
    %v6680 = vunpack.c.h.b16 %v5288
    %v6681 = vunpack.c.l.b16 %v5289
    %v6682 = vunpack.c.h.b16 %v5289
    %v6683 = vunpack.c.l.b16 %v5290
    %v6684 = vunpack.c.h.b16 %v5290
    %v6685 = vunpack.c.l.b16 %v5291
    %v6686 = vunpack.c.l.b16 %v5292
    %v6687 = vunpack.c.h.b16 %v5292
    %v6688 = vunpack.c.l.b16 %v5293
    %v6689 = vunpack.c.h.b16 %v5293
    %v6690 = vunpack.c.l.b16 %v5294
    %v6691 = vunpack.c.h.b16 %v5294
    %v6692 = vunpack.c.l.b16 %v5295
    %v6693 = vunpack.c.l.b16 %v5296
    %v6694 = vunpack.c.h.b16 %v5296
    %v6695 = vunpack.c.l.b16 %v5297
    %v6696 = vunpack.c.h.b16 %v5297
    %v6697 = vunpack.c.l.b16 %v5298
    %v6698 = vunpack.c.h.b16 %v5298
    %v6699 = vunpack.c.l.b16 %v5299
    %v6700 = vunpack.c.l.b16 %v5300
    %v6701 = vunpack.c.h.b16 %v5300
    %v6702 = vunpack.c.l.b16 %v5301
    %v6703 = vunpack.c.h.b16 %v5301
    %v6704 = vunpack.c.l.b16 %v5302
    %v6705 = vunpack.c.h.b16 %v5302
    %v6706 = vunpack.c.l.b16 %v5303
    %v6707 = vunpack.c.l.b16 %v5304
    %v6708 = vunpack.c.h.b16 %v5304
    %v6709 = vunpack.c.l.b16 %v5305
    %v6710 = vunpack.c.h.b16 %v5305
    %v6711 = vunpack.c.l.b16 %v5306
    %v6712 = vunpack.c.h.b16 %v5306
    %v6713 = vunpack.c.l.b16 %v5307
    %v6714 = vunpack.c.l.b16 %v5308
    %v6715 = vunpack.c.h.b16 %v5308
    %v6716 = vunpack.c.l.b16 %v5309
    %v6717 = vunpack.c.h.b16 %v5309
    %v6718 = vunpack.c.l.b16 %v5310
    %v6719 = vunpack.c.h.b16 %v5310
    %v6720 = vunpack.c.l.b16 %v5311
    %v6721 = vunpack.c.l.b16 %v5312
    %v6722 = vunpack.c.h.b16 %v5312
    %v6723 = vunpack.c.l.b16 %v5313
    %v6724 = vunpack.c.h.b16 %v5313
    %v6725 = vunpack.c.l.b16 %v5314
    %v6726 = vunpack.c.h.b16 %v5314
    %v6727 = vunpack.c.l.b16 %v5315
    %v6728 = vunpack.c.l.b16 %v5316
    %v6729 = vunpack.c.h.b16 %v5316
    %v6730 = vunpack.c.l.b16 %v5317
    %v6731 = vunpack.c.h.b16 %v5317
    %v6732 = vunpack.c.l.b16 %v5318
    %v6733 = vunpack.c.h.b16 %v5318
    %v6734 = vunpack.c.l.b16 %v5319
    %v6735 = vunpack.c.l.b16 %v5320
    %v6736 = vunpack.c.h.b16 %v5320
    %v6737 = vunpack.c.l.b16 %v5321
    %v6738 = vunpack.c.h.b16 %v5321
    %v6739 = vunpack.c.l.b16 %v5322
    %v6740 = vunpack.c.h.b16 %v5322
    %v6741 = vunpack.c.l.b16 %v5323
    %v6742 = vunpack.c.l.b16 %v5324
    %v6743 = vunpack.c.h.b16 %v5324
    %v6744 = vunpack.c.l.b16 %v5325
    %v6745 = vunpack.c.h.b16 %v5325
    %v6746 = vunpack.c.l.b16 %v5326
    %v6747 = vunpack.c.h.b16 %v5326
    %v6748 = vunpack.c.l.b16 %v5327
    %v6749 = vunpack.c.l.b16 %v5328
    %v6750 = vunpack.c.h.b16 %v5328
    %v6751 = vunpack.c.l.b16 %v5329
    %v6752 = vunpack.c.h.b16 %v5329
    %v6753 = vunpack.c.l.b16 %v5330
    %v6754 = vunpack.c.h.b16 %v5330
    %v6755 = vunpack.c.l.b16 %v5331
    %v6756 = vunpack.c.l.b16 %v5332
    %v6757 = vunpack.c.h.b16 %v5332
    %v6758 = vunpack.c.l.b16 %v5333
    %v6759 = vunpack.c.h.b16 %v5333
    %v6760 = vunpack.c.l.b16 %v5334
    %v6761 = vunpack.c.h.b16 %v5334
    %v6762 = vunpack.c.l.b16 %v5335
    %v6763 = vunpack.c.l.b16 %v5336
    %v6764 = vunpack.c.h.b16 %v5336
    %v6765 = vunpack.c.l.b16 %v5337
    %v6766 = vunpack.c.h.b16 %v5337
    %v6767 = vunpack.c.l.b16 %v5338
    %v6768 = vunpack.c.h.b16 %v5338
    %v6769 = vunpack.c.l.b16 %v5339
    %v6770 = vunpack.c.l.b16 %v5340
    %v6771 = vunpack.c.h.b16 %v5340
    %v6772 = vunpack.c.l.b16 %v5341
    %v6773 = vunpack.c.h.b16 %v5341
    %v6774 = vunpack.c.l.b16 %v5342
    %v6775 = vunpack.c.h.b16 %v5342
    %v6776 = vunpack.c.l.b16 %v5343
    %v6777 = vunpack.c.l.b16 %v5344
    %v6778 = vunpack.c.h.b16 %v5344
    %v6779 = vunpack.c.l.b16 %v5345
    %v6780 = vunpack.c.h.b16 %v5345
    %v6781 = vunpack.c.l.b16 %v5346
    %v6782 = vunpack.c.h.b16 %v5346
    %v6783 = vunpack.c.l.b16 %v5347
    %v6784 = vunpack.c.l.b16 %v5348
    %v6785 = vunpack.c.h.b16 %v5348
    %v6786 = vunpack.c.l.b16 %v5349
    %v6787 = vunpack.c.h.b16 %v5349
    %v6788 = vunpack.c.l.b16 %v5350
    %v6789 = vunpack.c.h.b16 %v5350
    %v6790 = vunpack.c.l.b16 %v5351
    %v6791 = vunpack.c.l.b16 %v5352
    %v6792 = vunpack.c.h.b16 %v5352
    %v6793 = vunpack.c.l.b16 %v5353
    %v6794 = vunpack.c.h.b16 %v5353
    %v6795 = vunpack.c.l.b16 %v5354
    %v6796 = vunpack.c.h.b16 %v5354
    %v6797 = vunpack.c.l.b16 %v5355
    %v6798 = vunpack.c.l.b16 %v5356
    %v6799 = vunpack.c.h.b16 %v5356
    %v6800 = vunpack.c.l.b16 %v5357
    %v6801 = vunpack.c.h.b16 %v5357
    %v6802 = vunpack.c.l.b16 %v5358
    %v6803 = vunpack.c.h.b16 %v5358
    %v6804 = vunpack.c.l.b16 %v5359
    %v6805 = vpack.c.b16 %v5916, %v5909
    %v6806 = vpack.c.b16 %v5917, %v5910
    %v6807 = vpack.c.b16 %v5918, %v5911
    %v6808 = vpack.c.b16 %v5919, %v5912
    %v6809 = vpack.c.b16 %v5920, %v5913
    %v6810 = vpack.c.b16 %v5921, %v5914
    %v6811 = vpack.c.b16 %v5922, %v5915
    %v6812 = vpack.c.b16 %v5930, %v5923
    %v6813 = vpack.c.b16 %v5931, %v5924
    %v6814 = vpack.c.b16 %v5932, %v5925
    %v6815 = vpack.c.b16 %v5933, %v5926
    %v6816 = vpack.c.b16 %v5934, %v5927
    %v6817 = vpack.c.b16 %v5935, %v5928
    %v6818 = vpack.c.b16 %v5936, %v5929
    %v6819 = vpack.c.b16 %v5944, %v5937
    %v6820 = vpack.c.b16 %v5945, %v5938
    %v6821 = vpack.c.b16 %v5946, %v5939
    %v6822 = vpack.c.b16 %v5947, %v5940
    %v6823 = vpack.c.b16 %v5948, %v5941
    %v6824 = vpack.c.b16 %v5949, %v5942
    %v6825 = vpack.c.b16 %v5950, %v5943
    %v6826 = vpack.c.b16 %v5958, %v5951
    %v6827 = vpack.c.b16 %v5959, %v5952
    %v6828 = vpack.c.b16 %v5960, %v5953
    %v6829 = vpack.c.b16 %v5961, %v5954
    %v6830 = vpack.c.b16 %v5962, %v5955
    %v6831 = vpack.c.b16 %v5963, %v5956
    %v6832 = vpack.c.b16 %v5964, %v5957
    %v6833 = vpack.c.b16 %v5972, %v5965
    %v6834 = vpack.c.b16 %v5973, %v5966
    %v6835 = vpack.c.b16 %v5974, %v5967
    %v6836 = vpack.c.b16 %v5975, %v5968
    %v6837 = vpack.c.b16 %v5976, %v5969
    %v6838 = vpack.c.b16 %v5977, %v5970
    %v6839 = vpack.c.b16 %v5978, %v5971
    %v6840 = vpack.c.b16 %v5986, %v5979
    %v6841 = vpack.c.b16 %v5987, %v5980
    %v6842 = vpack.c.b16 %v5988, %v5981
    %v6843 = vpack.c.b16 %v5989, %v5982
    %v6844 = vpack.c.b16 %v5990, %v5983
    %v6845 = vpack.c.b16 %v5991, %v5984
    %v6846 = vpack.c.b16 %v5992, %v5985
    %v6847 = vpack.c.b16 %v6000, %v5993
    %v6848 = vpack.c.b16 %v6001, %v5994
    %v6849 = vpack.c.b16 %v6002, %v5995
    %v6850 = vpack.c.b16 %v6003, %v5996
    %v6851 = vpack.c.b16 %v6004, %v5997
    %v6852 = vpack.c.b16 %v6005, %v5998
    %v6853 = vpack.c.b16 %v6006, %v5999
    %v6854 = vpack.c.b16 %v6014, %v6007
    %v6855 = vpack.c.b16 %v6015, %v6008
    %v6856 = vpack.c.b16 %v6016, %v6009
    %v6857 = vpack.c.b16 %v6017, %v6010
    %v6858 = vpack.c.b16 %v6018, %v6011
    %v6859 = vpack.c.b16 %v6019, %v6012
    %v6860 = vpack.c.b16 %v6020, %v6013
    %v6861 = vpack.c.b16 %v6028, %v6021
    %v6862 = vpack.c.b16 %v6029, %v6022
    %v6863 = vpack.c.b16 %v6030, %v6023
    %v6864 = vpack.c.b16 %v6031, %v6024
    %v6865 = vpack.c.b16 %v6032, %v6025
    %v6866 = vpack.c.b16 %v6033, %v6026
    %v6867 = vpack.c.b16 %v6034, %v6027
    %v6868 = vpack.c.b16 %v6042, %v6035
    %v6869 = vpack.c.b16 %v6043, %v6036
    %v6870 = vpack.c.b16 %v6044, %v6037
    %v6871 = vpack.c.b16 %v6045, %v6038
    %v6872 = vpack.c.b16 %v6046, %v6039
    %v6873 = vpack.c.b16 %v6047, %v6040
    %v6874 = vpack.c.b16 %v6048, %v6041
    %v6875 = vpack.c.b16 %v6056, %v6049
    %v6876 = vpack.c.b16 %v6057, %v6050
    %v6877 = vpack.c.b16 %v6058, %v6051
    %v6878 = vpack.c.b16 %v6059, %v6052
    %v6879 = vpack.c.b16 %v6060, %v6053
    %v6880 = vpack.c.b16 %v6061, %v6054
    %v6881 = vpack.c.b16 %v6062, %v6055
    %v6882 = vpack.c.b16 %v6070, %v6063
    %v6883 = vpack.c.b16 %v6071, %v6064
    %v6884 = vpack.c.b16 %v6072, %v6065
    %v6885 = vpack.c.b16 %v6073, %v6066
    %v6886 = vpack.c.b16 %v6074, %v6067
    %v6887 = vpack.c.b16 %v6075, %v6068
    %v6888 = vpack.c.b16 %v6076, %v6069
    %v6889 = vpack.c.b16 %v6084, %v6077
    %v6890 = vpack.c.b16 %v6085, %v6078
    %v6891 = vpack.c.b16 %v6086, %v6079
    %v6892 = vpack.c.b16 %v6087, %v6080
    %v6893 = vpack.c.b16 %v6088, %v6081
    %v6894 = vpack.c.b16 %v6089, %v6082
    %v6895 = vpack.c.b16 %v6090, %v6083
    %v6896 = vpack.c.b16 %v6098, %v6091
    %v6897 = vpack.c.b16 %v6099, %v6092
    %v6898 = vpack.c.b16 %v6100, %v6093
    %v6899 = vpack.c.b16 %v6101, %v6094
    %v6900 = vpack.c.b16 %v6102, %v6095
    %v6901 = vpack.c.b16 %v6103, %v6096
    %v6902 = vpack.c.b16 %v6104, %v6097
    %v6903 = vpack.c.b16 %v6112, %v6105
    %v6904 = vpack.c.b16 %v6113, %v6106
    %v6905 = vpack.c.b16 %v6114, %v6107
    %v6906 = vpack.c.b16 %v6115, %v6108
    %v6907 = vpack.c.b16 %v6116, %v6109
    %v6908 = vpack.c.b16 %v6117, %v6110
    %v6909 = vpack.c.b16 %v6118, %v6111
    %v6910 = vpack.c.b16 %v6126, %v6119
    %v6911 = vpack.c.b16 %v6127, %v6120
    %v6912 = vpack.c.b16 %v6128, %v6121
    %v6913 = vpack.c.b16 %v6129, %v6122
    %v6914 = vpack.c.b16 %v6130, %v6123
    %v6915 = vpack.c.b16 %v6131, %v6124
    %v6916 = vpack.c.b16 %v6132, %v6125
    %v6917 = vpack.c.b16 %v6140, %v6133
    %v6918 = vpack.c.b16 %v6141, %v6134
    %v6919 = vpack.c.b16 %v6142, %v6135
    %v6920 = vpack.c.b16 %v6143, %v6136
    %v6921 = vpack.c.b16 %v6144, %v6137
    %v6922 = vpack.c.b16 %v6145, %v6138
    %v6923 = vpack.c.b16 %v6146, %v6139
    %v6924 = vpack.c.b16 %v6154, %v6147
    %v6925 = vpack.c.b16 %v6155, %v6148
    %v6926 = vpack.c.b16 %v6156, %v6149
    %v6927 = vpack.c.b16 %v6157, %v6150
    %v6928 = vpack.c.b16 %v6158, %v6151
    %v6929 = vpack.c.b16 %v6159, %v6152
    %v6930 = vpack.c.b16 %v6160, %v6153
    %v6931 = vpack.c.b16 %v6168, %v6161
    %v6932 = vpack.c.b16 %v6169, %v6162
    %v6933 = vpack.c.b16 %v6170, %v6163
    %v6934 = vpack.c.b16 %v6171, %v6164
    %v6935 = vpack.c.b16 %v6172, %v6165
    %v6936 = vpack.c.b16 %v6173, %v6166
    %v6937 = vpack.c.b16 %v6174, %v6167
    %v6938 = vpack.c.b16 %v6182, %v6175
    %v6939 = vpack.c.b16 %v6183, %v6176
    %v6940 = vpack.c.b16 %v6184, %v6177
    %v6941 = vpack.c.b16 %v6185, %v6178
    %v6942 = vpack.c.b16 %v6186, %v6179
    %v6943 = vpack.c.b16 %v6187, %v6180
    %v6944 = vpack.c.b16 %v6188, %v6181
    %v6945 = vpack.c.b16 %v6196, %v6189
    %v6946 = vpack.c.b16 %v6197, %v6190
    %v6947 = vpack.c.b16 %v6198, %v6191
    %v6948 = vpack.c.b16 %v6199, %v6192
    %v6949 = vpack.c.b16 %v6200, %v6193
    %v6950 = vpack.c.b16 %v6201, %v6194
    %v6951 = vpack.c.b16 %v6202, %v6195
    %v6952 = vpack.c.b16 %v6210, %v6203
    %v6953 = vpack.c.b16 %v6211, %v6204
    %v6954 = vpack.c.b16 %v6212, %v6205
    %v6955 = vpack.c.b16 %v6213, %v6206
    %v6956 = vpack.c.b16 %v6214, %v6207
    %v6957 = vpack.c.b16 %v6215, %v6208
    %v6958 = vpack.c.b16 %v6216, %v6209
    %v6959 = vpack.c.b16 %v6224, %v6217
    %v6960 = vpack.c.b16 %v6225, %v6218
    %v6961 = vpack.c.b16 %v6226, %v6219
    %v6962 = vpack.c.b16 %v6227, %v6220
    %v6963 = vpack.c.b16 %v6228, %v6221
    %v6964 = vpack.c.b16 %v6229, %v6222
    %v6965 = vpack.c.b16 %v6230, %v6223
    %v6966 = vpack.c.b16 %v6238, %v6231
    %v6967 = vpack.c.b16 %v6239, %v6232
    %v6968 = vpack.c.b16 %v6240, %v6233
    %v6969 = vpack.c.b16 %v6241, %v6234
    %v6970 = vpack.c.b16 %v6242, %v6235
    %v6971 = vpack.c.b16 %v6243, %v6236
    %v6972 = vpack.c.b16 %v6244, %v6237
    %v6973 = vpack.c.b16 %v6252, %v6245
    %v6974 = vpack.c.b16 %v6253, %v6246
    %v6975 = vpack.c.b16 %v6254, %v6247
    %v6976 = vpack.c.b16 %v6255, %v6248
    %v6977 = vpack.c.b16 %v6256, %v6249
    %v6978 = vpack.c.b16 %v6257, %v6250
    %v6979 = vpack.c.b16 %v6258, %v6251
    %v6980 = vpack.c.b16 %v6266, %v6259
    %v6981 = vpack.c.b16 %v6267, %v6260
    %v6982 = vpack.c.b16 %v6268, %v6261
    %v6983 = vpack.c.b16 %v6269, %v6262
    %v6984 = vpack.c.b16 %v6270, %v6263
    %v6985 = vpack.c.b16 %v6271, %v6264
    %v6986 = vpack.c.b16 %v6272, %v6265
    %v6987 = vpack.c.b16 %v6280, %v6273
    %v6988 = vpack.c.b16 %v6281, %v6274
    %v6989 = vpack.c.b16 %v6282, %v6275
    %v6990 = vpack.c.b16 %v6283, %v6276
    %v6991 = vpack.c.b16 %v6284, %v6277
    %v6992 = vpack.c.b16 %v6285, %v6278
    %v6993 = vpack.c.b16 %v6286, %v6279
    %v6994 = vpack.c.b16 %v6294, %v6287
    %v6995 = vpack.c.b16 %v6295, %v6288
    %v6996 = vpack.c.b16 %v6296, %v6289
    %v6997 = vpack.c.b16 %v6297, %v6290
    %v6998 = vpack.c.b16 %v6298, %v6291
    %v6999 = vpack.c.b16 %v6299, %v6292
    %v7000 = vpack.c.b16 %v6300, %v6293
    %v7001 = vpack.c.b16 %v6308, %v6301
    %v7002 = vpack.c.b16 %v6309, %v6302
    %v7003 = vpack.c.b16 %v6310, %v6303
    %v7004 = vpack.c.b16 %v6311, %v6304
    %v7005 = vpack.c.b16 %v6312, %v6305
    %v7006 = vpack.c.b16 %v6313, %v6306
    %v7007 = vpack.c.b16 %v6314, %v6307
    %v7008 = vpack.c.b16 %v6322, %v6315
    %v7009 = vpack.c.b16 %v6323, %v6316
    %v7010 = vpack.c.b16 %v6324, %v6317
    %v7011 = vpack.c.b16 %v6325, %v6318
    %v7012 = vpack.c.b16 %v6326, %v6319
    %v7013 = vpack.c.b16 %v6327, %v6320
    %v7014 = vpack.c.b16 %v6328, %v6321
    %v7015 = vpack.c.b16 %v6336, %v6329
    %v7016 = vpack.c.b16 %v6337, %v6330
    %v7017 = vpack.c.b16 %v6338, %v6331
    %v7018 = vpack.c.b16 %v6339, %v6332
    %v7019 = vpack.c.b16 %v6340, %v6333
    %v7020 = vpack.c.b16 %v6341, %v6334
    %v7021 = vpack.c.b16 %v6342, %v6335
    %v7022 = vpack.c.b16 %v6350, %v6343
    %v7023 = vpack.c.b16 %v6351, %v6344
    %v7024 = vpack.c.b16 %v6352, %v6345
    %v7025 = vpack.c.b16 %v6353, %v6346
    %v7026 = vpack.c.b16 %v6354, %v6347
    %v7027 = vpack.c.b16 %v6355, %v6348
    %v7028 = vpack.c.b16 %v6356, %v6349
    %v7029 = vpack.c.b16 %v6364, %v6357
    %v7030 = vpack.c.b16 %v6365, %v6358
    %v7031 = vpack.c.b16 %v6366, %v6359
    %v7032 = vpack.c.b16 %v6367, %v6360
    %v7033 = vpack.c.b16 %v6368, %v6361
    %v7034 = vpack.c.b16 %v6369, %v6362
    %v7035 = vpack.c.b16 %v6370, %v6363
    %v7036 = vpack.c.b16 %v6378, %v6371
    %v7037 = vpack.c.b16 %v6379, %v6372
    %v7038 = vpack.c.b16 %v6380, %v6373
    %v7039 = vpack.c.b16 %v6381, %v6374
    %v7040 = vpack.c.b16 %v6382, %v6375
    %v7041 = vpack.c.b16 %v6383, %v6376
    %v7042 = vpack.c.b16 %v6384, %v6377
    %v7043 = vpack.c.b16 %v6392, %v6385
    %v7044 = vpack.c.b16 %v6393, %v6386
    %v7045 = vpack.c.b16 %v6394, %v6387
    %v7046 = vpack.c.b16 %v6395, %v6388
    %v7047 = vpack.c.b16 %v6396, %v6389
    %v7048 = vpack.c.b16 %v6397, %v6390
    %v7049 = vpack.c.b16 %v6398, %v6391
    %v7050 = vpack.c.b16 %v6406, %v6399
    %v7051 = vpack.c.b16 %v6407, %v6400
    %v7052 = vpack.c.b16 %v6408, %v6401
    %v7053 = vpack.c.b16 %v6409, %v6402
    %v7054 = vpack.c.b16 %v6410, %v6403
    %v7055 = vpack.c.b16 %v6411, %v6404
    %v7056 = vpack.c.b16 %v6412, %v6405
    %v7057 = vpack.c.b16 %v6420, %v6413
    %v7058 = vpack.c.b16 %v6421, %v6414
    %v7059 = vpack.c.b16 %v6422, %v6415
    %v7060 = vpack.c.b16 %v6423, %v6416
    %v7061 = vpack.c.b16 %v6424, %v6417
    %v7062 = vpack.c.b16 %v6425, %v6418
    %v7063 = vpack.c.b16 %v6426, %v6419
    %v7064 = vpack.c.b16 %v6434, %v6427
    %v7065 = vpack.c.b16 %v6435, %v6428
    %v7066 = vpack.c.b16 %v6436, %v6429
    %v7067 = vpack.c.b16 %v6437, %v6430
    %v7068 = vpack.c.b16 %v6438, %v6431
    %v7069 = vpack.c.b16 %v6439, %v6432
    %v7070 = vpack.c.b16 %v6440, %v6433
    %v7071 = vpack.c.b16 %v6448, %v6441
    %v7072 = vpack.c.b16 %v6449, %v6442
    %v7073 = vpack.c.b16 %v6450, %v6443
    %v7074 = vpack.c.b16 %v6451, %v6444
    %v7075 = vpack.c.b16 %v6452, %v6445
    %v7076 = vpack.c.b16 %v6453, %v6446
    %v7077 = vpack.c.b16 %v6454, %v6447
    %v7078 = vpack.c.b16 %v6462, %v6455
    %v7079 = vpack.c.b16 %v6463, %v6456
    %v7080 = vpack.c.b16 %v6464, %v6457
    %v7081 = vpack.c.b16 %v6465, %v6458
    %v7082 = vpack.c.b16 %v6466, %v6459
    %v7083 = vpack.c.b16 %v6467, %v6460
    %v7084 = vpack.c.b16 %v6468, %v6461
    %v7085 = vpack.c.b16 %v6476, %v6469
    %v7086 = vpack.c.b16 %v6477, %v6470
    %v7087 = vpack.c.b16 %v6478, %v6471
    %v7088 = vpack.c.b16 %v6479, %v6472
    %v7089 = vpack.c.b16 %v6480, %v6473
    %v7090 = vpack.c.b16 %v6481, %v6474
    %v7091 = vpack.c.b16 %v6482, %v6475
    %v7092 = vpack.c.b16 %v6490, %v6483
    %v7093 = vpack.c.b16 %v6491, %v6484
    %v7094 = vpack.c.b16 %v6492, %v6485
    %v7095 = vpack.c.b16 %v6493, %v6486
    %v7096 = vpack.c.b16 %v6494, %v6487
    %v7097 = vpack.c.b16 %v6495, %v6488
    %v7098 = vpack.c.b16 %v6496, %v6489
    %v7099 = vpack.c.b16 %v6504, %v6497
    %v7100 = vpack.c.b16 %v6505, %v6498
    %v7101 = vpack.c.b16 %v6506, %v6499
    %v7102 = vpack.c.b16 %v6507, %v6500
    %v7103 = vpack.c.b16 %v6508, %v6501
    %v7104 = vpack.c.b16 %v6509, %v6502
    %v7105 = vpack.c.b16 %v6510, %v6503
    %v7106 = vpack.c.b16 %v6518, %v6511
    %v7107 = vpack.c.b16 %v6519, %v6512
    %v7108 = vpack.c.b16 %v6520, %v6513
    %v7109 = vpack.c.b16 %v6521, %v6514
    %v7110 = vpack.c.b16 %v6522, %v6515
    %v7111 = vpack.c.b16 %v6523, %v6516
    %v7112 = vpack.c.b16 %v6524, %v6517
    %v7113 = vpack.c.b16 %v6532, %v6525
    %v7114 = vpack.c.b16 %v6533, %v6526
    %v7115 = vpack.c.b16 %v6534, %v6527
    %v7116 = vpack.c.b16 %v6535, %v6528
    %v7117 = vpack.c.b16 %v6536, %v6529
    %v7118 = vpack.c.b16 %v6537, %v6530
    %v7119 = vpack.c.b16 %v6538, %v6531
    %v7120 = vpack.c.b16 %v6546, %v6539
    %v7121 = vpack.c.b16 %v6547, %v6540
    %v7122 = vpack.c.b16 %v6548, %v6541
    %v7123 = vpack.c.b16 %v6549, %v6542
    %v7124 = vpack.c.b16 %v6550, %v6543
    %v7125 = vpack.c.b16 %v6551, %v6544
    %v7126 = vpack.c.b16 %v6552, %v6545
    %v7127 = vpack.c.b16 %v6560, %v6553
    %v7128 = vpack.c.b16 %v6561, %v6554
    %v7129 = vpack.c.b16 %v6562, %v6555
    %v7130 = vpack.c.b16 %v6563, %v6556
    %v7131 = vpack.c.b16 %v6564, %v6557
    %v7132 = vpack.c.b16 %v6565, %v6558
    %v7133 = vpack.c.b16 %v6566, %v6559
    %v7134 = vpack.c.b16 %v6574, %v6567
    %v7135 = vpack.c.b16 %v6575, %v6568
    %v7136 = vpack.c.b16 %v6576, %v6569
    %v7137 = vpack.c.b16 %v6577, %v6570
    %v7138 = vpack.c.b16 %v6578, %v6571
    %v7139 = vpack.c.b16 %v6579, %v6572
    %v7140 = vpack.c.b16 %v6580, %v6573
    %v7141 = vpack.c.b16 %v6588, %v6581
    %v7142 = vpack.c.b16 %v6589, %v6582
    %v7143 = vpack.c.b16 %v6590, %v6583
    %v7144 = vpack.c.b16 %v6591, %v6584
    %v7145 = vpack.c.b16 %v6592, %v6585
    %v7146 = vpack.c.b16 %v6593, %v6586
    %v7147 = vpack.c.b16 %v6594, %v6587
    %v7148 = vpack.c.b16 %v6602, %v6595
    %v7149 = vpack.c.b16 %v6603, %v6596
    %v7150 = vpack.c.b16 %v6604, %v6597
    %v7151 = vpack.c.b16 %v6605, %v6598
    %v7152 = vpack.c.b16 %v6606, %v6599
    %v7153 = vpack.c.b16 %v6607, %v6600
    %v7154 = vpack.c.b16 %v6608, %v6601
    %v7155 = vpack.c.b16 %v6616, %v6609
    %v7156 = vpack.c.b16 %v6617, %v6610
    %v7157 = vpack.c.b16 %v6618, %v6611
    %v7158 = vpack.c.b16 %v6619, %v6612
    %v7159 = vpack.c.b16 %v6620, %v6613
    %v7160 = vpack.c.b16 %v6621, %v6614
    %v7161 = vpack.c.b16 %v6622, %v6615
    %v7162 = vpack.c.b16 %v6630, %v6623
    %v7163 = vpack.c.b16 %v6631, %v6624
    %v7164 = vpack.c.b16 %v6632, %v6625
    %v7165 = vpack.c.b16 %v6633, %v6626
    %v7166 = vpack.c.b16 %v6634, %v6627
    %v7167 = vpack.c.b16 %v6635, %v6628
    %v7168 = vpack.c.b16 %v6636, %v6629
    %v7169 = vpack.c.b16 %v6644, %v6637
    %v7170 = vpack.c.b16 %v6645, %v6638
    %v7171 = vpack.c.b16 %v6646, %v6639
    %v7172 = vpack.c.b16 %v6647, %v6640
    %v7173 = vpack.c.b16 %v6648, %v6641
    %v7174 = vpack.c.b16 %v6649, %v6642
    %v7175 = vpack.c.b16 %v6650, %v6643
    %v7176 = vpack.c.b16 %v6658, %v6651
    %v7177 = vpack.c.b16 %v6659, %v6652
    %v7178 = vpack.c.b16 %v6660, %v6653
    %v7179 = vpack.c.b16 %v6661, %v6654
    %v7180 = vpack.c.b16 %v6662, %v6655
    %v7181 = vpack.c.b16 %v6663, %v6656
    %v7182 = vpack.c.b16 %v6664, %v6657
    %v7183 = vpack.c.b16 %v6672, %v6665
    %v7184 = vpack.c.b16 %v6673, %v6666
    %v7185 = vpack.c.b16 %v6674, %v6667
    %v7186 = vpack.c.b16 %v6675, %v6668
    %v7187 = vpack.c.b16 %v6676, %v6669
    %v7188 = vpack.c.b16 %v6677, %v6670
    %v7189 = vpack.c.b16 %v6678, %v6671
    %v7190 = vpack.c.b16 %v6686, %v6679
    %v7191 = vpack.c.b16 %v6687, %v6680
    %v7192 = vpack.c.b16 %v6688, %v6681
    %v7193 = vpack.c.b16 %v6689, %v6682
    %v7194 = vpack.c.b16 %v6690, %v6683
    %v7195 = vpack.c.b16 %v6691, %v6684
    %v7196 = vpack.c.b16 %v6692, %v6685
    %v7197 = vpack.c.b16 %v6700, %v6693
    %v7198 = vpack.c.b16 %v6701, %v6694
    %v7199 = vpack.c.b16 %v6702, %v6695
    %v7200 = vpack.c.b16 %v6703, %v6696
    %v7201 = vpack.c.b16 %v6704, %v6697
    %v7202 = vpack.c.b16 %v6705, %v6698
    %v7203 = vpack.c.b16 %v6706, %v6699
    %v7204 = vpack.c.b16 %v6714, %v6707
    %v7205 = vpack.c.b16 %v6715, %v6708
    %v7206 = vpack.c.b16 %v6716, %v6709
    %v7207 = vpack.c.b16 %v6717, %v6710
    %v7208 = vpack.c.b16 %v6718, %v6711
    %v7209 = vpack.c.b16 %v6719, %v6712
    %v7210 = vpack.c.b16 %v6720, %v6713
    %v7211 = vpack.c.b16 %v6728, %v6721
    %v7212 = vpack.c.b16 %v6729, %v6722
    %v7213 = vpack.c.b16 %v6730, %v6723
    %v7214 = vpack.c.b16 %v6731, %v6724
    %v7215 = vpack.c.b16 %v6732, %v6725
    %v7216 = vpack.c.b16 %v6733, %v6726
    %v7217 = vpack.c.b16 %v6734, %v6727
    %v7218 = vpack.c.b16 %v6742, %v6735
    %v7219 = vpack.c.b16 %v6743, %v6736
    %v7220 = vpack.c.b16 %v6744, %v6737
    %v7221 = vpack.c.b16 %v6745, %v6738
    %v7222 = vpack.c.b16 %v6746, %v6739
    %v7223 = vpack.c.b16 %v6747, %v6740
    %v7224 = vpack.c.b16 %v6748, %v6741
    %v7225 = vpack.c.b16 %v6756, %v6749
    %v7226 = vpack.c.b16 %v6757, %v6750
    %v7227 = vpack.c.b16 %v6758, %v6751
    %v7228 = vpack.c.b16 %v6759, %v6752
    %v7229 = vpack.c.b16 %v6760, %v6753
    %v7230 = vpack.c.b16 %v6761, %v6754
    %v7231 = vpack.c.b16 %v6762, %v6755
    %v7232 = vpack.c.b16 %v6770, %v6763
    %v7233 = vpack.c.b16 %v6771, %v6764
    %v7234 = vpack.c.b16 %v6772, %v6765
    %v7235 = vpack.c.b16 %v6773, %v6766
    %v7236 = vpack.c.b16 %v6774, %v6767
    %v7237 = vpack.c.b16 %v6775, %v6768
    %v7238 = vpack.c.b16 %v6776, %v6769
    %v7239 = vpack.c.b16 %v6784, %v6777
    %v7240 = vpack.c.b16 %v6785, %v6778
    %v7241 = vpack.c.b16 %v6786, %v6779
    %v7242 = vpack.c.b16 %v6787, %v6780
    %v7243 = vpack.c.b16 %v6788, %v6781
    %v7244 = vpack.c.b16 %v6789, %v6782
    %v7245 = vpack.c.b16 %v6790, %v6783
    %v7246 = vpack.c.b16 %v6798, %v6791
    %v7247 = vpack.c.b16 %v6799, %v6792
    %v7248 = vpack.c.b16 %v6800, %v6793
    %v7249 = vpack.c.b16 %v6801, %v6794
    %v7250 = vpack.c.b16 %v6802, %v6795
    %v7251 = vpack.c.b16 %v6803, %v6796
    %v7252 = vpack.c.b16 %v6804, %v6797
    %7701 = vmatprep.subr.bf16.mxu0 %v6855
    %7702 = vmatpush1.bf16.msra.mxu0 %v6854
    %7703 = vmatprep.subr.bf16.mxu0 %v6848
    %7704 = vmatpush1.bf16.msra.mxu0 %v6847
    %7705 = vmatprep.subr.bf16.mxu0 %v6841
    %7706 = vmatpush1.bf16.msra.mxu0 %v6840
    %7707 = vmatprep.subr.bf16.mxu0 %v6834
    %7708 = vmatpush1.bf16.msra.mxu0 %v6833
    %7709 = vmatprep.subr.bf16.mxu0 %v6827
    %7710 = vmatpush1.bf16.msra.mxu0 %v6826
    %7711 = vmatprep.subr.bf16.mxu0 %v6820
    %7712 = vmatpush1.bf16.msra.mxu0 %v6819
    %7713 = vmatprep.subr.bf16.mxu0 %v6813
    %7714 = vmatpush1.bf16.msra.mxu0 %v6812
    %7715 = vmatprep.subr.bf16.mxu0 %v6806
    %7716 = vmatpush1.bf16.msra.mxu0 %v6805
    %7717 = vmatprep.subr.bf16.mxu0 %v6911
    %7718 = vmatpush2.bf16.msra.mxu0 %v6910
    %7719 = vmatprep.subr.bf16.mxu0 %v6904
    %7720 = vmatpush2.bf16.msra.mxu0 %v6903
    %7721 = vmatprep.subr.bf16.mxu0 %v6897
    %7722 = vmatpush2.bf16.msra.mxu0 %v6896
    %7723 = vmatprep.subr.bf16.mxu0 %v6890
    %7724 = vmatpush2.bf16.msra.mxu0 %v6889
    %7725 = vmatprep.subr.bf16.mxu0 %v6883
    %7726 = vmatpush2.bf16.msra.mxu0 %v6882
    %7727 = vmatprep.subr.bf16.mxu0 %v6876
    %7728 = vmatpush2.bf16.msra.mxu0 %v6875
    %7729 = vmatprep.subr.bf16.mxu0 %v6869
    %7730 = vmatpush2.bf16.msra.mxu0 %v6868
    %7731 = vmatprep.subr.bf16.mxu0 %v6862
    %7732 = vmatpush2.bf16.msra.mxu0 %v6861
    %7733 = vmatprep.mubr.bf16.mxu0 %v4813
    %7734 = vmatmul.mubr.bf16.gmra.mxu0 %v4812
    %v7735 = vpop.f32.mrf.mxu0
    %v7736 = vadd.f32 %v5365, %v7735
    %v7737 = vpop.f32.mrf.mxu0
    %v7738 = vadd.f32 %v5369, %v7737
    %v7739 = vpop.f32.mrf.mxu0
    %v7740 = vadd.f32 %v5365, %v7739
    %v7741 = vpop.f32.mrf.mxu0
    %v7742 = vadd.f32 %v5369, %v7741
    %7743 = vmatprep.mubr.bf16.mxu0 %v4821
    %7744 = vmatmul.mubr.bf16.gmra.mxu0 %v4820
    %v7745 = vpop.f32.mrf.mxu0
    %v7746 = vadd.f32 %v5365, %v7745
    %v7747 = vpop.f32.mrf.mxu0
    %v7748 = vadd.f32 %v5369, %v7747
    %v7749 = vpop.f32.mrf.mxu0
    %v7750 = vadd.f32 %v5365, %v7749
    %v7751 = vpop.f32.mrf.mxu0
    %v7752 = vadd.f32 %v5369, %v7751
    %7753 = vmatprep.mubr.bf16.mxu0 %v4829
    %7754 = vmatmul.mubr.bf16.gmra.mxu0 %v4828
    %v7755 = vpop.f32.mrf.mxu0
    %v7756 = vadd.f32 %v5365, %v7755
    %v7757 = vpop.f32.mrf.mxu0
    %v7758 = vadd.f32 %v5369, %v7757
    %v7759 = vpop.f32.mrf.mxu0
    %v7760 = vadd.f32 %v5365, %v7759
    %v7761 = vpop.f32.mrf.mxu0
    %v7762 = vadd.f32 %v5369, %v7761
    %7763 = vmatprep.mubr.bf16.mxu0 %v4837
    %7764 = vmatmul.mubr.bf16.gmra.mxu0 %v4836
    %v7765 = vpop.f32.mrf.mxu0
    %v7766 = vadd.f32 %v5365, %v7765
    %v7767 = vpop.f32.mrf.mxu0
    %v7768 = vadd.f32 %v5369, %v7767
    %v7769 = vpop.f32.mrf.mxu0
    %v7770 = vadd.f32 %v5365, %v7769
    %v7771 = vpop.f32.mrf.mxu0
    %v7772 = vadd.f32 %v5369, %v7771
    %7773 = vdwg.mxu0
    %7774 = vmatprep.subr.bf16.mxu0 %v6967
    %7775 = vmatpush1.bf16.msra.mxu0 %v6966
    %7776 = vmatprep.subr.bf16.mxu0 %v6960
    %7777 = vmatpush1.bf16.msra.mxu0 %v6959
    %7778 = vmatprep.subr.bf16.mxu0 %v6953
    %7779 = vmatpush1.bf16.msra.mxu0 %v6952
    %7780 = vmatprep.subr.bf16.mxu0 %v6946
    %7781 = vmatpush1.bf16.msra.mxu0 %v6945
    %7782 = vmatprep.subr.bf16.mxu0 %v6939
    %7783 = vmatpush1.bf16.msra.mxu0 %v6938
    %7784 = vmatprep.subr.bf16.mxu0 %v6932
    %7785 = vmatpush1.bf16.msra.mxu0 %v6931
    %7786 = vmatprep.subr.bf16.mxu0 %v6925
    %7787 = vmatpush1.bf16.msra.mxu0 %v6924
    %7788 = vmatprep.subr.bf16.mxu0 %v6918
    %7789 = vmatpush1.bf16.msra.mxu0 %v6917
    %7790 = vmatprep.subr.bf16.mxu0 %v7023
    %7791 = vmatpush2.bf16.msra.mxu0 %v7022
    %7792 = vmatprep.subr.bf16.mxu0 %v7016
    %7793 = vmatpush2.bf16.msra.mxu0 %v7015
    %7794 = vmatprep.subr.bf16.mxu0 %v7009
    %7795 = vmatpush2.bf16.msra.mxu0 %v7008
    %7796 = vmatprep.subr.bf16.mxu0 %v7002
    %7797 = vmatpush2.bf16.msra.mxu0 %v7001
    %7798 = vmatprep.subr.bf16.mxu0 %v6995
    %7799 = vmatpush2.bf16.msra.mxu0 %v6994
    %7800 = vmatprep.subr.bf16.mxu0 %v6988
    %7801 = vmatpush2.bf16.msra.mxu0 %v6987
    %7802 = vmatprep.subr.bf16.mxu0 %v6981
    %7803 = vmatpush2.bf16.msra.mxu0 %v6980
    %7804 = vmatprep.subr.bf16.mxu0 %v6974
    %7805 = vmatpush2.bf16.msra.mxu0 %v6973
    %7806 = vmatprep.mubr.bf16.mxu0 %v4815
    %7807 = vmatmul.mubr.bf16.gmra.mxu0 %v4814
    %v7808 = vpop.f32.mrf.mxu0
    %v7809 = vadd.f32 %v7736, %v7808
    %v7810 = vpop.f32.mrf.mxu0
    %v7811 = vadd.f32 %v7738, %v7810
    %v7812 = vpop.f32.mrf.mxu0
    %v7813 = vadd.f32 %v7740, %v7812
    %v7814 = vpop.f32.mrf.mxu0
    %v7815 = vadd.f32 %v7742, %v7814
    %7816 = vmatprep.mubr.bf16.mxu0 %v4823
    %7817 = vmatmul.mubr.bf16.gmra.mxu0 %v4822
    %v7818 = vpop.f32.mrf.mxu0
    %v7819 = vadd.f32 %v7746, %v7818
    %v7820 = vpop.f32.mrf.mxu0
    %v7821 = vadd.f32 %v7748, %v7820
    %v7822 = vpop.f32.mrf.mxu0
    %v7823 = vadd.f32 %v7750, %v7822
    %v7824 = vpop.f32.mrf.mxu0
    %v7825 = vadd.f32 %v7752, %v7824
    %7826 = vmatprep.mubr.bf16.mxu0 %v4831
    %7827 = vmatmul.mubr.bf16.gmra.mxu0 %v4830
    %v7828 = vpop.f32.mrf.mxu0
    %v7829 = vadd.f32 %v7756, %v7828
    %v7830 = vpop.f32.mrf.mxu0
    %v7831 = vadd.f32 %v7758, %v7830
    %v7832 = vpop.f32.mrf.mxu0
    %v7833 = vadd.f32 %v7760, %v7832
    %v7834 = vpop.f32.mrf.mxu0
    %v7835 = vadd.f32 %v7762, %v7834
    %7836 = vmatprep.mubr.bf16.mxu0 %v4839
    %7837 = vmatmul.mubr.bf16.gmra.mxu0 %v4838
    %v7838 = vpop.f32.mrf.mxu0
    %v7839 = vadd.f32 %v7766, %v7838
    %v7840 = vpop.f32.mrf.mxu0
    %v7841 = vadd.f32 %v7768, %v7840
    %v7842 = vpop.f32.mrf.mxu0
    %v7843 = vadd.f32 %v7770, %v7842
    %v7844 = vpop.f32.mrf.mxu0
    %v7845 = vadd.f32 %v7772, %v7844
    %7846 = vdwg.mxu0
    %7847 = vmatprep.subr.bf16.mxu0 %v7079
    %7848 = vmatpush1.bf16.msra.mxu0 %v7078
    %7849 = vmatprep.subr.bf16.mxu0 %v7072
    %7850 = vmatpush1.bf16.msra.mxu0 %v7071
    %7851 = vmatprep.subr.bf16.mxu0 %v7065
    %7852 = vmatpush1.bf16.msra.mxu0 %v7064
    %7853 = vmatprep.subr.bf16.mxu0 %v7058
    %7854 = vmatpush1.bf16.msra.mxu0 %v7057
    %7855 = vmatprep.subr.bf16.mxu0 %v7051
    %7856 = vmatpush1.bf16.msra.mxu0 %v7050
    %7857 = vmatprep.subr.bf16.mxu0 %v7044
    %7858 = vmatpush1.bf16.msra.mxu0 %v7043
    %7859 = vmatprep.subr.bf16.mxu0 %v7037
    %7860 = vmatpush1.bf16.msra.mxu0 %v7036
    %7861 = vmatprep.subr.bf16.mxu0 %v7030
    %7862 = vmatpush1.bf16.msra.mxu0 %v7029
    %7863 = vmatprep.subr.bf16.mxu0 %v7135
    %7864 = vmatpush2.bf16.msra.mxu0 %v7134
    %7865 = vmatprep.subr.bf16.mxu0 %v7128
    %7866 = vmatpush2.bf16.msra.mxu0 %v7127
    %7867 = vmatprep.subr.bf16.mxu0 %v7121
    %7868 = vmatpush2.bf16.msra.mxu0 %v7120
    %7869 = vmatprep.subr.bf16.mxu0 %v7114
    %7870 = vmatpush2.bf16.msra.mxu0 %v7113
    %7871 = vmatprep.subr.bf16.mxu0 %v7107
    %7872 = vmatpush2.bf16.msra.mxu0 %v7106
    %7873 = vmatprep.subr.bf16.mxu0 %v7100
    %7874 = vmatpush2.bf16.msra.mxu0 %v7099
    %7875 = vmatprep.subr.bf16.mxu0 %v7093
    %7876 = vmatpush2.bf16.msra.mxu0 %v7092
    %7877 = vmatprep.subr.bf16.mxu0 %v7086
    %7878 = vmatpush2.bf16.msra.mxu0 %v7085
    %7879 = vmatprep.mubr.bf16.mxu0 %v4817
    %7880 = vmatmul.mubr.bf16.gmra.mxu0 %v4816
    %v7881 = vpop.f32.mrf.mxu0
    %v7882 = vadd.f32 %v7809, %v7881
    %v7883 = vpop.f32.mrf.mxu0
    %v7884 = vadd.f32 %v7811, %v7883
    %v7885 = vpop.f32.mrf.mxu0
    %v7886 = vadd.f32 %v7813, %v7885
    %v7887 = vpop.f32.mrf.mxu0
    %v7888 = vadd.f32 %v7815, %v7887
    %7889 = vmatprep.mubr.bf16.mxu0 %v4825
    %7890 = vmatmul.mubr.bf16.gmra.mxu0 %v4824
    %v7891 = vpop.f32.mrf.mxu0
    %v7892 = vadd.f32 %v7819, %v7891
    %v7893 = vpop.f32.mrf.mxu0
    %v7894 = vadd.f32 %v7821, %v7893
    %v7895 = vpop.f32.mrf.mxu0
    %v7896 = vadd.f32 %v7823, %v7895
    %v7897 = vpop.f32.mrf.mxu0
    %v7898 = vadd.f32 %v7825, %v7897
    %7899 = vmatprep.mubr.bf16.mxu0 %v4833
    %7900 = vmatmul.mubr.bf16.gmra.mxu0 %v4832
    %v7901 = vpop.f32.mrf.mxu0
    %v7902 = vadd.f32 %v7829, %v7901
    %v7903 = vpop.f32.mrf.mxu0
    %v7904 = vadd.f32 %v7831, %v7903
    %v7905 = vpop.f32.mrf.mxu0
    %v7906 = vadd.f32 %v7833, %v7905
    %v7907 = vpop.f32.mrf.mxu0
    %v7908 = vadd.f32 %v7835, %v7907
    %7909 = vmatprep.mubr.bf16.mxu0 %v4841
    %7910 = vmatmul.mubr.bf16.gmra.mxu0 %v4840
    %v7911 = vpop.f32.mrf.mxu0
    %v7912 = vadd.f32 %v7839, %v7911
    %v7913 = vpop.f32.mrf.mxu0
    %v7914 = vadd.f32 %v7841, %v7913
    %v7915 = vpop.f32.mrf.mxu0
    %v7916 = vadd.f32 %v7843, %v7915
    %v7917 = vpop.f32.mrf.mxu0
    %v7918 = vadd.f32 %v7845, %v7917
    %7919 = vdwg.mxu0
    %7920 = vmatprep.subr.bf16.mxu0 %v7191
    %7921 = vmatpush1.bf16.msra.mxu0 %v7190
    %7922 = vmatprep.subr.bf16.mxu0 %v7184
    %7923 = vmatpush1.bf16.msra.mxu0 %v7183
    %7924 = vmatprep.subr.bf16.mxu0 %v7177
    %7925 = vmatpush1.bf16.msra.mxu0 %v7176
    %7926 = vmatprep.subr.bf16.mxu0 %v7170
    %7927 = vmatpush1.bf16.msra.mxu0 %v7169
    %7928 = vmatprep.subr.bf16.mxu0 %v7163
    %7929 = vmatpush1.bf16.msra.mxu0 %v7162
    %7930 = vmatprep.subr.bf16.mxu0 %v7156
    %7931 = vmatpush1.bf16.msra.mxu0 %v7155
    %7932 = vmatprep.subr.bf16.mxu0 %v7149
    %7933 = vmatpush1.bf16.msra.mxu0 %v7148
    %7934 = vmatprep.subr.bf16.mxu0 %v7142
    %7935 = vmatpush1.bf16.msra.mxu0 %v7141
    %7936 = vmatprep.subr.bf16.mxu0 %v7247
    %7937 = vmatpush2.bf16.msra.mxu0 %v7246
    %7938 = vmatprep.subr.bf16.mxu0 %v7240
    %7939 = vmatpush2.bf16.msra.mxu0 %v7239
    %7940 = vmatprep.subr.bf16.mxu0 %v7233
    %7941 = vmatpush2.bf16.msra.mxu0 %v7232
    %7942 = vmatprep.subr.bf16.mxu0 %v7226
    %7943 = vmatpush2.bf16.msra.mxu0 %v7225
    %7944 = vmatprep.subr.bf16.mxu0 %v7219
    %7945 = vmatpush2.bf16.msra.mxu0 %v7218
    %7946 = vmatprep.subr.bf16.mxu0 %v7212
    %7947 = vmatpush2.bf16.msra.mxu0 %v7211
    %7948 = vmatprep.subr.bf16.mxu0 %v7205
    %7949 = vmatpush2.bf16.msra.mxu0 %v7204
    %7950 = vmatprep.subr.bf16.mxu0 %v7198
    %7951 = vmatpush2.bf16.msra.mxu0 %v7197
    %7952 = vmatprep.mubr.bf16.mxu0 %v4819
    %7953 = vmatmul.mubr.bf16.gmra.mxu0 %v4818
    %v7954 = vpop.f32.mrf.mxu0
    %v7955 = vadd.f32 %v7882, %v7954
    %v7956 = vpop.f32.mrf.mxu0
    %v7957 = vadd.f32 %v7884, %v7956
    %v7958 = vpop.f32.mrf.mxu0
    %v7959 = vadd.f32 %v7886, %v7958
    %v7960 = vpop.f32.mrf.mxu0
    %v7961 = vadd.f32 %v7888, %v7960
    %7962 = vmatprep.mubr.bf16.mxu0 %v4827
    %7963 = vmatmul.mubr.bf16.gmra.mxu0 %v4826
    %v7964 = vpop.f32.mrf.mxu0
    %v7965 = vadd.f32 %v7892, %v7964
    %v7966 = vpop.f32.mrf.mxu0
    %v7967 = vadd.f32 %v7894, %v7966
    %v7968 = vpop.f32.mrf.mxu0
    %v7969 = vadd.f32 %v7896, %v7968
    %v7970 = vpop.f32.mrf.mxu0
    %v7971 = vadd.f32 %v7898, %v7970
    %7972 = vmatprep.mubr.bf16.mxu0 %v4835
    %7973 = vmatmul.mubr.bf16.gmra.mxu0 %v4834
    %v7974 = vpop.f32.mrf.mxu0
    %v7975 = vadd.f32 %v7902, %v7974
    %v7976 = vpop.f32.mrf.mxu0
    %v7977 = vadd.f32 %v7904, %v7976
    %v7978 = vpop.f32.mrf.mxu0
    %v7979 = vadd.f32 %v7906, %v7978
    %v7980 = vpop.f32.mrf.mxu0
    %v7981 = vadd.f32 %v7908, %v7980
    %7982 = vmatprep.mubr.bf16.mxu0 %v4843
    %7983 = vmatmul.mubr.bf16.gmra.mxu0 %v4842
    %v7984 = vpop.f32.mrf.mxu0
    %v7985 = vadd.f32 %v7912, %v7984
    %v7986 = vpop.f32.mrf.mxu0
    %v7987 = vadd.f32 %v7914, %v7986
    %v7988 = vpop.f32.mrf.mxu0
    %v7989 = vadd.f32 %v7916, %v7988
    %v7990 = vpop.f32.mrf.mxu0
    %v7991 = vadd.f32 %v7918, %v7990
    %7992 = vdwg.mxu0
    %7993 = vmatprep.subr.bf16.mxu0 %v6857
    %7994 = vmatpush1.bf16.msra.mxu0 %v6856
    %7995 = vmatprep.subr.bf16.mxu0 %v6850
    %7996 = vmatpush1.bf16.msra.mxu0 %v6849
    %7997 = vmatprep.subr.bf16.mxu0 %v6843
    %7998 = vmatpush1.bf16.msra.mxu0 %v6842
    %7999 = vmatprep.subr.bf16.mxu0 %v6836
    %8000 = vmatpush1.bf16.msra.mxu0 %v6835
    %8001 = vmatprep.subr.bf16.mxu0 %v6829
    %8002 = vmatpush1.bf16.msra.mxu0 %v6828
    %8003 = vmatprep.subr.bf16.mxu0 %v6822
    %8004 = vmatpush1.bf16.msra.mxu0 %v6821
    %8005 = vmatprep.subr.bf16.mxu0 %v6815
    %8006 = vmatpush1.bf16.msra.mxu0 %v6814
    %8007 = vmatprep.subr.bf16.mxu0 %v6808
    %8008 = vmatpush1.bf16.msra.mxu0 %v6807
    %8009 = vmatprep.subr.bf16.mxu0 %v6913
    %8010 = vmatpush2.bf16.msra.mxu0 %v6912
    %8011 = vmatprep.subr.bf16.mxu0 %v6906
    %8012 = vmatpush2.bf16.msra.mxu0 %v6905
    %8013 = vmatprep.subr.bf16.mxu0 %v6899
    %8014 = vmatpush2.bf16.msra.mxu0 %v6898
    %8015 = vmatprep.subr.bf16.mxu0 %v6892
    %8016 = vmatpush2.bf16.msra.mxu0 %v6891
    %8017 = vmatprep.subr.bf16.mxu0 %v6885
    %8018 = vmatpush2.bf16.msra.mxu0 %v6884
    %8019 = vmatprep.subr.bf16.mxu0 %v6878
    %8020 = vmatpush2.bf16.msra.mxu0 %v6877
    %8021 = vmatprep.subr.bf16.mxu0 %v6871
    %8022 = vmatpush2.bf16.msra.mxu0 %v6870
    %8023 = vmatprep.subr.bf16.mxu0 %v6864
    %8024 = vmatpush2.bf16.msra.mxu0 %v6863
    %8025 = vmatprep.mubr.bf16.mxu0 %v4813
    %8026 = vmatmul.mubr.bf16.gmra.mxu0 %v4812
    %v8027 = vpop.f32.mrf.mxu0
    %v8028 = vadd.f32 %v5373, %v8027
    %v8029 = vpop.f32.mrf.mxu0
    %v8030 = vadd.f32 %v5377, %v8029
    %v8031 = vpop.f32.mrf.mxu0
    %v8032 = vadd.f32 %v5373, %v8031
    %v8033 = vpop.f32.mrf.mxu0
    %v8034 = vadd.f32 %v5377, %v8033
    %8035 = vmatprep.mubr.bf16.mxu0 %v4821
    %8036 = vmatmul.mubr.bf16.gmra.mxu0 %v4820
    %v8037 = vpop.f32.mrf.mxu0
    %v8038 = vadd.f32 %v5373, %v8037
    %v8039 = vpop.f32.mrf.mxu0
    %v8040 = vadd.f32 %v5377, %v8039
    %v8041 = vpop.f32.mrf.mxu0
    %v8042 = vadd.f32 %v5373, %v8041
    %v8043 = vpop.f32.mrf.mxu0
    %v8044 = vadd.f32 %v5377, %v8043
    %8045 = vmatprep.mubr.bf16.mxu0 %v4829
    %8046 = vmatmul.mubr.bf16.gmra.mxu0 %v4828
    %v8047 = vpop.f32.mrf.mxu0
    %v8048 = vadd.f32 %v5373, %v8047
    %v8049 = vpop.f32.mrf.mxu0
    %v8050 = vadd.f32 %v5377, %v8049
    %v8051 = vpop.f32.mrf.mxu0
    %v8052 = vadd.f32 %v5373, %v8051
    %v8053 = vpop.f32.mrf.mxu0
    %v8054 = vadd.f32 %v5377, %v8053
    %8055 = vmatprep.mubr.bf16.mxu0 %v4837
    %8056 = vmatmul.mubr.bf16.gmra.mxu0 %v4836
    %v8057 = vpop.f32.mrf.mxu0
    %v8058 = vadd.f32 %v5373, %v8057
    %v8059 = vpop.f32.mrf.mxu0
    %v8060 = vadd.f32 %v5377, %v8059
    %v8061 = vpop.f32.mrf.mxu0
    %v8062 = vadd.f32 %v5373, %v8061
    %v8063 = vpop.f32.mrf.mxu0
    %v8064 = vadd.f32 %v5377, %v8063
    %8065 = vdwg.mxu0
    %8066 = vmatprep.subr.bf16.mxu0 %v6969
    %8067 = vmatpush1.bf16.msra.mxu0 %v6968
    %8068 = vmatprep.subr.bf16.mxu0 %v6962
    %8069 = vmatpush1.bf16.msra.mxu0 %v6961
    %8070 = vmatprep.subr.bf16.mxu0 %v6955
    %8071 = vmatpush1.bf16.msra.mxu0 %v6954
    %8072 = vmatprep.subr.bf16.mxu0 %v6948
    %8073 = vmatpush1.bf16.msra.mxu0 %v6947
    %8074 = vmatprep.subr.bf16.mxu0 %v6941
    %8075 = vmatpush1.bf16.msra.mxu0 %v6940
    %8076 = vmatprep.subr.bf16.mxu0 %v6934
    %8077 = vmatpush1.bf16.msra.mxu0 %v6933
    %8078 = vmatprep.subr.bf16.mxu0 %v6927
    %8079 = vmatpush1.bf16.msra.mxu0 %v6926
    %8080 = vmatprep.subr.bf16.mxu0 %v6920
    %8081 = vmatpush1.bf16.msra.mxu0 %v6919
    %8082 = vmatprep.subr.bf16.mxu0 %v7025
    %8083 = vmatpush2.bf16.msra.mxu0 %v7024
    %8084 = vmatprep.subr.bf16.mxu0 %v7018
    %8085 = vmatpush2.bf16.msra.mxu0 %v7017
    %8086 = vmatprep.subr.bf16.mxu0 %v7011
    %8087 = vmatpush2.bf16.msra.mxu0 %v7010
    %8088 = vmatprep.subr.bf16.mxu0 %v7004
    %8089 = vmatpush2.bf16.msra.mxu0 %v7003
    %8090 = vmatprep.subr.bf16.mxu0 %v6997
    %8091 = vmatpush2.bf16.msra.mxu0 %v6996
    %8092 = vmatprep.subr.bf16.mxu0 %v6990
    %8093 = vmatpush2.bf16.msra.mxu0 %v6989
    %8094 = vmatprep.subr.bf16.mxu0 %v6983
    %8095 = vmatpush2.bf16.msra.mxu0 %v6982
    %8096 = vmatprep.subr.bf16.mxu0 %v6976
    %8097 = vmatpush2.bf16.msra.mxu0 %v6975
    %8098 = vmatprep.mubr.bf16.mxu0 %v4815
    %8099 = vmatmul.mubr.bf16.gmra.mxu0 %v4814
    %v8100 = vpop.f32.mrf.mxu0
    %v8101 = vadd.f32 %v8028, %v8100
    %v8102 = vpop.f32.mrf.mxu0
    %v8103 = vadd.f32 %v8030, %v8102
    %v8104 = vpop.f32.mrf.mxu0
    %v8105 = vadd.f32 %v8032, %v8104
    %v8106 = vpop.f32.mrf.mxu0
    %v8107 = vadd.f32 %v8034, %v8106
    %8108 = vmatprep.mubr.bf16.mxu0 %v4823
    %8109 = vmatmul.mubr.bf16.gmra.mxu0 %v4822
    %v8110 = vpop.f32.mrf.mxu0
    %v8111 = vadd.f32 %v8038, %v8110
    %v8112 = vpop.f32.mrf.mxu0
    %v8113 = vadd.f32 %v8040, %v8112
    %v8114 = vpop.f32.mrf.mxu0
    %v8115 = vadd.f32 %v8042, %v8114
    %v8116 = vpop.f32.mrf.mxu0
    %v8117 = vadd.f32 %v8044, %v8116
    %8118 = vmatprep.mubr.bf16.mxu0 %v4831
    %8119 = vmatmul.mubr.bf16.gmra.mxu0 %v4830
    %v8120 = vpop.f32.mrf.mxu0
    %v8121 = vadd.f32 %v8048, %v8120
    %v8122 = vpop.f32.mrf.mxu0
    %v8123 = vadd.f32 %v8050, %v8122
    %v8124 = vpop.f32.mrf.mxu0
    %v8125 = vadd.f32 %v8052, %v8124
    %v8126 = vpop.f32.mrf.mxu0
    %v8127 = vadd.f32 %v8054, %v8126
    %8128 = vmatprep.mubr.bf16.mxu0 %v4839
    %8129 = vmatmul.mubr.bf16.gmra.mxu0 %v4838
    %v8130 = vpop.f32.mrf.mxu0
    %v8131 = vadd.f32 %v8058, %v8130
    %v8132 = vpop.f32.mrf.mxu0
    %v8133 = vadd.f32 %v8060, %v8132
    %v8134 = vpop.f32.mrf.mxu0
    %v8135 = vadd.f32 %v8062, %v8134
    %v8136 = vpop.f32.mrf.mxu0
    %v8137 = vadd.f32 %v8064, %v8136
    %8138 = vdwg.mxu0
    %8139 = vmatprep.subr.bf16.mxu0 %v7081
    %8140 = vmatpush1.bf16.msra.mxu0 %v7080
    %8141 = vmatprep.subr.bf16.mxu0 %v7074
    %8142 = vmatpush1.bf16.msra.mxu0 %v7073
    %8143 = vmatprep.subr.bf16.mxu0 %v7067
    %8144 = vmatpush1.bf16.msra.mxu0 %v7066
    %8145 = vmatprep.subr.bf16.mxu0 %v7060
    %8146 = vmatpush1.bf16.msra.mxu0 %v7059
    %8147 = vmatprep.subr.bf16.mxu0 %v7053
    %8148 = vmatpush1.bf16.msra.mxu0 %v7052
    %8149 = vmatprep.subr.bf16.mxu0 %v7046
    %8150 = vmatpush1.bf16.msra.mxu0 %v7045
    %8151 = vmatprep.subr.bf16.mxu0 %v7039
    %8152 = vmatpush1.bf16.msra.mxu0 %v7038
    %8153 = vmatprep.subr.bf16.mxu0 %v7032
    %8154 = vmatpush1.bf16.msra.mxu0 %v7031
    %8155 = vmatprep.subr.bf16.mxu0 %v7137
    %8156 = vmatpush2.bf16.msra.mxu0 %v7136
    %8157 = vmatprep.subr.bf16.mxu0 %v7130
    %8158 = vmatpush2.bf16.msra.mxu0 %v7129
    %8159 = vmatprep.subr.bf16.mxu0 %v7123
    %8160 = vmatpush2.bf16.msra.mxu0 %v7122
    %8161 = vmatprep.subr.bf16.mxu0 %v7116
    %8162 = vmatpush2.bf16.msra.mxu0 %v7115
    %8163 = vmatprep.subr.bf16.mxu0 %v7109
    %8164 = vmatpush2.bf16.msra.mxu0 %v7108
    %8165 = vmatprep.subr.bf16.mxu0 %v7102
    %8166 = vmatpush2.bf16.msra.mxu0 %v7101
    %8167 = vmatprep.subr.bf16.mxu0 %v7095
    %8168 = vmatpush2.bf16.msra.mxu0 %v7094
    %8169 = vmatprep.subr.bf16.mxu0 %v7088
    %8170 = vmatpush2.bf16.msra.mxu0 %v7087
    %8171 = vmatprep.mubr.bf16.mxu0 %v4817
    %8172 = vmatmul.mubr.bf16.gmra.mxu0 %v4816
    %v8173 = vpop.f32.mrf.mxu0
    %v8174 = vadd.f32 %v8101, %v8173
    %v8175 = vpop.f32.mrf.mxu0
    %v8176 = vadd.f32 %v8103, %v8175
    %v8177 = vpop.f32.mrf.mxu0
    %v8178 = vadd.f32 %v8105, %v8177
    %v8179 = vpop.f32.mrf.mxu0
    %v8180 = vadd.f32 %v8107, %v8179
    %8181 = vmatprep.mubr.bf16.mxu0 %v4825
    %8182 = vmatmul.mubr.bf16.gmra.mxu0 %v4824
    %v8183 = vpop.f32.mrf.mxu0
    %v8184 = vadd.f32 %v8111, %v8183
    %v8185 = vpop.f32.mrf.mxu0
    %v8186 = vadd.f32 %v8113, %v8185
    %v8187 = vpop.f32.mrf.mxu0
    %v8188 = vadd.f32 %v8115, %v8187
    %v8189 = vpop.f32.mrf.mxu0
    %v8190 = vadd.f32 %v8117, %v8189
    %8191 = vmatprep.mubr.bf16.mxu0 %v4833
    %8192 = vmatmul.mubr.bf16.gmra.mxu0 %v4832
    %v8193 = vpop.f32.mrf.mxu0
    %v8194 = vadd.f32 %v8121, %v8193
    %v8195 = vpop.f32.mrf.mxu0
    %v8196 = vadd.f32 %v8123, %v8195
    %v8197 = vpop.f32.mrf.mxu0
    %v8198 = vadd.f32 %v8125, %v8197
    %v8199 = vpop.f32.mrf.mxu0
    %v8200 = vadd.f32 %v8127, %v8199
    %8201 = vmatprep.mubr.bf16.mxu0 %v4841
    %8202 = vmatmul.mubr.bf16.gmra.mxu0 %v4840
    %v8203 = vpop.f32.mrf.mxu0
    %v8204 = vadd.f32 %v8131, %v8203
    %v8205 = vpop.f32.mrf.mxu0
    %v8206 = vadd.f32 %v8133, %v8205
    %v8207 = vpop.f32.mrf.mxu0
    %v8208 = vadd.f32 %v8135, %v8207
    %v8209 = vpop.f32.mrf.mxu0
    %v8210 = vadd.f32 %v8137, %v8209
    %8211 = vdwg.mxu0
    %8212 = vmatprep.subr.bf16.mxu0 %v7193
    %8213 = vmatpush1.bf16.msra.mxu0 %v7192
    %8214 = vmatprep.subr.bf16.mxu0 %v7186
    %8215 = vmatpush1.bf16.msra.mxu0 %v7185
    %8216 = vmatprep.subr.bf16.mxu0 %v7179
    %8217 = vmatpush1.bf16.msra.mxu0 %v7178
    %8218 = vmatprep.subr.bf16.mxu0 %v7172
    %8219 = vmatpush1.bf16.msra.mxu0 %v7171
    %8220 = vmatprep.subr.bf16.mxu0 %v7165
    %8221 = vmatpush1.bf16.msra.mxu0 %v7164
    %8222 = vmatprep.subr.bf16.mxu0 %v7158
    %8223 = vmatpush1.bf16.msra.mxu0 %v7157
    %8224 = vmatprep.subr.bf16.mxu0 %v7151
    %8225 = vmatpush1.bf16.msra.mxu0 %v7150
    %8226 = vmatprep.subr.bf16.mxu0 %v7144
    %8227 = vmatpush1.bf16.msra.mxu0 %v7143
    %8228 = vmatprep.subr.bf16.mxu0 %v7249
    %8229 = vmatpush2.bf16.msra.mxu0 %v7248
    %8230 = vmatprep.subr.bf16.mxu0 %v7242
    %8231 = vmatpush2.bf16.msra.mxu0 %v7241
    %8232 = vmatprep.subr.bf16.mxu0 %v7235
    %8233 = vmatpush2.bf16.msra.mxu0 %v7234
    %8234 = vmatprep.subr.bf16.mxu0 %v7228
    %8235 = vmatpush2.bf16.msra.mxu0 %v7227
    %8236 = vmatprep.subr.bf16.mxu0 %v7221
    %8237 = vmatpush2.bf16.msra.mxu0 %v7220
    %8238 = vmatprep.subr.bf16.mxu0 %v7214
    %8239 = vmatpush2.bf16.msra.mxu0 %v7213
    %8240 = vmatprep.subr.bf16.mxu0 %v7207
    %8241 = vmatpush2.bf16.msra.mxu0 %v7206
    %8242 = vmatprep.subr.bf16.mxu0 %v7200
    %8243 = vmatpush2.bf16.msra.mxu0 %v7199
    %8244 = vmatprep.mubr.bf16.mxu0 %v4819
    %8245 = vmatmul.mubr.bf16.gmra.mxu0 %v4818
    %v8246 = vpop.f32.mrf.mxu0
    %v8247 = vadd.f32 %v8174, %v8246
    %v8248 = vpop.f32.mrf.mxu0
    %v8249 = vadd.f32 %v8176, %v8248
    %v8250 = vpop.f32.mrf.mxu0
    %v8251 = vadd.f32 %v8178, %v8250
    %v8252 = vpop.f32.mrf.mxu0
    %v8253 = vadd.f32 %v8180, %v8252
    %8254 = vmatprep.mubr.bf16.mxu0 %v4827
    %8255 = vmatmul.mubr.bf16.gmra.mxu0 %v4826
    %v8256 = vpop.f32.mrf.mxu0
    %v8257 = vadd.f32 %v8184, %v8256
    %v8258 = vpop.f32.mrf.mxu0
    %v8259 = vadd.f32 %v8186, %v8258
    %v8260 = vpop.f32.mrf.mxu0
    %v8261 = vadd.f32 %v8188, %v8260
    %v8262 = vpop.f32.mrf.mxu0
    %v8263 = vadd.f32 %v8190, %v8262
    %8264 = vmatprep.mubr.bf16.mxu0 %v4835
    %8265 = vmatmul.mubr.bf16.gmra.mxu0 %v4834
    %v8266 = vpop.f32.mrf.mxu0
    %v8267 = vadd.f32 %v8194, %v8266
    %v8268 = vpop.f32.mrf.mxu0
    %v8269 = vadd.f32 %v8196, %v8268
    %v8270 = vpop.f32.mrf.mxu0
    %v8271 = vadd.f32 %v8198, %v8270
    %v8272 = vpop.f32.mrf.mxu0
    %v8273 = vadd.f32 %v8200, %v8272
    %8274 = vmatprep.mubr.bf16.mxu0 %v4843
    %8275 = vmatmul.mubr.bf16.gmra.mxu0 %v4842
    %v8276 = vpop.f32.mrf.mxu0
    %v8277 = vadd.f32 %v8204, %v8276
    %v8278 = vpop.f32.mrf.mxu0
    %v8279 = vadd.f32 %v8206, %v8278
    %v8280 = vpop.f32.mrf.mxu0
    %v8281 = vadd.f32 %v8208, %v8280
    %v8282 = vpop.f32.mrf.mxu0
    %v8283 = vadd.f32 %v8210, %v8282
    %8284 = vdwg.mxu0
    %8285 = vmatprep.subr.bf16.mxu0 %v6859
    %8286 = vmatpush1.bf16.msra.mxu0 %v6858
    %8287 = vmatprep.subr.bf16.mxu0 %v6852
    %8288 = vmatpush1.bf16.msra.mxu0 %v6851
    %8289 = vmatprep.subr.bf16.mxu0 %v6845
    %8290 = vmatpush1.bf16.msra.mxu0 %v6844
    %8291 = vmatprep.subr.bf16.mxu0 %v6838
    %8292 = vmatpush1.bf16.msra.mxu0 %v6837
    %8293 = vmatprep.subr.bf16.mxu0 %v6831
    %8294 = vmatpush1.bf16.msra.mxu0 %v6830
    %8295 = vmatprep.subr.bf16.mxu0 %v6824
    %8296 = vmatpush1.bf16.msra.mxu0 %v6823
    %8297 = vmatprep.subr.bf16.mxu0 %v6817
    %8298 = vmatpush1.bf16.msra.mxu0 %v6816
    %8299 = vmatprep.subr.bf16.mxu0 %v6810
    %8300 = vmatpush1.bf16.msra.mxu0 %v6809
    %8301 = vmatprep.subr.bf16.mxu0 %v6915
    %8302 = vmatpush2.bf16.msra.mxu0 %v6914
    %8303 = vmatprep.subr.bf16.mxu0 %v6908
    %8304 = vmatpush2.bf16.msra.mxu0 %v6907
    %8305 = vmatprep.subr.bf16.mxu0 %v6901
    %8306 = vmatpush2.bf16.msra.mxu0 %v6900
    %8307 = vmatprep.subr.bf16.mxu0 %v6894
    %8308 = vmatpush2.bf16.msra.mxu0 %v6893
    %8309 = vmatprep.subr.bf16.mxu0 %v6887
    %8310 = vmatpush2.bf16.msra.mxu0 %v6886
    %8311 = vmatprep.subr.bf16.mxu0 %v6880
    %8312 = vmatpush2.bf16.msra.mxu0 %v6879
    %8313 = vmatprep.subr.bf16.mxu0 %v6873
    %8314 = vmatpush2.bf16.msra.mxu0 %v6872
    %8315 = vmatprep.subr.bf16.mxu0 %v6866
    %8316 = vmatpush2.bf16.msra.mxu0 %v6865
    %8317 = vmatprep.mubr.bf16.mxu0 %v4813
    %8318 = vmatmul.mubr.bf16.gmra.mxu0 %v4812
    %v8319 = vpop.f32.mrf.mxu0
    %v8320 = vadd.f32 %v5381, %v8319
    %v8321 = vpop.f32.mrf.mxu0
    %v8322 = vadd.f32 %v5385, %v8321
    %v8323 = vpop.f32.mrf.mxu0
    %v8324 = vadd.f32 %v5381, %v8323
    %v8325 = vpop.f32.mrf.mxu0
    %v8326 = vadd.f32 %v5385, %v8325
    %8327 = vmatprep.mubr.bf16.mxu0 %v4821
    %8328 = vmatmul.mubr.bf16.gmra.mxu0 %v4820
    %v8329 = vpop.f32.mrf.mxu0
    %v8330 = vadd.f32 %v5381, %v8329
    %v8331 = vpop.f32.mrf.mxu0
    %v8332 = vadd.f32 %v5385, %v8331
    %v8333 = vpop.f32.mrf.mxu0
    %v8334 = vadd.f32 %v5381, %v8333
    %v8335 = vpop.f32.mrf.mxu0
    %v8336 = vadd.f32 %v5385, %v8335
    %8337 = vmatprep.mubr.bf16.mxu0 %v4829
    %8338 = vmatmul.mubr.bf16.gmra.mxu0 %v4828
    %v8339 = vpop.f32.mrf.mxu0
    %v8340 = vadd.f32 %v5381, %v8339
    %v8341 = vpop.f32.mrf.mxu0
    %v8342 = vadd.f32 %v5385, %v8341
    %v8343 = vpop.f32.mrf.mxu0
    %v8344 = vadd.f32 %v5381, %v8343
    %v8345 = vpop.f32.mrf.mxu0
    %v8346 = vadd.f32 %v5385, %v8345
    %8347 = vmatprep.mubr.bf16.mxu0 %v4837
    %8348 = vmatmul.mubr.bf16.gmra.mxu0 %v4836
    %v8349 = vpop.f32.mrf.mxu0
    %v8350 = vadd.f32 %v5381, %v8349
    %v8351 = vpop.f32.mrf.mxu0
    %v8352 = vadd.f32 %v5385, %v8351
    %v8353 = vpop.f32.mrf.mxu0
    %v8354 = vadd.f32 %v5381, %v8353
    %v8355 = vpop.f32.mrf.mxu0
    %v8356 = vadd.f32 %v5385, %v8355
    %8357 = vdwg.mxu0
    %8358 = vmatprep.subr.bf16.mxu0 %v6971
    %8359 = vmatpush1.bf16.msra.mxu0 %v6970
    %8360 = vmatprep.subr.bf16.mxu0 %v6964
    %8361 = vmatpush1.bf16.msra.mxu0 %v6963
    %8362 = vmatprep.subr.bf16.mxu0 %v6957
    %8363 = vmatpush1.bf16.msra.mxu0 %v6956
    %8364 = vmatprep.subr.bf16.mxu0 %v6950
    %8365 = vmatpush1.bf16.msra.mxu0 %v6949
    %8366 = vmatprep.subr.bf16.mxu0 %v6943
    %8367 = vmatpush1.bf16.msra.mxu0 %v6942
    %8368 = vmatprep.subr.bf16.mxu0 %v6936
    %8369 = vmatpush1.bf16.msra.mxu0 %v6935
    %8370 = vmatprep.subr.bf16.mxu0 %v6929
    %8371 = vmatpush1.bf16.msra.mxu0 %v6928
    %8372 = vmatprep.subr.bf16.mxu0 %v6922
    %8373 = vmatpush1.bf16.msra.mxu0 %v6921
    %8374 = vmatprep.subr.bf16.mxu0 %v7027
    %8375 = vmatpush2.bf16.msra.mxu0 %v7026
    %8376 = vmatprep.subr.bf16.mxu0 %v7020
    %8377 = vmatpush2.bf16.msra.mxu0 %v7019
    %8378 = vmatprep.subr.bf16.mxu0 %v7013
    %8379 = vmatpush2.bf16.msra.mxu0 %v7012
    %8380 = vmatprep.subr.bf16.mxu0 %v7006
    %8381 = vmatpush2.bf16.msra.mxu0 %v7005
    %8382 = vmatprep.subr.bf16.mxu0 %v6999
    %8383 = vmatpush2.bf16.msra.mxu0 %v6998
    %8384 = vmatprep.subr.bf16.mxu0 %v6992
    %8385 = vmatpush2.bf16.msra.mxu0 %v6991
    %8386 = vmatprep.subr.bf16.mxu0 %v6985
    %8387 = vmatpush2.bf16.msra.mxu0 %v6984
    %8388 = vmatprep.subr.bf16.mxu0 %v6978
    %8389 = vmatpush2.bf16.msra.mxu0 %v6977
    %8390 = vmatprep.mubr.bf16.mxu0 %v4815
    %8391 = vmatmul.mubr.bf16.gmra.mxu0 %v4814
    %v8392 = vpop.f32.mrf.mxu0
    %v8393 = vadd.f32 %v8320, %v8392
    %v8394 = vpop.f32.mrf.mxu0
    %v8395 = vadd.f32 %v8322, %v8394
    %v8396 = vpop.f32.mrf.mxu0
    %v8397 = vadd.f32 %v8324, %v8396
    %v8398 = vpop.f32.mrf.mxu0
    %v8399 = vadd.f32 %v8326, %v8398
    %8400 = vmatprep.mubr.bf16.mxu0 %v4823
    %8401 = vmatmul.mubr.bf16.gmra.mxu0 %v4822
    %v8402 = vpop.f32.mrf.mxu0
    %v8403 = vadd.f32 %v8330, %v8402
    %v8404 = vpop.f32.mrf.mxu0
    %v8405 = vadd.f32 %v8332, %v8404
    %v8406 = vpop.f32.mrf.mxu0
    %v8407 = vadd.f32 %v8334, %v8406
    %v8408 = vpop.f32.mrf.mxu0
    %v8409 = vadd.f32 %v8336, %v8408
    %8410 = vmatprep.mubr.bf16.mxu0 %v4831
    %8411 = vmatmul.mubr.bf16.gmra.mxu0 %v4830
    %v8412 = vpop.f32.mrf.mxu0
    %v8413 = vadd.f32 %v8340, %v8412
    %v8414 = vpop.f32.mrf.mxu0
    %v8415 = vadd.f32 %v8342, %v8414
    %v8416 = vpop.f32.mrf.mxu0
    %v8417 = vadd.f32 %v8344, %v8416
    %v8418 = vpop.f32.mrf.mxu0
    %v8419 = vadd.f32 %v8346, %v8418
    %8420 = vmatprep.mubr.bf16.mxu0 %v4839
    %8421 = vmatmul.mubr.bf16.gmra.mxu0 %v4838
    %v8422 = vpop.f32.mrf.mxu0
    %v8423 = vadd.f32 %v8350, %v8422
    %v8424 = vpop.f32.mrf.mxu0
    %v8425 = vadd.f32 %v8352, %v8424
    %v8426 = vpop.f32.mrf.mxu0
    %v8427 = vadd.f32 %v8354, %v8426
    %v8428 = vpop.f32.mrf.mxu0
    %v8429 = vadd.f32 %v8356, %v8428
    %8430 = vdwg.mxu0
    %8431 = vmatprep.subr.bf16.mxu0 %v7083
    %8432 = vmatpush1.bf16.msra.mxu0 %v7082
    %8433 = vmatprep.subr.bf16.mxu0 %v7076
    %8434 = vmatpush1.bf16.msra.mxu0 %v7075
    %8435 = vmatprep.subr.bf16.mxu0 %v7069
    %8436 = vmatpush1.bf16.msra.mxu0 %v7068
    %8437 = vmatprep.subr.bf16.mxu0 %v7062
    %8438 = vmatpush1.bf16.msra.mxu0 %v7061
    %8439 = vmatprep.subr.bf16.mxu0 %v7055
    %8440 = vmatpush1.bf16.msra.mxu0 %v7054
    %8441 = vmatprep.subr.bf16.mxu0 %v7048
    %8442 = vmatpush1.bf16.msra.mxu0 %v7047
    %8443 = vmatprep.subr.bf16.mxu0 %v7041
    %8444 = vmatpush1.bf16.msra.mxu0 %v7040
    %8445 = vmatprep.subr.bf16.mxu0 %v7034
    %8446 = vmatpush1.bf16.msra.mxu0 %v7033
    %8447 = vmatprep.subr.bf16.mxu0 %v7139
    %8448 = vmatpush2.bf16.msra.mxu0 %v7138
    %8449 = vmatprep.subr.bf16.mxu0 %v7132
    %8450 = vmatpush2.bf16.msra.mxu0 %v7131
    %8451 = vmatprep.subr.bf16.mxu0 %v7125
    %8452 = vmatpush2.bf16.msra.mxu0 %v7124
    %8453 = vmatprep.subr.bf16.mxu0 %v7118
    %8454 = vmatpush2.bf16.msra.mxu0 %v7117
    %8455 = vmatprep.subr.bf16.mxu0 %v7111
    %8456 = vmatpush2.bf16.msra.mxu0 %v7110
    %8457 = vmatprep.subr.bf16.mxu0 %v7104
    %8458 = vmatpush2.bf16.msra.mxu0 %v7103
    %8459 = vmatprep.subr.bf16.mxu0 %v7097
    %8460 = vmatpush2.bf16.msra.mxu0 %v7096
    %8461 = vmatprep.subr.bf16.mxu0 %v7090
    %8462 = vmatpush2.bf16.msra.mxu0 %v7089
    %8463 = vmatprep.mubr.bf16.mxu0 %v4817
    %8464 = vmatmul.mubr.bf16.gmra.mxu0 %v4816
    %v8465 = vpop.f32.mrf.mxu0
    %v8466 = vadd.f32 %v8393, %v8465
    %v8467 = vpop.f32.mrf.mxu0
    %v8468 = vadd.f32 %v8395, %v8467
    %v8469 = vpop.f32.mrf.mxu0
    %v8470 = vadd.f32 %v8397, %v8469
    %v8471 = vpop.f32.mrf.mxu0
    %v8472 = vadd.f32 %v8399, %v8471
    %8473 = vmatprep.mubr.bf16.mxu0 %v4825
    %8474 = vmatmul.mubr.bf16.gmra.mxu0 %v4824
    %v8475 = vpop.f32.mrf.mxu0
    %v8476 = vadd.f32 %v8403, %v8475
    %v8477 = vpop.f32.mrf.mxu0
    %v8478 = vadd.f32 %v8405, %v8477
    %v8479 = vpop.f32.mrf.mxu0
    %v8480 = vadd.f32 %v8407, %v8479
    %v8481 = vpop.f32.mrf.mxu0
    %v8482 = vadd.f32 %v8409, %v8481
    %8483 = vmatprep.mubr.bf16.mxu0 %v4833
    %8484 = vmatmul.mubr.bf16.gmra.mxu0 %v4832
    %v8485 = vpop.f32.mrf.mxu0
    %v8486 = vadd.f32 %v8413, %v8485
    %v8487 = vpop.f32.mrf.mxu0
    %v8488 = vadd.f32 %v8415, %v8487
    %v8489 = vpop.f32.mrf.mxu0
    %v8490 = vadd.f32 %v8417, %v8489
    %v8491 = vpop.f32.mrf.mxu0
    %v8492 = vadd.f32 %v8419, %v8491
    %8493 = vmatprep.mubr.bf16.mxu0 %v4841
    %8494 = vmatmul.mubr.bf16.gmra.mxu0 %v4840
    %v8495 = vpop.f32.mrf.mxu0
    %v8496 = vadd.f32 %v8423, %v8495
    %v8497 = vpop.f32.mrf.mxu0
    %v8498 = vadd.f32 %v8425, %v8497
    %v8499 = vpop.f32.mrf.mxu0
    %v8500 = vadd.f32 %v8427, %v8499
    %v8501 = vpop.f32.mrf.mxu0
    %v8502 = vadd.f32 %v8429, %v8501
    %8503 = vdwg.mxu0
    %8504 = vmatprep.subr.bf16.mxu0 %v7195
    %8505 = vmatpush1.bf16.msra.mxu0 %v7194
    %8506 = vmatprep.subr.bf16.mxu0 %v7188
    %8507 = vmatpush1.bf16.msra.mxu0 %v7187
    %8508 = vmatprep.subr.bf16.mxu0 %v7181
    %8509 = vmatpush1.bf16.msra.mxu0 %v7180
    %8510 = vmatprep.subr.bf16.mxu0 %v7174
    %8511 = vmatpush1.bf16.msra.mxu0 %v7173
    %8512 = vmatprep.subr.bf16.mxu0 %v7167
    %8513 = vmatpush1.bf16.msra.mxu0 %v7166
    %8514 = vmatprep.subr.bf16.mxu0 %v7160
    %8515 = vmatpush1.bf16.msra.mxu0 %v7159
    %8516 = vmatprep.subr.bf16.mxu0 %v7153
    %8517 = vmatpush1.bf16.msra.mxu0 %v7152
    %8518 = vmatprep.subr.bf16.mxu0 %v7146
    %8519 = vmatpush1.bf16.msra.mxu0 %v7145
    %8520 = vmatprep.subr.bf16.mxu0 %v7251
    %8521 = vmatpush2.bf16.msra.mxu0 %v7250
    %8522 = vmatprep.subr.bf16.mxu0 %v7244
    %8523 = vmatpush2.bf16.msra.mxu0 %v7243
    %8524 = vmatprep.subr.bf16.mxu0 %v7237
    %8525 = vmatpush2.bf16.msra.mxu0 %v7236
    %8526 = vmatprep.subr.bf16.mxu0 %v7230
    %8527 = vmatpush2.bf16.msra.mxu0 %v7229
    %8528 = vmatprep.subr.bf16.mxu0 %v7223
    %8529 = vmatpush2.bf16.msra.mxu0 %v7222
    %8530 = vmatprep.subr.bf16.mxu0 %v7216
    %8531 = vmatpush2.bf16.msra.mxu0 %v7215
    %8532 = vmatprep.subr.bf16.mxu0 %v7209
    %8533 = vmatpush2.bf16.msra.mxu0 %v7208
    %8534 = vmatprep.subr.bf16.mxu0 %v7202
    %8535 = vmatpush2.bf16.msra.mxu0 %v7201
    %8536 = vmatprep.mubr.bf16.mxu0 %v4819
    %8537 = vmatmul.mubr.bf16.gmra.mxu0 %v4818
    %v8538 = vpop.f32.mrf.mxu0
    %v8539 = vadd.f32 %v8466, %v8538
    %v8540 = vpop.f32.mrf.mxu0
    %v8541 = vadd.f32 %v8468, %v8540
    %v8542 = vpop.f32.mrf.mxu0
    %v8543 = vadd.f32 %v8470, %v8542
    %v8544 = vpop.f32.mrf.mxu0
    %v8545 = vadd.f32 %v8472, %v8544
    %8546 = vmatprep.mubr.bf16.mxu0 %v4827
    %8547 = vmatmul.mubr.bf16.gmra.mxu0 %v4826
    %v8548 = vpop.f32.mrf.mxu0
    %v8549 = vadd.f32 %v8476, %v8548
    %v8550 = vpop.f32.mrf.mxu0
    %v8551 = vadd.f32 %v8478, %v8550
    %v8552 = vpop.f32.mrf.mxu0
    %v8553 = vadd.f32 %v8480, %v8552
    %v8554 = vpop.f32.mrf.mxu0
    %v8555 = vadd.f32 %v8482, %v8554
    %8556 = vmatprep.mubr.bf16.mxu0 %v4835
    %8557 = vmatmul.mubr.bf16.gmra.mxu0 %v4834
    %v8558 = vpop.f32.mrf.mxu0
    %v8559 = vadd.f32 %v8486, %v8558
    %v8560 = vpop.f32.mrf.mxu0
    %v8561 = vadd.f32 %v8488, %v8560
    %v8562 = vpop.f32.mrf.mxu0
    %v8563 = vadd.f32 %v8490, %v8562
    %v8564 = vpop.f32.mrf.mxu0
    %v8565 = vadd.f32 %v8492, %v8564
    %8566 = vmatprep.mubr.bf16.mxu0 %v4843
    %8567 = vmatmul.mubr.bf16.gmra.mxu0 %v4842
    %v8568 = vpop.f32.mrf.mxu0
    %v8569 = vadd.f32 %v8496, %v8568
    %v8570 = vpop.f32.mrf.mxu0
    %v8571 = vadd.f32 %v8498, %v8570
    %v8572 = vpop.f32.mrf.mxu0
    %v8573 = vadd.f32 %v8500, %v8572
    %v8574 = vpop.f32.mrf.mxu0
    %v8575 = vadd.f32 %v8502, %v8574
    %8576 = vdwg.mxu0
    %8577 = vmatprep.subr.bf16.mxu0 0
    %8578 = vmatpush1.bf16.msra.mxu0 %v6860
    %8579 = vmatprep.subr.bf16.mxu0 0
    %8580 = vmatpush1.bf16.msra.mxu0 %v6853
    %8581 = vmatprep.subr.bf16.mxu0 0
    %8582 = vmatpush1.bf16.msra.mxu0 %v6846
    %8583 = vmatprep.subr.bf16.mxu0 0
    %8584 = vmatpush1.bf16.msra.mxu0 %v6839
    %8585 = vmatprep.subr.bf16.mxu0 0
    %8586 = vmatpush1.bf16.msra.mxu0 %v6832
    %8587 = vmatprep.subr.bf16.mxu0 0
    %8588 = vmatpush1.bf16.msra.mxu0 %v6825
    %8589 = vmatprep.subr.bf16.mxu0 0
    %8590 = vmatpush1.bf16.msra.mxu0 %v6818
    %8591 = vmatprep.subr.bf16.mxu0 0
    %8592 = vmatpush1.bf16.msra.mxu0 %v6811
    %8593 = vmatprep.subr.bf16.mxu0 0
    %8594 = vmatpush2.bf16.msra.mxu0 %v6916
    %8595 = vmatprep.subr.bf16.mxu0 0
    %8596 = vmatpush2.bf16.msra.mxu0 %v6909
    %8597 = vmatprep.subr.bf16.mxu0 0
    %8598 = vmatpush2.bf16.msra.mxu0 %v6902
    %8599 = vmatprep.subr.bf16.mxu0 0
    %8600 = vmatpush2.bf16.msra.mxu0 %v6895
    %8601 = vmatprep.subr.bf16.mxu0 0
    %8602 = vmatpush2.bf16.msra.mxu0 %v6888
    %8603 = vmatprep.subr.bf16.mxu0 0
    %8604 = vmatpush2.bf16.msra.mxu0 %v6881
    %8605 = vmatprep.subr.bf16.mxu0 0
    %8606 = vmatpush2.bf16.msra.mxu0 %v6874
    %8607 = vmatprep.subr.bf16.mxu0 0
    %8608 = vmatpush2.bf16.msra.mxu0 %v6867
    %8609 = vmatprep.mubr.bf16.mxu0 %v4813
    %8610 = vmatmul.mubr.bf16.gmra.mxu0 %v4812
    %v8611 = vpop.f32.mrf.mxu0
    %v8612 = vadd.f32 %v5389, %v8611
    %v8613 = vpop.f32.mrf.mxu0
    %v8614 = vpop.f32.mrf.mxu0
    %v8615 = vadd.f32 %v5389, %v8614
    %v8616 = vpop.f32.mrf.mxu0
    %8617 = vmatprep.mubr.bf16.mxu0 %v4821
    %8618 = vmatmul.mubr.bf16.gmra.mxu0 %v4820
    %v8619 = vpop.f32.mrf.mxu0
    %v8620 = vadd.f32 %v5389, %v8619
    %v8621 = vpop.f32.mrf.mxu0
    %v8622 = vpop.f32.mrf.mxu0
    %v8623 = vadd.f32 %v5389, %v8622
    %v8624 = vpop.f32.mrf.mxu0
    %8625 = vmatprep.mubr.bf16.mxu0 %v4829
    %8626 = vmatmul.mubr.bf16.gmra.mxu0 %v4828
    %v8627 = vpop.f32.mrf.mxu0
    %v8628 = vadd.f32 %v5389, %v8627
    %v8629 = vpop.f32.mrf.mxu0
    %v8630 = vpop.f32.mrf.mxu0
    %v8631 = vadd.f32 %v5389, %v8630
    %v8632 = vpop.f32.mrf.mxu0
    %8633 = vmatprep.mubr.bf16.mxu0 %v4837
    %8634 = vmatmul.mubr.bf16.gmra.mxu0 %v4836
    %v8635 = vpop.f32.mrf.mxu0
    %v8636 = vadd.f32 %v5389, %v8635
    %v8637 = vpop.f32.mrf.mxu0
    %v8638 = vpop.f32.mrf.mxu0
    %v8639 = vadd.f32 %v5389, %v8638
    %v8640 = vpop.f32.mrf.mxu0
    %8641 = vdwg.mxu0
    %8642 = vmatprep.subr.bf16.mxu0 0
    %8643 = vmatpush1.bf16.msra.mxu0 %v6972
    %8644 = vmatprep.subr.bf16.mxu0 0
    %8645 = vmatpush1.bf16.msra.mxu0 %v6965
    %8646 = vmatprep.subr.bf16.mxu0 0
    %8647 = vmatpush1.bf16.msra.mxu0 %v6958
    %8648 = vmatprep.subr.bf16.mxu0 0
    %8649 = vmatpush1.bf16.msra.mxu0 %v6951
    %8650 = vmatprep.subr.bf16.mxu0 0
    %8651 = vmatpush1.bf16.msra.mxu0 %v6944
    %8652 = vmatprep.subr.bf16.mxu0 0
    %8653 = vmatpush1.bf16.msra.mxu0 %v6937
    %8654 = vmatprep.subr.bf16.mxu0 0
    %8655 = vmatpush1.bf16.msra.mxu0 %v6930
    %8656 = vmatprep.subr.bf16.mxu0 0
    %8657 = vmatpush1.bf16.msra.mxu0 %v6923
    %8658 = vmatprep.subr.bf16.mxu0 0
    %8659 = vmatpush2.bf16.msra.mxu0 %v7028
    %8660 = vmatprep.subr.bf16.mxu0 0
    %8661 = vmatpush2.bf16.msra.mxu0 %v7021
    %8662 = vmatprep.subr.bf16.mxu0 0
    %8663 = vmatpush2.bf16.msra.mxu0 %v7014
    %8664 = vmatprep.subr.bf16.mxu0 0
    %8665 = vmatpush2.bf16.msra.mxu0 %v7007
    %8666 = vmatprep.subr.bf16.mxu0 0
    %8667 = vmatpush2.bf16.msra.mxu0 %v7000
    %8668 = vmatprep.subr.bf16.mxu0 0
    %8669 = vmatpush2.bf16.msra.mxu0 %v6993
    %8670 = vmatprep.subr.bf16.mxu0 0
    %8671 = vmatpush2.bf16.msra.mxu0 %v6986
    %8672 = vmatprep.subr.bf16.mxu0 0
    %8673 = vmatpush2.bf16.msra.mxu0 %v6979
    %8674 = vmatprep.mubr.bf16.mxu0 %v4815
    %8675 = vmatmul.mubr.bf16.gmra.mxu0 %v4814
    %v8676 = vpop.f32.mrf.mxu0
    %v8677 = vadd.f32 %v8612, %v8676
    %v8678 = vpop.f32.mrf.mxu0
    %v8679 = vpop.f32.mrf.mxu0
    %v8680 = vadd.f32 %v8615, %v8679
    %v8681 = vpop.f32.mrf.mxu0
    %8682 = vmatprep.mubr.bf16.mxu0 %v4823
    %8683 = vmatmul.mubr.bf16.gmra.mxu0 %v4822
    %v8684 = vpop.f32.mrf.mxu0
    %v8685 = vadd.f32 %v8620, %v8684
    %v8686 = vpop.f32.mrf.mxu0
    %v8687 = vpop.f32.mrf.mxu0
    %v8688 = vadd.f32 %v8623, %v8687
    %v8689 = vpop.f32.mrf.mxu0
    %8690 = vmatprep.mubr.bf16.mxu0 %v4831
    %8691 = vmatmul.mubr.bf16.gmra.mxu0 %v4830
    %v8692 = vpop.f32.mrf.mxu0
    %v8693 = vadd.f32 %v8628, %v8692
    %v8694 = vpop.f32.mrf.mxu0
    %v8695 = vpop.f32.mrf.mxu0
    %v8696 = vadd.f32 %v8631, %v8695
    %v8697 = vpop.f32.mrf.mxu0
    %8698 = vmatprep.mubr.bf16.mxu0 %v4839
    %8699 = vmatmul.mubr.bf16.gmra.mxu0 %v4838
    %v8700 = vpop.f32.mrf.mxu0
    %v8701 = vadd.f32 %v8636, %v8700
    %v8702 = vpop.f32.mrf.mxu0
    %v8703 = vpop.f32.mrf.mxu0
    %v8704 = vadd.f32 %v8639, %v8703
    %v8705 = vpop.f32.mrf.mxu0
    %8706 = vdwg.mxu0
    %8707 = vmatprep.subr.bf16.mxu0 0
    %8708 = vmatpush1.bf16.msra.mxu0 %v7084
    %8709 = vmatprep.subr.bf16.mxu0 0
    %8710 = vmatpush1.bf16.msra.mxu0 %v7077
    %8711 = vmatprep.subr.bf16.mxu0 0
    %8712 = vmatpush1.bf16.msra.mxu0 %v7070
    %8713 = vmatprep.subr.bf16.mxu0 0
    %8714 = vmatpush1.bf16.msra.mxu0 %v7063
    %8715 = vmatprep.subr.bf16.mxu0 0
    %8716 = vmatpush1.bf16.msra.mxu0 %v7056
    %8717 = vmatprep.subr.bf16.mxu0 0
    %8718 = vmatpush1.bf16.msra.mxu0 %v7049
    %8719 = vmatprep.subr.bf16.mxu0 0
    %8720 = vmatpush1.bf16.msra.mxu0 %v7042
    %8721 = vmatprep.subr.bf16.mxu0 0
    %8722 = vmatpush1.bf16.msra.mxu0 %v7035
    %8723 = vmatprep.subr.bf16.mxu0 0
    %8724 = vmatpush2.bf16.msra.mxu0 %v7140
    %8725 = vmatprep.subr.bf16.mxu0 0
    %8726 = vmatpush2.bf16.msra.mxu0 %v7133
    %8727 = vmatprep.subr.bf16.mxu0 0
    %8728 = vmatpush2.bf16.msra.mxu0 %v7126
    %8729 = vmatprep.subr.bf16.mxu0 0
    %8730 = vmatpush2.bf16.msra.mxu0 %v7119
    %8731 = vmatprep.subr.bf16.mxu0 0
    %8732 = vmatpush2.bf16.msra.mxu0 %v7112
    %8733 = vmatprep.subr.bf16.mxu0 0
    %8734 = vmatpush2.bf16.msra.mxu0 %v7105
    %8735 = vmatprep.subr.bf16.mxu0 0
    %8736 = vmatpush2.bf16.msra.mxu0 %v7098
    %8737 = vmatprep.subr.bf16.mxu0 0
    %8738 = vmatpush2.bf16.msra.mxu0 %v7091
    %8739 = vmatprep.mubr.bf16.mxu0 %v4817
    %8740 = vmatmul.mubr.bf16.gmra.mxu0 %v4816
    %v8741 = vpop.f32.mrf.mxu0
    %v8742 = vadd.f32 %v8677, %v8741
    %v8743 = vpop.f32.mrf.mxu0
    %v8744 = vpop.f32.mrf.mxu0
    %v8745 = vadd.f32 %v8680, %v8744
    %v8746 = vpop.f32.mrf.mxu0
    %8747 = vmatprep.mubr.bf16.mxu0 %v4825
    %8748 = vmatmul.mubr.bf16.gmra.mxu0 %v4824
    %v8749 = vpop.f32.mrf.mxu0
    %v8750 = vadd.f32 %v8685, %v8749
    %v8751 = vpop.f32.mrf.mxu0
    %v8752 = vpop.f32.mrf.mxu0
    %v8753 = vadd.f32 %v8688, %v8752
    %v8754 = vpop.f32.mrf.mxu0
    %8755 = vmatprep.mubr.bf16.mxu0 %v4833
    %8756 = vmatmul.mubr.bf16.gmra.mxu0 %v4832
    %v8757 = vpop.f32.mrf.mxu0
    %v8758 = vadd.f32 %v8693, %v8757
    %v8759 = vpop.f32.mrf.mxu0
    %v8760 = vpop.f32.mrf.mxu0
    %v8761 = vadd.f32 %v8696, %v8760
    %v8762 = vpop.f32.mrf.mxu0
    %8763 = vmatprep.mubr.bf16.mxu0 %v4841
    %8764 = vmatmul.mubr.bf16.gmra.mxu0 %v4840
    %v8765 = vpop.f32.mrf.mxu0
    %v8766 = vadd.f32 %v8701, %v8765
    %v8767 = vpop.f32.mrf.mxu0
    %v8768 = vpop.f32.mrf.mxu0
    %v8769 = vadd.f32 %v8704, %v8768
    %v8770 = vpop.f32.mrf.mxu0
    %8771 = vdwg.mxu0
    %8772 = vmatprep.subr.bf16.mxu0 0
    %8773 = vmatpush1.bf16.msra.mxu0 %v7196
    %8774 = vmatprep.subr.bf16.mxu0 0
    %8775 = vmatpush1.bf16.msra.mxu0 %v7189
    %8776 = vmatprep.subr.bf16.mxu0 0
    %8777 = vmatpush1.bf16.msra.mxu0 %v7182
    %8778 = vmatprep.subr.bf16.mxu0 0
    %8779 = vmatpush1.bf16.msra.mxu0 %v7175
    %8780 = vmatprep.subr.bf16.mxu0 0
    %8781 = vmatpush1.bf16.msra.mxu0 %v7168
    %8782 = vmatprep.subr.bf16.mxu0 0
    %8783 = vmatpush1.bf16.msra.mxu0 %v7161
    %8784 = vmatprep.subr.bf16.mxu0 0
    %8785 = vmatpush1.bf16.msra.mxu0 %v7154
    %8786 = vmatprep.subr.bf16.mxu0 0
    %8787 = vmatpush1.bf16.msra.mxu0 %v7147
    %8788 = vmatprep.subr.bf16.mxu0 0
    %8789 = vmatpush2.bf16.msra.mxu0 %v7252
    %8790 = vmatprep.subr.bf16.mxu0 0
    %8791 = vmatpush2.bf16.msra.mxu0 %v7245
    %8792 = vmatprep.subr.bf16.mxu0 0
    %8793 = vmatpush2.bf16.msra.mxu0 %v7238
    %8794 = vmatprep.subr.bf16.mxu0 0
    %8795 = vmatpush2.bf16.msra.mxu0 %v7231
    %8796 = vmatprep.subr.bf16.mxu0 0
    %8797 = vmatpush2.bf16.msra.mxu0 %v7224
    %8798 = vmatprep.subr.bf16.mxu0 0
    %8799 = vmatpush2.bf16.msra.mxu0 %v7217
    %8800 = vmatprep.subr.bf16.mxu0 0
    %8801 = vmatpush2.bf16.msra.mxu0 %v7210
    %8802 = vmatprep.subr.bf16.mxu0 0
    %8803 = vmatpush2.bf16.msra.mxu0 %v7203
    %8804 = vmatprep.mubr.bf16.mxu0 %v4819
    %8805 = vmatmul.mubr.bf16.gmra.mxu0 %v4818
    %v8806 = vpop.f32.mrf.mxu0
    %v8807 = vadd.f32 %v8742, %v8806
    %v8808 = vpop.f32.mrf.mxu0
    %v8809 = vpop.f32.mrf.mxu0
    %v8810 = vadd.f32 %v8745, %v8809
    %v8811 = vpop.f32.mrf.mxu0
    %8812 = vmatprep.mubr.bf16.mxu0 %v4827
    %8813 = vmatmul.mubr.bf16.gmra.mxu0 %v4826
    %v8814 = vpop.f32.mrf.mxu0
    %v8815 = vadd.f32 %v8750, %v8814
    %v8816 = vpop.f32.mrf.mxu0
    %v8817 = vpop.f32.mrf.mxu0
    %v8818 = vadd.f32 %v8753, %v8817
    %v8819 = vpop.f32.mrf.mxu0
    %8820 = vmatprep.mubr.bf16.mxu0 %v4835
    %8821 = vmatmul.mubr.bf16.gmra.mxu0 %v4834
    %v8822 = vpop.f32.mrf.mxu0
    %v8823 = vadd.f32 %v8758, %v8822
    %v8824 = vpop.f32.mrf.mxu0
    %v8825 = vpop.f32.mrf.mxu0
    %v8826 = vadd.f32 %v8761, %v8825
    %v8827 = vpop.f32.mrf.mxu0
    %8828 = vmatprep.mubr.bf16.mxu0 %v4843
    %8829 = vmatmul.mubr.bf16.gmra.mxu0 %v4842
    %v8830 = vpop.f32.mrf.mxu0
    %v8831 = vadd.f32 %v8766, %v8830
    %v8832 = vpop.f32.mrf.mxu0
    %v8833 = vpop.f32.mrf.mxu0
    %v8834 = vadd.f32 %v8769, %v8833
    %v8835 = vpop.f32.mrf.mxu0
    %8836 = vdwg.mxu0
    %v8837 = vtanh.pop %v7955
    %v8838 = vtanh.pop %v7957
    %v8839 = vtanh.pop %v8247
    %v8840 = vtanh.pop %v8249
    %v8841 = vtanh.pop %v8539
    %v8842 = vtanh.pop %v8541
    %v8843 = vtanh.pop %v8807
    %v8844 = vtanh.pop %v7959
    %v8845 = vtanh.pop %v7961
    %v8846 = vtanh.pop %v8251
    %v8847 = vtanh.pop %v8253
    %v8848 = vtanh.pop %v8543
    %v8849 = vtanh.pop %v8545
    %v8850 = vtanh.pop %v8810
    %v8851 = vtanh.pop %v7965
    %v8852 = vtanh.pop %v7967
    %v8853 = vtanh.pop %v8257
    %v8854 = vtanh.pop %v8259
    %v8855 = vtanh.pop %v8549
    %v8856 = vtanh.pop %v8551
    %v8857 = vtanh.pop %v8815
    %v8858 = vtanh.pop %v7969
    %v8859 = vtanh.pop %v7971
    %v8860 = vtanh.pop %v8261
    %v8861 = vtanh.pop %v8263
    %v8862 = vtanh.pop %v8553
    %v8863 = vtanh.pop %v8555
    %v8864 = vtanh.pop %v8818
    %v8865 = vtanh.pop %v7975
    %v8866 = vtanh.pop %v7977
    %v8867 = vtanh.pop %v8267
    %v8868 = vtanh.pop %v8269
    %v8869 = vtanh.pop %v8559
    %v8870 = vtanh.pop %v8561
    %v8871 = vtanh.pop %v8823
    %v8872 = vtanh.pop %v7979
    %v8873 = vtanh.pop %v7981
    %v8874 = vtanh.pop %v8271
    %v8875 = vtanh.pop %v8273
    %v8876 = vtanh.pop %v8563
    %v8877 = vtanh.pop %v8565
    %v8878 = vtanh.pop %v8826
    %v8879 = vtanh.pop %v7985
    %v8880 = vtanh.pop %v7987
    %v8881 = vtanh.pop %v8277
    %v8882 = vtanh.pop %v8279
    %v8883 = vtanh.pop %v8569
    %v8884 = vtanh.pop %v8571
    %v8885 = vtanh.pop %v8831
    %v8886 = vtanh.pop %v7989
    %v8887 = vtanh.pop %v7991
    %v8888 = vtanh.pop %v8281
    %v8889 = vtanh.pop %v8283
    %v8890 = vtanh.pop %v8573
    %v8891 = vtanh.pop %v8575
    %v8892 = vtanh.pop %v8834
    %8893 = vst [vmem:[#allocation5] sm:$0xff] %v8837
    %8894 = vst [vmem:[#allocation5 + $0x8] sm:$0xff] %v8838
    %8895 = vst [vmem:[#allocation5 + $0x10] sm:$0xff] %v8839
    %8896 = vst [vmem:[#allocation5 + $0x18] sm:$0xff] %v8840
    %8897 = vst [vmem:[#allocation5 + $0x20] sm:$0xff] %v8841
    %8898 = vst [vmem:[#allocation5 + $0x28] sm:$0xff] %v8842
    %8899 = vst [vmem:[#allocation5 + $0x30] sm:$0xff] %v8843
    %8900 = vst [vmem:[#allocation5 + $0x38] sm:$0xff] %v8844
    %8901 = vst [vmem:[#allocation5 + $0x40] sm:$0xff] %v8845
    %8902 = vst [vmem:[#allocation5 + $0x48] sm:$0xff] %v8846
    %8903 = vst [vmem:[#allocation5 + $0x50] sm:$0xff] %v8847
    %8904 = vst [vmem:[#allocation5 + $0x58] sm:$0xff] %v8848
    %8905 = vst [vmem:[#allocation5 + $0x60] sm:$0xff] %v8849
    %8906 = vst [vmem:[#allocation5 + $0x68] sm:$0xff] %v8850
    %8907 = vst [vmem:[#allocation5 + $0x70] sm:$0xff] %v8851
    %8908 = vst [vmem:[#allocation5 + $0x78] sm:$0xff] %v8852
    %8909 = vst [vmem:[#allocation5 + $0x80] sm:$0xff] %v8853
    %8910 = vst [vmem:[#allocation5 + $0x88] sm:$0xff] %v8854
    %8911 = vst [vmem:[#allocation5 + $0x90] sm:$0xff] %v8855
    %8912 = vst [vmem:[#allocation5 + $0x98] sm:$0xff] %v8856
    %8913 = vst [vmem:[#allocation5 + $0xa0] sm:$0xff] %v8857
    %8914 = vst [vmem:[#allocation5 + $0xa8] sm:$0xff] %v8858
    %8915 = vst [vmem:[#allocation5 + $0xb0] sm:$0xff] %v8859
    %8916 = vst [vmem:[#allocation5 + $0xb8] sm:$0xff] %v8860
    %8917 = vst [vmem:[#allocation5 + $0xc0] sm:$0xff] %v8861
    %8918 = vst [vmem:[#allocation5 + $0xc8] sm:$0xff] %v8862
    %8919 = vst [vmem:[#allocation5 + $0xd0] sm:$0xff] %v8863
    %8920 = vst [vmem:[#allocation5 + $0xd8] sm:$0xff] %v8864
    %8921 = vst [vmem:[#allocation5 + $0xe0] sm:$0xff] %v8865
    %8922 = vst [vmem:[#allocation5 + $0xe8] sm:$0xff] %v8866
    %8923 = vst [vmem:[#allocation5 + $0xf0] sm:$0xff] %v8867
    %8924 = vst [vmem:[#allocation5 + $0xf8] sm:$0xff] %v8868
    %8925 = vst [vmem:[#allocation5 + $0x100] sm:$0xff] %v8869
    %8926 = vst [vmem:[#allocation5 + $0x108] sm:$0xff] %v8870
    %8927 = vst [vmem:[#allocation5 + $0x110] sm:$0xff] %v8871
    %8928 = vst [vmem:[#allocation5 + $0x118] sm:$0xff] %v8872
    %8929 = vst [vmem:[#allocation5 + $0x120] sm:$0xff] %v8873
    %8930 = vst [vmem:[#allocation5 + $0x128] sm:$0xff] %v8874
    %8931 = vst [vmem:[#allocation5 + $0x130] sm:$0xff] %v8875
    %8932 = vst [vmem:[#allocation5 + $0x138] sm:$0xff] %v8876
    %8933 = vst [vmem:[#allocation5 + $0x140] sm:$0xff] %v8877
    %8934 = vst [vmem:[#allocation5 + $0x148] sm:$0xff] %v8878
    %8935 = vst [vmem:[#allocation5 + $0x150] sm:$0xff] %v8879
    %8936 = vst [vmem:[#allocation5 + $0x158] sm:$0xff] %v8880
    %8937 = vst [vmem:[#allocation5 + $0x160] sm:$0xff] %v8881
    %8938 = vst [vmem:[#allocation5 + $0x168] sm:$0xff] %v8882
    %8939 = vst [vmem:[#allocation5 + $0x170] sm:$0xff] %v8883
    %8940 = vst [vmem:[#allocation5 + $0x178] sm:$0xff] %v8884
    %8941 = vst [vmem:[#allocation5 + $0x180] sm:$0xff] %v8885
    %8942 = vst [vmem:[#allocation5 + $0x188] sm:$0xff] %v8886
    %8943 = vst [vmem:[#allocation5 + $0x190] sm:$0xff] %v8887
    %8944 = vst [vmem:[#allocation5 + $0x198] sm:$0xff] %v8888
    %8945 = vst [vmem:[#allocation5 + $0x1a0] sm:$0xff] %v8889
    %8946 = vst [vmem:[#allocation5 + $0x1a8] sm:$0xff] %v8890
    %8947 = vst [vmem:[#allocation5 + $0x1b0] sm:$0xff] %v8891
    %8948 = vst [vmem:[#allocation5 + $0x1b8] sm:$0xff] %v8892
    // Predicated region
    $region98: #{generator_forward.1} parent=1 // pred_check
      _
    $region99: #{generator_forward.1} parent=1 // pred_check_branch
      %8950 = sbr.rel (0) target = $region101
    $region100: #{generator_forward.1} parent=1 // pred_region
      %s8952 = ssub.s32 7168, 7168
      %8953 = vsyncadd [#allocation6], %s8952
      %s8954 = sshll.u32 [#allocation5], 4
      %s8955 = int_to_ptr.vmem [resolvable:$true] %s8954
      %8960 = dma.vmem_to_hbm [thread:$0]  %s8955, 7168, %s9, [#allocation6], 896, 896, 56
    $region101: #{generator_forward.1} parent=1 // pred_fallthru
      _
    // Predicated region
    $region102: #{generator_forward.1} parent=1 // pred_check
      _
    $region103: #{generator_forward.1} parent=1 // pred_check_branch
      %8962 = sbr.rel (0) target = $region105
    $region104: #{generator_forward.1} parent=1 // pred_region
      %8963 = dma.done [#allocation6], 7168
    $region105: #{generator_forward.1} parent=1 // pred_fallthru
      _
    %8964 = vsyncpa [#allocation6], 1
  %8965 = vsyncmov [#allocation4]
  %s8966 = vpop.sfrf %8965
  %p8967 = scmp.eq.s32.totalorder %s8966, 0
  %p8968 = pneg %p8967
  %8970 = shalt.err (%p8968)
  %s8971 = scalar_lea.sflag [#allocation4], 1
  %8972 = vsyncmov %s8971
  %s8973 = vpop.sfrf %8972
  %p8974 = scmp.eq.s32.totalorder %s8973, 0
  %p8975 = pneg %p8974
  %8977 = shalt.err (%p8975)

</llo_original>
